<compile_context>
chip_gen: v7x
topology: tpu7x:2x2x1
jax: 0.10.0
libtpu: 0.0.40
codegen_flags: <defaults>
</compile_context>

<pallas_src>
import math

import numpy as np

import jax
import jax.numpy as jnp
from jax import lax
from jax.experimental import pallas as pl
from jax.experimental.pallas import tpu as pltpu


# ----------------------------------------------------------------------------
# Geometry / module configuration
# ----------------------------------------------------------------------------
N_EEG = 19                        # cha_num (EEG electrodes = spatial height)
L_TIME = 16                       # time samples (spatial width)
NL = N_EEG * L_TIME               # 304: flattened, lane-dense spatial axis
PAD = 128                         # lane-aligned interior start in the scratch
PADW = NL + 2 * PAD               # 560
C_STAGES = ((1, 8), (8, 16), (16, 32))   # (cin, cout) per residual stage
C_MAX = 32
C_OUT = C_STAGES[-1][1]

BN_EPS = 1e-5
NEG_SLOPE = 0.2


# ----------------------------------------------------------------------------
# Parameter slab layout (after host-side folding of BN / biases / skip-dw)
# ----------------------------------------------------------------------------
def _stage_layout(cin, cout):
    ch = cout // 2
    return (("ds1_dw", cin, 9), ("ds1_pw", cout, cin), ("ds1_pb", cout, 1),
            ("ds2_dw", cout, 9), ("ds2_pw", cout, cout), ("ds2_pb", cout, 1),
            ("sk_pw", cout, cin), ("sk_pb", cout, 1),
            ("w1", ch, cout), ("w2", cout, ch))


def _round8(n):
    return -(-n // 8) * 8


def _build_layout():
    offsets, row = [], 0
    for cin, cout in C_STAGES:
        d = {}
        for name, r, c in _stage_layout(cin, cout):
            d[name] = (row, r, c)          # (row0, rows, cols) in the slab
            row += _round8(r)              # 8-aligned so every slice is clean
        offsets.append(d)
    return offsets, _round8(row)


_OFFSETS, SLAB_ROWS = _build_layout()      # SLAB_ROWS == 512
SLAB_COLS = 32                             # widest param is (32, 32)


# ----------------------------------------------------------------------------
# Host-built constants (pooling / expansion matrices, lane masks)
# ----------------------------------------------------------------------------
def _build_constants():
    p = np.arange(NL)
    n = p // L_TIME
    l = p % L_TIME
    # expand[n, p] = 1 if flat position p belongs to EEG row n
    expand = (n[None, :] == np.arange(N_EEG)[:, None]).astype(np.float32)
    mask_l = (l > 0).astype(np.float32)[None, :]             # dx = -1 valid
    mask_r = (l < L_TIME - 1).astype(np.float32)[None, :]    # dx = +1 valid
    lane_const = np.concatenate([expand, mask_l, mask_r], 0)  # (21, NL)

    pool_avg = (expand.T / np.float32(L_TIME)).astype(np.float32)   # (NL, 19)
    pool_sel = (p[:, None] == (np.arange(N_EEG) * L_TIME)[None, :]
                ).astype(np.float32)                                 # (NL, 19)
    pool_const = np.stack([pool_avg, pool_sel], 0)            # (2, NL, 19)
    return jnp.asarray(lane_const), jnp.asarray(pool_const)


_LANE_CONST, _POOL_CONST = _build_constants()


# ----------------------------------------------------------------------------
# Fused kernel: one batch element per grid step, everything in VMEM.
# ----------------------------------------------------------------------------
def _mcfe_kernel(x_ref, slab_ref, lane_ref, pool_ref, out_ref, pad_ref):
    f32 = jnp.float32

    # Zero ONLY the border columns of the padded scratch (a few vregs).  The
    # interior is always rewritten before it is read; the borders supply the
    # zero padding for the row (n) direction of the 3x3 depthwise conv and
    # for the max-pool tree.
    pad_ref[:, 0:PAD] = jnp.zeros((C_MAX, PAD), f32)
    pad_ref[:, PAD + NL:PADW] = jnp.zeros((C_MAX, PADW - PAD - NL), f32)

    expand = lane_ref[0:N_EEG, :]                       # (19, NL)
    mask_l = lane_ref[N_EEG:N_EEG + 1, :]               # (1, NL): l > 0
    mask_r = lane_ref[N_EEG + 1:N_EEG + 2, :]           # (1, NL): l < L-1
    pool_avg = pool_ref[0]                              # (NL, 19)
    pool_sel = pool_ref[1]                              # (NL, 19)

    def getp(si, name):                                 # static slab slice
        r0, r, c = _OFFSETS[si][name]
        return slab_ref[r0:r0 + r, 0:c]

    def leaky(z):
        return jnp.maximum(z, NEG_SLOPE * z)

    def depthwise3x3(x, dww, cin):
        # x: (cin, NL).  Write the (lane-aligned) interior once, read 9
        # statically shifted views; lane masks fix the intra-row (l) wrap,
        # the zero borders handle the row (n) boundaries.
        pad_ref[0:cin, PAD:PAD + NL] = x
        y = None
        for ky in range(3):
            for kx in range(3):
                off = (ky - 1) * L_TIME + (kx - 1)
                t = ky * 3 + kx
                w = dww[:, t:t + 1]                     # (cin, 1)
                if kx == 0:
                    w = w * mask_l
                elif kx == 2:
                    w = w * mask_r
                term = w * pad_ref[0:cin, PAD + off:PAD + off + NL]
                y = term if y is None else y + term
        return y

    def pointwise(y, pw, pb, cin):
        if cin == 1:
            z = pw * y                                  # (cout,1)*(1,NL)
        else:
            z = jnp.dot(pw, y, preferred_element_type=f32)   # MXU
        return z + pb

    def attention(r, w1, w2, cout):
        # AdaptiveAvg/MaxPool2d((N, 1)) == reduce over the L time samples.
        avg = jnp.dot(r, pool_avg, preferred_element_type=f32)      # (C, 19)

        # log2(L) = 4 step doubling-tree max; exact at every group-head lane.
        m = r
        for s in (1, 2, 4, 8):
            pad_ref[0:cout, PAD:PAD + NL] = m
            m = jnp.maximum(m, pad_ref[0:cout, PAD + s:PAD + s + NL])
        mx = jnp.dot(m, pool_sel, preferred_element_type=f32)       # (C, 19)

        def fc(v):                                      # shared bias-free MLP
            h = jnp.maximum(jnp.dot(w1, v, preferred_element_type=f32), 0.0)
            return jnp.dot(w2, h, preferred_element_type=f32)

        scale = fc(avg) + fc(mx)
        scale = 1.0 / (1.0 + jnp.exp(-scale))           # sigmoid (EUP exp)
        # channel mean on the small (C, 19) tile, THEN expand over time
        sm = jnp.mean(scale, axis=0, keepdims=True)                 # (1, 19)
        srep = jnp.dot(jnp.broadcast_to(sm, (cout, N_EEG)), expand,
                       preferred_element_type=f32)                  # (C, NL)
        return r * srep

    # --- the three fused stages ----------------------------------------------
    x = x_ref[0].astype(f32)                            # (cin0, NL)
    for si, (cin, cout) in enumerate(C_STAGES):
        a = leaky(pointwise(depthwise3x3(x, getp(si, "ds1_dw"), cin),
                            getp(si, "ds1_pw"), getp(si, "ds1_pb"), cin))
        a = leaky(pointwise(depthwise3x3(a, getp(si, "ds2_dw"), cout),
                            getp(si, "ds2_pw"), getp(si, "ds2_pb"), cout))
        s = pointwise(x, getp(si, "sk_pw"), getp(si, "sk_pb"), cin)  # skip
        r = a + s                                       # residual add
        x = leaky(attention(r, getp(si, "w1"), getp(si, "w2"), cout))
    out_ref[0] = x.astype(out_ref.dtype)


# ----------------------------------------------------------------------------
# Host-side folding (eval BN + depthwise biases + skip depthwise scale) and
# packing into a single resident parameter slab.
# ----------------------------------------------------------------------------
def _fold_block(blk):
    bn_s = blk["bn_gamma"] / jnp.sqrt(blk["bn_var"] + BN_EPS)
    bn_b = blk["bn_beta"] - blk["bn_mean"] * bn_s
    pw = blk["pw_w"] * bn_s[:, None]
    # pw_w @ dw_b done elementwise (exact f32, no MXU precision surprises)
    pb = bn_s * ((blk["pw_w"] * blk["dw_b"][None, :]).sum(axis=1)
                 + blk["pw_b"]) + bn_b
    return pw, pb


def _pack_params(params):
    slab = jnp.zeros((SLAB_ROWS, SLAB_COLS), jnp.float32)

    def put(slab, off, val):
        r0, r, c = off
        return slab.at[r0:r0 + r, 0:c].set(
            jnp.asarray(val, jnp.float32).reshape(r, c))

    for si, (cin, cout) in enumerate(C_STAGES):
        res, att = params[f"res{si + 1}"], params[f"att{si + 1}"]
        off = _OFFSETS[si]
        ds1_pw, ds1_pb = _fold_block(res["ds1"])
        ds2_pw, ds2_pb = _fold_block(res["ds2"])
        sk_pw, sk_pb = _fold_block(res["skip"])
        sk_pw = sk_pw * res["skip"]["dw_w"].reshape(1, cin)   # fold 1x1 dw scale
        slab = put(slab, off["ds1_dw"], res["ds1"]["dw_w"])
        slab = put(slab, off["ds1_pw"], ds1_pw)
        slab = put(slab, off["ds1_pb"], ds1_pb)
        slab = put(slab, off["ds2_dw"], res["ds2"]["dw_w"])
        slab = put(slab, off["ds2_pw"], ds2_pw)
        slab = put(slab, off["ds2_pb"], ds2_pb)
        slab = put(slab, off["sk_pw"], sk_pw)
        slab = put(slab, off["sk_pb"], sk_pb)
        slab = put(slab, off["w1"], att["w1"])
        slab = put(slab, off["w2"], att["w2"])
    return slab


# ----------------------------------------------------------------------------
# Wrapper
# ----------------------------------------------------------------------------
def mcfe_block_depwise(x, params):
    B, cin0, n, l = x.shape
    assert (cin0, n, l) == (C_STAGES[0][0], N_EEG, L_TIME), x.shape
    x_flat = x.reshape(B, cin0, NL).astype(jnp.float32)   # lane-dense input
    slab = _pack_params(params)

    out = pl.pallas_call(
        _mcfe_kernel,
        out_shape=jax.ShapeDtypeStruct((B, C_OUT, NL), jnp.float32),
        grid=(B,),
        in_specs=[
            pl.BlockSpec((1, cin0, NL), lambda b: (b, 0, 0)),
            pl.BlockSpec((SLAB_ROWS, SLAB_COLS), lambda b: (0, 0)),
            pl.BlockSpec(_LANE_CONST.shape, lambda b: (0, 0)),
            pl.BlockSpec(_POOL_CONST.shape, lambda b: (0, 0, 0)),
        ],
        out_specs=pl.BlockSpec((1, C_OUT, NL), lambda b: (b, 0, 0)),
        scratch_shapes=[pltpu.VMEM((C_MAX, PADW), jnp.float32)],
        compiler_params=pltpu.CompilerParams(
            dimension_semantics=("parallel",)),
    )(x_flat, slab, _LANE_CONST, _POOL_CONST)
    return out.reshape(B, C_OUT, N_EEG, L_TIME)


# ----------------------------------------------------------------------------
# Parameter init (Xavier conv weights, zero biases, eval-mode BN — matches the
# PyTorch initialize_weights()); `rich=True` randomizes biases/BN stats to
# exercise the host-side folding.
# ----------------------------------------------------------------------------
def _xavier(key, shape, fan_in, fan_out):
    a = math.sqrt(6.0 / (fan_in + fan_out))
    return jax.random.uniform(key, shape, jnp.float32, -a, a)


def _dsconv_params(key, cin, cout, k, rich):
    ks = jax.random.split(key, 8)
    p = dict(
        dw_w=_xavier(ks[0], (cin, k, k), 1 * k * k, cin * k * k),
        dw_b=jnp.zeros((cin,), jnp.float32),
        pw_w=_xavier(ks[1], (cout, cin), cin, cout),
        pw_b=jnp.zeros((cout,), jnp.float32),
        bn_gamma=jnp.ones((cout,), jnp.float32),
        bn_beta=jnp.zeros((cout,), jnp.float32),
        bn_mean=jnp.zeros((cout,), jnp.float32),
        bn_var=jnp.ones((cout,), jnp.float32),
    )
    if rich:
        p["dw_b"] = 0.1 * jax.random.normal(ks[2], (cin,), jnp.float32)
        p["pw_b"] = 0.1 * jax.random.normal(ks[3], (cout,), jnp.float32)
        p["bn_gamma"] = 1.0 + 0.2 * jax.random.normal(ks[4], (cout,), jnp.float32)
        p["bn_beta"] = 0.2 * jax.random.normal(ks[5], (cout,), jnp.float32)
        p["bn_mean"] = 0.2 * jax.random.normal(ks[6], (cout,), jnp.float32)
        p["bn_var"] = 0.5 + jax.random.uniform(ks[7], (cout,), jnp.float32)
    return p


def _attn_params(key, c):
    k1, k2 = jax.random.split(key)
    ch = c // 2
    return dict(w1=_xavier(k1, (ch, c), c, ch), w2=_xavier(k2, (c, ch), ch, c))


def init_params(key, rich=False):
    keys = jax.random.split(key, 2 * len(C_STAGES))
    p = {}
    for i, (cin, cout) in enumerate(C_STAGES):
        k1, k2, k3 = jax.random.split(keys[i], 3)
        p[f"res{i + 1}"] = dict(ds1=_dsconv_params(k1, cin, cout, 3, rich),
                                ds2=_dsconv_params(k2, cout, cout, 3, rich),
                                skip=_dsconv_params(k3, cin, cout, 1, rich))
        p[f"att{i + 1}"] = _attn_params(keys[len(C_STAGES) + i], cout)
    return p


# ----------------------------------------------------------------------------
# Pure-JAX reference (mirrors the PyTorch module), used as correctness check.
# ----------------------------------------------------------------------------
def _ref_leaky(v):
    return jnp.where(v >= 0, v, NEG_SLOPE * v)


def _ref_bn(z, blk):
    s = blk["bn_gamma"] / jnp.sqrt(blk["bn_var"] + BN_EPS)
    b = blk["bn_beta"] - blk["bn_mean"] * s
    return z * s.reshape(1, -1, 1, 1) + b.reshape(1, -1, 1, 1)


def _ref_dsconv(x, blk, k, padding):
    cin = x.shape[1]
    cout = blk["pw_w"].shape[0]
    dw = blk["dw_w"].reshape(cin, 1, k, k)
    y = lax.conv_general_dilated(
        x, dw, window_strides=(1, 1), padding=[(padding, padding)] * 2,
        dimension_numbers=("NCHW", "OIHW", "NCHW"),
        feature_group_count=cin, precision=lax.Precision.HIGHEST)
    y = y + blk["dw_b"].reshape(1, cin, 1, 1)
    z = jnp.einsum("oc,bcnl->bonl", blk["pw_w"], y,
                   precision=lax.Precision.HIGHEST)
    return z + blk["pw_b"].reshape(1, cout, 1, 1)


def _ref_attention(x, att):
    avg = jnp.mean(x, axis=3, keepdims=True)
    mx = jnp.max(x, axis=3, keepdims=True)

    def fc(v):
        h = jnp.maximum(jnp.einsum("hc,bcnl->bhnl", att["w1"], v,
                                   precision=lax.Precision.HIGHEST), 0.0)
        return jnp.einsum("ch,bhnl->bcnl", att["w2"], h,
                          precision=lax.Precision.HIGHEST)

    scale = jax.nn.sigmoid(fc(avg) + fc(mx))
    scale = jnp.mean(scale, axis=1, keepdims=True)
    return x * scale


def mcfe_reference(x, params):
    x = x.astype(jnp.float32)
    for i in range(1, len(C_STAGES) + 1):
        res, att = params[f"res{i}"], params[f"att{i}"]
        a = _ref_leaky(_ref_bn(_ref_dsconv(x, res["ds1"], 3, 1), res["ds1"]))
        a = _ref_leaky(_ref_bn(_ref_dsconv(a, res["ds2"], 3, 1), res["ds2"]))
        s = _ref_bn(_ref_dsconv(x, res["skip"], 1, 0), res["skip"])
        x = _ref_leaky(_ref_attention(a + s, att))
    return x


# ----------------------------------------------------------------------------
if __name__ == "__main__":
    key = jax.random.PRNGKey(0)
    kx, kp0, kp1 = jax.random.split(key, 3)

    # x: (batch=2, in_channels=1, EEG channels N=19 (= cha_num), time L=16)
    B = 2
    x = jax.random.normal(kx, (B, C_STAGES[0][0], N_EEG, L_TIME), jnp.float32)

    fwd = jax.jit(mcfe_block_depwise)
    ref = jax.jit(mcfe_reference)

    for tag, params in (("module-init", init_params(kp0, rich=False)),
                        ("folded-bn", init_params(kp1, rich=True))):
        out = jax.block_until_ready(fwd(x, params))
        assert out.shape == (B, C_OUT, N_EEG, L_TIME), out.shape
        assert bool(jnp.all(jnp.isfinite(out)))
        expect = jax.block_until_ready(ref(x, params))
        err = float(jnp.max(jnp.abs(out - expect)))
        assert err < 2e-3, (tag, err)

    print("KERNEL_OK")
</pallas_src>

<mosaic_0001>
module attributes {stable_mosaic.version = 11 : i64} {
  func.func @_mcfe_kernel(%arg0: i32, %arg1: memref<1x1x304xf32, #tpu.memory_space<vmem>>, %arg2: memref<512x32xf32, #tpu.memory_space<vmem>>, %arg3: memref<21x304xf32, #tpu.memory_space<vmem>>, %arg4: memref<2x304x19xf32, #tpu.memory_space<vmem>>, %arg5: memref<1x32x304xf32, #tpu.memory_space<vmem>>, %arg6: memref<32x560xf32, #tpu.memory_space<vmem>>) attributes {dimension_semantics = [#tpu.dimension_semantics<parallel>], iteration_bounds = array<i64: 2>, scalar_prefetch = 0 : i64, scratch_operands = 1 : i64, tpu.core_type = #tpu.core_type<tc>, window_params = [{transform_indices = @transform_0, window_bounds = array<i64: 1, 1, 304>}, {pipeline_mode = #tpu.pipeline_mode<synchronous>, transform_indices = @transform_1, window_bounds = array<i64: 512, 32>}, {pipeline_mode = #tpu.pipeline_mode<synchronous>, transform_indices = @transform_2, window_bounds = array<i64: 21, 304>}, {pipeline_mode = #tpu.pipeline_mode<synchronous>, transform_indices = @transform_3, window_bounds = array<i64: 2, 304, 19>}, {transform_indices = @transform_4, window_bounds = array<i64: 1, 32, 304>}]} {
    %cst = arith.constant 0.000000e+00 : f32
    %0 = vector.broadcast %cst : f32 to vector<32x128xf32>
    %c0 = arith.constant 0 : index
    %c0_0 = arith.constant 0 : index
    %1 = vector.load %arg6[%c0, %c0_0] : memref<32x560xf32, #tpu.memory_space<vmem>>, vector<32x128xf32>
    tpu.vector_store %arg6[%c0, %c0_0], %0 {strides = array<i32>} : memref<32x560xf32, #tpu.memory_space<vmem>>, vector<32x128xf32>,
    %cst_1 = arith.constant 0.000000e+00 : f32
    %2 = vector.broadcast %cst_1 : f32 to vector<32x128xf32>
    %c0_2 = arith.constant 0 : index
    %c432 = arith.constant 432 : index
    %3 = vector.load %arg6[%c0_2, %c432] : memref<32x560xf32, #tpu.memory_space<vmem>>, vector<32x128xf32>
    tpu.vector_store %arg6[%c0_2, %c432], %2 {strides = array<i32>} : memref<32x560xf32, #tpu.memory_space<vmem>>, vector<32x128xf32>,
    %c0_3 = arith.constant 0 : index
    %c0_4 = arith.constant 0 : index
    %4 = vector.load %arg3[%c0_3, %c0_4] : memref<21x304xf32, #tpu.memory_space<vmem>>, vector<19x304xf32>
    %c19 = arith.constant 19 : index
    %c0_5 = arith.constant 0 : index
    %5 = vector.load %arg3[%c19, %c0_5] : memref<21x304xf32, #tpu.memory_space<vmem>>, vector<1x304xf32>
    %c20 = arith.constant 20 : index
    %c0_6 = arith.constant 0 : index
    %6 = vector.load %arg3[%c20, %c0_6] : memref<21x304xf32, #tpu.memory_space<vmem>>, vector<1x304xf32>
    %c0_7 = arith.constant 0 : index
    %c0_8 = arith.constant 0 : index
    %c0_9 = arith.constant 0 : index
    %7 = vector.load %arg4[%c0_7, %c0_8, %c0_9] : memref<2x304x19xf32, #tpu.memory_space<vmem>>, vector<1x304x19xf32>
    %8 = vector.shape_cast %7 : vector<1x304x19xf32> to vector<304x19xf32>
    %c1 = arith.constant 1 : index
    %c0_10 = arith.constant 0 : index
    %c0_11 = arith.constant 0 : index
    %9 = vector.load %arg4[%c1, %c0_10, %c0_11] : memref<2x304x19xf32, #tpu.memory_space<vmem>>, vector<1x304x19xf32>
    %10 = vector.shape_cast %9 : vector<1x304x19xf32> to vector<304x19xf32>
    %c0_12 = arith.constant 0 : index
    %c0_13 = arith.constant 0 : index
    %c0_14 = arith.constant 0 : index
    %11 = vector.load %arg1[%c0_12, %c0_13, %c0_14] : memref<1x1x304xf32, #tpu.memory_space<vmem>>, vector<1x1x304xf32>
    %12 = vector.shape_cast %11 : vector<1x1x304xf32> to vector<1x304xf32>
    %c0_15 = arith.constant 0 : index
    %c0_16 = arith.constant 0 : index
    %13 = vector.load %arg2[%c0_15, %c0_16] : memref<512x32xf32, #tpu.memory_space<vmem>>, vector<1x9xf32>
    %c0_17 = arith.constant 0 : index
    %c128 = arith.constant 128 : index
    %14 = vector.load %arg6[%c0_17, %c128] : memref<32x560xf32, #tpu.memory_space<vmem>>, vector<1x304xf32>
    tpu.vector_store %arg6[%c0_17, %c128], %12 {strides = array<i32>} : memref<32x560xf32, #tpu.memory_space<vmem>>, vector<1x304xf32>,
    %15 = vector.extract_strided_slice %13 {offsets = [0, 0], sizes = [1, 1], strides = [1, 1]} : vector<1x9xf32> to vector<1x1xf32>
    %16 = vector.broadcast %15 : vector<1x1xf32> to vector<1x304xf32>
    %17 = arith.mulf %16, %5 : vector<1x304xf32>
    %c0_18 = arith.constant 0 : index
    %c111 = arith.constant 111 : index
    %18 = vector.load %arg6[%c0_18, %c111] : memref<32x560xf32, #tpu.memory_space<vmem>>, vector<1x304xf32>
    %19 = arith.mulf %17, %18 : vector<1x304xf32>
    %20 = vector.extract_strided_slice %13 {offsets = [0, 1], sizes = [1, 1], strides = [1, 1]} : vector<1x9xf32> to vector<1x1xf32>
    %c0_19 = arith.constant 0 : index
    %c112 = arith.constant 112 : index
    %21 = vector.load %arg6[%c0_19, %c112] : memref<32x560xf32, #tpu.memory_space<vmem>>, vector<1x304xf32>
    %22 = vector.broadcast %20 : vector<1x1xf32> to vector<1x304xf32>
    %23 = arith.mulf %22, %21 : vector<1x304xf32>
    %24 = arith.addf %19, %23 : vector<1x304xf32>
    %25 = vector.extract_strided_slice %13 {offsets = [0, 2], sizes = [1, 1], strides = [1, 1]} : vector<1x9xf32> to vector<1x1xf32>
    %26 = vector.broadcast %25 : vector<1x1xf32> to vector<1x304xf32>
    %27 = arith.mulf %26, %6 : vector<1x304xf32>
    %c0_20 = arith.constant 0 : index
    %c113 = arith.constant 113 : index
    %28 = vector.load %arg6[%c0_20, %c113] : memref<32x560xf32, #tpu.memory_space<vmem>>, vector<1x304xf32>
    %29 = arith.mulf %27, %28 : vector<1x304xf32>
    %30 = arith.addf %24, %29 : vector<1x304xf32>
    %31 = vector.extract_strided_slice %13 {offsets = [0, 3], sizes = [1, 1], strides = [1, 1]} : vector<1x9xf32> to vector<1x1xf32>
    %32 = vector.broadcast %31 : vector<1x1xf32> to vector<1x304xf32>
    %33 = arith.mulf %32, %5 : vector<1x304xf32>
    %c0_21 = arith.constant 0 : index
    %c127 = arith.constant 127 : index
    %34 = vector.load %arg6[%c0_21, %c127] : memref<32x560xf32, #tpu.memory_space<vmem>>, vector<1x304xf32>
    %35 = arith.mulf %33, %34 : vector<1x304xf32>
    %36 = arith.addf %30, %35 : vector<1x304xf32>
    %37 = vector.extract_strided_slice %13 {offsets = [0, 4], sizes = [1, 1], strides = [1, 1]} : vector<1x9xf32> to vector<1x1xf32>
    %c0_22 = arith.constant 0 : index
    %c128_23 = arith.constant 128 : index
    %38 = vector.load %arg6[%c0_22, %c128_23] : memref<32x560xf32, #tpu.memory_space<vmem>>, vector<1x304xf32>
    %39 = vector.broadcast %37 : vector<1x1xf32> to vector<1x304xf32>
    %40 = arith.mulf %39, %38 : vector<1x304xf32>
    %41 = arith.addf %36, %40 : vector<1x304xf32>
    %42 = vector.extract_strided_slice %13 {offsets = [0, 5], sizes = [1, 1], strides = [1, 1]} : vector<1x9xf32> to vector<1x1xf32>
    %43 = vector.broadcast %42 : vector<1x1xf32> to vector<1x304xf32>
    %44 = arith.mulf %43, %6 : vector<1x304xf32>
    %c0_24 = arith.constant 0 : index
    %c129 = arith.constant 129 : index
    %45 = vector.load %arg6[%c0_24, %c129] : memref<32x560xf32, #tpu.memory_space<vmem>>, vector<1x304xf32>
    %46 = arith.mulf %44, %45 : vector<1x304xf32>
    %47 = arith.addf %41, %46 : vector<1x304xf32>
    %48 = vector.extract_strided_slice %13 {offsets = [0, 6], sizes = [1, 1], strides = [1, 1]} : vector<1x9xf32> to vector<1x1xf32>
    %49 = vector.broadcast %48 : vector<1x1xf32> to vector<1x304xf32>
    %50 = arith.mulf %49, %5 : vector<1x304xf32>
    %c0_25 = arith.constant 0 : index
    %c143 = arith.constant 143 : index
    %51 = vector.load %arg6[%c0_25, %c143] : memref<32x560xf32, #tpu.memory_space<vmem>>, vector<1x304xf32>
    %52 = arith.mulf %50, %51 : vector<1x304xf32>
    %53 = arith.addf %47, %52 : vector<1x304xf32>
    %54 = vector.extract_strided_slice %13 {offsets = [0, 7], sizes = [1, 1], strides = [1, 1]} : vector<1x9xf32> to vector<1x1xf32>
    %c0_26 = arith.constant 0 : index
    %c144 = arith.constant 144 : index
    %55 = vector.load %arg6[%c0_26, %c144] : memref<32x560xf32, #tpu.memory_space<vmem>>, vector<1x304xf32>
    %56 = vector.broadcast %54 : vector<1x1xf32> to vector<1x304xf32>
    %57 = arith.mulf %56, %55 : vector<1x304xf32>
    %58 = arith.addf %53, %57 : vector<1x304xf32>
    %59 = vector.extract_strided_slice %13 {offsets = [0, 8], sizes = [1, 1], strides = [1, 1]} : vector<1x9xf32> to vector<1x1xf32>
    %60 = vector.broadcast %59 : vector<1x1xf32> to vector<1x304xf32>
    %61 = arith.mulf %60, %6 : vector<1x304xf32>
    %c0_27 = arith.constant 0 : index
    %c145 = arith.constant 145 : index
    %62 = vector.load %arg6[%c0_27, %c145] : memref<32x560xf32, #tpu.memory_space<vmem>>, vector<1x304xf32>
    %63 = arith.mulf %61, %62 : vector<1x304xf32>
    %64 = arith.addf %58, %63 : vector<1x304xf32>
    %c8 = arith.constant 8 : index
    %c0_28 = arith.constant 0 : index
    %65 = vector.load %arg2[%c8, %c0_28] : memref<512x32xf32, #tpu.memory_space<vmem>>, vector<8x1xf32>
    %c16 = arith.constant 16 : index
    %c0_29 = arith.constant 0 : index
    %66 = vector.load %arg2[%c16, %c0_29] : memref<512x32xf32, #tpu.memory_space<vmem>>, vector<8x1xf32>
    %67 = vector.broadcast %65 : vector<8x1xf32> to vector<8x304xf32>
    %68 = vector.broadcast %64 : vector<1x304xf32> to vector<8x304xf32>
    %69 = arith.mulf %67, %68 : vector<8x304xf32>
    %70 = vector.broadcast %66 : vector<8x1xf32> to vector<8x304xf32>
    %71 = arith.addf %69, %70 : vector<8x304xf32>
    %cst_30 = arith.constant 2.000000e-01 : f32
    %72 = vector.broadcast %cst_30 : f32 to vector<8x304xf32>
    %73 = arith.mulf %72, %71 : vector<8x304xf32>
    %74 = arith.maximumf %71, %73 : vector<8x304xf32>
    %c24 = arith.constant 24 : index
    %c0_31 = arith.constant 0 : index
    %75 = vector.load %arg2[%c24, %c0_31] : memref<512x32xf32, #tpu.memory_space<vmem>>, vector<8x9xf32>
    %c0_32 = arith.constant 0 : index
    %c128_33 = arith.constant 128 : index
    %76 = vector.load %arg6[%c0_32, %c128_33] : memref<32x560xf32, #tpu.memory_space<vmem>>, vector<8x304xf32>
    tpu.vector_store %arg6[%c0_32, %c128_33], %74 {strides = array<i32>} : memref<32x560xf32, #tpu.memory_space<vmem>>, vector<8x304xf32>,
    %77 = vector.extract_strided_slice %75 {offsets = [0, 0], sizes = [8, 1], strides = [1, 1]} : vector<8x9xf32> to vector<8x1xf32>
    %78 = vector.broadcast %77 : vector<8x1xf32> to vector<8x304xf32>
    %79 = vector.broadcast %5 : vector<1x304xf32> to vector<8x304xf32>
    %80 = arith.mulf %78, %79 : vector<8x304xf32>
    %c0_34 = arith.constant 0 : index
    %c111_35 = arith.constant 111 : index
    %81 = vector.load %arg6[%c0_34, %c111_35] : memref<32x560xf32, #tpu.memory_space<vmem>>, vector<8x304xf32>
    %82 = arith.mulf %80, %81 : vector<8x304xf32>
    %83 = vector.extract_strided_slice %75 {offsets = [0, 1], sizes = [8, 1], strides = [1, 1]} : vector<8x9xf32> to vector<8x1xf32>
    %c0_36 = arith.constant 0 : index
    %c112_37 = arith.constant 112 : index
    %84 = vector.load %arg6[%c0_36, %c112_37] : memref<32x560xf32, #tpu.memory_space<vmem>>, vector<8x304xf32>
    %85 = vector.broadcast %83 : vector<8x1xf32> to vector<8x304xf32>
    %86 = arith.mulf %85, %84 : vector<8x304xf32>
    %87 = arith.addf %82, %86 : vector<8x304xf32>
    %88 = vector.extract_strided_slice %75 {offsets = [0, 2], sizes = [8, 1], strides = [1, 1]} : vector<8x9xf32> to vector<8x1xf32>
    %89 = vector.broadcast %88 : vector<8x1xf32> to vector<8x304xf32>
    %90 = vector.broadcast %6 : vector<1x304xf32> to vector<8x304xf32>
    %91 = arith.mulf %89, %90 : vector<8x304xf32>
    %c0_38 = arith.constant 0 : index
    %c113_39 = arith.constant 113 : index
    %92 = vector.load %arg6[%c0_38, %c113_39] : memref<32x560xf32, #tpu.memory_space<vmem>>, vector<8x304xf32>
    %93 = arith.mulf %91, %92 : vector<8x304xf32>
    %94 = arith.addf %87, %93 : vector<8x304xf32>
    %95 = vector.extract_strided_slice %75 {offsets = [0, 3], sizes = [8, 1], strides = [1, 1]} : vector<8x9xf32> to vector<8x1xf32>
    %96 = vector.broadcast %95 : vector<8x1xf32> to vector<8x304xf32>
    %97 = vector.broadcast %5 : vector<1x304xf32> to vector<8x304xf32>
    %98 = arith.mulf %96, %97 : vector<8x304xf32>
    %c0_40 = arith.constant 0 : index
    %c127_41 = arith.constant 127 : index
    %99 = vector.load %arg6[%c0_40, %c127_41] : memref<32x560xf32, #tpu.memory_space<vmem>>, vector<8x304xf32>
    %100 = arith.mulf %98, %99 : vector<8x304xf32>
    %101 = arith.addf %94, %100 : vector<8x304xf32>
    %102 = vector.extract_strided_slice %75 {offsets = [0, 4], sizes = [8, 1], strides = [1, 1]} : vector<8x9xf32> to vector<8x1xf32>
    %c0_42 = arith.constant 0 : index
    %c128_43 = arith.constant 128 : index
    %103 = vector.load %arg6[%c0_42, %c128_43] : memref<32x560xf32, #tpu.memory_space<vmem>>, vector<8x304xf32>
    %104 = vector.broadcast %102 : vector<8x1xf32> to vector<8x304xf32>
    %105 = arith.mulf %104, %103 : vector<8x304xf32>
    %106 = arith.addf %101, %105 : vector<8x304xf32>
    %107 = vector.extract_strided_slice %75 {offsets = [0, 5], sizes = [8, 1], strides = [1, 1]} : vector<8x9xf32> to vector<8x1xf32>
    %108 = vector.broadcast %107 : vector<8x1xf32> to vector<8x304xf32>
    %109 = vector.broadcast %6 : vector<1x304xf32> to vector<8x304xf32>
    %110 = arith.mulf %108, %109 : vector<8x304xf32>
    %c0_44 = arith.constant 0 : index
    %c129_45 = arith.constant 129 : index
    %111 = vector.load %arg6[%c0_44, %c129_45] : memref<32x560xf32, #tpu.memory_space<vmem>>, vector<8x304xf32>
    %112 = arith.mulf %110, %111 : vector<8x304xf32>
    %113 = arith.addf %106, %112 : vector<8x304xf32>
    %114 = vector.extract_strided_slice %75 {offsets = [0, 6], sizes = [8, 1], strides = [1, 1]} : vector<8x9xf32> to vector<8x1xf32>
    %115 = vector.broadcast %114 : vector<8x1xf32> to vector<8x304xf32>
    %116 = vector.broadcast %5 : vector<1x304xf32> to vector<8x304xf32>
    %117 = arith.mulf %115, %116 : vector<8x304xf32>
    %c0_46 = arith.constant 0 : index
    %c143_47 = arith.constant 143 : index
    %118 = vector.load %arg6[%c0_46, %c143_47] : memref<32x560xf32, #tpu.memory_space<vmem>>, vector<8x304xf32>
    %119 = arith.mulf %117, %118 : vector<8x304xf32>
    %120 = arith.addf %113, %119 : vector<8x304xf32>
    %121 = vector.extract_strided_slice %75 {offsets = [0, 7], sizes = [8, 1], strides = [1, 1]} : vector<8x9xf32> to vector<8x1xf32>
    %c0_48 = arith.constant 0 : index
    %c144_49 = arith.constant 144 : index
    %122 = vector.load %arg6[%c0_48, %c144_49] : memref<32x560xf32, #tpu.memory_space<vmem>>, vector<8x304xf32>
    %123 = vector.broadcast %121 : vector<8x1xf32> to vector<8x304xf32>
    %124 = arith.mulf %123, %122 : vector<8x304xf32>
    %125 = arith.addf %120, %124 : vector<8x304xf32>
    %126 = vector.extract_strided_slice %75 {offsets = [0, 8], sizes = [8, 1], strides = [1, 1]} : vector<8x9xf32> to vector<8x1xf32>
    %127 = vector.broadcast %126 : vector<8x1xf32> to vector<8x304xf32>
    %128 = vector.broadcast %6 : vector<1x304xf32> to vector<8x304xf32>
    %129 = arith.mulf %127, %128 : vector<8x304xf32>
    %c0_50 = arith.constant 0 : index
    %c145_51 = arith.constant 145 : index
    %130 = vector.load %arg6[%c0_50, %c145_51] : memref<32x560xf32, #tpu.memory_space<vmem>>, vector<8x304xf32>
    %131 = arith.mulf %129, %130 : vector<8x304xf32>
    %132 = arith.addf %125, %131 : vector<8x304xf32>
    %c32 = arith.constant 32 : index
    %c0_52 = arith.constant 0 : index
    %133 = vector.load %arg2[%c32, %c0_52] : memref<512x32xf32, #tpu.memory_space<vmem>>, vector<8x8xf32>
    %c40 = arith.constant 40 : index
    %c0_53 = arith.constant 0 : index
    %134 = vector.load %arg2[%c40, %c0_53] : memref<512x32xf32, #tpu.memory_space<vmem>>, vector<8x1xf32>
    %cst_54 = arith.constant dense<0.000000e+00> : vector<8x304xf32>
    %135 = tpu.matmul %133, %132, %cst_54 {dimension_numbers = #tpu.dot_dimension_numbers<[1], [0], [0], [1], [0, 0, 1, 1], [], []>} : vector<8x8xf32>, vector<8x304xf32>, vector<8x304xf32> -> vector<8x304xf32>
    %136 = vector.broadcast %134 : vector<8x1xf32> to vector<8x304xf32>
    %137 = arith.addf %135, %136 : vector<8x304xf32>
    %cst_55 = arith.constant 2.000000e-01 : f32
    %138 = vector.broadcast %cst_55 : f32 to vector<8x304xf32>
    %139 = arith.mulf %138, %137 : vector<8x304xf32>
    %140 = arith.maximumf %137, %139 : vector<8x304xf32>
    %c48 = arith.constant 48 : index
    %c0_56 = arith.constant 0 : index
    %141 = vector.load %arg2[%c48, %c0_56] : memref<512x32xf32, #tpu.memory_space<vmem>>, vector<8x1xf32>
    %c56 = arith.constant 56 : index
    %c0_57 = arith.constant 0 : index
    %142 = vector.load %arg2[%c56, %c0_57] : memref<512x32xf32, #tpu.memory_space<vmem>>, vector<8x1xf32>
    %143 = vector.broadcast %141 : vector<8x1xf32> to vector<8x304xf32>
    %144 = vector.broadcast %12 : vector<1x304xf32> to vector<8x304xf32>
    %145 = arith.mulf %143, %144 : vector<8x304xf32>
    %146 = vector.broadcast %142 : vector<8x1xf32> to vector<8x304xf32>
    %147 = arith.addf %145, %146 : vector<8x304xf32>
    %148 = arith.addf %140, %147 : vector<8x304xf32>
    %c64 = arith.constant 64 : index
    %c0_58 = arith.constant 0 : index
    %149 = vector.load %arg2[%c64, %c0_58] : memref<512x32xf32, #tpu.memory_space<vmem>>, vector<4x8xf32>
    %c72 = arith.constant 72 : index
    %c0_59 = arith.constant 0 : index
    %150 = vector.load %arg2[%c72, %c0_59] : memref<512x32xf32, #tpu.memory_space<vmem>>, vector<8x4xf32>
    %cst_60 = arith.constant dense<0.000000e+00> : vector<8x19xf32>
    %151 = tpu.matmul %148, %8, %cst_60 {dimension_numbers = #tpu.dot_dimension_numbers<[1], [0], [0], [1], [0, 0, 1, 1], [], []>} : vector<8x304xf32>, vector<304x19xf32>, vector<8x19xf32> -> vector<8x19xf32>
    %c0_61 = arith.constant 0 : index
    %c128_62 = arith.constant 128 : index
    %152 = vector.load %arg6[%c0_61, %c128_62] : memref<32x560xf32, #tpu.memory_space<vmem>>, vector<8x304xf32>
    tpu.vector_store %arg6[%c0_61, %c128_62], %148 {strides = array<i32>} : memref<32x560xf32, #tpu.memory_space<vmem>>, vector<8x304xf32>,
    %c0_63 = arith.constant 0 : index
    %c129_64 = arith.constant 129 : index
    %153 = vector.load %arg6[%c0_63, %c129_64] : memref<32x560xf32, #tpu.memory_space<vmem>>, vector<8x304xf32>
    %154 = arith.maximumf %148, %153 : vector<8x304xf32>
    %c0_65 = arith.constant 0 : index
    %c128_66 = arith.constant 128 : index
    %155 = vector.load %arg6[%c0_65, %c128_66] : memref<32x560xf32, #tpu.memory_space<vmem>>, vector<8x304xf32>
    tpu.vector_store %arg6[%c0_65, %c128_66], %154 {strides = array<i32>} : memref<32x560xf32, #tpu.memory_space<vmem>>, vector<8x304xf32>,
    %c0_67 = arith.constant 0 : index
    %c130 = arith.constant 130 : index
    %156 = vector.load %arg6[%c0_67, %c130] : memref<32x560xf32, #tpu.memory_space<vmem>>, vector<8x304xf32>
    %157 = arith.maximumf %154, %156 : vector<8x304xf32>
    %c0_68 = arith.constant 0 : index
    %c128_69 = arith.constant 128 : index
    %158 = vector.load %arg6[%c0_68, %c128_69] : memref<32x560xf32, #tpu.memory_space<vmem>>, vector<8x304xf32>
    tpu.vector_store %arg6[%c0_68, %c128_69], %157 {strides = array<i32>} : memref<32x560xf32, #tpu.memory_space<vmem>>, vector<8x304xf32>,
    %c0_70 = arith.constant 0 : index
    %c132 = arith.constant 132 : index
    %159 = vector.load %arg6[%c0_70, %c132] : memref<32x560xf32, #tpu.memory_space<vmem>>, vector<8x304xf32>
    %160 = arith.maximumf %157, %159 : vector<8x304xf32>
    %c0_71 = arith.constant 0 : index
    %c128_72 = arith.constant 128 : index
    %161 = vector.load %arg6[%c0_71, %c128_72] : memref<32x560xf32, #tpu.memory_space<vmem>>, vector<8x304xf32>
    tpu.vector_store %arg6[%c0_71, %c128_72], %160 {strides = array<i32>} : memref<32x560xf32, #tpu.memory_space<vmem>>, vector<8x304xf32>,
    %c0_73 = arith.constant 0 : index
    %c136 = arith.constant 136 : index
    %162 = vector.load %arg6[%c0_73, %c136] : memref<32x560xf32, #tpu.memory_space<vmem>>, vector<8x304xf32>
    %163 = arith.maximumf %160, %162 : vector<8x304xf32>
    %cst_74 = arith.constant dense<0.000000e+00> : vector<8x19xf32>
    %164 = tpu.matmul %163, %10, %cst_74 {dimension_numbers = #tpu.dot_dimension_numbers<[1], [0], [0], [1], [0, 0, 1, 1], [], []>} : vector<8x304xf32>, vector<304x19xf32>, vector<8x19xf32> -> vector<8x19xf32>
    %cst_75 = arith.constant dense<0.000000e+00> : vector<4x19xf32>
    %165 = tpu.matmul %149, %151, %cst_75 {dimension_numbers = #tpu.dot_dimension_numbers<[1], [0], [0], [1], [0, 0, 1, 1], [], []>} : vector<4x8xf32>, vector<8x19xf32>, vector<4x19xf32> -> vector<4x19xf32>
    %cst_76 = arith.constant 0.000000e+00 : f32
    %166 = vector.broadcast %cst_76 : f32 to vector<4x19xf32>
    %167 = arith.maximumf %165, %166 : vector<4x19xf32>
    %cst_77 = arith.constant dense<0.000000e+00> : vector<8x19xf32>
    %168 = tpu.matmul %150, %167, %cst_77 {dimension_numbers = #tpu.dot_dimension_numbers<[1], [0], [0], [1], [0, 0, 1, 1], [], []>} : vector<8x4xf32>, vector<4x19xf32>, vector<8x19xf32> -> vector<8x19xf32>
    %cst_78 = arith.constant dense<0.000000e+00> : vector<4x19xf32>
    %169 = tpu.matmul %149, %164, %cst_78 {dimension_numbers = #tpu.dot_dimension_numbers<[1], [0], [0], [1], [0, 0, 1, 1], [], []>} : vector<4x8xf32>, vector<8x19xf32>, vector<4x19xf32> -> vector<4x19xf32>
    %cst_79 = arith.constant 0.000000e+00 : f32
    %170 = vector.broadcast %cst_79 : f32 to vector<4x19xf32>
    %171 = arith.maximumf %169, %170 : vector<4x19xf32>
    %cst_80 = arith.constant dense<0.000000e+00> : vector<8x19xf32>
    %172 = tpu.matmul %150, %171, %cst_80 {dimension_numbers = #tpu.dot_dimension_numbers<[1], [0], [0], [1], [0, 0, 1, 1], [], []>} : vector<8x4xf32>, vector<4x19xf32>, vector<8x19xf32> -> vector<8x19xf32>
    %173 = arith.addf %168, %172 : vector<8x19xf32>
    %cst_81 = arith.constant 0.000000e+00 : f32
    %174 = vector.broadcast %cst_81 : f32 to vector<8x19xf32>
    %175 = arith.subf %174, %173 : vector<8x19xf32>
    %176 = math.exp %175 : vector<8x19xf32>
    %cst_82 = arith.constant 1.000000e+00 : f32
    %177 = vector.broadcast %cst_82 : f32 to vector<8x19xf32>
    %178 = arith.addf %177, %176 : vector<8x19xf32>
    %cst_83 = arith.constant 1.000000e+00 : f32
    %179 = vector.broadcast %cst_83 : f32 to vector<8x19xf32>
    %180 = arith.divf %179, %178 : vector<8x19xf32>
    %cst_84 = arith.constant dense<0.000000e+00> : vector<19xf32>
    %181 = vector.multi_reduction <add>, %180, %cst_84 [0] : vector<8x19xf32> to vector<19xf32>
    %182 = vector.shape_cast %181 : vector<19xf32> to vector<1x19xf32>
    %cst_85 = arith.constant 8.000000e+00 : f32
    %183 = vector.broadcast %cst_85 : f32 to vector<1x19xf32>
    %184 = arith.divf %182, %183 : vector<1x19xf32>
    %185 = vector.shape_cast %184 : vector<1x19xf32> to vector<1x19xf32>
    %186 = vector.broadcast %185 : vector<1x19xf32> to vector<8x19xf32>
    %cst_86 = arith.constant dense<0.000000e+00> : vector<8x304xf32>
    %187 = tpu.matmul %186, %4, %cst_86 {dimension_numbers = #tpu.dot_dimension_numbers<[1], [0], [0], [1], [0, 0, 1, 1], [], []>} : vector<8x19xf32>, vector<19x304xf32>, vector<8x304xf32> -> vector<8x304xf32>
    %188 = arith.mulf %148, %187 : vector<8x304xf32>
    %cst_87 = arith.constant 2.000000e-01 : f32
    %189 = vector.broadcast %cst_87 : f32 to vector<8x304xf32>
    %190 = arith.mulf %189, %188 : vector<8x304xf32>
    %191 = arith.maximumf %188, %190 : vector<8x304xf32>
    %c80 = arith.constant 80 : index
    %c0_88 = arith.constant 0 : index
    %192 = vector.load %arg2[%c80, %c0_88] : memref<512x32xf32, #tpu.memory_space<vmem>>, vector<8x9xf32>
    %c0_89 = arith.constant 0 : index
    %c128_90 = arith.constant 128 : index
    %193 = vector.load %arg6[%c0_89, %c128_90] : memref<32x560xf32, #tpu.memory_space<vmem>>, vector<8x304xf32>
    tpu.vector_store %arg6[%c0_89, %c128_90], %191 {strides = array<i32>} : memref<32x560xf32, #tpu.memory_space<vmem>>, vector<8x304xf32>,
    %194 = vector.extract_strided_slice %192 {offsets = [0, 0], sizes = [8, 1], strides = [1, 1]} : vector<8x9xf32> to vector<8x1xf32>
    %195 = vector.broadcast %194 : vector<8x1xf32> to vector<8x304xf32>
    %196 = vector.broadcast %5 : vector<1x304xf32> to vector<8x304xf32>
    %197 = arith.mulf %195, %196 : vector<8x304xf32>
    %c0_91 = arith.constant 0 : index
    %c111_92 = arith.constant 111 : index
    %198 = vector.load %arg6[%c0_91, %c111_92] : memref<32x560xf32, #tpu.memory_space<vmem>>, vector<8x304xf32>
    %199 = arith.mulf %197, %198 : vector<8x304xf32>
    %200 = vector.extract_strided_slice %192 {offsets = [0, 1], sizes = [8, 1], strides = [1, 1]} : vector<8x9xf32> to vector<8x1xf32>
    %c0_93 = arith.constant 0 : index
    %c112_94 = arith.constant 112 : index
    %201 = vector.load %arg6[%c0_93, %c112_94] : memref<32x560xf32, #tpu.memory_space<vmem>>, vector<8x304xf32>
    %202 = vector.broadcast %200 : vector<8x1xf32> to vector<8x304xf32>
    %203 = arith.mulf %202, %201 : vector<8x304xf32>
    %204 = arith.addf %199, %203 : vector<8x304xf32>
    %205 = vector.extract_strided_slice %192 {offsets = [0, 2], sizes = [8, 1], strides = [1, 1]} : vector<8x9xf32> to vector<8x1xf32>
    %206 = vector.broadcast %205 : vector<8x1xf32> to vector<8x304xf32>
    %207 = vector.broadcast %6 : vector<1x304xf32> to vector<8x304xf32>
    %208 = arith.mulf %206, %207 : vector<8x304xf32>
    %c0_95 = arith.constant 0 : index
    %c113_96 = arith.constant 113 : index
    %209 = vector.load %arg6[%c0_95, %c113_96] : memref<32x560xf32, #tpu.memory_space<vmem>>, vector<8x304xf32>
    %210 = arith.mulf %208, %209 : vector<8x304xf32>
    %211 = arith.addf %204, %210 : vector<8x304xf32>
    %212 = vector.extract_strided_slice %192 {offsets = [0, 3], sizes = [8, 1], strides = [1, 1]} : vector<8x9xf32> to vector<8x1xf32>
    %213 = vector.broadcast %212 : vector<8x1xf32> to vector<8x304xf32>
    %214 = vector.broadcast %5 : vector<1x304xf32> to vector<8x304xf32>
    %215 = arith.mulf %213, %214 : vector<8x304xf32>
    %c0_97 = arith.constant 0 : index
    %c127_98 = arith.constant 127 : index
    %216 = vector.load %arg6[%c0_97, %c127_98] : memref<32x560xf32, #tpu.memory_space<vmem>>, vector<8x304xf32>
    %217 = arith.mulf %215, %216 : vector<8x304xf32>
    %218 = arith.addf %211, %217 : vector<8x304xf32>
    %219 = vector.extract_strided_slice %192 {offsets = [0, 4], sizes = [8, 1], strides = [1, 1]} : vector<8x9xf32> to vector<8x1xf32>
    %c0_99 = arith.constant 0 : index
    %c128_100 = arith.constant 128 : index
    %220 = vector.load %arg6[%c0_99, %c128_100] : memref<32x560xf32, #tpu.memory_space<vmem>>, vector<8x304xf32>
    %221 = vector.broadcast %219 : vector<8x1xf32> to vector<8x304xf32>
    %222 = arith.mulf %221, %220 : vector<8x304xf32>
    %223 = arith.addf %218, %222 : vector<8x304xf32>
    %224 = vector.extract_strided_slice %192 {offsets = [0, 5], sizes = [8, 1], strides = [1, 1]} : vector<8x9xf32> to vector<8x1xf32>
    %225 = vector.broadcast %224 : vector<8x1xf32> to vector<8x304xf32>
    %226 = vector.broadcast %6 : vector<1x304xf32> to vector<8x304xf32>
    %227 = arith.mulf %225, %226 : vector<8x304xf32>
    %c0_101 = arith.constant 0 : index
    %c129_102 = arith.constant 129 : index
    %228 = vector.load %arg6[%c0_101, %c129_102] : memref<32x560xf32, #tpu.memory_space<vmem>>, vector<8x304xf32>
    %229 = arith.mulf %227, %228 : vector<8x304xf32>
    %230 = arith.addf %223, %229 : vector<8x304xf32>
    %231 = vector.extract_strided_slice %192 {offsets = [0, 6], sizes = [8, 1], strides = [1, 1]} : vector<8x9xf32> to vector<8x1xf32>
    %232 = vector.broadcast %231 : vector<8x1xf32> to vector<8x304xf32>
    %233 = vector.broadcast %5 : vector<1x304xf32> to vector<8x304xf32>
    %234 = arith.mulf %232, %233 : vector<8x304xf32>
    %c0_103 = arith.constant 0 : index
    %c143_104 = arith.constant 143 : index
    %235 = vector.load %arg6[%c0_103, %c143_104] : memref<32x560xf32, #tpu.memory_space<vmem>>, vector<8x304xf32>
    %236 = arith.mulf %234, %235 : vector<8x304xf32>
    %237 = arith.addf %230, %236 : vector<8x304xf32>
    %238 = vector.extract_strided_slice %192 {offsets = [0, 7], sizes = [8, 1], strides = [1, 1]} : vector<8x9xf32> to vector<8x1xf32>
    %c0_105 = arith.constant 0 : index
    %c144_106 = arith.constant 144 : index
    %239 = vector.load %arg6[%c0_105, %c144_106] : memref<32x560xf32, #tpu.memory_space<vmem>>, vector<8x304xf32>
    %240 = vector.broadcast %238 : vector<8x1xf32> to vector<8x304xf32>
    %241 = arith.mulf %240, %239 : vector<8x304xf32>
    %242 = arith.addf %237, %241 : vector<8x304xf32>
    %243 = vector.extract_strided_slice %192 {offsets = [0, 8], sizes = [8, 1], strides = [1, 1]} : vector<8x9xf32> to vector<8x1xf32>
    %244 = vector.broadcast %243 : vector<8x1xf32> to vector<8x304xf32>
    %245 = vector.broadcast %6 : vector<1x304xf32> to vector<8x304xf32>
    %246 = arith.mulf %244, %245 : vector<8x304xf32>
    %c0_107 = arith.constant 0 : index
    %c145_108 = arith.constant 145 : index
    %247 = vector.load %arg6[%c0_107, %c145_108] : memref<32x560xf32, #tpu.memory_space<vmem>>, vector<8x304xf32>
    %248 = arith.mulf %246, %247 : vector<8x304xf32>
    %249 = arith.addf %242, %248 : vector<8x304xf32>
    %c88 = arith.constant 88 : index
    %c0_109 = arith.constant 0 : index
    %250 = vector.load %arg2[%c88, %c0_109] : memref<512x32xf32, #tpu.memory_space<vmem>>, vector<16x8xf32>
    %c104 = arith.constant 104 : index
    %c0_110 = arith.constant 0 : index
    %251 = vector.load %arg2[%c104, %c0_110] : memref<512x32xf32, #tpu.memory_space<vmem>>, vector<16x1xf32>
    %cst_111 = arith.constant dense<0.000000e+00> : vector<16x304xf32>
    %252 = tpu.matmul %250, %249, %cst_111 {dimension_numbers = #tpu.dot_dimension_numbers<[1], [0], [0], [1], [0, 0, 1, 1], [], []>} : vector<16x8xf32>, vector<8x304xf32>, vector<16x304xf32> -> vector<16x304xf32>
    %253 = vector.broadcast %251 : vector<16x1xf32> to vector<16x304xf32>
    %254 = arith.addf %252, %253 : vector<16x304xf32>
    %cst_112 = arith.constant 2.000000e-01 : f32
    %255 = vector.broadcast %cst_112 : f32 to vector<16x304xf32>
    %256 = arith.mulf %255, %254 : vector<16x304xf32>
    %257 = arith.maximumf %254, %256 : vector<16x304xf32>
    %c120 = arith.constant 120 : index
    %c0_113 = arith.constant 0 : index
    %258 = vector.load %arg2[%c120, %c0_113] : memref<512x32xf32, #tpu.memory_space<vmem>>, vector<16x9xf32>
    %c0_114 = arith.constant 0 : index
    %c128_115 = arith.constant 128 : index
    %259 = vector.load %arg6[%c0_114, %c128_115] : memref<32x560xf32, #tpu.memory_space<vmem>>, vector<16x304xf32>
    tpu.vector_store %arg6[%c0_114, %c128_115], %257 {strides = array<i32>} : memref<32x560xf32, #tpu.memory_space<vmem>>, vector<16x304xf32>,
    %260 = vector.extract_strided_slice %258 {offsets = [0, 0], sizes = [16, 1], strides = [1, 1]} : vector<16x9xf32> to vector<16x1xf32>
    %261 = vector.broadcast %260 : vector<16x1xf32> to vector<16x304xf32>
    %262 = vector.broadcast %5 : vector<1x304xf32> to vector<16x304xf32>
    %263 = arith.mulf %261, %262 : vector<16x304xf32>
    %c0_116 = arith.constant 0 : index
    %c111_117 = arith.constant 111 : index
    %264 = vector.load %arg6[%c0_116, %c111_117] : memref<32x560xf32, #tpu.memory_space<vmem>>, vector<16x304xf32>
    %265 = arith.mulf %263, %264 : vector<16x304xf32>
    %266 = vector.extract_strided_slice %258 {offsets = [0, 1], sizes = [16, 1], strides = [1, 1]} : vector<16x9xf32> to vector<16x1xf32>
    %c0_118 = arith.constant 0 : index
    %c112_119 = arith.constant 112 : index
    %267 = vector.load %arg6[%c0_118, %c112_119] : memref<32x560xf32, #tpu.memory_space<vmem>>, vector<16x304xf32>
    %268 = vector.broadcast %266 : vector<16x1xf32> to vector<16x304xf32>
    %269 = arith.mulf %268, %267 : vector<16x304xf32>
    %270 = arith.addf %265, %269 : vector<16x304xf32>
    %271 = vector.extract_strided_slice %258 {offsets = [0, 2], sizes = [16, 1], strides = [1, 1]} : vector<16x9xf32> to vector<16x1xf32>
    %272 = vector.broadcast %271 : vector<16x1xf32> to vector<16x304xf32>
    %273 = vector.broadcast %6 : vector<1x304xf32> to vector<16x304xf32>
    %274 = arith.mulf %272, %273 : vector<16x304xf32>
    %c0_120 = arith.constant 0 : index
    %c113_121 = arith.constant 113 : index
    %275 = vector.load %arg6[%c0_120, %c113_121] : memref<32x560xf32, #tpu.memory_space<vmem>>, vector<16x304xf32>
    %276 = arith.mulf %274, %275 : vector<16x304xf32>
    %277 = arith.addf %270, %276 : vector<16x304xf32>
    %278 = vector.extract_strided_slice %258 {offsets = [0, 3], sizes = [16, 1], strides = [1, 1]} : vector<16x9xf32> to vector<16x1xf32>
    %279 = vector.broadcast %278 : vector<16x1xf32> to vector<16x304xf32>
    %280 = vector.broadcast %5 : vector<1x304xf32> to vector<16x304xf32>
    %281 = arith.mulf %279, %280 : vector<16x304xf32>
    %c0_122 = arith.constant 0 : index
    %c127_123 = arith.constant 127 : index
    %282 = vector.load %arg6[%c0_122, %c127_123] : memref<32x560xf32, #tpu.memory_space<vmem>>, vector<16x304xf32>
    %283 = arith.mulf %281, %282 : vector<16x304xf32>
    %284 = arith.addf %277, %283 : vector<16x304xf32>
    %285 = vector.extract_strided_slice %258 {offsets = [0, 4], sizes = [16, 1], strides = [1, 1]} : vector<16x9xf32> to vector<16x1xf32>
    %c0_124 = arith.constant 0 : index
    %c128_125 = arith.constant 128 : index
    %286 = vector.load %arg6[%c0_124, %c128_125] : memref<32x560xf32, #tpu.memory_space<vmem>>, vector<16x304xf32>
    %287 = vector.broadcast %285 : vector<16x1xf32> to vector<16x304xf32>
    %288 = arith.mulf %287, %286 : vector<16x304xf32>
    %289 = arith.addf %284, %288 : vector<16x304xf32>
    %290 = vector.extract_strided_slice %258 {offsets = [0, 5], sizes = [16, 1], strides = [1, 1]} : vector<16x9xf32> to vector<16x1xf32>
    %291 = vector.broadcast %290 : vector<16x1xf32> to vector<16x304xf32>
    %292 = vector.broadcast %6 : vector<1x304xf32> to vector<16x304xf32>
    %293 = arith.mulf %291, %292 : vector<16x304xf32>
    %c0_126 = arith.constant 0 : index
    %c129_127 = arith.constant 129 : index
    %294 = vector.load %arg6[%c0_126, %c129_127] : memref<32x560xf32, #tpu.memory_space<vmem>>, vector<16x304xf32>
    %295 = arith.mulf %293, %294 : vector<16x304xf32>
    %296 = arith.addf %289, %295 : vector<16x304xf32>
    %297 = vector.extract_strided_slice %258 {offsets = [0, 6], sizes = [16, 1], strides = [1, 1]} : vector<16x9xf32> to vector<16x1xf32>
    %298 = vector.broadcast %297 : vector<16x1xf32> to vector<16x304xf32>
    %299 = vector.broadcast %5 : vector<1x304xf32> to vector<16x304xf32>
    %300 = arith.mulf %298, %299 : vector<16x304xf32>
    %c0_128 = arith.constant 0 : index
    %c143_129 = arith.constant 143 : index
    %301 = vector.load %arg6[%c0_128, %c143_129] : memref<32x560xf32, #tpu.memory_space<vmem>>, vector<16x304xf32>
    %302 = arith.mulf %300, %301 : vector<16x304xf32>
    %303 = arith.addf %296, %302 : vector<16x304xf32>
    %304 = vector.extract_strided_slice %258 {offsets = [0, 7], sizes = [16, 1], strides = [1, 1]} : vector<16x9xf32> to vector<16x1xf32>
    %c0_130 = arith.constant 0 : index
    %c144_131 = arith.constant 144 : index
    %305 = vector.load %arg6[%c0_130, %c144_131] : memref<32x560xf32, #tpu.memory_space<vmem>>, vector<16x304xf32>
    %306 = vector.broadcast %304 : vector<16x1xf32> to vector<16x304xf32>
    %307 = arith.mulf %306, %305 : vector<16x304xf32>
    %308 = arith.addf %303, %307 : vector<16x304xf32>
    %309 = vector.extract_strided_slice %258 {offsets = [0, 8], sizes = [16, 1], strides = [1, 1]} : vector<16x9xf32> to vector<16x1xf32>
    %310 = vector.broadcast %309 : vector<16x1xf32> to vector<16x304xf32>
    %311 = vector.broadcast %6 : vector<1x304xf32> to vector<16x304xf32>
    %312 = arith.mulf %310, %311 : vector<16x304xf32>
    %c0_132 = arith.constant 0 : index
    %c145_133 = arith.constant 145 : index
    %313 = vector.load %arg6[%c0_132, %c145_133] : memref<32x560xf32, #tpu.memory_space<vmem>>, vector<16x304xf32>
    %314 = arith.mulf %312, %313 : vector<16x304xf32>
    %315 = arith.addf %308, %314 : vector<16x304xf32>
    %c136_134 = arith.constant 136 : index
    %c0_135 = arith.constant 0 : index
    %316 = vector.load %arg2[%c136_134, %c0_135] : memref<512x32xf32, #tpu.memory_space<vmem>>, vector<16x16xf32>
    %c152 = arith.constant 152 : index
    %c0_136 = arith.constant 0 : index
    %317 = vector.load %arg2[%c152, %c0_136] : memref<512x32xf32, #tpu.memory_space<vmem>>, vector<16x1xf32>
    %cst_137 = arith.constant dense<0.000000e+00> : vector<16x304xf32>
    %318 = tpu.matmul %316, %315, %cst_137 {dimension_numbers = #tpu.dot_dimension_numbers<[1], [0], [0], [1], [0, 0, 1, 1], [], []>} : vector<16x16xf32>, vector<16x304xf32>, vector<16x304xf32> -> vector<16x304xf32>
    %319 = vector.broadcast %317 : vector<16x1xf32> to vector<16x304xf32>
    %320 = arith.addf %318, %319 : vector<16x304xf32>
    %cst_138 = arith.constant 2.000000e-01 : f32
    %321 = vector.broadcast %cst_138 : f32 to vector<16x304xf32>
    %322 = arith.mulf %321, %320 : vector<16x304xf32>
    %323 = arith.maximumf %320, %322 : vector<16x304xf32>
    %c168 = arith.constant 168 : index
    %c0_139 = arith.constant 0 : index
    %324 = vector.load %arg2[%c168, %c0_139] : memref<512x32xf32, #tpu.memory_space<vmem>>, vector<16x8xf32>
    %c184 = arith.constant 184 : index
    %c0_140 = arith.constant 0 : index
    %325 = vector.load %arg2[%c184, %c0_140] : memref<512x32xf32, #tpu.memory_space<vmem>>, vector<16x1xf32>
    %cst_141 = arith.constant dense<0.000000e+00> : vector<16x304xf32>
    %326 = tpu.matmul %324, %191, %cst_141 {dimension_numbers = #tpu.dot_dimension_numbers<[1], [0], [0], [1], [0, 0, 1, 1], [], []>} : vector<16x8xf32>, vector<8x304xf32>, vector<16x304xf32> -> vector<16x304xf32>
    %327 = vector.broadcast %325 : vector<16x1xf32> to vector<16x304xf32>
    %328 = arith.addf %326, %327 : vector<16x304xf32>
    %329 = arith.addf %323, %328 : vector<16x304xf32>
    %c200 = arith.constant 200 : index
    %c0_142 = arith.constant 0 : index
    %330 = vector.load %arg2[%c200, %c0_142] : memref<512x32xf32, #tpu.memory_space<vmem>>, vector<8x16xf32>
    %c208 = arith.constant 208 : index
    %c0_143 = arith.constant 0 : index
    %331 = vector.load %arg2[%c208, %c0_143] : memref<512x32xf32, #tpu.memory_space<vmem>>, vector<16x8xf32>
    %cst_144 = arith.constant dense<0.000000e+00> : vector<16x19xf32>
    %332 = tpu.matmul %329, %8, %cst_144 {dimension_numbers = #tpu.dot_dimension_numbers<[1], [0], [0], [1], [0, 0, 1, 1], [], []>} : vector<16x304xf32>, vector<304x19xf32>, vector<16x19xf32> -> vector<16x19xf32>
    %c0_145 = arith.constant 0 : index
    %c128_146 = arith.constant 128 : index
    %333 = vector.load %arg6[%c0_145, %c128_146] : memref<32x560xf32, #tpu.memory_space<vmem>>, vector<16x304xf32>
    tpu.vector_store %arg6[%c0_145, %c128_146], %329 {strides = array<i32>} : memref<32x560xf32, #tpu.memory_space<vmem>>, vector<16x304xf32>,
    %c0_147 = arith.constant 0 : index
    %c129_148 = arith.constant 129 : index
    %334 = vector.load %arg6[%c0_147, %c129_148] : memref<32x560xf32, #tpu.memory_space<vmem>>, vector<16x304xf32>
    %335 = arith.maximumf %329, %334 : vector<16x304xf32>
    %c0_149 = arith.constant 0 : index
    %c128_150 = arith.constant 128 : index
    %336 = vector.load %arg6[%c0_149, %c128_150] : memref<32x560xf32, #tpu.memory_space<vmem>>, vector<16x304xf32>
    tpu.vector_store %arg6[%c0_149, %c128_150], %335 {strides = array<i32>} : memref<32x560xf32, #tpu.memory_space<vmem>>, vector<16x304xf32>,
    %c0_151 = arith.constant 0 : index
    %c130_152 = arith.constant 130 : index
    %337 = vector.load %arg6[%c0_151, %c130_152] : memref<32x560xf32, #tpu.memory_space<vmem>>, vector<16x304xf32>
    %338 = arith.maximumf %335, %337 : vector<16x304xf32>
    %c0_153 = arith.constant 0 : index
    %c128_154 = arith.constant 128 : index
    %339 = vector.load %arg6[%c0_153, %c128_154] : memref<32x560xf32, #tpu.memory_space<vmem>>, vector<16x304xf32>
    tpu.vector_store %arg6[%c0_153, %c128_154], %338 {strides = array<i32>} : memref<32x560xf32, #tpu.memory_space<vmem>>, vector<16x304xf32>,
    %c0_155 = arith.constant 0 : index
    %c132_156 = arith.constant 132 : index
    %340 = vector.load %arg6[%c0_155, %c132_156] : memref<32x560xf32, #tpu.memory_space<vmem>>, vector<16x304xf32>
    %341 = arith.maximumf %338, %340 : vector<16x304xf32>
    %c0_157 = arith.constant 0 : index
    %c128_158 = arith.constant 128 : index
    %342 = vector.load %arg6[%c0_157, %c128_158] : memref<32x560xf32, #tpu.memory_space<vmem>>, vector<16x304xf32>
    tpu.vector_store %arg6[%c0_157, %c128_158], %341 {strides = array<i32>} : memref<32x560xf32, #tpu.memory_space<vmem>>, vector<16x304xf32>,
    %c0_159 = arith.constant 0 : index
    %c136_160 = arith.constant 136 : index
    %343 = vector.load %arg6[%c0_159, %c136_160] : memref<32x560xf32, #tpu.memory_space<vmem>>, vector<16x304xf32>
    %344 = arith.maximumf %341, %343 : vector<16x304xf32>
    %cst_161 = arith.constant dense<0.000000e+00> : vector<16x19xf32>
    %345 = tpu.matmul %344, %10, %cst_161 {dimension_numbers = #tpu.dot_dimension_numbers<[1], [0], [0], [1], [0, 0, 1, 1], [], []>} : vector<16x304xf32>, vector<304x19xf32>, vector<16x19xf32> -> vector<16x19xf32>
    %cst_162 = arith.constant dense<0.000000e+00> : vector<8x19xf32>
    %346 = tpu.matmul %330, %332, %cst_162 {dimension_numbers = #tpu.dot_dimension_numbers<[1], [0], [0], [1], [0, 0, 1, 1], [], []>} : vector<8x16xf32>, vector<16x19xf32>, vector<8x19xf32> -> vector<8x19xf32>
    %cst_163 = arith.constant 0.000000e+00 : f32
    %347 = vector.broadcast %cst_163 : f32 to vector<8x19xf32>
    %348 = arith.maximumf %346, %347 : vector<8x19xf32>
    %cst_164 = arith.constant dense<0.000000e+00> : vector<16x19xf32>
    %349 = tpu.matmul %331, %348, %cst_164 {dimension_numbers = #tpu.dot_dimension_numbers<[1], [0], [0], [1], [0, 0, 1, 1], [], []>} : vector<16x8xf32>, vector<8x19xf32>, vector<16x19xf32> -> vector<16x19xf32>
    %cst_165 = arith.constant dense<0.000000e+00> : vector<8x19xf32>
    %350 = tpu.matmul %330, %345, %cst_165 {dimension_numbers = #tpu.dot_dimension_numbers<[1], [0], [0], [1], [0, 0, 1, 1], [], []>} : vector<8x16xf32>, vector<16x19xf32>, vector<8x19xf32> -> vector<8x19xf32>
    %cst_166 = arith.constant 0.000000e+00 : f32
    %351 = vector.broadcast %cst_166 : f32 to vector<8x19xf32>
    %352 = arith.maximumf %350, %351 : vector<8x19xf32>
    %cst_167 = arith.constant dense<0.000000e+00> : vector<16x19xf32>
    %353 = tpu.matmul %331, %352, %cst_167 {dimension_numbers = #tpu.dot_dimension_numbers<[1], [0], [0], [1], [0, 0, 1, 1], [], []>} : vector<16x8xf32>, vector<8x19xf32>, vector<16x19xf32> -> vector<16x19xf32>
    %354 = arith.addf %349, %353 : vector<16x19xf32>
    %cst_168 = arith.constant 0.000000e+00 : f32
    %355 = vector.broadcast %cst_168 : f32 to vector<16x19xf32>
    %356 = arith.subf %355, %354 : vector<16x19xf32>
    %357 = math.exp %356 : vector<16x19xf32>
    %cst_169 = arith.constant 1.000000e+00 : f32
    %358 = vector.broadcast %cst_169 : f32 to vector<16x19xf32>
    %359 = arith.addf %358, %357 : vector<16x19xf32>
    %cst_170 = arith.constant 1.000000e+00 : f32
    %360 = vector.broadcast %cst_170 : f32 to vector<16x19xf32>
    %361 = arith.divf %360, %359 : vector<16x19xf32>
    %cst_171 = arith.constant dense<0.000000e+00> : vector<19xf32>
    %362 = vector.multi_reduction <add>, %361, %cst_171 [0] : vector<16x19xf32> to vector<19xf32>
    %363 = vector.shape_cast %362 : vector<19xf32> to vector<1x19xf32>
    %cst_172 = arith.constant 1.600000e+01 : f32
    %364 = vector.broadcast %cst_172 : f32 to vector<1x19xf32>
    %365 = arith.divf %363, %364 : vector<1x19xf32>
    %366 = vector.shape_cast %365 : vector<1x19xf32> to vector<1x19xf32>
    %367 = vector.broadcast %366 : vector<1x19xf32> to vector<16x19xf32>
    %cst_173 = arith.constant dense<0.000000e+00> : vector<16x304xf32>
    %368 = tpu.matmul %367, %4, %cst_173 {dimension_numbers = #tpu.dot_dimension_numbers<[1], [0], [0], [1], [0, 0, 1, 1], [], []>} : vector<16x19xf32>, vector<19x304xf32>, vector<16x304xf32> -> vector<16x304xf32>
    %369 = arith.mulf %329, %368 : vector<16x304xf32>
    %cst_174 = arith.constant 2.000000e-01 : f32
    %370 = vector.broadcast %cst_174 : f32 to vector<16x304xf32>
    %371 = arith.mulf %370, %369 : vector<16x304xf32>
    %372 = arith.maximumf %369, %371 : vector<16x304xf32>
    %c224 = arith.constant 224 : index
    %c0_175 = arith.constant 0 : index
    %373 = vector.load %arg2[%c224, %c0_175] : memref<512x32xf32, #tpu.memory_space<vmem>>, vector<16x9xf32>
    %c0_176 = arith.constant 0 : index
    %c128_177 = arith.constant 128 : index
    %374 = vector.load %arg6[%c0_176, %c128_177] : memref<32x560xf32, #tpu.memory_space<vmem>>, vector<16x304xf32>
    tpu.vector_store %arg6[%c0_176, %c128_177], %372 {strides = array<i32>} : memref<32x560xf32, #tpu.memory_space<vmem>>, vector<16x304xf32>,
    %375 = vector.extract_strided_slice %373 {offsets = [0, 0], sizes = [16, 1], strides = [1, 1]} : vector<16x9xf32> to vector<16x1xf32>
    %376 = vector.broadcast %375 : vector<16x1xf32> to vector<16x304xf32>
    %377 = vector.broadcast %5 : vector<1x304xf32> to vector<16x304xf32>
    %378 = arith.mulf %376, %377 : vector<16x304xf32>
    %c0_178 = arith.constant 0 : index
    %c111_179 = arith.constant 111 : index
    %379 = vector.load %arg6[%c0_178, %c111_179] : memref<32x560xf32, #tpu.memory_space<vmem>>, vector<16x304xf32>
    %380 = arith.mulf %378, %379 : vector<16x304xf32>
    %381 = vector.extract_strided_slice %373 {offsets = [0, 1], sizes = [16, 1], strides = [1, 1]} : vector<16x9xf32> to vector<16x1xf32>
    %c0_180 = arith.constant 0 : index
    %c112_181 = arith.constant 112 : index
    %382 = vector.load %arg6[%c0_180, %c112_181] : memref<32x560xf32, #tpu.memory_space<vmem>>, vector<16x304xf32>
    %383 = vector.broadcast %381 : vector<16x1xf32> to vector<16x304xf32>
    %384 = arith.mulf %383, %382 : vector<16x304xf32>
    %385 = arith.addf %380, %384 : vector<16x304xf32>
    %386 = vector.extract_strided_slice %373 {offsets = [0, 2], sizes = [16, 1], strides = [1, 1]} : vector<16x9xf32> to vector<16x1xf32>
    %387 = vector.broadcast %386 : vector<16x1xf32> to vector<16x304xf32>
    %388 = vector.broadcast %6 : vector<1x304xf32> to vector<16x304xf32>
    %389 = arith.mulf %387, %388 : vector<16x304xf32>
    %c0_182 = arith.constant 0 : index
    %c113_183 = arith.constant 113 : index
    %390 = vector.load %arg6[%c0_182, %c113_183] : memref<32x560xf32, #tpu.memory_space<vmem>>, vector<16x304xf32>
    %391 = arith.mulf %389, %390 : vector<16x304xf32>
    %392 = arith.addf %385, %391 : vector<16x304xf32>
    %393 = vector.extract_strided_slice %373 {offsets = [0, 3], sizes = [16, 1], strides = [1, 1]} : vector<16x9xf32> to vector<16x1xf32>
    %394 = vector.broadcast %393 : vector<16x1xf32> to vector<16x304xf32>
    %395 = vector.broadcast %5 : vector<1x304xf32> to vector<16x304xf32>
    %396 = arith.mulf %394, %395 : vector<16x304xf32>
    %c0_184 = arith.constant 0 : index
    %c127_185 = arith.constant 127 : index
    %397 = vector.load %arg6[%c0_184, %c127_185] : memref<32x560xf32, #tpu.memory_space<vmem>>, vector<16x304xf32>
    %398 = arith.mulf %396, %397 : vector<16x304xf32>
    %399 = arith.addf %392, %398 : vector<16x304xf32>
    %400 = vector.extract_strided_slice %373 {offsets = [0, 4], sizes = [16, 1], strides = [1, 1]} : vector<16x9xf32> to vector<16x1xf32>
    %c0_186 = arith.constant 0 : index
    %c128_187 = arith.constant 128 : index
    %401 = vector.load %arg6[%c0_186, %c128_187] : memref<32x560xf32, #tpu.memory_space<vmem>>, vector<16x304xf32>
    %402 = vector.broadcast %400 : vector<16x1xf32> to vector<16x304xf32>
    %403 = arith.mulf %402, %401 : vector<16x304xf32>
    %404 = arith.addf %399, %403 : vector<16x304xf32>
    %405 = vector.extract_strided_slice %373 {offsets = [0, 5], sizes = [16, 1], strides = [1, 1]} : vector<16x9xf32> to vector<16x1xf32>
    %406 = vector.broadcast %405 : vector<16x1xf32> to vector<16x304xf32>
    %407 = vector.broadcast %6 : vector<1x304xf32> to vector<16x304xf32>
    %408 = arith.mulf %406, %407 : vector<16x304xf32>
    %c0_188 = arith.constant 0 : index
    %c129_189 = arith.constant 129 : index
    %409 = vector.load %arg6[%c0_188, %c129_189] : memref<32x560xf32, #tpu.memory_space<vmem>>, vector<16x304xf32>
    %410 = arith.mulf %408, %409 : vector<16x304xf32>
    %411 = arith.addf %404, %410 : vector<16x304xf32>
    %412 = vector.extract_strided_slice %373 {offsets = [0, 6], sizes = [16, 1], strides = [1, 1]} : vector<16x9xf32> to vector<16x1xf32>
    %413 = vector.broadcast %412 : vector<16x1xf32> to vector<16x304xf32>
    %414 = vector.broadcast %5 : vector<1x304xf32> to vector<16x304xf32>
    %415 = arith.mulf %413, %414 : vector<16x304xf32>
    %c0_190 = arith.constant 0 : index
    %c143_191 = arith.constant 143 : index
    %416 = vector.load %arg6[%c0_190, %c143_191] : memref<32x560xf32, #tpu.memory_space<vmem>>, vector<16x304xf32>
    %417 = arith.mulf %415, %416 : vector<16x304xf32>
    %418 = arith.addf %411, %417 : vector<16x304xf32>
    %419 = vector.extract_strided_slice %373 {offsets = [0, 7], sizes = [16, 1], strides = [1, 1]} : vector<16x9xf32> to vector<16x1xf32>
    %c0_192 = arith.constant 0 : index
    %c144_193 = arith.constant 144 : index
    %420 = vector.load %arg6[%c0_192, %c144_193] : memref<32x560xf32, #tpu.memory_space<vmem>>, vector<16x304xf32>
    %421 = vector.broadcast %419 : vector<16x1xf32> to vector<16x304xf32>
    %422 = arith.mulf %421, %420 : vector<16x304xf32>
    %423 = arith.addf %418, %422 : vector<16x304xf32>
    %424 = vector.extract_strided_slice %373 {offsets = [0, 8], sizes = [16, 1], strides = [1, 1]} : vector<16x9xf32> to vector<16x1xf32>
    %425 = vector.broadcast %424 : vector<16x1xf32> to vector<16x304xf32>
    %426 = vector.broadcast %6 : vector<1x304xf32> to vector<16x304xf32>
    %427 = arith.mulf %425, %426 : vector<16x304xf32>
    %c0_194 = arith.constant 0 : index
    %c145_195 = arith.constant 145 : index
    %428 = vector.load %arg6[%c0_194, %c145_195] : memref<32x560xf32, #tpu.memory_space<vmem>>, vector<16x304xf32>
    %429 = arith.mulf %427, %428 : vector<16x304xf32>
    %430 = arith.addf %423, %429 : vector<16x304xf32>
    %c240 = arith.constant 240 : index
    %c0_196 = arith.constant 0 : index
    %431 = vector.load %arg2[%c240, %c0_196] : memref<512x32xf32, #tpu.memory_space<vmem>>, vector<32x16xf32>
    %c272 = arith.constant 272 : index
    %c0_197 = arith.constant 0 : index
    %432 = vector.load %arg2[%c272, %c0_197] : memref<512x32xf32, #tpu.memory_space<vmem>>, vector<32x1xf32>
    %cst_198 = arith.constant dense<0.000000e+00> : vector<32x304xf32>
    %433 = tpu.matmul %431, %430, %cst_198 {dimension_numbers = #tpu.dot_dimension_numbers<[1], [0], [0], [1], [0, 0, 1, 1], [], []>} : vector<32x16xf32>, vector<16x304xf32>, vector<32x304xf32> -> vector<32x304xf32>
    %434 = vector.broadcast %432 : vector<32x1xf32> to vector<32x304xf32>
    %435 = arith.addf %433, %434 : vector<32x304xf32>
    %cst_199 = arith.constant 2.000000e-01 : f32
    %436 = vector.broadcast %cst_199 : f32 to vector<32x304xf32>
    %437 = arith.mulf %436, %435 : vector<32x304xf32>
    %438 = arith.maximumf %435, %437 : vector<32x304xf32>
    %c304 = arith.constant 304 : index
    %c0_200 = arith.constant 0 : index
    %439 = vector.load %arg2[%c304, %c0_200] : memref<512x32xf32, #tpu.memory_space<vmem>>, vector<32x9xf32>
    %c0_201 = arith.constant 0 : index
    %c128_202 = arith.constant 128 : index
    %440 = vector.load %arg6[%c0_201, %c128_202] : memref<32x560xf32, #tpu.memory_space<vmem>>, vector<32x304xf32>
    tpu.vector_store %arg6[%c0_201, %c128_202], %438 {strides = array<i32>} : memref<32x560xf32, #tpu.memory_space<vmem>>, vector<32x304xf32>,
    %441 = vector.extract_strided_slice %439 {offsets = [0, 0], sizes = [32, 1], strides = [1, 1]} : vector<32x9xf32> to vector<32x1xf32>
    %442 = vector.broadcast %441 : vector<32x1xf32> to vector<32x304xf32>
    %443 = vector.broadcast %5 : vector<1x304xf32> to vector<32x304xf32>
    %444 = arith.mulf %442, %443 : vector<32x304xf32>
    %c0_203 = arith.constant 0 : index
    %c111_204 = arith.constant 111 : index
    %445 = vector.load %arg6[%c0_203, %c111_204] : memref<32x560xf32, #tpu.memory_space<vmem>>, vector<32x304xf32>
    %446 = arith.mulf %444, %445 : vector<32x304xf32>
    %447 = vector.extract_strided_slice %439 {offsets = [0, 1], sizes = [32, 1], strides = [1, 1]} : vector<32x9xf32> to vector<32x1xf32>
    %c0_205 = arith.constant 0 : index
    %c112_206 = arith.constant 112 : index
    %448 = vector.load %arg6[%c0_205, %c112_206] : memref<32x560xf32, #tpu.memory_space<vmem>>, vector<32x304xf32>
    %449 = vector.broadcast %447 : vector<32x1xf32> to vector<32x304xf32>
    %450 = arith.mulf %449, %448 : vector<32x304xf32>
    %451 = arith.addf %446, %450 : vector<32x304xf32>
    %452 = vector.extract_strided_slice %439 {offsets = [0, 2], sizes = [32, 1], strides = [1, 1]} : vector<32x9xf32> to vector<32x1xf32>
    %453 = vector.broadcast %452 : vector<32x1xf32> to vector<32x304xf32>
    %454 = vector.broadcast %6 : vector<1x304xf32> to vector<32x304xf32>
    %455 = arith.mulf %453, %454 : vector<32x304xf32>
    %c0_207 = arith.constant 0 : index
    %c113_208 = arith.constant 113 : index
    %456 = vector.load %arg6[%c0_207, %c113_208] : memref<32x560xf32, #tpu.memory_space<vmem>>, vector<32x304xf32>
    %457 = arith.mulf %455, %456 : vector<32x304xf32>
    %458 = arith.addf %451, %457 : vector<32x304xf32>
    %459 = vector.extract_strided_slice %439 {offsets = [0, 3], sizes = [32, 1], strides = [1, 1]} : vector<32x9xf32> to vector<32x1xf32>
    %460 = vector.broadcast %459 : vector<32x1xf32> to vector<32x304xf32>
    %461 = vector.broadcast %5 : vector<1x304xf32> to vector<32x304xf32>
    %462 = arith.mulf %460, %461 : vector<32x304xf32>
    %c0_209 = arith.constant 0 : index
    %c127_210 = arith.constant 127 : index
    %463 = vector.load %arg6[%c0_209, %c127_210] : memref<32x560xf32, #tpu.memory_space<vmem>>, vector<32x304xf32>
    %464 = arith.mulf %462, %463 : vector<32x304xf32>
    %465 = arith.addf %458, %464 : vector<32x304xf32>
    %466 = vector.extract_strided_slice %439 {offsets = [0, 4], sizes = [32, 1], strides = [1, 1]} : vector<32x9xf32> to vector<32x1xf32>
    %c0_211 = arith.constant 0 : index
    %c128_212 = arith.constant 128 : index
    %467 = vector.load %arg6[%c0_211, %c128_212] : memref<32x560xf32, #tpu.memory_space<vmem>>, vector<32x304xf32>
    %468 = vector.broadcast %466 : vector<32x1xf32> to vector<32x304xf32>
    %469 = arith.mulf %468, %467 : vector<32x304xf32>
    %470 = arith.addf %465, %469 : vector<32x304xf32>
    %471 = vector.extract_strided_slice %439 {offsets = [0, 5], sizes = [32, 1], strides = [1, 1]} : vector<32x9xf32> to vector<32x1xf32>
    %472 = vector.broadcast %471 : vector<32x1xf32> to vector<32x304xf32>
    %473 = vector.broadcast %6 : vector<1x304xf32> to vector<32x304xf32>
    %474 = arith.mulf %472, %473 : vector<32x304xf32>
    %c0_213 = arith.constant 0 : index
    %c129_214 = arith.constant 129 : index
    %475 = vector.load %arg6[%c0_213, %c129_214] : memref<32x560xf32, #tpu.memory_space<vmem>>, vector<32x304xf32>
    %476 = arith.mulf %474, %475 : vector<32x304xf32>
    %477 = arith.addf %470, %476 : vector<32x304xf32>
    %478 = vector.extract_strided_slice %439 {offsets = [0, 6], sizes = [32, 1], strides = [1, 1]} : vector<32x9xf32> to vector<32x1xf32>
    %479 = vector.broadcast %478 : vector<32x1xf32> to vector<32x304xf32>
    %480 = vector.broadcast %5 : vector<1x304xf32> to vector<32x304xf32>
    %481 = arith.mulf %479, %480 : vector<32x304xf32>
    %c0_215 = arith.constant 0 : index
    %c143_216 = arith.constant 143 : index
    %482 = vector.load %arg6[%c0_215, %c143_216] : memref<32x560xf32, #tpu.memory_space<vmem>>, vector<32x304xf32>
    %483 = arith.mulf %481, %482 : vector<32x304xf32>
    %484 = arith.addf %477, %483 : vector<32x304xf32>
    %485 = vector.extract_strided_slice %439 {offsets = [0, 7], sizes = [32, 1], strides = [1, 1]} : vector<32x9xf32> to vector<32x1xf32>
    %c0_217 = arith.constant 0 : index
    %c144_218 = arith.constant 144 : index
    %486 = vector.load %arg6[%c0_217, %c144_218] : memref<32x560xf32, #tpu.memory_space<vmem>>, vector<32x304xf32>
    %487 = vector.broadcast %485 : vector<32x1xf32> to vector<32x304xf32>
    %488 = arith.mulf %487, %486 : vector<32x304xf32>
    %489 = arith.addf %484, %488 : vector<32x304xf32>
    %490 = vector.extract_strided_slice %439 {offsets = [0, 8], sizes = [32, 1], strides = [1, 1]} : vector<32x9xf32> to vector<32x1xf32>
    %491 = vector.broadcast %490 : vector<32x1xf32> to vector<32x304xf32>
    %492 = vector.broadcast %6 : vector<1x304xf32> to vector<32x304xf32>
    %493 = arith.mulf %491, %492 : vector<32x304xf32>
    %c0_219 = arith.constant 0 : index
    %c145_220 = arith.constant 145 : index
    %494 = vector.load %arg6[%c0_219, %c145_220] : memref<32x560xf32, #tpu.memory_space<vmem>>, vector<32x304xf32>
    %495 = arith.mulf %493, %494 : vector<32x304xf32>
    %496 = arith.addf %489, %495 : vector<32x304xf32>
    %c336 = arith.constant 336 : index
    %c0_221 = arith.constant 0 : index
    %497 = vector.load %arg2[%c336, %c0_221] : memref<512x32xf32, #tpu.memory_space<vmem>>, vector<32x32xf32>
    %c368 = arith.constant 368 : index
    %c0_222 = arith.constant 0 : index
    %498 = vector.load %arg2[%c368, %c0_222] : memref<512x32xf32, #tpu.memory_space<vmem>>, vector<32x1xf32>
    %cst_223 = arith.constant dense<0.000000e+00> : vector<32x304xf32>
    %499 = tpu.matmul %497, %496, %cst_223 {dimension_numbers = #tpu.dot_dimension_numbers<[1], [0], [0], [1], [0, 0, 1, 1], [], []>} : vector<32x32xf32>, vector<32x304xf32>, vector<32x304xf32> -> vector<32x304xf32>
    %500 = vector.broadcast %498 : vector<32x1xf32> to vector<32x304xf32>
    %501 = arith.addf %499, %500 : vector<32x304xf32>
    %cst_224 = arith.constant 2.000000e-01 : f32
    %502 = vector.broadcast %cst_224 : f32 to vector<32x304xf32>
    %503 = arith.mulf %502, %501 : vector<32x304xf32>
    %504 = arith.maximumf %501, %503 : vector<32x304xf32>
    %c400 = arith.constant 400 : index
    %c0_225 = arith.constant 0 : index
    %505 = vector.load %arg2[%c400, %c0_225] : memref<512x32xf32, #tpu.memory_space<vmem>>, vector<32x16xf32>
    %c432_226 = arith.constant 432 : index
    %c0_227 = arith.constant 0 : index
    %506 = vector.load %arg2[%c432_226, %c0_227] : memref<512x32xf32, #tpu.memory_space<vmem>>, vector<32x1xf32>
    %cst_228 = arith.constant dense<0.000000e+00> : vector<32x304xf32>
    %507 = tpu.matmul %505, %372, %cst_228 {dimension_numbers = #tpu.dot_dimension_numbers<[1], [0], [0], [1], [0, 0, 1, 1], [], []>} : vector<32x16xf32>, vector<16x304xf32>, vector<32x304xf32> -> vector<32x304xf32>
    %508 = vector.broadcast %506 : vector<32x1xf32> to vector<32x304xf32>
    %509 = arith.addf %507, %508 : vector<32x304xf32>
    %510 = arith.addf %504, %509 : vector<32x304xf32>
    %c464 = arith.constant 464 : index
    %c0_229 = arith.constant 0 : index
    %511 = vector.load %arg2[%c464, %c0_229] : memref<512x32xf32, #tpu.memory_space<vmem>>, vector<16x32xf32>
    %c480 = arith.constant 480 : index
    %c0_230 = arith.constant 0 : index
    %512 = vector.load %arg2[%c480, %c0_230] : memref<512x32xf32, #tpu.memory_space<vmem>>, vector<32x16xf32>
    %cst_231 = arith.constant dense<0.000000e+00> : vector<32x19xf32>
    %513 = tpu.matmul %510, %8, %cst_231 {dimension_numbers = #tpu.dot_dimension_numbers<[1], [0], [0], [1], [0, 0, 1, 1], [], []>} : vector<32x304xf32>, vector<304x19xf32>, vector<32x19xf32> -> vector<32x19xf32>
    %c0_232 = arith.constant 0 : index
    %c128_233 = arith.constant 128 : index
    %514 = vector.load %arg6[%c0_232, %c128_233] : memref<32x560xf32, #tpu.memory_space<vmem>>, vector<32x304xf32>
    tpu.vector_store %arg6[%c0_232, %c128_233], %510 {strides = array<i32>} : memref<32x560xf32, #tpu.memory_space<vmem>>, vector<32x304xf32>,
    %c0_234 = arith.constant 0 : index
    %c129_235 = arith.constant 129 : index
    %515 = vector.load %arg6[%c0_234, %c129_235] : memref<32x560xf32, #tpu.memory_space<vmem>>, vector<32x304xf32>
    %516 = arith.maximumf %510, %515 : vector<32x304xf32>
    %c0_236 = arith.constant 0 : index
    %c128_237 = arith.constant 128 : index
    %517 = vector.load %arg6[%c0_236, %c128_237] : memref<32x560xf32, #tpu.memory_space<vmem>>, vector<32x304xf32>
    tpu.vector_store %arg6[%c0_236, %c128_237], %516 {strides = array<i32>} : memref<32x560xf32, #tpu.memory_space<vmem>>, vector<32x304xf32>,
    %c0_238 = arith.constant 0 : index
    %c130_239 = arith.constant 130 : index
    %518 = vector.load %arg6[%c0_238, %c130_239] : memref<32x560xf32, #tpu.memory_space<vmem>>, vector<32x304xf32>
    %519 = arith.maximumf %516, %518 : vector<32x304xf32>
    %c0_240 = arith.constant 0 : index
    %c128_241 = arith.constant 128 : index
    %520 = vector.load %arg6[%c0_240, %c128_241] : memref<32x560xf32, #tpu.memory_space<vmem>>, vector<32x304xf32>
    tpu.vector_store %arg6[%c0_240, %c128_241], %519 {strides = array<i32>} : memref<32x560xf32, #tpu.memory_space<vmem>>, vector<32x304xf32>,
    %c0_242 = arith.constant 0 : index
    %c132_243 = arith.constant 132 : index
    %521 = vector.load %arg6[%c0_242, %c132_243] : memref<32x560xf32, #tpu.memory_space<vmem>>, vector<32x304xf32>
    %522 = arith.maximumf %519, %521 : vector<32x304xf32>
    %c0_244 = arith.constant 0 : index
    %c128_245 = arith.constant 128 : index
    %523 = vector.load %arg6[%c0_244, %c128_245] : memref<32x560xf32, #tpu.memory_space<vmem>>, vector<32x304xf32>
    tpu.vector_store %arg6[%c0_244, %c128_245], %522 {strides = array<i32>} : memref<32x560xf32, #tpu.memory_space<vmem>>, vector<32x304xf32>,
    %c0_246 = arith.constant 0 : index
    %c136_247 = arith.constant 136 : index
    %524 = vector.load %arg6[%c0_246, %c136_247] : memref<32x560xf32, #tpu.memory_space<vmem>>, vector<32x304xf32>
    %525 = arith.maximumf %522, %524 : vector<32x304xf32>
    %cst_248 = arith.constant dense<0.000000e+00> : vector<32x19xf32>
    %526 = tpu.matmul %525, %10, %cst_248 {dimension_numbers = #tpu.dot_dimension_numbers<[1], [0], [0], [1], [0, 0, 1, 1], [], []>} : vector<32x304xf32>, vector<304x19xf32>, vector<32x19xf32> -> vector<32x19xf32>
    %cst_249 = arith.constant dense<0.000000e+00> : vector<16x19xf32>
    %527 = tpu.matmul %511, %513, %cst_249 {dimension_numbers = #tpu.dot_dimension_numbers<[1], [0], [0], [1], [0, 0, 1, 1], [], []>} : vector<16x32xf32>, vector<32x19xf32>, vector<16x19xf32> -> vector<16x19xf32>
    %cst_250 = arith.constant 0.000000e+00 : f32
    %528 = vector.broadcast %cst_250 : f32 to vector<16x19xf32>
    %529 = arith.maximumf %527, %528 : vector<16x19xf32>
    %cst_251 = arith.constant dense<0.000000e+00> : vector<32x19xf32>
    %530 = tpu.matmul %512, %529, %cst_251 {dimension_numbers = #tpu.dot_dimension_numbers<[1], [0], [0], [1], [0, 0, 1, 1], [], []>} : vector<32x16xf32>, vector<16x19xf32>, vector<32x19xf32> -> vector<32x19xf32>
    %cst_252 = arith.constant dense<0.000000e+00> : vector<16x19xf32>
    %531 = tpu.matmul %511, %526, %cst_252 {dimension_numbers = #tpu.dot_dimension_numbers<[1], [0], [0], [1], [0, 0, 1, 1], [], []>} : vector<16x32xf32>, vector<32x19xf32>, vector<16x19xf32> -> vector<16x19xf32>
    %cst_253 = arith.constant 0.000000e+00 : f32
    %532 = vector.broadcast %cst_253 : f32 to vector<16x19xf32>
    %533 = arith.maximumf %531, %532 : vector<16x19xf32>
    %cst_254 = arith.constant dense<0.000000e+00> : vector<32x19xf32>
    %534 = tpu.matmul %512, %533, %cst_254 {dimension_numbers = #tpu.dot_dimension_numbers<[1], [0], [0], [1], [0, 0, 1, 1], [], []>} : vector<32x16xf32>, vector<16x19xf32>, vector<32x19xf32> -> vector<32x19xf32>
    %535 = arith.addf %530, %534 : vector<32x19xf32>
    %cst_255 = arith.constant 0.000000e+00 : f32
    %536 = vector.broadcast %cst_255 : f32 to vector<32x19xf32>
    %537 = arith.subf %536, %535 : vector<32x19xf32>
    %538 = math.exp %537 : vector<32x19xf32>
    %cst_256 = arith.constant 1.000000e+00 : f32
    %539 = vector.broadcast %cst_256 : f32 to vector<32x19xf32>
    %540 = arith.addf %539, %538 : vector<32x19xf32>
    %cst_257 = arith.constant 1.000000e+00 : f32
    %541 = vector.broadcast %cst_257 : f32 to vector<32x19xf32>
    %542 = arith.divf %541, %540 : vector<32x19xf32>
    %cst_258 = arith.constant dense<0.000000e+00> : vector<19xf32>
    %543 = vector.multi_reduction <add>, %542, %cst_258 [0] : vector<32x19xf32> to vector<19xf32>
    %544 = vector.shape_cast %543 : vector<19xf32> to vector<1x19xf32>
    %cst_259 = arith.constant 3.200000e+01 : f32
    %545 = vector.broadcast %cst_259 : f32 to vector<1x19xf32>
    %546 = arith.divf %544, %545 : vector<1x19xf32>
    %547 = vector.shape_cast %546 : vector<1x19xf32> to vector<1x19xf32>
    %548 = vector.broadcast %547 : vector<1x19xf32> to vector<32x19xf32>
    %cst_260 = arith.constant dense<0.000000e+00> : vector<32x304xf32>
    %549 = tpu.matmul %548, %4, %cst_260 {dimension_numbers = #tpu.dot_dimension_numbers<[1], [0], [0], [1], [0, 0, 1, 1], [], []>} : vector<32x19xf32>, vector<19x304xf32>, vector<32x304xf32> -> vector<32x304xf32>
    %550 = arith.mulf %510, %549 : vector<32x304xf32>
    %cst_261 = arith.constant 2.000000e-01 : f32
    %551 = vector.broadcast %cst_261 : f32 to vector<32x304xf32>
    %552 = arith.mulf %551, %550 : vector<32x304xf32>
    %553 = arith.maximumf %550, %552 : vector<32x304xf32>
    %c0_262 = arith.constant 0 : index
    %c0_263 = arith.constant 0 : index
    %c0_264 = arith.constant 0 : index
    %554 = vector.load %arg5[%c0_262, %c0_263, %c0_264] : memref<1x32x304xf32, #tpu.memory_space<vmem>>, vector<1x32x304xf32>
    %555 = vector.shape_cast %554 : vector<1x32x304xf32> to vector<32x304xf32>
    %556 = vector.shape_cast %553 : vector<32x304xf32> to vector<1x32x304xf32>
    tpu.vector_store %arg5[%c0_262, %c0_263, %c0_264], %556 {strides = array<i32>} : memref<1x32x304xf32, #tpu.memory_space<vmem>>, vector<1x32x304xf32>,
    return
  }
  func.func @transform_0(%arg0: i32) -> (i32, i32, i32) {
    %c0_i32 = arith.constant 0 : i32
    %c0_i32_0 = arith.constant 0 : i32
    %c0_i32_1 = arith.constant 0 : i32
    return %arg0, %c0_i32, %c0_i32_0 : i32, i32, i32
  }
  func.func @transform_1(%arg0: i32) -> (i32, i32) {
    %c0_i32 = arith.constant 0 : i32
    %c0_i32_0 = arith.constant 0 : i32
    %c0_i32_1 = arith.constant 0 : i32
    return %c0_i32, %c0_i32_0 : i32, i32
  }
  func.func @transform_2(%arg0: i32) -> (i32, i32) {
    %c0_i32 = arith.constant 0 : i32
    %c0_i32_0 = arith.constant 0 : i32
    %c0_i32_1 = arith.constant 0 : i32
    return %c0_i32, %c0_i32_0 : i32, i32
  }
  func.func @transform_3(%arg0: i32) -> (i32, i32, i32) {
    %c0_i32 = arith.constant 0 : i32
    %c0_i32_0 = arith.constant 0 : i32
    %c0_i32_1 = arith.constant 0 : i32
    %c0_i32_2 = arith.constant 0 : i32
    return %c0_i32, %c0_i32_0, %c0_i32_1 : i32, i32, i32
  }
  func.func @transform_4(%arg0: i32) -> (i32, i32, i32) {
    %c0_i32 = arith.constant 0 : i32
    %c0_i32_0 = arith.constant 0 : i32
    %c0_i32_1 = arith.constant 0 : i32
    return %arg0, %c0_i32, %c0_i32_0 : i32, i32, i32
  }
}

</mosaic_0001>

<llo_original>
// kernel: mul.97
$region0: #{mul.97}
  #allocation0 [shape = 's32[1]{0}', space=sflag, size = 0x4, scoped, tag = 'scoped memory for mul.97']
  %s0 = inlined_call_operand.vmem [shape: f32[8,1], index: 0, kind: input, shape index: {}]
  %s1 = inlined_call_operand.vmem [shape: f32[8,1], index: 1, kind: input, shape index: {}]
  %s2 = inlined_call_operand.vmem [shape: f32[8,1], index: 2, kind: output, shape index: {}]
  %v3 = vld [vmem:[%s0] sm:$0xff]
  %v4 = vld [vmem:[%s1] sm:$0xff]
  %5 = xla_tuple %v3, %v4
  %6 = xla_tuple %5
  %v7 = vmul.f32 %v3, %v4
  %8 = xla_tuple %v7
  %9 = vst [vmem:[%s2] sm:$0xff] %v7

// kernel: mcfe_block_depwise.1
$region0: #{mcfe_block_depwise.1}
  #allocation0 [shape = 'u32[]', space=smem, size = 0x4, offset = 0x4, fixed_abs, tag = 'smem constant byte address 0x4 - core index']
  #allocation1 [shape = 'u32[144,128]{1,0:T(1,128)}', space=vmem, size = 0x12000, scoped, tag = 'internal scratch']
  #allocation2 [shape = 'f32[32,560]{1,0:T(8,128)}', space=vmem, size = 0x14000, scoped, tag = 'scratch operand']
  %s0 = inlined_call_operand.vmem [shape: f32[2,1,304], index: 0, kind: input, shape index: {}]
  %s1 = inlined_call_operand.vmem [shape: f32[512,32], index: 1, kind: input, shape index: {}]
  %s2 = inlined_call_operand.vmem [shape: f32[21,304], index: 2, kind: input, shape index: {}]
  %s3 = inlined_call_operand.vmem [shape: f32[2,304,19], index: 3, kind: input, shape index: {}]
  %s4 = inlined_call_operand.vmem [shape: f32[2,32,304], index: 4, kind: output, shape index: {}]
  %s5 = sld [smem:[#allocation0]]
  $region49: #{mcfe_block_depwise.1} parent=0
    _
  %s7 = ssub.s32 1, %s5
  %s8 = scalar_select 0, %s7, %s5
  loop: start=0, step=1, limit=4
  $region2: #{mcfe_block_depwise.1} parent=0 // loop_pre_header
    _
  $region3: #{mcfe_block_depwise.1} parent=0 // loop_header
    %s10 = sphi 0, %s14
    %p11 = scmp.ge.s32.totalorder %s10, 4
    %s20 = sphi 0, %s22
    %s23 = sphi 0, %s20
    %s24 = sphi 0, %s23
    %s40 = sphi 0, %s24
    %s44 = sphi 0, %s44
    %s46 = sphi 0, %s44
    %s47 = sphi 0, %s46
    %s61 = sphi 0, %s47
    %s65 = sphi 0, %s65
    %s67 = sphi 0, %s65
    %s68 = sphi 0, %s67
    %s82 = sphi 0, %s68
    %s86 = sphi 0, %s86
    %s88 = sphi 0, %s86
    %s89 = sphi 0, %s88
    %s103 = sphi 0, %s89
    %s109 = sphi 0, %s111
    %s112 = sphi 0, %s109
    %s113 = sphi 0, %s112
    %s129 = sphi 0, %s113
  $region4: #{mcfe_block_depwise.1} parent=0 // loop_header_branch
    %13 = sbr.rel (%p11) target = $region8
  $region5: #{mcfe_block_depwise.1} parent=0 // loop_body
    %s15 = ssub.s32 %s10, 1
    %s16 = ssub.s32 %s10, 2
    %s17 = sadd.s32 %s10, 1
    %s18 = ssub.s32 %s10, %s17
    %p19 = scmp.eq.s32.totalorder %s18, 0
    %s21 = sadd.s32 %s20, 1
    %s22 = scalar_select %p19, %s20, %s21
    %p25 = pneg %p19
    %p26 = scmp.eq.s32.totalorder %s10, 1
    %p27 = por %p25, %p26
    %p28 = scmp.ne.s32.totalorder %s20, %s23
    %p29 = scmp.eq.s32.totalorder %s10, 0
    %p30 = por %p28, %p29
    %p31 = scmp.ne.s32.totalorder %s20, %s23
    %p32 = scmp.eq.s32.totalorder %s15, 1
    %p33 = por %p31, %p32
    %p34 = scmp.ne.s32.totalorder %s23, %s24
    %p35 = scmp.eq.s32.totalorder %s15, 0
    %p36 = por %p34, %p35
    %p37 = scmp.ne.s32.totalorder %s23, %s24
    %p38 = scmp.eq.s32.totalorder %s16, 1
    %p39 = por %p37, %p38
    %p41 = scmp.ne.s32.totalorder %s24, %s40
    %p42 = scmp.eq.s32.totalorder %s16, 0
    %p43 = por %p41, %p42
    %s45 = sadd.s32 %s44, 1
    %p48 = scmp.eq.s32.totalorder %s10, 1
    %p49 = scmp.ne.s32.totalorder %s44, %s46
    %p50 = scmp.eq.s32.totalorder %s10, 0
    %p51 = por %p49, %p50
    %p52 = scmp.ne.s32.totalorder %s44, %s46
    %p53 = scmp.eq.s32.totalorder %s15, 1
    %p54 = por %p52, %p53
    %p55 = scmp.ne.s32.totalorder %s46, %s47
    %p56 = scmp.eq.s32.totalorder %s15, 0
    %p57 = por %p55, %p56
    %p58 = scmp.ne.s32.totalorder %s46, %s47
    %p59 = scmp.eq.s32.totalorder %s16, 1
    %p60 = por %p58, %p59
    %p62 = scmp.ne.s32.totalorder %s47, %s61
    %p63 = scmp.eq.s32.totalorder %s16, 0
    %p64 = por %p62, %p63
    %s66 = sadd.s32 %s65, 1
    %p69 = scmp.eq.s32.totalorder %s10, 1
    %p70 = scmp.ne.s32.totalorder %s65, %s67
    %p71 = scmp.eq.s32.totalorder %s10, 0
    %p72 = por %p70, %p71
    %p73 = scmp.ne.s32.totalorder %s65, %s67
    %p74 = scmp.eq.s32.totalorder %s15, 1
    %p75 = por %p73, %p74
    %p76 = scmp.ne.s32.totalorder %s67, %s68
    %p77 = scmp.eq.s32.totalorder %s15, 0
    %p78 = por %p76, %p77
    %p79 = scmp.ne.s32.totalorder %s67, %s68
    %p80 = scmp.eq.s32.totalorder %s16, 1
    %p81 = por %p79, %p80
    %p83 = scmp.ne.s32.totalorder %s68, %s82
    %p84 = scmp.eq.s32.totalorder %s16, 0
    %p85 = por %p83, %p84
    %s87 = sadd.s32 %s86, 1
    %p90 = scmp.eq.s32.totalorder %s10, 1
    %p91 = scmp.ne.s32.totalorder %s86, %s88
    %p92 = scmp.eq.s32.totalorder %s10, 0
    %p93 = por %p91, %p92
    %p94 = scmp.ne.s32.totalorder %s86, %s88
    %p95 = scmp.eq.s32.totalorder %s15, 1
    %p96 = por %p94, %p95
    %p97 = scmp.ne.s32.totalorder %s88, %s89
    %p98 = scmp.eq.s32.totalorder %s15, 0
    %p99 = por %p97, %p98
    %p100 = scmp.ne.s32.totalorder %s88, %s89
    %p101 = scmp.eq.s32.totalorder %s16, 1
    %p102 = por %p100, %p101
    %p104 = scmp.ne.s32.totalorder %s89, %s103
    %p105 = scmp.eq.s32.totalorder %s16, 0
    %p106 = por %p104, %p105
    %s107 = ssub.s32 %s10, %s17
    %p108 = scmp.eq.s32.totalorder %s107, 0
    %s110 = sadd.s32 %s109, 1
    %s111 = scalar_select %p108, %s109, %s110
    %p114 = pneg %p108
    %p115 = scmp.eq.s32.totalorder %s10, 1
    %p116 = por %p114, %p115
    %p117 = scmp.ne.s32.totalorder %s109, %s112
    %p118 = scmp.eq.s32.totalorder %s10, 0
    %p119 = por %p117, %p118
    %p120 = scmp.ne.s32.totalorder %s109, %s112
    %p121 = scmp.eq.s32.totalorder %s15, 1
    %p122 = por %p120, %p121
    %p123 = scmp.ne.s32.totalorder %s112, %s113
    %p124 = scmp.eq.s32.totalorder %s15, 0
    %p125 = por %p123, %p124
    %p126 = scmp.ne.s32.totalorder %s112, %s113
    %p127 = scmp.eq.s32.totalorder %s16, 1
    %p128 = por %p126, %p127
    %p130 = scmp.ne.s32.totalorder %s113, %s129
    %p131 = scmp.eq.s32.totalorder %s16, 0
    %p132 = por %p130, %p131
    %p133 = scmp.le.s32.totalorder 1, %s10
    %p134 = scmp.lt.s32.totalorder %s10, 3
    %p135 = pnand %p133, %p134
    %p136 = pneg %p135
    // Predicated region
    $region9: #{mcfe_block_depwise.1} parent=5 // pred_check
      _
    $region10: #{mcfe_block_depwise.1} parent=5 // pred_check_branch
      %138 = sbr.rel (%p135) target = $region12
    $region11: #{mcfe_block_depwise.1} parent=5 // pred_region
      %s139 = ssub.s32 %s10, 1
      // Predicated region
      $region13: #{mcfe_block_depwise.1} parent=11 // pred_check
        %p140 = pneg %p57
      $region14: #{mcfe_block_depwise.1} parent=11 // pred_check_branch
        %142 = sbr.rel (%p140) target = $region16
      $region15: #{mcfe_block_depwise.1} parent=11 // pred_region
        _
      $region16: #{mcfe_block_depwise.1} parent=11 // pred_fallthru
        _
      // Predicated region
      $region17: #{mcfe_block_depwise.1} parent=11 // pred_check
        %p143 = pneg %p78
      $region18: #{mcfe_block_depwise.1} parent=11 // pred_check_branch
        %145 = sbr.rel (%p143) target = $region20
      $region19: #{mcfe_block_depwise.1} parent=11 // pred_region
        _
      $region20: #{mcfe_block_depwise.1} parent=11 // pred_fallthru
        _
      // Predicated region
      $region21: #{mcfe_block_depwise.1} parent=11 // pred_check
        %p146 = pneg %p99
      $region22: #{mcfe_block_depwise.1} parent=11 // pred_check_branch
        %148 = sbr.rel (%p146) target = $region24
      $region23: #{mcfe_block_depwise.1} parent=11 // pred_region
        _
      $region24: #{mcfe_block_depwise.1} parent=11 // pred_fallthru
        _
    $region12: #{mcfe_block_depwise.1} parent=5 // pred_fallthru
      _
    %p149 = scmp.lt.s32.totalorder %s10, 2
    // Predicated region
    $region25: #{mcfe_block_depwise.1} parent=5 // pred_check
      %p150 = pneg %p149
    $region26: #{mcfe_block_depwise.1} parent=5 // pred_check_branch
      %152 = sbr.rel (%p150) target = $region28
    $region27: #{mcfe_block_depwise.1} parent=5 // pred_region
      // Predicated region
      $region29: #{mcfe_block_depwise.1} parent=27 // pred_check
        %p153 = pneg %p30
      $region30: #{mcfe_block_depwise.1} parent=27 // pred_check_branch
        %155 = sbr.rel (%p153) target = $region32
      $region31: #{mcfe_block_depwise.1} parent=27 // pred_region
        %p156 = scmp.lt.s32.totalorder %s10, 1
        %s157 = scalar_select %p156, %s10, 1
        %s158 = smul.addr %s157, 3
        %s159 = scalar_lea.vmem %s0, %s158
      $region32: #{mcfe_block_depwise.1} parent=27 // pred_fallthru
        _
    $region28: #{mcfe_block_depwise.1} parent=5 // pred_fallthru
      _
    %p160 = scmp.le.s32.totalorder 1, %s10
    %p161 = scmp.lt.s32.totalorder %s10, 3
    %p162 = pnand %p160, %p161
    %p163 = pneg %p162
    // Predicated region
    $region33: #{mcfe_block_depwise.1} parent=5 // pred_check
      _
    $region34: #{mcfe_block_depwise.1} parent=5 // pred_check_branch
      %165 = sbr.rel (%p162) target = $region36
    $region35: #{mcfe_block_depwise.1} parent=5 // pred_region
      %s166 = ssub.s32 %s10, 1
      %p167 = scmp.lt.s32.totalorder %s15, 1
      %s168 = scalar_select %p167, %s15, 1
      %s169 = smul.addr %s168, 3
      %s170 = scalar_lea.vmem %s0, %s169
      %p171 = pneg %p36
      %p172 = pneg %p33
      %p173 = pneg %p57
      %p174 = pneg %p54
      %p175 = pneg %p78
      %p176 = pneg %p75
      %p177 = pneg %p99
      %p178 = pneg %p96
      %p179 = pneg %p125
      %p180 = pneg %p122
      %p181 = scmp.lt.s32.totalorder %s15, 1
      %s182 = scalar_select %p181, %s15, 1
      %s183 = smul.addr %s182, 12
      %s184 = smul.addr %s183, 8
      %s185 = scalar_lea.vmem %s4, %s184
      %p186 = scmp.lt.s32.totalorder %s15, 1
      %s187 = scalar_select %p186, %s15, 1
      %s188 = smul.addr %s187, 3
      %s189 = scalar_lea.vmem %s0, %s188
      %p190 = scmp.lt.s32.totalorder %s15, 1
      %s191 = scalar_select %p190, %s15, 1
      %s192 = smul.addr %s191, 12
      %s193 = smul.addr %s192, 8
      %s194 = scalar_lea.vmem %s4, %s193
      %195 = vst [vmem:[#allocation2] sm:$0xff] 0.0
      %196 = vst [vmem:[#allocation2 + $0x28] sm:$0xff] 0.0
      %197 = vst [vmem:[#allocation2 + $0x50] sm:$0xff] 0.0
      %198 = vst [vmem:[#allocation2 + $0x78] sm:$0xff] 0.0
      %vm199 = vcmask 1047936
      %200 = vst.msk [vmem:[#allocation2 + $0x18] sm:$0xff] %vm199, 0.0
      %vm201 = vcmask 392192
      %202 = vst.msk [vmem:[#allocation2 + $0x20] sm:$0xff] %vm201, 0.0
      %203 = vst.msk [vmem:[#allocation2 + $0x40] sm:$0xff] %vm199, 0.0
      %204 = vst.msk [vmem:[#allocation2 + $0x48] sm:$0xff] %vm201, 0.0
      %205 = vst.msk [vmem:[#allocation2 + $0x68] sm:$0xff] %vm199, 0.0
      %206 = vst.msk [vmem:[#allocation2 + $0x70] sm:$0xff] %vm201, 0.0
      %207 = vst.msk [vmem:[#allocation2 + $0x90] sm:$0xff] %vm199, 0.0
      %208 = vst.msk [vmem:[#allocation2 + $0x98] sm:$0xff] %vm201, 0.0
      %v209 = vld [vmem:[%s2] sm:$0xff]
      %v210 = vld [vmem:[%s2 + $0x8] sm:$0xff]
      %v211 = vld [vmem:[%s2 + $0x10] sm:$0xff]
      %v212 = vld [vmem:[%s2 + $0x18] sm:$0xff]
      %v213 = vld [vmem:[%s2 + $0x20] sm:$0xff]
      %v214 = vld [vmem:[%s2 + $0x28] sm:$0xff]
      %v215 = vld [vmem:[%s2 + $0x30] sm:$0x7]
      %v216 = vld [vmem:[%s2 + $0x38] sm:$0x7]
      %v217 = vld [vmem:[%s2 + $0x40] sm:$0x7]
      %s218 = scalar_lea.vmem %s2, 51
      %v219 = vld [vmem:[%s218] ss:$8 sm:$0x7]
      %s220 = scalar_lea.vmem %s2, 52
      %v221 = vld [vmem:[%s220] ss:$8 sm:$0x7]
      %v222 = vld [vmem:[%s3] sm:$0xff]
      %v223 = vld [vmem:[%s3 + $0x8] sm:$0xff]
      %v224 = vld [vmem:[%s3 + $0x10] sm:$0xff]
      %v225 = vld [vmem:[%s3 + $0x18] sm:$0xff]
      %v226 = vld [vmem:[%s3 + $0x20] sm:$0xff]
      %v227 = vld [vmem:[%s3 + $0x28] sm:$0xff]
      %v228 = vld [vmem:[%s3 + $0x30] sm:$0xff]
      %v229 = vld [vmem:[%s3 + $0x38] sm:$0xff]
      %v230 = vld [vmem:[%s3 + $0x40] sm:$0xff]
      %v231 = vld [vmem:[%s3 + $0x48] sm:$0xff]
      %v232 = vld [vmem:[%s3 + $0x50] sm:$0xff]
      %v233 = vld [vmem:[%s3 + $0x58] sm:$0xff]
      %v234 = vld [vmem:[%s3 + $0x60] sm:$0xff]
      %v235 = vld [vmem:[%s3 + $0x68] sm:$0xff]
      %v236 = vld [vmem:[%s3 + $0x70] sm:$0xff]
      %v237 = vld [vmem:[%s3 + $0x78] sm:$0xff]
      %v238 = vld [vmem:[%s3 + $0x80] sm:$0xff]
      %v239 = vld [vmem:[%s3 + $0x88] sm:$0xff]
      %v240 = vld [vmem:[%s3 + $0x90] sm:$0xff]
      %v241 = vld [vmem:[%s3 + $0x98] sm:$0xff]
      %v242 = vld [vmem:[%s3 + $0xa0] sm:$0xff]
      %v243 = vld [vmem:[%s3 + $0xa8] sm:$0xff]
      %v244 = vld [vmem:[%s3 + $0xb0] sm:$0xff]
      %v245 = vld [vmem:[%s3 + $0xb8] sm:$0xff]
      %v246 = vld [vmem:[%s3 + $0xc0] sm:$0xff]
      %v247 = vld [vmem:[%s3 + $0xc8] sm:$0xff]
      %v248 = vld [vmem:[%s3 + $0xd0] sm:$0xff]
      %v249 = vld [vmem:[%s3 + $0xd8] sm:$0xff]
      %v250 = vld [vmem:[%s3 + $0xe0] sm:$0xff]
      %v251 = vld [vmem:[%s3 + $0xe8] sm:$0xff]
      %v252 = vld [vmem:[%s3 + $0xf0] sm:$0xff]
      %v253 = vld [vmem:[%s3 + $0xf8] sm:$0xff]
      %v254 = vld [vmem:[%s3 + $0x100] sm:$0xff]
      %v255 = vld [vmem:[%s3 + $0x108] sm:$0xff]
      %v256 = vld [vmem:[%s3 + $0x110] sm:$0xff]
      %v257 = vld [vmem:[%s3 + $0x118] sm:$0xff]
      %v258 = vld [vmem:[%s3 + $0x120] sm:$0xff]
      %v259 = vld [vmem:[%s3 + $0x128] sm:$0xff]
      %s260 = scalar_lea.vmem %s3, 304
      %v261 = vld [vmem:[%s260] sm:$0xff]
      %v262 = vld [vmem:[%s260 + $0x8] sm:$0xff]
      %v263 = vld [vmem:[%s260 + $0x10] sm:$0xff]
      %v264 = vld [vmem:[%s260 + $0x18] sm:$0xff]
      %v265 = vld [vmem:[%s260 + $0x20] sm:$0xff]
      %v266 = vld [vmem:[%s260 + $0x28] sm:$0xff]
      %v267 = vld [vmem:[%s260 + $0x30] sm:$0xff]
      %v268 = vld [vmem:[%s260 + $0x38] sm:$0xff]
      %v269 = vld [vmem:[%s260 + $0x40] sm:$0xff]
      %v270 = vld [vmem:[%s260 + $0x48] sm:$0xff]
      %v271 = vld [vmem:[%s260 + $0x50] sm:$0xff]
      %v272 = vld [vmem:[%s260 + $0x58] sm:$0xff]
      %v273 = vld [vmem:[%s260 + $0x60] sm:$0xff]
      %v274 = vld [vmem:[%s260 + $0x68] sm:$0xff]
      %v275 = vld [vmem:[%s260 + $0x70] sm:$0xff]
      %v276 = vld [vmem:[%s260 + $0x78] sm:$0xff]
      %v277 = vld [vmem:[%s260 + $0x80] sm:$0xff]
      %v278 = vld [vmem:[%s260 + $0x88] sm:$0xff]
      %v279 = vld [vmem:[%s260 + $0x90] sm:$0xff]
      %v280 = vld [vmem:[%s260 + $0x98] sm:$0xff]
      %v281 = vld [vmem:[%s260 + $0xa0] sm:$0xff]
      %v282 = vld [vmem:[%s260 + $0xa8] sm:$0xff]
      %v283 = vld [vmem:[%s260 + $0xb0] sm:$0xff]
      %v284 = vld [vmem:[%s260 + $0xb8] sm:$0xff]
      %v285 = vld [vmem:[%s260 + $0xc0] sm:$0xff]
      %v286 = vld [vmem:[%s260 + $0xc8] sm:$0xff]
      %v287 = vld [vmem:[%s260 + $0xd0] sm:$0xff]
      %v288 = vld [vmem:[%s260 + $0xd8] sm:$0xff]
      %v289 = vld [vmem:[%s260 + $0xe0] sm:$0xff]
      %v290 = vld [vmem:[%s260 + $0xe8] sm:$0xff]
      %v291 = vld [vmem:[%s260 + $0xf0] sm:$0xff]
      %v292 = vld [vmem:[%s260 + $0xf8] sm:$0xff]
      %v293 = vld [vmem:[%s260 + $0x100] sm:$0xff]
      %v294 = vld [vmem:[%s260 + $0x108] sm:$0xff]
      %v295 = vld [vmem:[%s260 + $0x110] sm:$0xff]
      %v296 = vld [vmem:[%s260 + $0x118] sm:$0xff]
      %v297 = vld [vmem:[%s260 + $0x120] sm:$0xff]
      %v298 = vld [vmem:[%s260 + $0x128] sm:$0xff]
      %v299 = vld [vmem:[%s189] sm:$0x7]
      %v300 = vld [vmem:[%s1] sm:$0x1]
      %v301 = vlaneseq
      %vm302 = vcmp.ge.s32.totalorder %v301, 0
      %vm303 = vcmp.lt.s32.totalorder %v301, 304
      %vm304 = vmand %vm302, %vm303
      %s305 = scalar_lea.vmem [#allocation2], 8
      %306 = vst.msk [vmem:[%s305] ss:$8 sm:$0x7] %vm304, %v299
      %307 = vst.msk [vmem:[%s305] ss:$8 sm:$0x0] %vm304, %v299
      %309 = vset.pattern.permute.xlu0 0
      %310 = vperm.xlu0 %309, %v300
      %v311 = vpop.permute.xlu0 %310
      %v314 = vlaneseq
      %v315 = vshrl.u32 %v314, 7
      %v316 = vsub.s32 0, %v315
      %v317 = vrot.slane %v219, %v316
      %v318 = vlaneseq
      %v319 = vshrl.u32 %v318, 7
      %v320 = vsub.s32 1, %v319
      %v321 = vrot.slane %v219, %v320
      %v322 = vlaneseq
      %v323 = vshrl.u32 %v322, 7
      %v324 = vsub.s32 2, %v323
      %v325 = vrot.slane %v219, %v324
      %v329 = vmul.f32 %v311, %v317
      %v330 = vmul.f32 %v311, %v321
      %v331 = vmul.f32 %v311, %v325
      %v332 = vld [vmem:[#allocation2] ss:$8 sm:$0xf]
      %v334 = vlaneseq
      %v335 = vshrl.u32 %v334, 7
      %v336 = vsub.s32 0, %v335
      %v337 = vrot.slane %v332, %v336
      %v338 = vlaneseq
      %v339 = vshrl.u32 %v338, 7
      %v340 = vsub.s32 1, %v339
      %v341 = vrot.slane %v332, %v340
      %v342 = vlaneseq
      %v343 = vshrl.u32 %v342, 7
      %v344 = vsub.s32 2, %v343
      %v345 = vrot.slane %v332, %v344
      %v346 = vlaneseq
      %v347 = vshrl.u32 %v346, 7
      %v348 = vsub.s32 3, %v347
      %v349 = vrot.slane %v332, %v348
      %350 = vrot.lane.b32.xlu0 %v337, 17
      %v351 = vpop.permute.xlu0 %350
      %352 = vrot.lane.b32.xlu0 %v341, 17
      %v353 = vpop.permute.xlu0 %352
      %354 = vrot.lane.b32.xlu0 %v345, 17
      %v355 = vpop.permute.xlu0 %354
      %356 = vrot.lane.b32.xlu0 %v349, 17
      %v357 = vpop.permute.xlu0 %356
      %vm358 = vcmask 138240
      %v359 = vsel %vm358, %v351, %v353
      %v360 = vsel %vm358, %v353, %v355
      %v361 = vsel %vm358, %v355, %v357
      %v365 = vmul.f32 %v329, %v359
      %v366 = vmul.f32 %v330, %v360
      %v367 = vmul.f32 %v331, %v361
      %368 = vset.pattern.permute.xlu0 1
      %369 = vperm.xlu0 %368, %v300
      %v370 = vpop.permute.xlu0 %369
      %372 = vrot.lane.b32.xlu0 %v337, 16
      %v373 = vpop.permute.xlu0 %372
      %374 = vrot.lane.b32.xlu0 %v341, 16
      %v375 = vpop.permute.xlu0 %374
      %376 = vrot.lane.b32.xlu0 %v345, 16
      %v377 = vpop.permute.xlu0 %376
      %378 = vrot.lane.b32.xlu0 %v349, 16
      %v379 = vpop.permute.xlu0 %378
      %vm380 = vcmask 130048
      %v381 = vsel %vm380, %v373, %v375
      %v382 = vsel %vm380, %v375, %v377
      %v383 = vsel %vm380, %v377, %v379
      %v387 = vmul.f32 %v370, %v381
      %v388 = vmul.f32 %v370, %v382
      %v389 = vmul.f32 %v370, %v383
      %v390 = vadd.f32 %v365, %v387
      %v391 = vadd.f32 %v366, %v388
      %v392 = vadd.f32 %v367, %v389
      %393 = vset.pattern.permute.xlu0 2
      %394 = vperm.xlu0 %393, %v300
      %v395 = vpop.permute.xlu0 %394
      %v398 = vlaneseq
      %v399 = vshrl.u32 %v398, 7
      %v400 = vsub.s32 0, %v399
      %v401 = vrot.slane %v221, %v400
      %v402 = vlaneseq
      %v403 = vshrl.u32 %v402, 7
      %v404 = vsub.s32 1, %v403
      %v405 = vrot.slane %v221, %v404
      %v406 = vlaneseq
      %v407 = vshrl.u32 %v406, 7
      %v408 = vsub.s32 2, %v407
      %v409 = vrot.slane %v221, %v408
      %v413 = vmul.f32 %v395, %v401
      %v414 = vmul.f32 %v395, %v405
      %v415 = vmul.f32 %v395, %v409
      %416 = vrot.lane.b32.xlu0 %v337, 15
      %v417 = vpop.permute.xlu0 %416
      %418 = vrot.lane.b32.xlu0 %v341, 15
      %v419 = vpop.permute.xlu0 %418
      %420 = vrot.lane.b32.xlu0 %v345, 15
      %v421 = vpop.permute.xlu0 %420
      %422 = vrot.lane.b32.xlu0 %v349, 15
      %v423 = vpop.permute.xlu0 %422
      %vm424 = vcmask 121856
      %v425 = vsel %vm424, %v417, %v419
      %v426 = vsel %vm424, %v419, %v421
      %v427 = vsel %vm424, %v421, %v423
      %v431 = vmul.f32 %v413, %v425
      %v432 = vmul.f32 %v414, %v426
      %v433 = vmul.f32 %v415, %v427
      %v434 = vadd.f32 %v390, %v431
      %v435 = vadd.f32 %v391, %v432
      %v436 = vadd.f32 %v392, %v433
      %437 = vset.pattern.permute.xlu0 3
      %438 = vperm.xlu0 %437, %v300
      %v439 = vpop.permute.xlu0 %438
      %v441 = vmul.f32 %v439, %v317
      %v442 = vmul.f32 %v439, %v321
      %v443 = vmul.f32 %v439, %v325
      %444 = vrot.lane.b32.xlu0 %v337, 1
      %v445 = vpop.permute.xlu0 %444
      %446 = vrot.lane.b32.xlu0 %v341, 1
      %v447 = vpop.permute.xlu0 %446
      %448 = vrot.lane.b32.xlu0 %v345, 1
      %v449 = vpop.permute.xlu0 %448
      %450 = vrot.lane.b32.xlu0 %v349, 1
      %v451 = vpop.permute.xlu0 %450
      %vm452 = vcmask 7168
      %v453 = vsel %vm452, %v445, %v447
      %v454 = vsel %vm452, %v447, %v449
      %v455 = vsel %vm452, %v449, %v451
      %v459 = vmul.f32 %v441, %v453
      %v460 = vmul.f32 %v442, %v454
      %v461 = vmul.f32 %v443, %v455
      %v462 = vadd.f32 %v434, %v459
      %v463 = vadd.f32 %v435, %v460
      %v464 = vadd.f32 %v436, %v461
      %v465 = vld [vmem:[%s305] ss:$8 sm:$0x7]
      %466 = vset.pattern.permute.xlu0 4
      %467 = vperm.xlu0 %466, %v300
      %v468 = vpop.permute.xlu0 %467
      %v471 = vlaneseq
      %v472 = vshrl.u32 %v471, 7
      %v473 = vsub.s32 0, %v472
      %v474 = vrot.slane %v465, %v473
      %v475 = vlaneseq
      %v476 = vshrl.u32 %v475, 7
      %v477 = vsub.s32 1, %v476
      %v478 = vrot.slane %v465, %v477
      %v479 = vlaneseq
      %v480 = vshrl.u32 %v479, 7
      %v481 = vsub.s32 2, %v480
      %v482 = vrot.slane %v465, %v481
      %v486 = vmul.f32 %v468, %v474
      %v487 = vmul.f32 %v468, %v478
      %v488 = vmul.f32 %v468, %v482
      %v489 = vadd.f32 %v462, %v486
      %v490 = vadd.f32 %v463, %v487
      %v491 = vadd.f32 %v464, %v488
      %492 = vset.pattern.permute.xlu0 5
      %493 = vperm.xlu0 %492, %v300
      %v494 = vpop.permute.xlu0 %493
      %v496 = vmul.f32 %v494, %v401
      %v497 = vmul.f32 %v494, %v405
      %v498 = vmul.f32 %v494, %v409
      %499 = vrot.lane.b32.xlu0 %v474, 127
      %v500 = vpop.permute.xlu0 %499
      %501 = vrot.lane.b32.xlu0 %v478, 127
      %v502 = vpop.permute.xlu0 %501
      %503 = vrot.lane.b32.xlu0 %v482, 127
      %v504 = vpop.permute.xlu0 %503
      %vm505 = vcmask 1039360
      %v506 = vsel %vm505, %v500, %v502
      %v507 = vsel %vm505, %v502, %v504
      %v511 = vmul.f32 %v496, %v506
      %v512 = vmul.f32 %v497, %v507
      %v513 = vmul.f32 %v498, %v504
      %v514 = vadd.f32 %v489, %v511
      %v515 = vadd.f32 %v490, %v512
      %v516 = vadd.f32 %v491, %v513
      %517 = vset.pattern.permute.xlu0 6
      %518 = vperm.xlu0 %517, %v300
      %v519 = vpop.permute.xlu0 %518
      %v521 = vmul.f32 %v519, %v317
      %v522 = vmul.f32 %v519, %v321
      %v523 = vmul.f32 %v519, %v325
      %524 = vrot.lane.b32.xlu0 %v474, 113
      %v525 = vpop.permute.xlu0 %524
      %526 = vrot.lane.b32.xlu0 %v478, 113
      %v527 = vpop.permute.xlu0 %526
      %528 = vrot.lane.b32.xlu0 %v482, 113
      %v529 = vpop.permute.xlu0 %528
      %vm530 = vcmask 924672
      %v531 = vsel %vm530, %v525, %v527
      %v532 = vsel %vm530, %v527, %v529
      %v536 = vmul.f32 %v521, %v531
      %v537 = vmul.f32 %v522, %v532
      %v538 = vmul.f32 %v523, %v529
      %v539 = vadd.f32 %v514, %v536
      %v540 = vadd.f32 %v515, %v537
      %v541 = vadd.f32 %v516, %v538
      %542 = vset.pattern.permute.xlu0 7
      %543 = vperm.xlu0 %542, %v300
      %v544 = vpop.permute.xlu0 %543
      %546 = vrot.lane.b32.xlu0 %v474, 112
      %v547 = vpop.permute.xlu0 %546
      %548 = vrot.lane.b32.xlu0 %v478, 112
      %v549 = vpop.permute.xlu0 %548
      %550 = vrot.lane.b32.xlu0 %v482, 112
      %v551 = vpop.permute.xlu0 %550
      %vm552 = vcmask 916480
      %v553 = vsel %vm552, %v547, %v549
      %v554 = vsel %vm552, %v549, %v551
      %v558 = vmul.f32 %v544, %v553
      %v559 = vmul.f32 %v544, %v554
      %v560 = vmul.f32 %v544, %v551
      %v561 = vadd.f32 %v539, %v558
      %v562 = vadd.f32 %v540, %v559
      %v563 = vadd.f32 %v541, %v560
      %564 = vset.pattern.permute.xlu0 8
      %565 = vperm.xlu0 %564, %v300
      %v566 = vpop.permute.xlu0 %565
      %v568 = vmul.f32 %v566, %v401
      %v569 = vmul.f32 %v566, %v405
      %v570 = vmul.f32 %v566, %v409
      %571 = vrot.lane.b32.xlu0 %v474, 111
      %v572 = vpop.permute.xlu0 %571
      %573 = vrot.lane.b32.xlu0 %v478, 111
      %v574 = vpop.permute.xlu0 %573
      %575 = vrot.lane.b32.xlu0 %v482, 111
      %v576 = vpop.permute.xlu0 %575
      %vm577 = vcmask 908288
      %v578 = vsel %vm577, %v572, %v574
      %v579 = vsel %vm577, %v574, %v576
      %v583 = vmul.f32 %v568, %v578
      %v584 = vmul.f32 %v569, %v579
      %v585 = vmul.f32 %v570, %v576
      %v586 = vadd.f32 %v561, %v583
      %v587 = vadd.f32 %v562, %v584
      %v588 = vadd.f32 %v563, %v585
      %v589 = vld [vmem:[%s1 + $0x8] sm:$0xff]
      %v590 = vld [vmem:[%s1 + $0x10] sm:$0xff]
      %592 = vset.pattern.permute.xlu0 0
      %593 = vperm.xlu0 %592, %v589
      %v594 = vpop.permute.xlu0 %593
      %v596 = vlaneseq
      %v597 = vshrl.u32 %v596, 7
      %v598 = vsub.s32 0, %v597
      %v599 = vrot.slane %v586, %v598
      %v600 = vlaneseq
      %v601 = vshrl.u32 %v600, 7
      %v602 = vsub.s32 0, %v601
      %v603 = vrot.slane %v587, %v602
      %v604 = vlaneseq
      %v605 = vshrl.u32 %v604, 7
      %v606 = vsub.s32 0, %v605
      %v607 = vrot.slane %v588, %v606
      %v608 = vmul.f32 %v594, %v599
      %v609 = vmul.f32 %v594, %v603
      %v610 = vmul.f32 %v594, %v607
      %612 = vset.pattern.permute.xlu0 0
      %613 = vperm.xlu0 %612, %v590
      %v614 = vpop.permute.xlu0 %613
      %v616 = vadd.f32 %v608, %v614
      %v617 = vadd.f32 %v609, %v614
      %v618 = vadd.f32 %v610, %v614
      %v619 = vmul.f32 %v616, 0.2
      %v620 = vmul.f32 %v617, 0.2
      %v621 = vmul.f32 %v618, 0.2
      %v622 = vmax.f32 %v616, %v619
      %v623 = vmax.f32 %v617, %v620
      %v624 = vmax.f32 %v618, %v621
      %v625 = vld [vmem:[%s1 + $0x18] sm:$0xff]
      %626 = vst [vmem:[#allocation2 + $0x8] sm:$0xff] %v622
      %627 = vst [vmem:[#allocation2 + $0x10] sm:$0xff] %v623
      %628 = vst.msk [vmem:[#allocation2 + $0x18] sm:$0xff] %vm201, %v624
      %630 = vset.pattern.permute.xlu0 0
      %631 = vperm.xlu0 %630, %v625
      %v632 = vpop.permute.xlu0 %631
      %v634 = vmul.f32 %v632, %v317
      %v635 = vmul.f32 %v632, %v321
      %v636 = vmul.f32 %v632, %v325
      %v637 = vld [vmem:[#allocation2] sm:$0xff]
      %v638 = vld [vmem:[#allocation2 + $0x8] sm:$0xff]
      %v639 = vld [vmem:[#allocation2 + $0x10] sm:$0xff]
      %v640 = vld [vmem:[#allocation2 + $0x18] sm:$0xff]
      %645 = vrot.lane.b32.xlu0 %v637, 17
      %v646 = vpop.permute.xlu0 %645
      %647 = vrot.lane.b32.xlu0 %v638, 17
      %v648 = vpop.permute.xlu0 %647
      %649 = vrot.lane.b32.xlu0 %v639, 17
      %v650 = vpop.permute.xlu0 %649
      %651 = vrot.lane.b32.xlu0 %v640, 17
      %v652 = vpop.permute.xlu0 %651
      %v653 = vsel %vm358, %v646, %v648
      %v654 = vsel %vm358, %v648, %v650
      %v655 = vsel %vm358, %v650, %v652
      %v659 = vmul.f32 %v634, %v653
      %v660 = vmul.f32 %v635, %v654
      %v661 = vmul.f32 %v636, %v655
      %662 = vset.pattern.permute.xlu0 1
      %663 = vperm.xlu0 %662, %v625
      %v664 = vpop.permute.xlu0 %663
      %v666 = vmul.f32 %v664, %v637
      %v667 = vmul.f32 %v664, %v638
      %v668 = vmul.f32 %v664, %v639
      %v669 = vmul.f32 %v664, %v640
      %674 = vrot.lane.b32.xlu0 %v666, 16
      %v675 = vpop.permute.xlu0 %674
      %676 = vrot.lane.b32.xlu0 %v667, 16
      %v677 = vpop.permute.xlu0 %676
      %678 = vrot.lane.b32.xlu0 %v668, 16
      %v679 = vpop.permute.xlu0 %678
      %680 = vrot.lane.b32.xlu0 %v669, 16
      %v681 = vpop.permute.xlu0 %680
      %v682 = vsel %vm380, %v675, %v677
      %v683 = vsel %vm380, %v677, %v679
      %v684 = vsel %vm380, %v679, %v681
      %v688 = vadd.f32 %v659, %v682
      %v689 = vadd.f32 %v660, %v683
      %v690 = vadd.f32 %v661, %v684
      %691 = vset.pattern.permute.xlu0 2
      %692 = vperm.xlu0 %691, %v625
      %v693 = vpop.permute.xlu0 %692
      %v695 = vmul.f32 %v693, %v401
      %v696 = vmul.f32 %v693, %v405
      %v697 = vmul.f32 %v693, %v409
      %698 = vrot.lane.b32.xlu0 %v637, 15
      %v699 = vpop.permute.xlu0 %698
      %700 = vrot.lane.b32.xlu0 %v638, 15
      %v701 = vpop.permute.xlu0 %700
      %702 = vrot.lane.b32.xlu0 %v639, 15
      %v703 = vpop.permute.xlu0 %702
      %704 = vrot.lane.b32.xlu0 %v640, 15
      %v705 = vpop.permute.xlu0 %704
      %v706 = vsel %vm424, %v699, %v701
      %v707 = vsel %vm424, %v701, %v703
      %v708 = vsel %vm424, %v703, %v705
      %v712 = vmul.f32 %v695, %v706
      %v713 = vmul.f32 %v696, %v707
      %v714 = vmul.f32 %v697, %v708
      %v715 = vadd.f32 %v688, %v712
      %v716 = vadd.f32 %v689, %v713
      %v717 = vadd.f32 %v690, %v714
      %718 = vset.pattern.permute.xlu0 3
      %719 = vperm.xlu0 %718, %v625
      %v720 = vpop.permute.xlu0 %719
      %v722 = vmul.f32 %v720, %v317
      %v723 = vmul.f32 %v720, %v321
      %v724 = vmul.f32 %v720, %v325
      %725 = vrot.lane.b32.xlu0 %v637, 1
      %v726 = vpop.permute.xlu0 %725
      %727 = vrot.lane.b32.xlu0 %v638, 1
      %v728 = vpop.permute.xlu0 %727
      %729 = vrot.lane.b32.xlu0 %v639, 1
      %v730 = vpop.permute.xlu0 %729
      %731 = vrot.lane.b32.xlu0 %v640, 1
      %v732 = vpop.permute.xlu0 %731
      %v733 = vsel %vm452, %v726, %v728
      %v734 = vsel %vm452, %v728, %v730
      %v735 = vsel %vm452, %v730, %v732
      %v739 = vmul.f32 %v722, %v733
      %v740 = vmul.f32 %v723, %v734
      %v741 = vmul.f32 %v724, %v735
      %v742 = vadd.f32 %v715, %v739
      %v743 = vadd.f32 %v716, %v740
      %v744 = vadd.f32 %v717, %v741
      %745 = vset.pattern.permute.xlu0 4
      %746 = vperm.xlu0 %745, %v625
      %v747 = vpop.permute.xlu0 %746
      %v749 = vmul.f32 %v747, %v638
      %v750 = vmul.f32 %v747, %v639
      %v751 = vmul.f32 %v747, %v640
      %v752 = vadd.f32 %v742, %v749
      %v753 = vadd.f32 %v743, %v750
      %v754 = vadd.f32 %v744, %v751
      %755 = vset.pattern.permute.xlu0 5
      %756 = vperm.xlu0 %755, %v625
      %v757 = vpop.permute.xlu0 %756
      %v759 = vmul.f32 %v757, %v401
      %v760 = vmul.f32 %v757, %v405
      %v761 = vmul.f32 %v757, %v409
      %762 = vrot.lane.b32.xlu0 %v638, 127
      %v763 = vpop.permute.xlu0 %762
      %764 = vrot.lane.b32.xlu0 %v639, 127
      %v765 = vpop.permute.xlu0 %764
      %766 = vrot.lane.b32.xlu0 %v640, 127
      %v767 = vpop.permute.xlu0 %766
      %v768 = vsel %vm505, %v763, %v765
      %v769 = vsel %vm505, %v765, %v767
      %v773 = vmul.f32 %v759, %v768
      %v774 = vmul.f32 %v760, %v769
      %v775 = vmul.f32 %v761, %v767
      %v776 = vadd.f32 %v752, %v773
      %v777 = vadd.f32 %v753, %v774
      %v778 = vadd.f32 %v754, %v775
      %779 = vset.pattern.permute.xlu0 6
      %780 = vperm.xlu0 %779, %v625
      %v781 = vpop.permute.xlu0 %780
      %v783 = vmul.f32 %v781, %v317
      %v784 = vmul.f32 %v781, %v321
      %v785 = vmul.f32 %v781, %v325
      %786 = vrot.lane.b32.xlu0 %v638, 113
      %v787 = vpop.permute.xlu0 %786
      %788 = vrot.lane.b32.xlu0 %v639, 113
      %v789 = vpop.permute.xlu0 %788
      %790 = vrot.lane.b32.xlu0 %v640, 113
      %v791 = vpop.permute.xlu0 %790
      %v792 = vsel %vm530, %v787, %v789
      %v793 = vsel %vm530, %v789, %v791
      %v797 = vmul.f32 %v783, %v792
      %v798 = vmul.f32 %v784, %v793
      %v799 = vmul.f32 %v785, %v791
      %v800 = vadd.f32 %v776, %v797
      %v801 = vadd.f32 %v777, %v798
      %v802 = vadd.f32 %v778, %v799
      %803 = vset.pattern.permute.xlu0 7
      %804 = vperm.xlu0 %803, %v625
      %v805 = vpop.permute.xlu0 %804
      %v807 = vmul.f32 %v805, %v638
      %v808 = vmul.f32 %v805, %v639
      %v809 = vmul.f32 %v805, %v640
      %813 = vrot.lane.b32.xlu0 %v807, 112
      %v814 = vpop.permute.xlu0 %813
      %815 = vrot.lane.b32.xlu0 %v808, 112
      %v816 = vpop.permute.xlu0 %815
      %817 = vrot.lane.b32.xlu0 %v809, 112
      %v818 = vpop.permute.xlu0 %817
      %v819 = vsel %vm552, %v814, %v816
      %v820 = vsel %vm552, %v816, %v818
      %v824 = vadd.f32 %v800, %v819
      %v825 = vadd.f32 %v801, %v820
      %v826 = vadd.f32 %v802, %v818
      %827 = vset.pattern.permute.xlu0 8
      %828 = vperm.xlu0 %827, %v625
      %v829 = vpop.permute.xlu0 %828
      %v831 = vmul.f32 %v829, %v401
      %v832 = vmul.f32 %v829, %v405
      %v833 = vmul.f32 %v829, %v409
      %834 = vrot.lane.b32.xlu0 %v638, 111
      %v835 = vpop.permute.xlu0 %834
      %836 = vrot.lane.b32.xlu0 %v639, 111
      %v837 = vpop.permute.xlu0 %836
      %838 = vrot.lane.b32.xlu0 %v640, 111
      %v839 = vpop.permute.xlu0 %838
      %v840 = vsel %vm577, %v835, %v837
      %v841 = vsel %vm577, %v837, %v839
      %v845 = vmul.f32 %v831, %v840
      %v846 = vmul.f32 %v832, %v841
      %v847 = vmul.f32 %v833, %v839
      %v848 = vadd.f32 %v824, %v845
      %v849 = vadd.f32 %v825, %v846
      %v850 = vadd.f32 %v826, %v847
      %v851 = vld [vmem:[%s1 + $0x20] sm:$0xff]
      %v852 = vld [vmem:[%s1 + $0x28] sm:$0xff]
      %854 = vset.pattern.permute.xlu0 0
      %855 = vperm.xlu0 %854, %v852
      %v856 = vpop.permute.xlu0 %855
      %vm858 = vcmask 64512
      %v860 = vsel %vm858, %v851, 0
      %862 = vmatprep.subr.mxu0 %v849
      %863 = vmatpush1.msra.mxu0 %v848
      %864 = vmatprep.subr.mxu0 0.0
      %865 = vmatpush1.msra.mxu0 0.0
      %866 = vmatprep.subr.mxu0 0.0
      %867 = vmatpush1.msra.mxu0 0.0
      %868 = vmatprep.subr.mxu0 0.0
      %869 = vmatpush1.msra.mxu0 0.0
      %870 = vmatprep.subr.mxu0 0.0
      %871 = vmatpush1.msra.mxu0 0.0
      %872 = vmatprep.subr.mxu0 0.0
      %873 = vmatpush1.msra.mxu0 0.0
      %874 = vmatprep.subr.mxu0 0.0
      %875 = vmatpush1.msra.mxu0 0.0
      %876 = vmatprep.subr.mxu0 0.0
      %877 = vmatpush1.msra.mxu0 0.0
      %878 = vmatprep.subr.mxu0 0.0
      %879 = vmatpush1.msra.mxu0 0.0
      %880 = vmatprep.subr.mxu0 0.0
      %881 = vmatpush1.msra.mxu0 0.0
      %882 = vmatprep.subr.mxu0 0.0
      %883 = vmatpush1.msra.mxu0 0.0
      %884 = vmatprep.subr.mxu0 0.0
      %885 = vmatpush1.msra.mxu0 0.0
      %886 = vmatprep.subr.mxu0 0.0
      %887 = vmatpush1.msra.mxu0 0.0
      %888 = vmatprep.subr.mxu0 0.0
      %889 = vmatpush1.msra.mxu0 0.0
      %890 = vmatprep.subr.mxu0 0.0
      %891 = vmatpush1.msra.mxu0 0.0
      %892 = vmatprep.subr.mxu0 0.0
      %893 = vmatpush1.msra.mxu0 0.0
      %894 = vmatprep.subr.mxu0 0.0
      %895 = vmatpush1.msra.mxu0 0.0
      %896 = vmatprep.subr.mxu0 0.0
      %897 = vmatpush1.msra.mxu0 0.0
      %898 = vmatprep.subr.mxu0 0.0
      %899 = vmatpush1.msra.mxu0 0.0
      %900 = vmatprep.subr.mxu0 0.0
      %901 = vmatpush1.msra.mxu0 0.0
      %902 = vmatprep.subr.mxu0 0.0
      %903 = vmatpush1.msra.mxu0 0.0
      %904 = vmatprep.subr.mxu0 0.0
      %905 = vmatpush1.msra.mxu0 0.0
      %906 = vmatprep.subr.mxu0 0.0
      %907 = vmatpush1.msra.mxu0 0.0
      %908 = vmatprep.subr.mxu0 0.0
      %909 = vmatpush1.msra.mxu0 0.0
      %910 = vmatprep.subr.mxu0 0.0
      %911 = vmatpush1.msra.mxu0 0.0
      %912 = vmatprep.subr.mxu0 0.0
      %913 = vmatpush1.msra.mxu0 0.0
      %914 = vmatprep.subr.mxu0 0.0
      %915 = vmatpush1.msra.mxu0 0.0
      %916 = vmatprep.subr.mxu0 0.0
      %917 = vmatpush1.msra.mxu0 0.0
      %918 = vmatprep.subr.mxu0 0.0
      %919 = vmatpush1.msra.mxu0 0.0
      %920 = vmatprep.subr.mxu0 0.0
      %921 = vmatpush1.msra.mxu0 0.0
      %922 = vmatprep.subr.mxu0 0.0
      %923 = vmatpush1.msra.mxu0 0.0
      %924 = vmatprep.subr.mxu0 0.0
      %925 = vmatpush1.msra.mxu0 0.0
      %926 = vmatprep.mubr.f32.mxu0 0.0
      %927 = vmatmul.mubr.f32.gmra.mrb[0].mxu0 %v860
      %v928 = vpop.f32.mrb[0].mxu0
      %v929 = vadd.f32 %v856, %v928
      %v930 = vpop.f32.mrb[0].mxu0
      %v931 = vadd.f32 %v856, %v930
      %932 = vdwg.mxu0
      %933 = vmatprep.subr.mxu0 0.0
      %934 = vmatpush1.msra.mxu0 %v850
      %935 = vmatprep.subr.mxu0 0.0
      %936 = vmatpush1.msra.mxu0 0.0
      %937 = vmatprep.subr.mxu0 0.0
      %938 = vmatpush1.msra.mxu0 0.0
      %939 = vmatprep.subr.mxu0 0.0
      %940 = vmatpush1.msra.mxu0 0.0
      %941 = vmatprep.subr.mxu0 0.0
      %942 = vmatpush1.msra.mxu0 0.0
      %943 = vmatprep.subr.mxu0 0.0
      %944 = vmatpush1.msra.mxu0 0.0
      %945 = vmatprep.subr.mxu0 0.0
      %946 = vmatpush1.msra.mxu0 0.0
      %947 = vmatprep.subr.mxu0 0.0
      %948 = vmatpush1.msra.mxu0 0.0
      %949 = vmatprep.subr.mxu0 0.0
      %950 = vmatpush1.msra.mxu0 0.0
      %951 = vmatprep.subr.mxu0 0.0
      %952 = vmatpush1.msra.mxu0 0.0
      %953 = vmatprep.subr.mxu0 0.0
      %954 = vmatpush1.msra.mxu0 0.0
      %955 = vmatprep.subr.mxu0 0.0
      %956 = vmatpush1.msra.mxu0 0.0
      %957 = vmatprep.subr.mxu0 0.0
      %958 = vmatpush1.msra.mxu0 0.0
      %959 = vmatprep.subr.mxu0 0.0
      %960 = vmatpush1.msra.mxu0 0.0
      %961 = vmatprep.subr.mxu0 0.0
      %962 = vmatpush1.msra.mxu0 0.0
      %963 = vmatprep.subr.mxu0 0.0
      %964 = vmatpush1.msra.mxu0 0.0
      %965 = vmatprep.subr.mxu0 0.0
      %966 = vmatpush1.msra.mxu0 0.0
      %967 = vmatprep.subr.mxu0 0.0
      %968 = vmatpush1.msra.mxu0 0.0
      %969 = vmatprep.subr.mxu0 0.0
      %970 = vmatpush1.msra.mxu0 0.0
      %971 = vmatprep.subr.mxu0 0.0
      %972 = vmatpush1.msra.mxu0 0.0
      %973 = vmatprep.subr.mxu0 0.0
      %974 = vmatpush1.msra.mxu0 0.0
      %975 = vmatprep.subr.mxu0 0.0
      %976 = vmatpush1.msra.mxu0 0.0
      %977 = vmatprep.subr.mxu0 0.0
      %978 = vmatpush1.msra.mxu0 0.0
      %979 = vmatprep.subr.mxu0 0.0
      %980 = vmatpush1.msra.mxu0 0.0
      %981 = vmatprep.subr.mxu0 0.0
      %982 = vmatpush1.msra.mxu0 0.0
      %983 = vmatprep.subr.mxu0 0.0
      %984 = vmatpush1.msra.mxu0 0.0
      %985 = vmatprep.subr.mxu0 0.0
      %986 = vmatpush1.msra.mxu0 0.0
      %987 = vmatprep.subr.mxu0 0.0
      %988 = vmatpush1.msra.mxu0 0.0
      %989 = vmatprep.subr.mxu0 0.0
      %990 = vmatpush1.msra.mxu0 0.0
      %991 = vmatprep.subr.mxu0 0.0
      %992 = vmatpush1.msra.mxu0 0.0
      %993 = vmatprep.subr.mxu0 0.0
      %994 = vmatpush1.msra.mxu0 0.0
      %995 = vmatprep.subr.mxu0 0.0
      %996 = vmatpush1.msra.mxu0 0.0
      %997 = vmatprep.mubr.f32.mxu0 0.0
      %998 = vmatmul.mubr.f32.gmra.mrb[0].mxu0 %v860
      %v999 = vpop.f32.mrb[0].mxu0
      %v1000 = vadd.f32 %v856, %v999
      %v1001 = vpop.f32.mrb[0].mxu0
      %1002 = vdwg.mxu0
      %v1003 = vmul.f32 %v929, 0.2
      %v1004 = vmul.f32 %v931, 0.2
      %v1005 = vmul.f32 %v1000, 0.2
      %v1006 = vmax.f32 %v929, %v1003
      %v1007 = vmax.f32 %v931, %v1004
      %v1008 = vmax.f32 %v1000, %v1005
      %v1009 = vld [vmem:[%s1 + $0x30] sm:$0xff]
      %v1010 = vld [vmem:[%s1 + $0x38] sm:$0xff]
      %1012 = vset.pattern.permute.xlu0 0
      %1013 = vperm.xlu0 %1012, %v1009
      %v1014 = vpop.permute.xlu0 %1013
      %v1017 = vlaneseq
      %v1018 = vshrl.u32 %v1017, 7
      %v1019 = vsub.s32 0, %v1018
      %v1020 = vrot.slane %v299, %v1019
      %v1021 = vlaneseq
      %v1022 = vshrl.u32 %v1021, 7
      %v1023 = vsub.s32 1, %v1022
      %v1024 = vrot.slane %v299, %v1023
      %v1025 = vlaneseq
      %v1026 = vshrl.u32 %v1025, 7
      %v1027 = vsub.s32 2, %v1026
      %v1028 = vrot.slane %v299, %v1027
      %v1032 = vmul.f32 %v1014, %v1020
      %v1033 = vmul.f32 %v1014, %v1024
      %v1034 = vmul.f32 %v1014, %v1028
      %1036 = vset.pattern.permute.xlu0 0
      %1037 = vperm.xlu0 %1036, %v1010
      %v1038 = vpop.permute.xlu0 %1037
      %v1040 = vadd.f32 %v1032, %v1038
      %v1041 = vadd.f32 %v1033, %v1038
      %v1042 = vadd.f32 %v1034, %v1038
      %v1043 = vadd.f32 %v1006, %v1040
      %v1044 = vadd.f32 %v1007, %v1041
      %v1045 = vadd.f32 %v1008, %v1042
      %v1046 = vld [vmem:[%s1 + $0x40] sm:$0xf]
      %v1047 = vld [vmem:[%s1 + $0x48] sm:$0xff]
      %v1049 = vsel %vm201, %v1045, 0
      %1051 = vmatprep.subr.mxu0 0.0
      %1052 = vmatpush1.msra.mxu0 %v222
      %1053 = vmatprep.subr.mxu0 0.0
      %1054 = vmatpush1.msra.mxu0 %v223
      %1055 = vmatprep.subr.mxu0 0.0
      %1056 = vmatpush1.msra.mxu0 %v224
      %1057 = vmatprep.subr.mxu0 0.0
      %1058 = vmatpush1.msra.mxu0 %v225
      %1059 = vmatprep.subr.mxu0 0.0
      %1060 = vmatpush1.msra.mxu0 %v226
      %1061 = vmatprep.subr.mxu0 0.0
      %1062 = vmatpush1.msra.mxu0 %v227
      %1063 = vmatprep.subr.mxu0 0.0
      %1064 = vmatpush1.msra.mxu0 %v228
      %1065 = vmatprep.subr.mxu0 0.0
      %1066 = vmatpush1.msra.mxu0 %v229
      %1067 = vmatprep.subr.mxu0 0.0
      %1068 = vmatpush1.msra.mxu0 %v230
      %1069 = vmatprep.subr.mxu0 0.0
      %1070 = vmatpush1.msra.mxu0 %v231
      %1071 = vmatprep.subr.mxu0 0.0
      %1072 = vmatpush1.msra.mxu0 %v232
      %1073 = vmatprep.subr.mxu0 0.0
      %1074 = vmatpush1.msra.mxu0 %v233
      %1075 = vmatprep.subr.mxu0 0.0
      %1076 = vmatpush1.msra.mxu0 %v234
      %1077 = vmatprep.subr.mxu0 0.0
      %1078 = vmatpush1.msra.mxu0 %v235
      %1079 = vmatprep.subr.mxu0 0.0
      %1080 = vmatpush1.msra.mxu0 %v236
      %1081 = vmatprep.subr.mxu0 0.0
      %1082 = vmatpush1.msra.mxu0 %v237
      %1083 = vmatprep.subr.mxu0 0.0
      %1084 = vmatpush1.msra.mxu0 %v238
      %1085 = vmatprep.subr.mxu0 0.0
      %1086 = vmatpush1.msra.mxu0 %v239
      %1087 = vmatprep.subr.mxu0 0.0
      %1088 = vmatpush1.msra.mxu0 %v240
      %1089 = vmatprep.subr.mxu0 0.0
      %1090 = vmatpush1.msra.mxu0 %v241
      %1091 = vmatprep.subr.mxu0 0.0
      %1092 = vmatpush1.msra.mxu0 %v242
      %1093 = vmatprep.subr.mxu0 0.0
      %1094 = vmatpush1.msra.mxu0 %v243
      %1095 = vmatprep.subr.mxu0 0.0
      %1096 = vmatpush1.msra.mxu0 %v244
      %1097 = vmatprep.subr.mxu0 0.0
      %1098 = vmatpush1.msra.mxu0 %v245
      %1099 = vmatprep.subr.mxu0 0.0
      %1100 = vmatpush1.msra.mxu0 %v246
      %1101 = vmatprep.subr.mxu0 0.0
      %1102 = vmatpush1.msra.mxu0 %v247
      %1103 = vmatprep.subr.mxu0 0.0
      %1104 = vmatpush1.msra.mxu0 %v248
      %1105 = vmatprep.subr.mxu0 0.0
      %1106 = vmatpush1.msra.mxu0 %v249
      %1107 = vmatprep.subr.mxu0 0.0
      %1108 = vmatpush1.msra.mxu0 %v250
      %1109 = vmatprep.subr.mxu0 0.0
      %1110 = vmatpush1.msra.mxu0 %v251
      %1111 = vmatprep.subr.mxu0 0.0
      %1112 = vmatpush1.msra.mxu0 %v252
      %1113 = vmatprep.subr.mxu0 0.0
      %1114 = vmatpush1.msra.mxu0 %v253
      %1115 = vmatprep.mubr.f32.mxu0 %v1044
      %1116 = vmatmul.mubr.f32.gmra.mrb[0].mxu0 %v1043
      %v1117 = vpop.f32.mrb[0].mxu0
      %v1118 = vadd.f32 0.0, %v1117
      %v1119 = vpop.f32.mrb[0].mxu0
      %1120 = vdwg.mxu0
      %1121 = vmatprep.subr.mxu0 0.0
      %1122 = vmatpush1.msra.mxu0 %v254
      %1123 = vmatprep.subr.mxu0 0.0
      %1124 = vmatpush1.msra.mxu0 %v255
      %1125 = vmatprep.subr.mxu0 0.0
      %1126 = vmatpush1.msra.mxu0 %v256
      %1127 = vmatprep.subr.mxu0 0.0
      %1128 = vmatpush1.msra.mxu0 %v257
      %1129 = vmatprep.subr.mxu0 0.0
      %1130 = vmatpush1.msra.mxu0 %v258
      %1131 = vmatprep.subr.mxu0 0.0
      %1132 = vmatpush1.msra.mxu0 %v259
      %1133 = vmatprep.subr.mxu0 0.0
      %1134 = vmatpush1.msra.mxu0 0.0
      %1135 = vmatprep.subr.mxu0 0.0
      %1136 = vmatpush1.msra.mxu0 0.0
      %1137 = vmatprep.subr.mxu0 0.0
      %1138 = vmatpush1.msra.mxu0 0.0
      %1139 = vmatprep.subr.mxu0 0.0
      %1140 = vmatpush1.msra.mxu0 0.0
      %1141 = vmatprep.subr.mxu0 0.0
      %1142 = vmatpush1.msra.mxu0 0.0
      %1143 = vmatprep.subr.mxu0 0.0
      %1144 = vmatpush1.msra.mxu0 0.0
      %1145 = vmatprep.subr.mxu0 0.0
      %1146 = vmatpush1.msra.mxu0 0.0
      %1147 = vmatprep.subr.mxu0 0.0
      %1148 = vmatpush1.msra.mxu0 0.0
      %1149 = vmatprep.subr.mxu0 0.0
      %1150 = vmatpush1.msra.mxu0 0.0
      %1151 = vmatprep.subr.mxu0 0.0
      %1152 = vmatpush1.msra.mxu0 0.0
      %1153 = vmatprep.subr.mxu0 0.0
      %1154 = vmatpush1.msra.mxu0 0.0
      %1155 = vmatprep.subr.mxu0 0.0
      %1156 = vmatpush1.msra.mxu0 0.0
      %1157 = vmatprep.subr.mxu0 0.0
      %1158 = vmatpush1.msra.mxu0 0.0
      %1159 = vmatprep.subr.mxu0 0.0
      %1160 = vmatpush1.msra.mxu0 0.0
      %1161 = vmatprep.subr.mxu0 0.0
      %1162 = vmatpush1.msra.mxu0 0.0
      %1163 = vmatprep.subr.mxu0 0.0
      %1164 = vmatpush1.msra.mxu0 0.0
      %1165 = vmatprep.subr.mxu0 0.0
      %1166 = vmatpush1.msra.mxu0 0.0
      %1167 = vmatprep.subr.mxu0 0.0
      %1168 = vmatpush1.msra.mxu0 0.0
      %1169 = vmatprep.subr.mxu0 0.0
      %1170 = vmatpush1.msra.mxu0 0.0
      %1171 = vmatprep.subr.mxu0 0.0
      %1172 = vmatpush1.msra.mxu0 0.0
      %1173 = vmatprep.subr.mxu0 0.0
      %1174 = vmatpush1.msra.mxu0 0.0
      %1175 = vmatprep.subr.mxu0 0.0
      %1176 = vmatpush1.msra.mxu0 0.0
      %1177 = vmatprep.subr.mxu0 0.0
      %1178 = vmatpush1.msra.mxu0 0.0
      %1179 = vmatprep.subr.mxu0 0.0
      %1180 = vmatpush1.msra.mxu0 0.0
      %1181 = vmatprep.subr.mxu0 0.0
      %1182 = vmatpush1.msra.mxu0 0.0
      %1183 = vmatprep.subr.mxu0 0.0
      %1184 = vmatpush1.msra.mxu0 0.0
      %1185 = vmatprep.mubr.f32.mxu0 0.0
      %1186 = vmatmul.mubr.f32.gmra.mrb[0].mxu0 %v1049
      %v1187 = vpop.f32.mrb[0].mxu0
      %v1188 = vadd.f32 %v1118, %v1187
      %v1189 = vpop.f32.mrb[0].mxu0
      %1190 = vdwg.mxu0
      %1191 = vst [vmem:[#allocation2 + $0x8] sm:$0xff] %v1043
      %1192 = vst [vmem:[#allocation2 + $0x10] sm:$0xff] %v1044
      %1193 = vst.msk [vmem:[#allocation2 + $0x18] sm:$0xff] %vm201, %v1045
      %v1194 = vld [vmem:[#allocation2 + $0x8] sm:$0xff]
      %v1195 = vld [vmem:[#allocation2 + $0x10] sm:$0xff]
      %v1196 = vld [vmem:[#allocation2 + $0x18] sm:$0xff]
      %1200 = vrot.lane.b32.xlu0 %v1194, 127
      %v1201 = vpop.permute.xlu0 %1200
      %1202 = vrot.lane.b32.xlu0 %v1195, 127
      %v1203 = vpop.permute.xlu0 %1202
      %1204 = vrot.lane.b32.xlu0 %v1196, 127
      %v1205 = vpop.permute.xlu0 %1204
      %v1206 = vsel %vm505, %v1201, %v1203
      %v1207 = vsel %vm505, %v1203, %v1205
      %v1211 = vmax.f32 %v1043, %v1206
      %v1212 = vmax.f32 %v1044, %v1207
      %v1213 = vmax.f32 %v1045, %v1205
      %1214 = vst [vmem:[#allocation2 + $0x8] sm:$0xff] %v1211
      %1215 = vst [vmem:[#allocation2 + $0x10] sm:$0xff] %v1212
      %1216 = vst.msk [vmem:[#allocation2 + $0x18] sm:$0xff] %vm201, %v1213
      %v1217 = vld [vmem:[#allocation2 + $0x8] sm:$0xff]
      %v1218 = vld [vmem:[#allocation2 + $0x10] sm:$0xff]
      %v1219 = vld [vmem:[#allocation2 + $0x18] sm:$0xff]
      %1223 = vrot.lane.b32.xlu0 %v1217, 126
      %v1224 = vpop.permute.xlu0 %1223
      %1225 = vrot.lane.b32.xlu0 %v1218, 126
      %v1226 = vpop.permute.xlu0 %1225
      %1227 = vrot.lane.b32.xlu0 %v1219, 126
      %v1228 = vpop.permute.xlu0 %1227
      %vm1229 = vcmask 1031168
      %v1230 = vsel %vm1229, %v1224, %v1226
      %v1231 = vsel %vm1229, %v1226, %v1228
      %v1235 = vmax.f32 %v1211, %v1230
      %v1236 = vmax.f32 %v1212, %v1231
      %v1237 = vmax.f32 %v1213, %v1228
      %1238 = vst [vmem:[#allocation2 + $0x8] sm:$0xff] %v1235
      %1239 = vst [vmem:[#allocation2 + $0x10] sm:$0xff] %v1236
      %1240 = vst.msk [vmem:[#allocation2 + $0x18] sm:$0xff] %vm201, %v1237
      %v1241 = vld [vmem:[#allocation2 + $0x8] sm:$0xff]
      %v1242 = vld [vmem:[#allocation2 + $0x10] sm:$0xff]
      %v1243 = vld [vmem:[#allocation2 + $0x18] sm:$0xff]
      %1247 = vrot.lane.b32.xlu0 %v1241, 124
      %v1248 = vpop.permute.xlu0 %1247
      %1249 = vrot.lane.b32.xlu0 %v1242, 124
      %v1250 = vpop.permute.xlu0 %1249
      %1251 = vrot.lane.b32.xlu0 %v1243, 124
      %v1252 = vpop.permute.xlu0 %1251
      %vm1253 = vcmask 1014784
      %v1254 = vsel %vm1253, %v1248, %v1250
      %v1255 = vsel %vm1253, %v1250, %v1252
      %v1259 = vmax.f32 %v1235, %v1254
      %v1260 = vmax.f32 %v1236, %v1255
      %v1261 = vmax.f32 %v1237, %v1252
      %1262 = vst [vmem:[#allocation2 + $0x8] sm:$0xff] %v1259
      %1263 = vst [vmem:[#allocation2 + $0x10] sm:$0xff] %v1260
      %1264 = vst.msk [vmem:[#allocation2 + $0x18] sm:$0xff] %vm201, %v1261
      %v1265 = vld [vmem:[#allocation2 + $0x8] sm:$0xff]
      %v1266 = vld [vmem:[#allocation2 + $0x10] sm:$0xff]
      %v1267 = vld [vmem:[#allocation2 + $0x18] sm:$0xff]
      %1271 = vrot.lane.b32.xlu0 %v1265, 120
      %v1272 = vpop.permute.xlu0 %1271
      %1273 = vrot.lane.b32.xlu0 %v1266, 120
      %v1274 = vpop.permute.xlu0 %1273
      %1275 = vrot.lane.b32.xlu0 %v1267, 120
      %v1276 = vpop.permute.xlu0 %1275
      %vm1277 = vcmask 982016
      %v1278 = vsel %vm1277, %v1272, %v1274
      %v1279 = vsel %vm1277, %v1274, %v1276
      %v1283 = vmax.f32 %v1259, %v1278
      %v1284 = vmax.f32 %v1260, %v1279
      %v1285 = vmax.f32 %v1261, %v1276
      %v1287 = vsel %vm201, %v1285, 0
      %1289 = vmatprep.subr.mxu0 0.0
      %1290 = vmatpush1.msra.mxu0 %v261
      %1291 = vmatprep.subr.mxu0 0.0
      %1292 = vmatpush1.msra.mxu0 %v262
      %1293 = vmatprep.subr.mxu0 0.0
      %1294 = vmatpush1.msra.mxu0 %v263
      %1295 = vmatprep.subr.mxu0 0.0
      %1296 = vmatpush1.msra.mxu0 %v264
      %1297 = vmatprep.subr.mxu0 0.0
      %1298 = vmatpush1.msra.mxu0 %v265
      %1299 = vmatprep.subr.mxu0 0.0
      %1300 = vmatpush1.msra.mxu0 %v266
      %1301 = vmatprep.subr.mxu0 0.0
      %1302 = vmatpush1.msra.mxu0 %v267
      %1303 = vmatprep.subr.mxu0 0.0
      %1304 = vmatpush1.msra.mxu0 %v268
      %1305 = vmatprep.subr.mxu0 0.0
      %1306 = vmatpush1.msra.mxu0 %v269
      %1307 = vmatprep.subr.mxu0 0.0
      %1308 = vmatpush1.msra.mxu0 %v270
      %1309 = vmatprep.subr.mxu0 0.0
      %1310 = vmatpush1.msra.mxu0 %v271
      %1311 = vmatprep.subr.mxu0 0.0
      %1312 = vmatpush1.msra.mxu0 %v272
      %1313 = vmatprep.subr.mxu0 0.0
      %1314 = vmatpush1.msra.mxu0 %v273
      %1315 = vmatprep.subr.mxu0 0.0
      %1316 = vmatpush1.msra.mxu0 %v274
      %1317 = vmatprep.subr.mxu0 0.0
      %1318 = vmatpush1.msra.mxu0 %v275
      %1319 = vmatprep.subr.mxu0 0.0
      %1320 = vmatpush1.msra.mxu0 %v276
      %1321 = vmatprep.subr.mxu0 0.0
      %1322 = vmatpush1.msra.mxu0 %v277
      %1323 = vmatprep.subr.mxu0 0.0
      %1324 = vmatpush1.msra.mxu0 %v278
      %1325 = vmatprep.subr.mxu0 0.0
      %1326 = vmatpush1.msra.mxu0 %v279
      %1327 = vmatprep.subr.mxu0 0.0
      %1328 = vmatpush1.msra.mxu0 %v280
      %1329 = vmatprep.subr.mxu0 0.0
      %1330 = vmatpush1.msra.mxu0 %v281
      %1331 = vmatprep.subr.mxu0 0.0
      %1332 = vmatpush1.msra.mxu0 %v282
      %1333 = vmatprep.subr.mxu0 0.0
      %1334 = vmatpush1.msra.mxu0 %v283
      %1335 = vmatprep.subr.mxu0 0.0
      %1336 = vmatpush1.msra.mxu0 %v284
      %1337 = vmatprep.subr.mxu0 0.0
      %1338 = vmatpush1.msra.mxu0 %v285
      %1339 = vmatprep.subr.mxu0 0.0
      %1340 = vmatpush1.msra.mxu0 %v286
      %1341 = vmatprep.subr.mxu0 0.0
      %1342 = vmatpush1.msra.mxu0 %v287
      %1343 = vmatprep.subr.mxu0 0.0
      %1344 = vmatpush1.msra.mxu0 %v288
      %1345 = vmatprep.subr.mxu0 0.0
      %1346 = vmatpush1.msra.mxu0 %v289
      %1347 = vmatprep.subr.mxu0 0.0
      %1348 = vmatpush1.msra.mxu0 %v290
      %1349 = vmatprep.subr.mxu0 0.0
      %1350 = vmatpush1.msra.mxu0 %v291
      %1351 = vmatprep.subr.mxu0 0.0
      %1352 = vmatpush1.msra.mxu0 %v292
      %1353 = vmatprep.mubr.f32.mxu0 %v1284
      %1354 = vmatmul.mubr.f32.gmra.mrb[0].mxu0 %v1283
      %v1355 = vpop.f32.mrb[0].mxu0
      %v1356 = vadd.f32 0.0, %v1355
      %v1357 = vpop.f32.mrb[0].mxu0
      %1358 = vdwg.mxu0
      %1359 = vmatprep.subr.mxu0 0.0
      %1360 = vmatpush1.msra.mxu0 %v293
      %1361 = vmatprep.subr.mxu0 0.0
      %1362 = vmatpush1.msra.mxu0 %v294
      %1363 = vmatprep.subr.mxu0 0.0
      %1364 = vmatpush1.msra.mxu0 %v295
      %1365 = vmatprep.subr.mxu0 0.0
      %1366 = vmatpush1.msra.mxu0 %v296
      %1367 = vmatprep.subr.mxu0 0.0
      %1368 = vmatpush1.msra.mxu0 %v297
      %1369 = vmatprep.subr.mxu0 0.0
      %1370 = vmatpush1.msra.mxu0 %v298
      %1371 = vmatprep.subr.mxu0 0.0
      %1372 = vmatpush1.msra.mxu0 0.0
      %1373 = vmatprep.subr.mxu0 0.0
      %1374 = vmatpush1.msra.mxu0 0.0
      %1375 = vmatprep.subr.mxu0 0.0
      %1376 = vmatpush1.msra.mxu0 0.0
      %1377 = vmatprep.subr.mxu0 0.0
      %1378 = vmatpush1.msra.mxu0 0.0
      %1379 = vmatprep.subr.mxu0 0.0
      %1380 = vmatpush1.msra.mxu0 0.0
      %1381 = vmatprep.subr.mxu0 0.0
      %1382 = vmatpush1.msra.mxu0 0.0
      %1383 = vmatprep.subr.mxu0 0.0
      %1384 = vmatpush1.msra.mxu0 0.0
      %1385 = vmatprep.subr.mxu0 0.0
      %1386 = vmatpush1.msra.mxu0 0.0
      %1387 = vmatprep.subr.mxu0 0.0
      %1388 = vmatpush1.msra.mxu0 0.0
      %1389 = vmatprep.subr.mxu0 0.0
      %1390 = vmatpush1.msra.mxu0 0.0
      %1391 = vmatprep.subr.mxu0 0.0
      %1392 = vmatpush1.msra.mxu0 0.0
      %1393 = vmatprep.subr.mxu0 0.0
      %1394 = vmatpush1.msra.mxu0 0.0
      %1395 = vmatprep.subr.mxu0 0.0
      %1396 = vmatpush1.msra.mxu0 0.0
      %1397 = vmatprep.subr.mxu0 0.0
      %1398 = vmatpush1.msra.mxu0 0.0
      %1399 = vmatprep.subr.mxu0 0.0
      %1400 = vmatpush1.msra.mxu0 0.0
      %1401 = vmatprep.subr.mxu0 0.0
      %1402 = vmatpush1.msra.mxu0 0.0
      %1403 = vmatprep.subr.mxu0 0.0
      %1404 = vmatpush1.msra.mxu0 0.0
      %1405 = vmatprep.subr.mxu0 0.0
      %1406 = vmatpush1.msra.mxu0 0.0
      %1407 = vmatprep.subr.mxu0 0.0
      %1408 = vmatpush1.msra.mxu0 0.0
      %1409 = vmatprep.subr.mxu0 0.0
      %1410 = vmatpush1.msra.mxu0 0.0
      %1411 = vmatprep.subr.mxu0 0.0
      %1412 = vmatpush1.msra.mxu0 0.0
      %1413 = vmatprep.subr.mxu0 0.0
      %1414 = vmatpush1.msra.mxu0 0.0
      %1415 = vmatprep.subr.mxu0 0.0
      %1416 = vmatpush1.msra.mxu0 0.0
      %1417 = vmatprep.subr.mxu0 0.0
      %1418 = vmatpush1.msra.mxu0 0.0
      %1419 = vmatprep.subr.mxu0 0.0
      %1420 = vmatpush1.msra.mxu0 0.0
      %1421 = vmatprep.subr.mxu0 0.0
      %1422 = vmatpush1.msra.mxu0 0.0
      %1423 = vmatprep.mubr.f32.mxu0 0.0
      %1424 = vmatmul.mubr.f32.gmra.mrb[0].mxu0 %v1287
      %v1425 = vpop.f32.mrb[0].mxu0
      %v1426 = vadd.f32 %v1356, %v1425
      %v1427 = vpop.f32.mrb[0].mxu0
      %1428 = vdwg.mxu0
      %v1430 = vsel %vm858, %v1046, 0
      %1432 = vmatprep.subr.mxu0 0.0
      %1433 = vmatpush1.msra.mxu0 %v1188
      %1434 = vmatprep.subr.mxu0 0.0
      %1435 = vmatpush1.msra.mxu0 0.0
      %1436 = vmatprep.subr.mxu0 0.0
      %1437 = vmatpush1.msra.mxu0 0.0
      %1438 = vmatprep.subr.mxu0 0.0
      %1439 = vmatpush1.msra.mxu0 0.0
      %1440 = vmatprep.subr.mxu0 0.0
      %1441 = vmatpush1.msra.mxu0 0.0
      %1442 = vmatprep.subr.mxu0 0.0
      %1443 = vmatpush1.msra.mxu0 0.0
      %1444 = vmatprep.subr.mxu0 0.0
      %1445 = vmatpush1.msra.mxu0 0.0
      %1446 = vmatprep.subr.mxu0 0.0
      %1447 = vmatpush1.msra.mxu0 0.0
      %1448 = vmatprep.subr.mxu0 0.0
      %1449 = vmatpush1.msra.mxu0 0.0
      %1450 = vmatprep.subr.mxu0 0.0
      %1451 = vmatpush1.msra.mxu0 0.0
      %1452 = vmatprep.subr.mxu0 0.0
      %1453 = vmatpush1.msra.mxu0 0.0
      %1454 = vmatprep.subr.mxu0 0.0
      %1455 = vmatpush1.msra.mxu0 0.0
      %1456 = vmatprep.subr.mxu0 0.0
      %1457 = vmatpush1.msra.mxu0 0.0
      %1458 = vmatprep.subr.mxu0 0.0
      %1459 = vmatpush1.msra.mxu0 0.0
      %1460 = vmatprep.subr.mxu0 0.0
      %1461 = vmatpush1.msra.mxu0 0.0
      %1462 = vmatprep.subr.mxu0 0.0
      %1463 = vmatpush1.msra.mxu0 0.0
      %1464 = vmatprep.subr.mxu0 0.0
      %1465 = vmatpush1.msra.mxu0 0.0
      %1466 = vmatprep.subr.mxu0 0.0
      %1467 = vmatpush1.msra.mxu0 0.0
      %1468 = vmatprep.subr.mxu0 0.0
      %1469 = vmatpush1.msra.mxu0 0.0
      %1470 = vmatprep.subr.mxu0 0.0
      %1471 = vmatpush1.msra.mxu0 0.0
      %1472 = vmatprep.subr.mxu0 0.0
      %1473 = vmatpush1.msra.mxu0 0.0
      %1474 = vmatprep.subr.mxu0 0.0
      %1475 = vmatpush1.msra.mxu0 0.0
      %1476 = vmatprep.subr.mxu0 0.0
      %1477 = vmatpush1.msra.mxu0 0.0
      %1478 = vmatprep.subr.mxu0 0.0
      %1479 = vmatpush1.msra.mxu0 0.0
      %1480 = vmatprep.subr.mxu0 0.0
      %1481 = vmatpush1.msra.mxu0 0.0
      %1482 = vmatprep.subr.mxu0 0.0
      %1483 = vmatpush1.msra.mxu0 0.0
      %1484 = vmatprep.subr.mxu0 0.0
      %1485 = vmatpush1.msra.mxu0 0.0
      %1486 = vmatprep.subr.mxu0 0.0
      %1487 = vmatpush1.msra.mxu0 0.0
      %1488 = vmatprep.subr.mxu0 0.0
      %1489 = vmatpush1.msra.mxu0 0.0
      %1490 = vmatprep.subr.mxu0 0.0
      %1491 = vmatpush1.msra.mxu0 0.0
      %1492 = vmatprep.subr.mxu0 0.0
      %1493 = vmatpush1.msra.mxu0 0.0
      %1494 = vmatprep.subr.mxu0 0.0
      %1495 = vmatpush1.msra.mxu0 0.0
      %1496 = vmatprep.mubr.f32.mxu0 0.0
      %1497 = vmatmul.mubr.f32.gmra.mrb[0].mxu0 %v1430
      %v1498 = vpop.f32.mrb[0].mxu0
      %v1499 = vadd.f32 0.0, %v1498
      %v1500 = vpop.f32.mrb[0].mxu0
      %1501 = vdwg.mxu0
      %v1502 = vmax.f32 %v1499, 0.0
      %1503 = vmatprep.subr.mxu0 0.0
      %1504 = vmatpush1.msra.mxu0 %v1426
      %1505 = vmatprep.subr.mxu0 0.0
      %1506 = vmatpush1.msra.mxu0 0.0
      %1507 = vmatprep.subr.mxu0 0.0
      %1508 = vmatpush1.msra.mxu0 0.0
      %1509 = vmatprep.subr.mxu0 0.0
      %1510 = vmatpush1.msra.mxu0 0.0
      %1511 = vmatprep.subr.mxu0 0.0
      %1512 = vmatpush1.msra.mxu0 0.0
      %1513 = vmatprep.subr.mxu0 0.0
      %1514 = vmatpush1.msra.mxu0 0.0
      %1515 = vmatprep.subr.mxu0 0.0
      %1516 = vmatpush1.msra.mxu0 0.0
      %1517 = vmatprep.subr.mxu0 0.0
      %1518 = vmatpush1.msra.mxu0 0.0
      %1519 = vmatprep.subr.mxu0 0.0
      %1520 = vmatpush1.msra.mxu0 0.0
      %1521 = vmatprep.subr.mxu0 0.0
      %1522 = vmatpush1.msra.mxu0 0.0
      %1523 = vmatprep.subr.mxu0 0.0
      %1524 = vmatpush1.msra.mxu0 0.0
      %1525 = vmatprep.subr.mxu0 0.0
      %1526 = vmatpush1.msra.mxu0 0.0
      %1527 = vmatprep.subr.mxu0 0.0
      %1528 = vmatpush1.msra.mxu0 0.0
      %1529 = vmatprep.subr.mxu0 0.0
      %1530 = vmatpush1.msra.mxu0 0.0
      %1531 = vmatprep.subr.mxu0 0.0
      %1532 = vmatpush1.msra.mxu0 0.0
      %1533 = vmatprep.subr.mxu0 0.0
      %1534 = vmatpush1.msra.mxu0 0.0
      %1535 = vmatprep.subr.mxu0 0.0
      %1536 = vmatpush1.msra.mxu0 0.0
      %1537 = vmatprep.subr.mxu0 0.0
      %1538 = vmatpush1.msra.mxu0 0.0
      %1539 = vmatprep.subr.mxu0 0.0
      %1540 = vmatpush1.msra.mxu0 0.0
      %1541 = vmatprep.subr.mxu0 0.0
      %1542 = vmatpush1.msra.mxu0 0.0
      %1543 = vmatprep.subr.mxu0 0.0
      %1544 = vmatpush1.msra.mxu0 0.0
      %1545 = vmatprep.subr.mxu0 0.0
      %1546 = vmatpush1.msra.mxu0 0.0
      %1547 = vmatprep.subr.mxu0 0.0
      %1548 = vmatpush1.msra.mxu0 0.0
      %1549 = vmatprep.subr.mxu0 0.0
      %1550 = vmatpush1.msra.mxu0 0.0
      %1551 = vmatprep.subr.mxu0 0.0
      %1552 = vmatpush1.msra.mxu0 0.0
      %1553 = vmatprep.subr.mxu0 0.0
      %1554 = vmatpush1.msra.mxu0 0.0
      %1555 = vmatprep.subr.mxu0 0.0
      %1556 = vmatpush1.msra.mxu0 0.0
      %1557 = vmatprep.subr.mxu0 0.0
      %1558 = vmatpush1.msra.mxu0 0.0
      %1559 = vmatprep.subr.mxu0 0.0
      %1560 = vmatpush1.msra.mxu0 0.0
      %1561 = vmatprep.subr.mxu0 0.0
      %1562 = vmatpush1.msra.mxu0 0.0
      %1563 = vmatprep.subr.mxu0 0.0
      %1564 = vmatpush1.msra.mxu0 0.0
      %1565 = vmatprep.subr.mxu0 0.0
      %1566 = vmatpush1.msra.mxu0 0.0
      %1567 = vmatprep.mubr.f32.mxu0 0.0
      %1568 = vmatmul.mubr.f32.gmra.mrb[0].mxu0 %v1430
      %v1569 = vpop.f32.mrb[0].mxu0
      %v1570 = vadd.f32 0.0, %v1569
      %v1571 = vpop.f32.mrb[0].mxu0
      %1572 = vdwg.mxu0
      %v1573 = vmax.f32 %v1570, 0.0
      %vm1574 = vcmask 31744
      %v1576 = vsel %vm1574, %v1047, 0
      %vm1578 = vcmask 1043456
      %v1580 = vsel %vm1578, %v1573, 0
      %1582 = vmatprep.subr.mxu0 0.0
      %1583 = vmatpush1.msra.mxu0 %v1580
      %1584 = vmatprep.subr.mxu0 0.0
      %1585 = vmatpush1.msra.mxu0 0.0
      %1586 = vmatprep.subr.mxu0 0.0
      %1587 = vmatpush1.msra.mxu0 0.0
      %1588 = vmatprep.subr.mxu0 0.0
      %1589 = vmatpush1.msra.mxu0 0.0
      %1590 = vmatprep.subr.mxu0 0.0
      %1591 = vmatpush1.msra.mxu0 0.0
      %1592 = vmatprep.subr.mxu0 0.0
      %1593 = vmatpush1.msra.mxu0 0.0
      %1594 = vmatprep.subr.mxu0 0.0
      %1595 = vmatpush1.msra.mxu0 0.0
      %1596 = vmatprep.subr.mxu0 0.0
      %1597 = vmatpush1.msra.mxu0 0.0
      %1598 = vmatprep.subr.mxu0 0.0
      %1599 = vmatpush1.msra.mxu0 0.0
      %1600 = vmatprep.subr.mxu0 0.0
      %1601 = vmatpush1.msra.mxu0 0.0
      %1602 = vmatprep.subr.mxu0 0.0
      %1603 = vmatpush1.msra.mxu0 0.0
      %1604 = vmatprep.subr.mxu0 0.0
      %1605 = vmatpush1.msra.mxu0 0.0
      %1606 = vmatprep.subr.mxu0 0.0
      %1607 = vmatpush1.msra.mxu0 0.0
      %1608 = vmatprep.subr.mxu0 0.0
      %1609 = vmatpush1.msra.mxu0 0.0
      %1610 = vmatprep.subr.mxu0 0.0
      %1611 = vmatpush1.msra.mxu0 0.0
      %1612 = vmatprep.subr.mxu0 0.0
      %1613 = vmatpush1.msra.mxu0 0.0
      %1614 = vmatprep.subr.mxu0 0.0
      %1615 = vmatpush1.msra.mxu0 0.0
      %1616 = vmatprep.subr.mxu0 0.0
      %1617 = vmatpush1.msra.mxu0 0.0
      %1618 = vmatprep.subr.mxu0 0.0
      %1619 = vmatpush1.msra.mxu0 0.0
      %1620 = vmatprep.subr.mxu0 0.0
      %1621 = vmatpush1.msra.mxu0 0.0
      %1622 = vmatprep.subr.mxu0 0.0
      %1623 = vmatpush1.msra.mxu0 0.0
      %1624 = vmatprep.subr.mxu0 0.0
      %1625 = vmatpush1.msra.mxu0 0.0
      %1626 = vmatprep.subr.mxu0 0.0
      %1627 = vmatpush1.msra.mxu0 0.0
      %1628 = vmatprep.subr.mxu0 0.0
      %1629 = vmatpush1.msra.mxu0 0.0
      %1630 = vmatprep.subr.mxu0 0.0
      %1631 = vmatpush1.msra.mxu0 0.0
      %1632 = vmatprep.subr.mxu0 0.0
      %1633 = vmatpush1.msra.mxu0 0.0
      %1634 = vmatprep.subr.mxu0 0.0
      %1635 = vmatpush1.msra.mxu0 0.0
      %1636 = vmatprep.subr.mxu0 0.0
      %1637 = vmatpush1.msra.mxu0 0.0
      %1638 = vmatprep.subr.mxu0 0.0
      %1639 = vmatpush1.msra.mxu0 0.0
      %1640 = vmatprep.subr.mxu0 0.0
      %1641 = vmatpush1.msra.mxu0 0.0
      %1642 = vmatprep.subr.mxu0 0.0
      %1643 = vmatpush1.msra.mxu0 0.0
      %1644 = vmatprep.subr.mxu0 0.0
      %1645 = vmatpush1.msra.mxu0 0.0
      %1646 = vmatprep.mubr.f32.mxu0 0.0
      %1647 = vmatmul.mubr.f32.gmra.mrb[0].mxu0 %v1576
      %v1648 = vpop.f32.mrb[0].mxu0
      %v1649 = vadd.f32 0.0, %v1648
      %v1650 = vpop.f32.mrb[0].mxu0
      %1651 = vdwg.mxu0
      %v1653 = vsel %vm1578, %v1502, 0
      %1655 = vmatprep.subr.mxu0 0.0
      %1656 = vmatpush1.msra.mxu0 %v1653
      %1657 = vmatprep.subr.mxu0 0.0
      %1658 = vmatpush1.msra.mxu0 0.0
      %1659 = vmatprep.subr.mxu0 0.0
      %1660 = vmatpush1.msra.mxu0 0.0
      %1661 = vmatprep.subr.mxu0 0.0
      %1662 = vmatpush1.msra.mxu0 0.0
      %1663 = vmatprep.subr.mxu0 0.0
      %1664 = vmatpush1.msra.mxu0 0.0
      %1665 = vmatprep.subr.mxu0 0.0
      %1666 = vmatpush1.msra.mxu0 0.0
      %1667 = vmatprep.subr.mxu0 0.0
      %1668 = vmatpush1.msra.mxu0 0.0
      %1669 = vmatprep.subr.mxu0 0.0
      %1670 = vmatpush1.msra.mxu0 0.0
      %1671 = vmatprep.subr.mxu0 0.0
      %1672 = vmatpush1.msra.mxu0 0.0
      %1673 = vmatprep.subr.mxu0 0.0
      %1674 = vmatpush1.msra.mxu0 0.0
      %1675 = vmatprep.subr.mxu0 0.0
      %1676 = vmatpush1.msra.mxu0 0.0
      %1677 = vmatprep.subr.mxu0 0.0
      %1678 = vmatpush1.msra.mxu0 0.0
      %1679 = vmatprep.subr.mxu0 0.0
      %1680 = vmatpush1.msra.mxu0 0.0
      %1681 = vmatprep.subr.mxu0 0.0
      %1682 = vmatpush1.msra.mxu0 0.0
      %1683 = vmatprep.subr.mxu0 0.0
      %1684 = vmatpush1.msra.mxu0 0.0
      %1685 = vmatprep.subr.mxu0 0.0
      %1686 = vmatpush1.msra.mxu0 0.0
      %1687 = vmatprep.subr.mxu0 0.0
      %1688 = vmatpush1.msra.mxu0 0.0
      %1689 = vmatprep.subr.mxu0 0.0
      %1690 = vmatpush1.msra.mxu0 0.0
      %1691 = vmatprep.subr.mxu0 0.0
      %1692 = vmatpush1.msra.mxu0 0.0
      %1693 = vmatprep.subr.mxu0 0.0
      %1694 = vmatpush1.msra.mxu0 0.0
      %1695 = vmatprep.subr.mxu0 0.0
      %1696 = vmatpush1.msra.mxu0 0.0
      %1697 = vmatprep.subr.mxu0 0.0
      %1698 = vmatpush1.msra.mxu0 0.0
      %1699 = vmatprep.subr.mxu0 0.0
      %1700 = vmatpush1.msra.mxu0 0.0
      %1701 = vmatprep.subr.mxu0 0.0
      %1702 = vmatpush1.msra.mxu0 0.0
      %1703 = vmatprep.subr.mxu0 0.0
      %1704 = vmatpush1.msra.mxu0 0.0
      %1705 = vmatprep.subr.mxu0 0.0
      %1706 = vmatpush1.msra.mxu0 0.0
      %1707 = vmatprep.subr.mxu0 0.0
      %1708 = vmatpush1.msra.mxu0 0.0
      %1709 = vmatprep.subr.mxu0 0.0
      %1710 = vmatpush1.msra.mxu0 0.0
      %1711 = vmatprep.subr.mxu0 0.0
      %1712 = vmatpush1.msra.mxu0 0.0
      %1713 = vmatprep.subr.mxu0 0.0
      %1714 = vmatpush1.msra.mxu0 0.0
      %1715 = vmatprep.subr.mxu0 0.0
      %1716 = vmatpush1.msra.mxu0 0.0
      %1717 = vmatprep.subr.mxu0 0.0
      %1718 = vmatpush1.msra.mxu0 0.0
      %1719 = vmatprep.mubr.f32.mxu0 0.0
      %1720 = vmatmul.mubr.f32.gmra.mrb[0].mxu0 %v1576
      %v1721 = vpop.f32.mrb[0].mxu0
      %v1722 = vadd.f32 %v1649, %v1721
      %v1723 = vpop.f32.mrb[0].mxu0
      %1724 = vdwg.mxu0
      %v1725 = vsub.f32 0.0, %v1722
      %v1726 = vmul.f32 %v1725, 1.442695
      %v1727 = vpow.pop %v1726
      %v1728 = vadd.f32 %v1727, 1.0
      %v1729 = vrcp.pop %v1728
      %v1730 = vmul.f32 1.0, %v1729
      %vm1731 = vcmask 154624
      %v1732 = vsel %vm1731, %v1730, 0.0
      %v1733 = vrot.slane %v1732, 4
      %v1734 = vadd.f32 %v1732, %v1733
      %v1735 = vrot.slane %v1734, 2
      %v1736 = vadd.f32 %v1734, %v1735
      %v1737 = vrot.slane %v1736, 1
      %v1738 = vadd.f32 %v1736, %v1737
      %v1739 = vrcp.pop 8.0
      %v1740 = vmul.f32 %v1738, %v1739
      %v1742 = vsel %vm1731, %v1740, 0
      %vm1744 = vcmask 1042432
      %v1746 = vsel %vm1744, %v215, 0
      %v1749 = vsel %vm1744, %v216, 0
      %v1752 = vsel %vm1744, %v217, 0
      %1754 = vmatprep.subr.mxu0 %v210
      %1755 = vmatpush1.msra.mxu0 %v209
      %1756 = vmatprep.subr.mxu0 %v213
      %1757 = vmatpush1.msra.mxu0 %v212
      %1758 = vmatprep.subr.mxu0 %v1749
      %1759 = vmatpush1.msra.mxu0 %v1746
      %1760 = vmatprep.subr.mxu0 0.0
      %1761 = vmatpush1.msra.mxu0 0.0
      %1762 = vmatprep.subr.mxu0 0.0
      %1763 = vmatpush1.msra.mxu0 0.0
      %1764 = vmatprep.subr.mxu0 0.0
      %1765 = vmatpush1.msra.mxu0 0.0
      %1766 = vmatprep.subr.mxu0 0.0
      %1767 = vmatpush1.msra.mxu0 0.0
      %1768 = vmatprep.subr.mxu0 0.0
      %1769 = vmatpush1.msra.mxu0 0.0
      %1770 = vmatprep.subr.mxu0 0.0
      %1771 = vmatpush1.msra.mxu0 0.0
      %1772 = vmatprep.subr.mxu0 0.0
      %1773 = vmatpush1.msra.mxu0 0.0
      %1774 = vmatprep.subr.mxu0 0.0
      %1775 = vmatpush1.msra.mxu0 0.0
      %1776 = vmatprep.subr.mxu0 0.0
      %1777 = vmatpush1.msra.mxu0 0.0
      %1778 = vmatprep.subr.mxu0 0.0
      %1779 = vmatpush1.msra.mxu0 0.0
      %1780 = vmatprep.subr.mxu0 0.0
      %1781 = vmatpush1.msra.mxu0 0.0
      %1782 = vmatprep.subr.mxu0 0.0
      %1783 = vmatpush1.msra.mxu0 0.0
      %1784 = vmatprep.subr.mxu0 0.0
      %1785 = vmatpush1.msra.mxu0 0.0
      %1786 = vmatprep.subr.mxu0 0.0
      %1787 = vmatpush1.msra.mxu0 0.0
      %1788 = vmatprep.subr.mxu0 0.0
      %1789 = vmatpush1.msra.mxu0 0.0
      %1790 = vmatprep.subr.mxu0 0.0
      %1791 = vmatpush1.msra.mxu0 0.0
      %1792 = vmatprep.subr.mxu0 0.0
      %1793 = vmatpush1.msra.mxu0 0.0
      %1794 = vmatprep.subr.mxu0 0.0
      %1795 = vmatpush1.msra.mxu0 0.0
      %1796 = vmatprep.subr.mxu0 0.0
      %1797 = vmatpush1.msra.mxu0 0.0
      %1798 = vmatprep.subr.mxu0 0.0
      %1799 = vmatpush1.msra.mxu0 0.0
      %1800 = vmatprep.subr.mxu0 0.0
      %1801 = vmatpush1.msra.mxu0 0.0
      %1802 = vmatprep.subr.mxu0 0.0
      %1803 = vmatpush1.msra.mxu0 0.0
      %1804 = vmatprep.subr.mxu0 0.0
      %1805 = vmatpush1.msra.mxu0 0.0
      %1806 = vmatprep.subr.mxu0 0.0
      %1807 = vmatpush1.msra.mxu0 0.0
      %1808 = vmatprep.subr.mxu0 0.0
      %1809 = vmatpush1.msra.mxu0 0.0
      %1810 = vmatprep.subr.mxu0 0.0
      %1811 = vmatpush1.msra.mxu0 0.0
      %1812 = vmatprep.subr.mxu0 0.0
      %1813 = vmatpush1.msra.mxu0 0.0
      %1814 = vmatprep.subr.mxu0 0.0
      %1815 = vmatpush1.msra.mxu0 0.0
      %1816 = vmatprep.subr.mxu0 0.0
      %1817 = vmatpush1.msra.mxu0 0.0
      %1818 = vmatprep.mubr.f32.mxu0 0.0
      %1819 = vmatmul.mubr.f32.gmra.mrb[0].mxu0 %v1742
      %v1820 = vpop.f32.mrb[0].mxu0
      %v1821 = vadd.f32 0.0, %v1820
      %v1822 = vpop.f32.mrb[0].mxu0
      %v1823 = vadd.f32 0.0, %v1822
      %1824 = vdwg.mxu0
      %1825 = vmatprep.subr.mxu0 0.0
      %1826 = vmatpush1.msra.mxu0 %v211
      %1827 = vmatprep.subr.mxu0 0.0
      %1828 = vmatpush1.msra.mxu0 %v214
      %1829 = vmatprep.subr.mxu0 0.0
      %1830 = vmatpush1.msra.mxu0 %v1752
      %1831 = vmatprep.subr.mxu0 0.0
      %1832 = vmatpush1.msra.mxu0 0.0
      %1833 = vmatprep.subr.mxu0 0.0
      %1834 = vmatpush1.msra.mxu0 0.0
      %1835 = vmatprep.subr.mxu0 0.0
      %1836 = vmatpush1.msra.mxu0 0.0
      %1837 = vmatprep.subr.mxu0 0.0
      %1838 = vmatpush1.msra.mxu0 0.0
      %1839 = vmatprep.subr.mxu0 0.0
      %1840 = vmatpush1.msra.mxu0 0.0
      %1841 = vmatprep.subr.mxu0 0.0
      %1842 = vmatpush1.msra.mxu0 0.0
      %1843 = vmatprep.subr.mxu0 0.0
      %1844 = vmatpush1.msra.mxu0 0.0
      %1845 = vmatprep.subr.mxu0 0.0
      %1846 = vmatpush1.msra.mxu0 0.0
      %1847 = vmatprep.subr.mxu0 0.0
      %1848 = vmatpush1.msra.mxu0 0.0
      %1849 = vmatprep.subr.mxu0 0.0
      %1850 = vmatpush1.msra.mxu0 0.0
      %1851 = vmatprep.subr.mxu0 0.0
      %1852 = vmatpush1.msra.mxu0 0.0
      %1853 = vmatprep.subr.mxu0 0.0
      %1854 = vmatpush1.msra.mxu0 0.0
      %1855 = vmatprep.subr.mxu0 0.0
      %1856 = vmatpush1.msra.mxu0 0.0
      %1857 = vmatprep.subr.mxu0 0.0
      %1858 = vmatpush1.msra.mxu0 0.0
      %1859 = vmatprep.subr.mxu0 0.0
      %1860 = vmatpush1.msra.mxu0 0.0
      %1861 = vmatprep.subr.mxu0 0.0
      %1862 = vmatpush1.msra.mxu0 0.0
      %1863 = vmatprep.subr.mxu0 0.0
      %1864 = vmatpush1.msra.mxu0 0.0
      %1865 = vmatprep.subr.mxu0 0.0
      %1866 = vmatpush1.msra.mxu0 0.0
      %1867 = vmatprep.subr.mxu0 0.0
      %1868 = vmatpush1.msra.mxu0 0.0
      %1869 = vmatprep.subr.mxu0 0.0
      %1870 = vmatpush1.msra.mxu0 0.0
      %1871 = vmatprep.subr.mxu0 0.0
      %1872 = vmatpush1.msra.mxu0 0.0
      %1873 = vmatprep.subr.mxu0 0.0
      %1874 = vmatpush1.msra.mxu0 0.0
      %1875 = vmatprep.subr.mxu0 0.0
      %1876 = vmatpush1.msra.mxu0 0.0
      %1877 = vmatprep.subr.mxu0 0.0
      %1878 = vmatpush1.msra.mxu0 0.0
      %1879 = vmatprep.subr.mxu0 0.0
      %1880 = vmatpush1.msra.mxu0 0.0
      %1881 = vmatprep.subr.mxu0 0.0
      %1882 = vmatpush1.msra.mxu0 0.0
      %1883 = vmatprep.subr.mxu0 0.0
      %1884 = vmatpush1.msra.mxu0 0.0
      %1885 = vmatprep.subr.mxu0 0.0
      %1886 = vmatpush1.msra.mxu0 0.0
      %1887 = vmatprep.subr.mxu0 0.0
      %1888 = vmatpush1.msra.mxu0 0.0
      %1889 = vmatprep.mubr.f32.mxu0 0.0
      %1890 = vmatmul.mubr.f32.gmra.mrb[0].mxu0 %v1742
      %v1891 = vpop.f32.mrb[0].mxu0
      %v1892 = vadd.f32 0.0, %v1891
      %v1893 = vpop.f32.mrb[0].mxu0
      %1894 = vdwg.mxu0
      %v1895 = vmul.f32 %v1043, %v1821
      %v1896 = vmul.f32 %v1044, %v1823
      %v1897 = vmul.f32 %v1045, %v1892
      %v1898 = vmul.f32 %v1895, 0.2
      %v1899 = vmul.f32 %v1896, 0.2
      %v1900 = vmul.f32 %v1897, 0.2
      %v1901 = vmax.f32 %v1895, %v1898
      %v1902 = vmax.f32 %v1896, %v1899
      %v1903 = vmax.f32 %v1897, %v1900
      %v1904 = vld [vmem:[%s1 + $0x50] sm:$0xff]
      %1905 = vst [vmem:[#allocation2 + $0x8] sm:$0xff] %v1901
      %1906 = vst [vmem:[#allocation2 + $0x10] sm:$0xff] %v1902
      %1907 = vst.msk [vmem:[#allocation2 + $0x18] sm:$0xff] %vm201, %v1903
      %1909 = vset.pattern.permute.xlu0 0
      %1910 = vperm.xlu0 %1909, %v1904
      %v1911 = vpop.permute.xlu0 %1910
      %v1913 = vmul.f32 %v1911, %v317
      %v1914 = vmul.f32 %v1911, %v321
      %v1915 = vmul.f32 %v1911, %v325
      %v1916 = vld [vmem:[#allocation2] sm:$0xff]
      %v1917 = vld [vmem:[#allocation2 + $0x8] sm:$0xff]
      %v1918 = vld [vmem:[#allocation2 + $0x10] sm:$0xff]
      %v1919 = vld [vmem:[#allocation2 + $0x18] sm:$0xff]
      %1924 = vrot.lane.b32.xlu0 %v1916, 17
      %v1925 = vpop.permute.xlu0 %1924
      %1926 = vrot.lane.b32.xlu0 %v1917, 17
      %v1927 = vpop.permute.xlu0 %1926
      %1928 = vrot.lane.b32.xlu0 %v1918, 17
      %v1929 = vpop.permute.xlu0 %1928
      %1930 = vrot.lane.b32.xlu0 %v1919, 17
      %v1931 = vpop.permute.xlu0 %1930
      %v1932 = vsel %vm358, %v1925, %v1927
      %v1933 = vsel %vm358, %v1927, %v1929
      %v1934 = vsel %vm358, %v1929, %v1931
      %v1938 = vmul.f32 %v1913, %v1932
      %v1939 = vmul.f32 %v1914, %v1933
      %v1940 = vmul.f32 %v1915, %v1934
      %1941 = vset.pattern.permute.xlu0 1
      %1942 = vperm.xlu0 %1941, %v1904
      %v1943 = vpop.permute.xlu0 %1942
      %v1945 = vmul.f32 %v1943, %v1916
      %v1946 = vmul.f32 %v1943, %v1917
      %v1947 = vmul.f32 %v1943, %v1918
      %v1948 = vmul.f32 %v1943, %v1919
      %1953 = vrot.lane.b32.xlu0 %v1945, 16
      %v1954 = vpop.permute.xlu0 %1953
      %1955 = vrot.lane.b32.xlu0 %v1946, 16
      %v1956 = vpop.permute.xlu0 %1955
      %1957 = vrot.lane.b32.xlu0 %v1947, 16
      %v1958 = vpop.permute.xlu0 %1957
      %1959 = vrot.lane.b32.xlu0 %v1948, 16
      %v1960 = vpop.permute.xlu0 %1959
      %v1961 = vsel %vm380, %v1954, %v1956
      %v1962 = vsel %vm380, %v1956, %v1958
      %v1963 = vsel %vm380, %v1958, %v1960
      %v1967 = vadd.f32 %v1938, %v1961
      %v1968 = vadd.f32 %v1939, %v1962
      %v1969 = vadd.f32 %v1940, %v1963
      %1970 = vset.pattern.permute.xlu0 2
      %1971 = vperm.xlu0 %1970, %v1904
      %v1972 = vpop.permute.xlu0 %1971
      %v1974 = vmul.f32 %v1972, %v401
      %v1975 = vmul.f32 %v1972, %v405
      %v1976 = vmul.f32 %v1972, %v409
      %1977 = vrot.lane.b32.xlu0 %v1916, 15
      %v1978 = vpop.permute.xlu0 %1977
      %1979 = vrot.lane.b32.xlu0 %v1917, 15
      %v1980 = vpop.permute.xlu0 %1979
      %1981 = vrot.lane.b32.xlu0 %v1918, 15
      %v1982 = vpop.permute.xlu0 %1981
      %1983 = vrot.lane.b32.xlu0 %v1919, 15
      %v1984 = vpop.permute.xlu0 %1983
      %v1985 = vsel %vm424, %v1978, %v1980
      %v1986 = vsel %vm424, %v1980, %v1982
      %v1987 = vsel %vm424, %v1982, %v1984
      %v1991 = vmul.f32 %v1974, %v1985
      %v1992 = vmul.f32 %v1975, %v1986
      %v1993 = vmul.f32 %v1976, %v1987
      %v1994 = vadd.f32 %v1967, %v1991
      %v1995 = vadd.f32 %v1968, %v1992
      %v1996 = vadd.f32 %v1969, %v1993
      %1997 = vset.pattern.permute.xlu0 3
      %1998 = vperm.xlu0 %1997, %v1904
      %v1999 = vpop.permute.xlu0 %1998
      %v2001 = vmul.f32 %v1999, %v317
      %v2002 = vmul.f32 %v1999, %v321
      %v2003 = vmul.f32 %v1999, %v325
      %2004 = vrot.lane.b32.xlu0 %v1916, 1
      %v2005 = vpop.permute.xlu0 %2004
      %2006 = vrot.lane.b32.xlu0 %v1917, 1
      %v2007 = vpop.permute.xlu0 %2006
      %2008 = vrot.lane.b32.xlu0 %v1918, 1
      %v2009 = vpop.permute.xlu0 %2008
      %2010 = vrot.lane.b32.xlu0 %v1919, 1
      %v2011 = vpop.permute.xlu0 %2010
      %v2012 = vsel %vm452, %v2005, %v2007
      %v2013 = vsel %vm452, %v2007, %v2009
      %v2014 = vsel %vm452, %v2009, %v2011
      %v2018 = vmul.f32 %v2001, %v2012
      %v2019 = vmul.f32 %v2002, %v2013
      %v2020 = vmul.f32 %v2003, %v2014
      %v2021 = vadd.f32 %v1994, %v2018
      %v2022 = vadd.f32 %v1995, %v2019
      %v2023 = vadd.f32 %v1996, %v2020
      %2024 = vset.pattern.permute.xlu0 4
      %2025 = vperm.xlu0 %2024, %v1904
      %v2026 = vpop.permute.xlu0 %2025
      %v2028 = vmul.f32 %v2026, %v1917
      %v2029 = vmul.f32 %v2026, %v1918
      %v2030 = vmul.f32 %v2026, %v1919
      %v2031 = vadd.f32 %v2021, %v2028
      %v2032 = vadd.f32 %v2022, %v2029
      %v2033 = vadd.f32 %v2023, %v2030
      %2034 = vset.pattern.permute.xlu0 5
      %2035 = vperm.xlu0 %2034, %v1904
      %v2036 = vpop.permute.xlu0 %2035
      %v2038 = vmul.f32 %v2036, %v401
      %v2039 = vmul.f32 %v2036, %v405
      %v2040 = vmul.f32 %v2036, %v409
      %2041 = vrot.lane.b32.xlu0 %v1917, 127
      %v2042 = vpop.permute.xlu0 %2041
      %2043 = vrot.lane.b32.xlu0 %v1918, 127
      %v2044 = vpop.permute.xlu0 %2043
      %2045 = vrot.lane.b32.xlu0 %v1919, 127
      %v2046 = vpop.permute.xlu0 %2045
      %v2047 = vsel %vm505, %v2042, %v2044
      %v2048 = vsel %vm505, %v2044, %v2046
      %v2052 = vmul.f32 %v2038, %v2047
      %v2053 = vmul.f32 %v2039, %v2048
      %v2054 = vmul.f32 %v2040, %v2046
      %v2055 = vadd.f32 %v2031, %v2052
      %v2056 = vadd.f32 %v2032, %v2053
      %v2057 = vadd.f32 %v2033, %v2054
      %2058 = vset.pattern.permute.xlu0 6
      %2059 = vperm.xlu0 %2058, %v1904
      %v2060 = vpop.permute.xlu0 %2059
      %v2062 = vmul.f32 %v2060, %v317
      %v2063 = vmul.f32 %v2060, %v321
      %v2064 = vmul.f32 %v2060, %v325
      %2065 = vrot.lane.b32.xlu0 %v1917, 113
      %v2066 = vpop.permute.xlu0 %2065
      %2067 = vrot.lane.b32.xlu0 %v1918, 113
      %v2068 = vpop.permute.xlu0 %2067
      %2069 = vrot.lane.b32.xlu0 %v1919, 113
      %v2070 = vpop.permute.xlu0 %2069
      %v2071 = vsel %vm530, %v2066, %v2068
      %v2072 = vsel %vm530, %v2068, %v2070
      %v2076 = vmul.f32 %v2062, %v2071
      %v2077 = vmul.f32 %v2063, %v2072
      %v2078 = vmul.f32 %v2064, %v2070
      %v2079 = vadd.f32 %v2055, %v2076
      %v2080 = vadd.f32 %v2056, %v2077
      %v2081 = vadd.f32 %v2057, %v2078
      %2082 = vset.pattern.permute.xlu0 7
      %2083 = vperm.xlu0 %2082, %v1904
      %v2084 = vpop.permute.xlu0 %2083
      %v2086 = vmul.f32 %v2084, %v1917
      %v2087 = vmul.f32 %v2084, %v1918
      %v2088 = vmul.f32 %v2084, %v1919
      %2092 = vrot.lane.b32.xlu0 %v2086, 112
      %v2093 = vpop.permute.xlu0 %2092
      %2094 = vrot.lane.b32.xlu0 %v2087, 112
      %v2095 = vpop.permute.xlu0 %2094
      %2096 = vrot.lane.b32.xlu0 %v2088, 112
      %v2097 = vpop.permute.xlu0 %2096
      %v2098 = vsel %vm552, %v2093, %v2095
      %v2099 = vsel %vm552, %v2095, %v2097
      %v2103 = vadd.f32 %v2079, %v2098
      %v2104 = vadd.f32 %v2080, %v2099
      %v2105 = vadd.f32 %v2081, %v2097
      %2106 = vset.pattern.permute.xlu0 8
      %2107 = vperm.xlu0 %2106, %v1904
      %v2108 = vpop.permute.xlu0 %2107
      %v2110 = vmul.f32 %v2108, %v401
      %v2111 = vmul.f32 %v2108, %v405
      %v2112 = vmul.f32 %v2108, %v409
      %2113 = vrot.lane.b32.xlu0 %v1917, 111
      %v2114 = vpop.permute.xlu0 %2113
      %2115 = vrot.lane.b32.xlu0 %v1918, 111
      %v2116 = vpop.permute.xlu0 %2115
      %2117 = vrot.lane.b32.xlu0 %v1919, 111
      %v2118 = vpop.permute.xlu0 %2117
      %v2119 = vsel %vm577, %v2114, %v2116
      %v2120 = vsel %vm577, %v2116, %v2118
      %v2124 = vmul.f32 %v2110, %v2119
      %v2125 = vmul.f32 %v2111, %v2120
      %v2126 = vmul.f32 %v2112, %v2118
      %v2127 = vadd.f32 %v2103, %v2124
      %v2128 = vadd.f32 %v2104, %v2125
      %v2129 = vadd.f32 %v2105, %v2126
      %v2130 = vld [vmem:[%s1 + $0x58] sm:$0xff]
      %v2131 = vld [vmem:[%s1 + $0x60] sm:$0xff]
      %v2132 = vld [vmem:[%s1 + $0x68] sm:$0xff]
      %v2133 = vld [vmem:[%s1 + $0x70] sm:$0xff]
      %2135 = vset.pattern.permute.xlu0 0
      %2136 = vperm.xlu0 %2135, %v2132
      %v2137 = vpop.permute.xlu0 %2136
      %2140 = vset.pattern.permute.xlu0 0
      %2141 = vperm.xlu0 %2140, %v2133
      %v2142 = vpop.permute.xlu0 %2141
      %v2145 = vsel %vm858, %v2130, 0
      %v2148 = vsel %vm858, %v2131, 0
      %2150 = vmatprep.subr.mxu0 %v2128
      %2151 = vmatpush1.msra.mxu0 %v2127
      %2152 = vmatprep.subr.mxu0 0.0
      %2153 = vmatpush1.msra.mxu0 0.0
      %2154 = vmatprep.subr.mxu0 0.0
      %2155 = vmatpush1.msra.mxu0 0.0
      %2156 = vmatprep.subr.mxu0 0.0
      %2157 = vmatpush1.msra.mxu0 0.0
      %2158 = vmatprep.subr.mxu0 0.0
      %2159 = vmatpush1.msra.mxu0 0.0
      %2160 = vmatprep.subr.mxu0 0.0
      %2161 = vmatpush1.msra.mxu0 0.0
      %2162 = vmatprep.subr.mxu0 0.0
      %2163 = vmatpush1.msra.mxu0 0.0
      %2164 = vmatprep.subr.mxu0 0.0
      %2165 = vmatpush1.msra.mxu0 0.0
      %2166 = vmatprep.subr.mxu0 0.0
      %2167 = vmatpush1.msra.mxu0 0.0
      %2168 = vmatprep.subr.mxu0 0.0
      %2169 = vmatpush1.msra.mxu0 0.0
      %2170 = vmatprep.subr.mxu0 0.0
      %2171 = vmatpush1.msra.mxu0 0.0
      %2172 = vmatprep.subr.mxu0 0.0
      %2173 = vmatpush1.msra.mxu0 0.0
      %2174 = vmatprep.subr.mxu0 0.0
      %2175 = vmatpush1.msra.mxu0 0.0
      %2176 = vmatprep.subr.mxu0 0.0
      %2177 = vmatpush1.msra.mxu0 0.0
      %2178 = vmatprep.subr.mxu0 0.0
      %2179 = vmatpush1.msra.mxu0 0.0
      %2180 = vmatprep.subr.mxu0 0.0
      %2181 = vmatpush1.msra.mxu0 0.0
      %2182 = vmatprep.subr.mxu0 0.0
      %2183 = vmatpush1.msra.mxu0 0.0
      %2184 = vmatprep.subr.mxu0 0.0
      %2185 = vmatpush1.msra.mxu0 0.0
      %2186 = vmatprep.subr.mxu0 0.0
      %2187 = vmatpush1.msra.mxu0 0.0
      %2188 = vmatprep.subr.mxu0 0.0
      %2189 = vmatpush1.msra.mxu0 0.0
      %2190 = vmatprep.subr.mxu0 0.0
      %2191 = vmatpush1.msra.mxu0 0.0
      %2192 = vmatprep.subr.mxu0 0.0
      %2193 = vmatpush1.msra.mxu0 0.0
      %2194 = vmatprep.subr.mxu0 0.0
      %2195 = vmatpush1.msra.mxu0 0.0
      %2196 = vmatprep.subr.mxu0 0.0
      %2197 = vmatpush1.msra.mxu0 0.0
      %2198 = vmatprep.subr.mxu0 0.0
      %2199 = vmatpush1.msra.mxu0 0.0
      %2200 = vmatprep.subr.mxu0 0.0
      %2201 = vmatpush1.msra.mxu0 0.0
      %2202 = vmatprep.subr.mxu0 0.0
      %2203 = vmatpush1.msra.mxu0 0.0
      %2204 = vmatprep.subr.mxu0 0.0
      %2205 = vmatpush1.msra.mxu0 0.0
      %2206 = vmatprep.subr.mxu0 0.0
      %2207 = vmatpush1.msra.mxu0 0.0
      %2208 = vmatprep.subr.mxu0 0.0
      %2209 = vmatpush1.msra.mxu0 0.0
      %2210 = vmatprep.subr.mxu0 0.0
      %2211 = vmatpush1.msra.mxu0 0.0
      %2212 = vmatprep.subr.mxu0 0.0
      %2213 = vmatpush1.msra.mxu0 0.0
      %2214 = vmatprep.mubr.f32.mxu0 0.0
      %2215 = vmatmul.mubr.f32.gmra.mrb[0].mxu0 %v2145
      %v2216 = vpop.f32.mrb[0].mxu0
      %v2217 = vadd.f32 %v2137, %v2216
      %v2218 = vpop.f32.mrb[0].mxu0
      %v2219 = vadd.f32 %v2137, %v2218
      %2220 = vmatprep.mubr.f32.mxu0 0.0
      %2221 = vmatmul.mubr.f32.gmra.mrb[0].mxu0 %v2148
      %v2222 = vpop.f32.mrb[0].mxu0
      %v2223 = vadd.f32 %v2142, %v2222
      %v2224 = vpop.f32.mrb[0].mxu0
      %v2225 = vadd.f32 %v2142, %v2224
      %2226 = vdwg.mxu0
      %2227 = vmatprep.subr.mxu0 0.0
      %2228 = vmatpush1.msra.mxu0 %v2129
      %2229 = vmatprep.subr.mxu0 0.0
      %2230 = vmatpush1.msra.mxu0 0.0
      %2231 = vmatprep.subr.mxu0 0.0
      %2232 = vmatpush1.msra.mxu0 0.0
      %2233 = vmatprep.subr.mxu0 0.0
      %2234 = vmatpush1.msra.mxu0 0.0
      %2235 = vmatprep.subr.mxu0 0.0
      %2236 = vmatpush1.msra.mxu0 0.0
      %2237 = vmatprep.subr.mxu0 0.0
      %2238 = vmatpush1.msra.mxu0 0.0
      %2239 = vmatprep.subr.mxu0 0.0
      %2240 = vmatpush1.msra.mxu0 0.0
      %2241 = vmatprep.subr.mxu0 0.0
      %2242 = vmatpush1.msra.mxu0 0.0
      %2243 = vmatprep.subr.mxu0 0.0
      %2244 = vmatpush1.msra.mxu0 0.0
      %2245 = vmatprep.subr.mxu0 0.0
      %2246 = vmatpush1.msra.mxu0 0.0
      %2247 = vmatprep.subr.mxu0 0.0
      %2248 = vmatpush1.msra.mxu0 0.0
      %2249 = vmatprep.subr.mxu0 0.0
      %2250 = vmatpush1.msra.mxu0 0.0
      %2251 = vmatprep.subr.mxu0 0.0
      %2252 = vmatpush1.msra.mxu0 0.0
      %2253 = vmatprep.subr.mxu0 0.0
      %2254 = vmatpush1.msra.mxu0 0.0
      %2255 = vmatprep.subr.mxu0 0.0
      %2256 = vmatpush1.msra.mxu0 0.0
      %2257 = vmatprep.subr.mxu0 0.0
      %2258 = vmatpush1.msra.mxu0 0.0
      %2259 = vmatprep.subr.mxu0 0.0
      %2260 = vmatpush1.msra.mxu0 0.0
      %2261 = vmatprep.subr.mxu0 0.0
      %2262 = vmatpush1.msra.mxu0 0.0
      %2263 = vmatprep.subr.mxu0 0.0
      %2264 = vmatpush1.msra.mxu0 0.0
      %2265 = vmatprep.subr.mxu0 0.0
      %2266 = vmatpush1.msra.mxu0 0.0
      %2267 = vmatprep.subr.mxu0 0.0
      %2268 = vmatpush1.msra.mxu0 0.0
      %2269 = vmatprep.subr.mxu0 0.0
      %2270 = vmatpush1.msra.mxu0 0.0
      %2271 = vmatprep.subr.mxu0 0.0
      %2272 = vmatpush1.msra.mxu0 0.0
      %2273 = vmatprep.subr.mxu0 0.0
      %2274 = vmatpush1.msra.mxu0 0.0
      %2275 = vmatprep.subr.mxu0 0.0
      %2276 = vmatpush1.msra.mxu0 0.0
      %2277 = vmatprep.subr.mxu0 0.0
      %2278 = vmatpush1.msra.mxu0 0.0
      %2279 = vmatprep.subr.mxu0 0.0
      %2280 = vmatpush1.msra.mxu0 0.0
      %2281 = vmatprep.subr.mxu0 0.0
      %2282 = vmatpush1.msra.mxu0 0.0
      %2283 = vmatprep.subr.mxu0 0.0
      %2284 = vmatpush1.msra.mxu0 0.0
      %2285 = vmatprep.subr.mxu0 0.0
      %2286 = vmatpush1.msra.mxu0 0.0
      %2287 = vmatprep.subr.mxu0 0.0
      %2288 = vmatpush1.msra.mxu0 0.0
      %2289 = vmatprep.subr.mxu0 0.0
      %2290 = vmatpush1.msra.mxu0 0.0
      %2291 = vmatprep.mubr.f32.mxu0 0.0
      %2292 = vmatmul.mubr.f32.gmra.mrb[0].mxu0 %v2145
      %v2293 = vpop.f32.mrb[0].mxu0
      %v2294 = vadd.f32 %v2137, %v2293
      %v2295 = vpop.f32.mrb[0].mxu0
      %2296 = vmatprep.mubr.f32.mxu0 0.0
      %2297 = vmatmul.mubr.f32.gmra.mrb[0].mxu0 %v2148
      %v2298 = vpop.f32.mrb[0].mxu0
      %v2299 = vadd.f32 %v2142, %v2298
      %v2300 = vpop.f32.mrb[0].mxu0
      %2301 = vdwg.mxu0
      %v2302 = vmul.f32 %v2217, 0.2
      %v2303 = vmul.f32 %v2219, 0.2
      %v2304 = vmul.f32 %v2294, 0.2
      %v2305 = vmul.f32 %v2223, 0.2
      %v2306 = vmul.f32 %v2225, 0.2
      %v2307 = vmul.f32 %v2299, 0.2
      %v2308 = vmax.f32 %v2217, %v2302
      %v2309 = vmax.f32 %v2219, %v2303
      %v2310 = vmax.f32 %v2294, %v2304
      %v2311 = vmax.f32 %v2223, %v2305
      %v2312 = vmax.f32 %v2225, %v2306
      %v2313 = vmax.f32 %v2299, %v2307
      %v2314 = vld [vmem:[%s1 + $0x78] sm:$0xff]
      %v2315 = vld [vmem:[%s1 + $0x80] sm:$0xff]
      %2316 = vst [vmem:[#allocation2 + $0x8] sm:$0xff] %v2308
      %2317 = vst [vmem:[#allocation2 + $0x10] sm:$0xff] %v2309
      %2318 = vst.msk [vmem:[#allocation2 + $0x18] sm:$0xff] %vm201, %v2310
      %2319 = vst [vmem:[#allocation2 + $0x30] sm:$0xff] %v2311
      %2320 = vst [vmem:[#allocation2 + $0x38] sm:$0xff] %v2312
      %2321 = vst.msk [vmem:[#allocation2 + $0x40] sm:$0xff] %vm201, %v2313
      %2323 = vset.pattern.permute.xlu0 0
      %2324 = vperm.xlu0 %2323, %v2314
      %v2325 = vpop.permute.xlu0 %2324
      %2328 = vset.pattern.permute.xlu0 0
      %2329 = vperm.xlu0 %2328, %v2315
      %v2330 = vpop.permute.xlu0 %2329
      %v2332 = vmul.f32 %v2325, %v317
      %v2333 = vmul.f32 %v2325, %v321
      %v2334 = vmul.f32 %v2325, %v325
      %v2335 = vmul.f32 %v2330, %v317
      %v2336 = vmul.f32 %v2330, %v321
      %v2337 = vmul.f32 %v2330, %v325
      %v2338 = vld [vmem:[#allocation2] sm:$0xff]
      %v2339 = vld [vmem:[#allocation2 + $0x8] sm:$0xff]
      %v2340 = vld [vmem:[#allocation2 + $0x10] sm:$0xff]
      %v2341 = vld [vmem:[#allocation2 + $0x18] sm:$0xff]
      %v2342 = vld [vmem:[#allocation2 + $0x28] sm:$0xff]
      %v2343 = vld [vmem:[#allocation2 + $0x30] sm:$0xff]
      %v2344 = vld [vmem:[#allocation2 + $0x38] sm:$0xff]
      %v2345 = vld [vmem:[#allocation2 + $0x40] sm:$0xff]
      %2354 = vrot.lane.b32.xlu0 %v2338, 17
      %v2355 = vpop.permute.xlu0 %2354
      %2356 = vrot.lane.b32.xlu0 %v2339, 17
      %v2357 = vpop.permute.xlu0 %2356
      %2358 = vrot.lane.b32.xlu0 %v2340, 17
      %v2359 = vpop.permute.xlu0 %2358
      %2360 = vrot.lane.b32.xlu0 %v2341, 17
      %v2361 = vpop.permute.xlu0 %2360
      %2362 = vrot.lane.b32.xlu0 %v2342, 17
      %v2363 = vpop.permute.xlu0 %2362
      %2364 = vrot.lane.b32.xlu0 %v2343, 17
      %v2365 = vpop.permute.xlu0 %2364
      %2366 = vrot.lane.b32.xlu0 %v2344, 17
      %v2367 = vpop.permute.xlu0 %2366
      %2368 = vrot.lane.b32.xlu0 %v2345, 17
      %v2369 = vpop.permute.xlu0 %2368
      %v2370 = vsel %vm358, %v2355, %v2357
      %v2371 = vsel %vm358, %v2357, %v2359
      %v2372 = vsel %vm358, %v2359, %v2361
      %v2373 = vsel %vm358, %v2363, %v2365
      %v2374 = vsel %vm358, %v2365, %v2367
      %v2375 = vsel %vm358, %v2367, %v2369
      %v2382 = vmul.f32 %v2332, %v2370
      %v2383 = vmul.f32 %v2333, %v2371
      %v2384 = vmul.f32 %v2334, %v2372
      %v2385 = vmul.f32 %v2335, %v2373
      %v2386 = vmul.f32 %v2336, %v2374
      %v2387 = vmul.f32 %v2337, %v2375
      %2388 = vset.pattern.permute.xlu0 1
      %2389 = vperm.xlu0 %2388, %v2314
      %v2390 = vpop.permute.xlu0 %2389
      %2392 = vset.pattern.permute.xlu0 1
      %2393 = vperm.xlu0 %2392, %v2315
      %v2394 = vpop.permute.xlu0 %2393
      %v2396 = vmul.f32 %v2390, %v2338
      %v2397 = vmul.f32 %v2390, %v2339
      %v2398 = vmul.f32 %v2390, %v2340
      %v2399 = vmul.f32 %v2390, %v2341
      %v2400 = vmul.f32 %v2394, %v2342
      %v2401 = vmul.f32 %v2394, %v2343
      %v2402 = vmul.f32 %v2394, %v2344
      %v2403 = vmul.f32 %v2394, %v2345
      %2412 = vrot.lane.b32.xlu0 %v2396, 16
      %v2413 = vpop.permute.xlu0 %2412
      %2414 = vrot.lane.b32.xlu0 %v2397, 16
      %v2415 = vpop.permute.xlu0 %2414
      %2416 = vrot.lane.b32.xlu0 %v2398, 16
      %v2417 = vpop.permute.xlu0 %2416
      %2418 = vrot.lane.b32.xlu0 %v2399, 16
      %v2419 = vpop.permute.xlu0 %2418
      %2420 = vrot.lane.b32.xlu0 %v2400, 16
      %v2421 = vpop.permute.xlu0 %2420
      %2422 = vrot.lane.b32.xlu0 %v2401, 16
      %v2423 = vpop.permute.xlu0 %2422
      %2424 = vrot.lane.b32.xlu0 %v2402, 16
      %v2425 = vpop.permute.xlu0 %2424
      %2426 = vrot.lane.b32.xlu0 %v2403, 16
      %v2427 = vpop.permute.xlu0 %2426
      %v2428 = vsel %vm380, %v2413, %v2415
      %v2429 = vsel %vm380, %v2415, %v2417
      %v2430 = vsel %vm380, %v2417, %v2419
      %v2431 = vsel %vm380, %v2421, %v2423
      %v2432 = vsel %vm380, %v2423, %v2425
      %v2433 = vsel %vm380, %v2425, %v2427
      %v2440 = vadd.f32 %v2382, %v2428
      %v2441 = vadd.f32 %v2383, %v2429
      %v2442 = vadd.f32 %v2384, %v2430
      %v2443 = vadd.f32 %v2385, %v2431
      %v2444 = vadd.f32 %v2386, %v2432
      %v2445 = vadd.f32 %v2387, %v2433
      %2446 = vset.pattern.permute.xlu0 2
      %2447 = vperm.xlu0 %2446, %v2314
      %v2448 = vpop.permute.xlu0 %2447
      %2450 = vset.pattern.permute.xlu0 2
      %2451 = vperm.xlu0 %2450, %v2315
      %v2452 = vpop.permute.xlu0 %2451
      %v2454 = vmul.f32 %v2448, %v401
      %v2455 = vmul.f32 %v2448, %v405
      %v2456 = vmul.f32 %v2448, %v409
      %v2457 = vmul.f32 %v2452, %v401
      %v2458 = vmul.f32 %v2452, %v405
      %v2459 = vmul.f32 %v2452, %v409
      %2460 = vrot.lane.b32.xlu0 %v2338, 15
      %v2461 = vpop.permute.xlu0 %2460
      %2462 = vrot.lane.b32.xlu0 %v2339, 15
      %v2463 = vpop.permute.xlu0 %2462
      %2464 = vrot.lane.b32.xlu0 %v2340, 15
      %v2465 = vpop.permute.xlu0 %2464
      %2466 = vrot.lane.b32.xlu0 %v2341, 15
      %v2467 = vpop.permute.xlu0 %2466
      %2468 = vrot.lane.b32.xlu0 %v2342, 15
      %v2469 = vpop.permute.xlu0 %2468
      %2470 = vrot.lane.b32.xlu0 %v2343, 15
      %v2471 = vpop.permute.xlu0 %2470
      %2472 = vrot.lane.b32.xlu0 %v2344, 15
      %v2473 = vpop.permute.xlu0 %2472
      %2474 = vrot.lane.b32.xlu0 %v2345, 15
      %v2475 = vpop.permute.xlu0 %2474
      %v2476 = vsel %vm424, %v2461, %v2463
      %v2477 = vsel %vm424, %v2463, %v2465
      %v2478 = vsel %vm424, %v2465, %v2467
      %v2479 = vsel %vm424, %v2469, %v2471
      %v2480 = vsel %vm424, %v2471, %v2473
      %v2481 = vsel %vm424, %v2473, %v2475
      %v2488 = vmul.f32 %v2454, %v2476
      %v2489 = vmul.f32 %v2455, %v2477
      %v2490 = vmul.f32 %v2456, %v2478
      %v2491 = vmul.f32 %v2457, %v2479
      %v2492 = vmul.f32 %v2458, %v2480
      %v2493 = vmul.f32 %v2459, %v2481
      %v2494 = vadd.f32 %v2440, %v2488
      %v2495 = vadd.f32 %v2441, %v2489
      %v2496 = vadd.f32 %v2442, %v2490
      %v2497 = vadd.f32 %v2443, %v2491
      %v2498 = vadd.f32 %v2444, %v2492
      %v2499 = vadd.f32 %v2445, %v2493
      %2500 = vset.pattern.permute.xlu0 3
      %2501 = vperm.xlu0 %2500, %v2314
      %v2502 = vpop.permute.xlu0 %2501
      %2504 = vset.pattern.permute.xlu0 3
      %2505 = vperm.xlu0 %2504, %v2315
      %v2506 = vpop.permute.xlu0 %2505
      %v2508 = vmul.f32 %v2502, %v317
      %v2509 = vmul.f32 %v2502, %v321
      %v2510 = vmul.f32 %v2502, %v325
      %v2511 = vmul.f32 %v2506, %v317
      %v2512 = vmul.f32 %v2506, %v321
      %v2513 = vmul.f32 %v2506, %v325
      %2514 = vrot.lane.b32.xlu0 %v2338, 1
      %v2515 = vpop.permute.xlu0 %2514
      %2516 = vrot.lane.b32.xlu0 %v2339, 1
      %v2517 = vpop.permute.xlu0 %2516
      %2518 = vrot.lane.b32.xlu0 %v2340, 1
      %v2519 = vpop.permute.xlu0 %2518
      %2520 = vrot.lane.b32.xlu0 %v2341, 1
      %v2521 = vpop.permute.xlu0 %2520
      %2522 = vrot.lane.b32.xlu0 %v2342, 1
      %v2523 = vpop.permute.xlu0 %2522
      %2524 = vrot.lane.b32.xlu0 %v2343, 1
      %v2525 = vpop.permute.xlu0 %2524
      %2526 = vrot.lane.b32.xlu0 %v2344, 1
      %v2527 = vpop.permute.xlu0 %2526
      %2528 = vrot.lane.b32.xlu0 %v2345, 1
      %v2529 = vpop.permute.xlu0 %2528
      %v2530 = vsel %vm452, %v2515, %v2517
      %v2531 = vsel %vm452, %v2517, %v2519
      %v2532 = vsel %vm452, %v2519, %v2521
      %v2533 = vsel %vm452, %v2523, %v2525
      %v2534 = vsel %vm452, %v2525, %v2527
      %v2535 = vsel %vm452, %v2527, %v2529
      %v2542 = vmul.f32 %v2508, %v2530
      %v2543 = vmul.f32 %v2509, %v2531
      %v2544 = vmul.f32 %v2510, %v2532
      %v2545 = vmul.f32 %v2511, %v2533
      %v2546 = vmul.f32 %v2512, %v2534
      %v2547 = vmul.f32 %v2513, %v2535
      %v2548 = vadd.f32 %v2494, %v2542
      %v2549 = vadd.f32 %v2495, %v2543
      %v2550 = vadd.f32 %v2496, %v2544
      %v2551 = vadd.f32 %v2497, %v2545
      %v2552 = vadd.f32 %v2498, %v2546
      %v2553 = vadd.f32 %v2499, %v2547
      %2554 = vset.pattern.permute.xlu0 4
      %2555 = vperm.xlu0 %2554, %v2314
      %v2556 = vpop.permute.xlu0 %2555
      %2558 = vset.pattern.permute.xlu0 4
      %2559 = vperm.xlu0 %2558, %v2315
      %v2560 = vpop.permute.xlu0 %2559
      %v2562 = vmul.f32 %v2556, %v2339
      %v2563 = vmul.f32 %v2556, %v2340
      %v2564 = vmul.f32 %v2556, %v2341
      %v2565 = vmul.f32 %v2560, %v2343
      %v2566 = vmul.f32 %v2560, %v2344
      %v2567 = vmul.f32 %v2560, %v2345
      %v2568 = vadd.f32 %v2548, %v2562
      %v2569 = vadd.f32 %v2549, %v2563
      %v2570 = vadd.f32 %v2550, %v2564
      %v2571 = vadd.f32 %v2551, %v2565
      %v2572 = vadd.f32 %v2552, %v2566
      %v2573 = vadd.f32 %v2553, %v2567
      %2574 = vset.pattern.permute.xlu0 5
      %2575 = vperm.xlu0 %2574, %v2314
      %v2576 = vpop.permute.xlu0 %2575
      %2578 = vset.pattern.permute.xlu0 5
      %2579 = vperm.xlu0 %2578, %v2315
      %v2580 = vpop.permute.xlu0 %2579
      %v2582 = vmul.f32 %v2576, %v401
      %v2583 = vmul.f32 %v2576, %v405
      %v2584 = vmul.f32 %v2576, %v409
      %v2585 = vmul.f32 %v2580, %v401
      %v2586 = vmul.f32 %v2580, %v405
      %v2587 = vmul.f32 %v2580, %v409
      %2588 = vrot.lane.b32.xlu0 %v2339, 127
      %v2589 = vpop.permute.xlu0 %2588
      %2590 = vrot.lane.b32.xlu0 %v2340, 127
      %v2591 = vpop.permute.xlu0 %2590
      %2592 = vrot.lane.b32.xlu0 %v2341, 127
      %v2593 = vpop.permute.xlu0 %2592
      %2594 = vrot.lane.b32.xlu0 %v2343, 127
      %v2595 = vpop.permute.xlu0 %2594
      %2596 = vrot.lane.b32.xlu0 %v2344, 127
      %v2597 = vpop.permute.xlu0 %2596
      %2598 = vrot.lane.b32.xlu0 %v2345, 127
      %v2599 = vpop.permute.xlu0 %2598
      %v2600 = vsel %vm505, %v2589, %v2591
      %v2601 = vsel %vm505, %v2591, %v2593
      %v2602 = vsel %vm505, %v2595, %v2597
      %v2603 = vsel %vm505, %v2597, %v2599
      %v2610 = vmul.f32 %v2582, %v2600
      %v2611 = vmul.f32 %v2583, %v2601
      %v2612 = vmul.f32 %v2584, %v2593
      %v2613 = vmul.f32 %v2585, %v2602
      %v2614 = vmul.f32 %v2586, %v2603
      %v2615 = vmul.f32 %v2587, %v2599
      %v2616 = vadd.f32 %v2568, %v2610
      %v2617 = vadd.f32 %v2569, %v2611
      %v2618 = vadd.f32 %v2570, %v2612
      %v2619 = vadd.f32 %v2571, %v2613
      %v2620 = vadd.f32 %v2572, %v2614
      %v2621 = vadd.f32 %v2573, %v2615
      %2622 = vset.pattern.permute.xlu0 6
      %2623 = vperm.xlu0 %2622, %v2314
      %v2624 = vpop.permute.xlu0 %2623
      %2626 = vset.pattern.permute.xlu0 6
      %2627 = vperm.xlu0 %2626, %v2315
      %v2628 = vpop.permute.xlu0 %2627
      %v2630 = vmul.f32 %v2624, %v317
      %v2631 = vmul.f32 %v2624, %v321
      %v2632 = vmul.f32 %v2624, %v325
      %v2633 = vmul.f32 %v2628, %v317
      %v2634 = vmul.f32 %v2628, %v321
      %v2635 = vmul.f32 %v2628, %v325
      %2636 = vrot.lane.b32.xlu0 %v2339, 113
      %v2637 = vpop.permute.xlu0 %2636
      %2638 = vrot.lane.b32.xlu0 %v2340, 113
      %v2639 = vpop.permute.xlu0 %2638
      %2640 = vrot.lane.b32.xlu0 %v2341, 113
      %v2641 = vpop.permute.xlu0 %2640
      %2642 = vrot.lane.b32.xlu0 %v2343, 113
      %v2643 = vpop.permute.xlu0 %2642
      %2644 = vrot.lane.b32.xlu0 %v2344, 113
      %v2645 = vpop.permute.xlu0 %2644
      %2646 = vrot.lane.b32.xlu0 %v2345, 113
      %v2647 = vpop.permute.xlu0 %2646
      %v2648 = vsel %vm530, %v2637, %v2639
      %v2649 = vsel %vm530, %v2639, %v2641
      %v2650 = vsel %vm530, %v2643, %v2645
      %v2651 = vsel %vm530, %v2645, %v2647
      %v2658 = vmul.f32 %v2630, %v2648
      %v2659 = vmul.f32 %v2631, %v2649
      %v2660 = vmul.f32 %v2632, %v2641
      %v2661 = vmul.f32 %v2633, %v2650
      %v2662 = vmul.f32 %v2634, %v2651
      %v2663 = vmul.f32 %v2635, %v2647
      %v2664 = vadd.f32 %v2616, %v2658
      %v2665 = vadd.f32 %v2617, %v2659
      %v2666 = vadd.f32 %v2618, %v2660
      %v2667 = vadd.f32 %v2619, %v2661
      %v2668 = vadd.f32 %v2620, %v2662
      %v2669 = vadd.f32 %v2621, %v2663
      %2670 = vset.pattern.permute.xlu0 7
      %2671 = vperm.xlu0 %2670, %v2314
      %v2672 = vpop.permute.xlu0 %2671
      %2674 = vset.pattern.permute.xlu0 7
      %2675 = vperm.xlu0 %2674, %v2315
      %v2676 = vpop.permute.xlu0 %2675
      %v2678 = vmul.f32 %v2672, %v2339
      %v2679 = vmul.f32 %v2672, %v2340
      %v2680 = vmul.f32 %v2672, %v2341
      %v2681 = vmul.f32 %v2676, %v2343
      %v2682 = vmul.f32 %v2676, %v2344
      %v2683 = vmul.f32 %v2676, %v2345
      %2690 = vrot.lane.b32.xlu0 %v2678, 112
      %v2691 = vpop.permute.xlu0 %2690
      %2692 = vrot.lane.b32.xlu0 %v2679, 112
      %v2693 = vpop.permute.xlu0 %2692
      %2694 = vrot.lane.b32.xlu0 %v2680, 112
      %v2695 = vpop.permute.xlu0 %2694
      %2696 = vrot.lane.b32.xlu0 %v2681, 112
      %v2697 = vpop.permute.xlu0 %2696
      %2698 = vrot.lane.b32.xlu0 %v2682, 112
      %v2699 = vpop.permute.xlu0 %2698
      %2700 = vrot.lane.b32.xlu0 %v2683, 112
      %v2701 = vpop.permute.xlu0 %2700
      %v2702 = vsel %vm552, %v2691, %v2693
      %v2703 = vsel %vm552, %v2693, %v2695
      %v2704 = vsel %vm552, %v2697, %v2699
      %v2705 = vsel %vm552, %v2699, %v2701
      %v2712 = vadd.f32 %v2664, %v2702
      %v2713 = vadd.f32 %v2665, %v2703
      %v2714 = vadd.f32 %v2666, %v2695
      %v2715 = vadd.f32 %v2667, %v2704
      %v2716 = vadd.f32 %v2668, %v2705
      %v2717 = vadd.f32 %v2669, %v2701
      %2718 = vset.pattern.permute.xlu0 8
      %2719 = vperm.xlu0 %2718, %v2314
      %v2720 = vpop.permute.xlu0 %2719
      %2722 = vset.pattern.permute.xlu0 8
      %2723 = vperm.xlu0 %2722, %v2315
      %v2724 = vpop.permute.xlu0 %2723
      %v2726 = vmul.f32 %v2720, %v401
      %v2727 = vmul.f32 %v2720, %v405
      %v2728 = vmul.f32 %v2720, %v409
      %v2729 = vmul.f32 %v2724, %v401
      %v2730 = vmul.f32 %v2724, %v405
      %v2731 = vmul.f32 %v2724, %v409
      %2732 = vrot.lane.b32.xlu0 %v2339, 111
      %v2733 = vpop.permute.xlu0 %2732
      %2734 = vrot.lane.b32.xlu0 %v2340, 111
      %v2735 = vpop.permute.xlu0 %2734
      %2736 = vrot.lane.b32.xlu0 %v2341, 111
      %v2737 = vpop.permute.xlu0 %2736
      %2738 = vrot.lane.b32.xlu0 %v2343, 111
      %v2739 = vpop.permute.xlu0 %2738
      %2740 = vrot.lane.b32.xlu0 %v2344, 111
      %v2741 = vpop.permute.xlu0 %2740
      %2742 = vrot.lane.b32.xlu0 %v2345, 111
      %v2743 = vpop.permute.xlu0 %2742
      %v2744 = vsel %vm577, %v2733, %v2735
      %v2745 = vsel %vm577, %v2735, %v2737
      %v2746 = vsel %vm577, %v2739, %v2741
      %v2747 = vsel %vm577, %v2741, %v2743
      %v2754 = vmul.f32 %v2726, %v2744
      %v2755 = vmul.f32 %v2727, %v2745
      %v2756 = vmul.f32 %v2728, %v2737
      %v2757 = vmul.f32 %v2729, %v2746
      %v2758 = vmul.f32 %v2730, %v2747
      %v2759 = vmul.f32 %v2731, %v2743
      %v2760 = vadd.f32 %v2712, %v2754
      %v2761 = vadd.f32 %v2713, %v2755
      %v2762 = vadd.f32 %v2714, %v2756
      %v2763 = vadd.f32 %v2715, %v2757
      %v2764 = vadd.f32 %v2716, %v2758
      %v2765 = vadd.f32 %v2717, %v2759
      %v2766 = vld [vmem:[%s1 + $0x88] sm:$0xff]
      %v2767 = vld [vmem:[%s1 + $0x90] sm:$0xff]
      %v2768 = vld [vmem:[%s1 + $0x98] sm:$0xff]
      %v2769 = vld [vmem:[%s1 + $0xa0] sm:$0xff]
      %2771 = vset.pattern.permute.xlu0 0
      %2772 = vperm.xlu0 %2771, %v2768
      %v2773 = vpop.permute.xlu0 %2772
      %2776 = vset.pattern.permute.xlu0 0
      %2777 = vperm.xlu0 %2776, %v2769
      %v2778 = vpop.permute.xlu0 %2777
      %v2781 = vsel %vm380, %v2766, 0
      %v2784 = vsel %vm380, %v2767, 0
      %2786 = vmatprep.subr.mxu0 %v2761
      %2787 = vmatpush1.msra.mxu0 %v2760
      %2788 = vmatprep.subr.mxu0 %v2764
      %2789 = vmatpush1.msra.mxu0 %v2763
      %2790 = vmatprep.subr.mxu0 0.0
      %2791 = vmatpush1.msra.mxu0 0.0
      %2792 = vmatprep.subr.mxu0 0.0
      %2793 = vmatpush1.msra.mxu0 0.0
      %2794 = vmatprep.subr.mxu0 0.0
      %2795 = vmatpush1.msra.mxu0 0.0
      %2796 = vmatprep.subr.mxu0 0.0
      %2797 = vmatpush1.msra.mxu0 0.0
      %2798 = vmatprep.subr.mxu0 0.0
      %2799 = vmatpush1.msra.mxu0 0.0
      %2800 = vmatprep.subr.mxu0 0.0
      %2801 = vmatpush1.msra.mxu0 0.0
      %2802 = vmatprep.subr.mxu0 0.0
      %2803 = vmatpush1.msra.mxu0 0.0
      %2804 = vmatprep.subr.mxu0 0.0
      %2805 = vmatpush1.msra.mxu0 0.0
      %2806 = vmatprep.subr.mxu0 0.0
      %2807 = vmatpush1.msra.mxu0 0.0
      %2808 = vmatprep.subr.mxu0 0.0
      %2809 = vmatpush1.msra.mxu0 0.0
      %2810 = vmatprep.subr.mxu0 0.0
      %2811 = vmatpush1.msra.mxu0 0.0
      %2812 = vmatprep.subr.mxu0 0.0
      %2813 = vmatpush1.msra.mxu0 0.0
      %2814 = vmatprep.subr.mxu0 0.0
      %2815 = vmatpush1.msra.mxu0 0.0
      %2816 = vmatprep.subr.mxu0 0.0
      %2817 = vmatpush1.msra.mxu0 0.0
      %2818 = vmatprep.subr.mxu0 0.0
      %2819 = vmatpush1.msra.mxu0 0.0
      %2820 = vmatprep.subr.mxu0 0.0
      %2821 = vmatpush1.msra.mxu0 0.0
      %2822 = vmatprep.subr.mxu0 0.0
      %2823 = vmatpush1.msra.mxu0 0.0
      %2824 = vmatprep.subr.mxu0 0.0
      %2825 = vmatpush1.msra.mxu0 0.0
      %2826 = vmatprep.subr.mxu0 0.0
      %2827 = vmatpush1.msra.mxu0 0.0
      %2828 = vmatprep.subr.mxu0 0.0
      %2829 = vmatpush1.msra.mxu0 0.0
      %2830 = vmatprep.subr.mxu0 0.0
      %2831 = vmatpush1.msra.mxu0 0.0
      %2832 = vmatprep.subr.mxu0 0.0
      %2833 = vmatpush1.msra.mxu0 0.0
      %2834 = vmatprep.subr.mxu0 0.0
      %2835 = vmatpush1.msra.mxu0 0.0
      %2836 = vmatprep.subr.mxu0 0.0
      %2837 = vmatpush1.msra.mxu0 0.0
      %2838 = vmatprep.subr.mxu0 0.0
      %2839 = vmatpush1.msra.mxu0 0.0
      %2840 = vmatprep.subr.mxu0 0.0
      %2841 = vmatpush1.msra.mxu0 0.0
      %2842 = vmatprep.subr.mxu0 0.0
      %2843 = vmatpush1.msra.mxu0 0.0
      %2844 = vmatprep.subr.mxu0 0.0
      %2845 = vmatpush1.msra.mxu0 0.0
      %2846 = vmatprep.subr.mxu0 0.0
      %2847 = vmatpush1.msra.mxu0 0.0
      %2848 = vmatprep.subr.mxu0 0.0
      %2849 = vmatpush1.msra.mxu0 0.0
      %2850 = vmatprep.mubr.f32.mxu0 0.0
      %2851 = vmatmul.mubr.f32.gmra.mrb[0].mxu0 %v2781
      %v2852 = vpop.f32.mrb[0].mxu0
      %v2853 = vadd.f32 %v2773, %v2852
      %v2854 = vpop.f32.mrb[0].mxu0
      %v2855 = vadd.f32 %v2773, %v2854
      %2856 = vmatprep.mubr.f32.mxu0 0.0
      %2857 = vmatmul.mubr.f32.gmra.mrb[0].mxu0 %v2784
      %v2858 = vpop.f32.mrb[0].mxu0
      %v2859 = vadd.f32 %v2778, %v2858
      %v2860 = vpop.f32.mrb[0].mxu0
      %v2861 = vadd.f32 %v2778, %v2860
      %2862 = vdwg.mxu0
      %2863 = vmatprep.subr.mxu0 0.0
      %2864 = vmatpush1.msra.mxu0 %v2762
      %2865 = vmatprep.subr.mxu0 0.0
      %2866 = vmatpush1.msra.mxu0 %v2765
      %2867 = vmatprep.subr.mxu0 0.0
      %2868 = vmatpush1.msra.mxu0 0.0
      %2869 = vmatprep.subr.mxu0 0.0
      %2870 = vmatpush1.msra.mxu0 0.0
      %2871 = vmatprep.subr.mxu0 0.0
      %2872 = vmatpush1.msra.mxu0 0.0
      %2873 = vmatprep.subr.mxu0 0.0
      %2874 = vmatpush1.msra.mxu0 0.0
      %2875 = vmatprep.subr.mxu0 0.0
      %2876 = vmatpush1.msra.mxu0 0.0
      %2877 = vmatprep.subr.mxu0 0.0
      %2878 = vmatpush1.msra.mxu0 0.0
      %2879 = vmatprep.subr.mxu0 0.0
      %2880 = vmatpush1.msra.mxu0 0.0
      %2881 = vmatprep.subr.mxu0 0.0
      %2882 = vmatpush1.msra.mxu0 0.0
      %2883 = vmatprep.subr.mxu0 0.0
      %2884 = vmatpush1.msra.mxu0 0.0
      %2885 = vmatprep.subr.mxu0 0.0
      %2886 = vmatpush1.msra.mxu0 0.0
      %2887 = vmatprep.subr.mxu0 0.0
      %2888 = vmatpush1.msra.mxu0 0.0
      %2889 = vmatprep.subr.mxu0 0.0
      %2890 = vmatpush1.msra.mxu0 0.0
      %2891 = vmatprep.subr.mxu0 0.0
      %2892 = vmatpush1.msra.mxu0 0.0
      %2893 = vmatprep.subr.mxu0 0.0
      %2894 = vmatpush1.msra.mxu0 0.0
      %2895 = vmatprep.subr.mxu0 0.0
      %2896 = vmatpush1.msra.mxu0 0.0
      %2897 = vmatprep.subr.mxu0 0.0
      %2898 = vmatpush1.msra.mxu0 0.0
      %2899 = vmatprep.subr.mxu0 0.0
      %2900 = vmatpush1.msra.mxu0 0.0
      %2901 = vmatprep.subr.mxu0 0.0
      %2902 = vmatpush1.msra.mxu0 0.0
      %2903 = vmatprep.subr.mxu0 0.0
      %2904 = vmatpush1.msra.mxu0 0.0
      %2905 = vmatprep.subr.mxu0 0.0
      %2906 = vmatpush1.msra.mxu0 0.0
      %2907 = vmatprep.subr.mxu0 0.0
      %2908 = vmatpush1.msra.mxu0 0.0
      %2909 = vmatprep.subr.mxu0 0.0
      %2910 = vmatpush1.msra.mxu0 0.0
      %2911 = vmatprep.subr.mxu0 0.0
      %2912 = vmatpush1.msra.mxu0 0.0
      %2913 = vmatprep.subr.mxu0 0.0
      %2914 = vmatpush1.msra.mxu0 0.0
      %2915 = vmatprep.subr.mxu0 0.0
      %2916 = vmatpush1.msra.mxu0 0.0
      %2917 = vmatprep.subr.mxu0 0.0
      %2918 = vmatpush1.msra.mxu0 0.0
      %2919 = vmatprep.subr.mxu0 0.0
      %2920 = vmatpush1.msra.mxu0 0.0
      %2921 = vmatprep.subr.mxu0 0.0
      %2922 = vmatpush1.msra.mxu0 0.0
      %2923 = vmatprep.subr.mxu0 0.0
      %2924 = vmatpush1.msra.mxu0 0.0
      %2925 = vmatprep.subr.mxu0 0.0
      %2926 = vmatpush1.msra.mxu0 0.0
      %2927 = vmatprep.mubr.f32.mxu0 0.0
      %2928 = vmatmul.mubr.f32.gmra.mrb[0].mxu0 %v2781
      %v2929 = vpop.f32.mrb[0].mxu0
      %v2930 = vadd.f32 %v2773, %v2929
      %v2931 = vpop.f32.mrb[0].mxu0
      %2932 = vmatprep.mubr.f32.mxu0 0.0
      %2933 = vmatmul.mubr.f32.gmra.mrb[0].mxu0 %v2784
      %v2934 = vpop.f32.mrb[0].mxu0
      %v2935 = vadd.f32 %v2778, %v2934
      %v2936 = vpop.f32.mrb[0].mxu0
      %2937 = vdwg.mxu0
      %v2938 = vmul.f32 %v2853, 0.2
      %v2939 = vmul.f32 %v2855, 0.2
      %v2940 = vmul.f32 %v2930, 0.2
      %v2941 = vmul.f32 %v2859, 0.2
      %v2942 = vmul.f32 %v2861, 0.2
      %v2943 = vmul.f32 %v2935, 0.2
      %v2944 = vmax.f32 %v2853, %v2938
      %v2945 = vmax.f32 %v2855, %v2939
      %v2946 = vmax.f32 %v2930, %v2940
      %v2947 = vmax.f32 %v2859, %v2941
      %v2948 = vmax.f32 %v2861, %v2942
      %v2949 = vmax.f32 %v2935, %v2943
      %v2950 = vld [vmem:[%s1 + $0xa8] sm:$0xff]
      %v2951 = vld [vmem:[%s1 + $0xb0] sm:$0xff]
      %v2952 = vld [vmem:[%s1 + $0xb8] sm:$0xff]
      %v2953 = vld [vmem:[%s1 + $0xc0] sm:$0xff]
      %2955 = vset.pattern.permute.xlu0 0
      %2956 = vperm.xlu0 %2955, %v2952
      %v2957 = vpop.permute.xlu0 %2956
      %2960 = vset.pattern.permute.xlu0 0
      %2961 = vperm.xlu0 %2960, %v2953
      %v2962 = vpop.permute.xlu0 %2961
      %v2965 = vsel %vm858, %v2950, 0
      %v2968 = vsel %vm858, %v2951, 0
      %2970 = vmatprep.subr.mxu0 %v1902
      %2971 = vmatpush1.msra.mxu0 %v1901
      %2972 = vmatprep.subr.mxu0 0.0
      %2973 = vmatpush1.msra.mxu0 0.0
      %2974 = vmatprep.subr.mxu0 0.0
      %2975 = vmatpush1.msra.mxu0 0.0
      %2976 = vmatprep.subr.mxu0 0.0
      %2977 = vmatpush1.msra.mxu0 0.0
      %2978 = vmatprep.subr.mxu0 0.0
      %2979 = vmatpush1.msra.mxu0 0.0
      %2980 = vmatprep.subr.mxu0 0.0
      %2981 = vmatpush1.msra.mxu0 0.0
      %2982 = vmatprep.subr.mxu0 0.0
      %2983 = vmatpush1.msra.mxu0 0.0
      %2984 = vmatprep.subr.mxu0 0.0
      %2985 = vmatpush1.msra.mxu0 0.0
      %2986 = vmatprep.subr.mxu0 0.0
      %2987 = vmatpush1.msra.mxu0 0.0
      %2988 = vmatprep.subr.mxu0 0.0
      %2989 = vmatpush1.msra.mxu0 0.0
      %2990 = vmatprep.subr.mxu0 0.0
      %2991 = vmatpush1.msra.mxu0 0.0
      %2992 = vmatprep.subr.mxu0 0.0
      %2993 = vmatpush1.msra.mxu0 0.0
      %2994 = vmatprep.subr.mxu0 0.0
      %2995 = vmatpush1.msra.mxu0 0.0
      %2996 = vmatprep.subr.mxu0 0.0
      %2997 = vmatpush1.msra.mxu0 0.0
      %2998 = vmatprep.subr.mxu0 0.0
      %2999 = vmatpush1.msra.mxu0 0.0
      %3000 = vmatprep.subr.mxu0 0.0
      %3001 = vmatpush1.msra.mxu0 0.0
      %3002 = vmatprep.subr.mxu0 0.0
      %3003 = vmatpush1.msra.mxu0 0.0
      %3004 = vmatprep.subr.mxu0 0.0
      %3005 = vmatpush1.msra.mxu0 0.0
      %3006 = vmatprep.subr.mxu0 0.0
      %3007 = vmatpush1.msra.mxu0 0.0
      %3008 = vmatprep.subr.mxu0 0.0
      %3009 = vmatpush1.msra.mxu0 0.0
      %3010 = vmatprep.subr.mxu0 0.0
      %3011 = vmatpush1.msra.mxu0 0.0
      %3012 = vmatprep.subr.mxu0 0.0
      %3013 = vmatpush1.msra.mxu0 0.0
      %3014 = vmatprep.subr.mxu0 0.0
      %3015 = vmatpush1.msra.mxu0 0.0
      %3016 = vmatprep.subr.mxu0 0.0
      %3017 = vmatpush1.msra.mxu0 0.0
      %3018 = vmatprep.subr.mxu0 0.0
      %3019 = vmatpush1.msra.mxu0 0.0
      %3020 = vmatprep.subr.mxu0 0.0
      %3021 = vmatpush1.msra.mxu0 0.0
      %3022 = vmatprep.subr.mxu0 0.0
      %3023 = vmatpush1.msra.mxu0 0.0
      %3024 = vmatprep.subr.mxu0 0.0
      %3025 = vmatpush1.msra.mxu0 0.0
      %3026 = vmatprep.subr.mxu0 0.0
      %3027 = vmatpush1.msra.mxu0 0.0
      %3028 = vmatprep.subr.mxu0 0.0
      %3029 = vmatpush1.msra.mxu0 0.0
      %3030 = vmatprep.subr.mxu0 0.0
      %3031 = vmatpush1.msra.mxu0 0.0
      %3032 = vmatprep.subr.mxu0 0.0
      %3033 = vmatpush1.msra.mxu0 0.0
      %3034 = vmatprep.mubr.f32.mxu0 0.0
      %3035 = vmatmul.mubr.f32.gmra.mrb[0].mxu0 %v2965
      %v3036 = vpop.f32.mrb[0].mxu0
      %v3037 = vadd.f32 %v2957, %v3036
      %v3038 = vpop.f32.mrb[0].mxu0
      %v3039 = vadd.f32 %v2957, %v3038
      %3040 = vmatprep.mubr.f32.mxu0 0.0
      %3041 = vmatmul.mubr.f32.gmra.mrb[0].mxu0 %v2968
      %v3042 = vpop.f32.mrb[0].mxu0
      %v3043 = vadd.f32 %v2962, %v3042
      %v3044 = vpop.f32.mrb[0].mxu0
      %v3045 = vadd.f32 %v2962, %v3044
      %3046 = vdwg.mxu0
      %3047 = vmatprep.subr.mxu0 0.0
      %3048 = vmatpush1.msra.mxu0 %v1903
      %3049 = vmatprep.subr.mxu0 0.0
      %3050 = vmatpush1.msra.mxu0 0.0
      %3051 = vmatprep.subr.mxu0 0.0
      %3052 = vmatpush1.msra.mxu0 0.0
      %3053 = vmatprep.subr.mxu0 0.0
      %3054 = vmatpush1.msra.mxu0 0.0
      %3055 = vmatprep.subr.mxu0 0.0
      %3056 = vmatpush1.msra.mxu0 0.0
      %3057 = vmatprep.subr.mxu0 0.0
      %3058 = vmatpush1.msra.mxu0 0.0
      %3059 = vmatprep.subr.mxu0 0.0
      %3060 = vmatpush1.msra.mxu0 0.0
      %3061 = vmatprep.subr.mxu0 0.0
      %3062 = vmatpush1.msra.mxu0 0.0
      %3063 = vmatprep.subr.mxu0 0.0
      %3064 = vmatpush1.msra.mxu0 0.0
      %3065 = vmatprep.subr.mxu0 0.0
      %3066 = vmatpush1.msra.mxu0 0.0
      %3067 = vmatprep.subr.mxu0 0.0
      %3068 = vmatpush1.msra.mxu0 0.0
      %3069 = vmatprep.subr.mxu0 0.0
      %3070 = vmatpush1.msra.mxu0 0.0
      %3071 = vmatprep.subr.mxu0 0.0
      %3072 = vmatpush1.msra.mxu0 0.0
      %3073 = vmatprep.subr.mxu0 0.0
      %3074 = vmatpush1.msra.mxu0 0.0
      %3075 = vmatprep.subr.mxu0 0.0
      %3076 = vmatpush1.msra.mxu0 0.0
      %3077 = vmatprep.subr.mxu0 0.0
      %3078 = vmatpush1.msra.mxu0 0.0
      %3079 = vmatprep.subr.mxu0 0.0
      %3080 = vmatpush1.msra.mxu0 0.0
      %3081 = vmatprep.subr.mxu0 0.0
      %3082 = vmatpush1.msra.mxu0 0.0
      %3083 = vmatprep.subr.mxu0 0.0
      %3084 = vmatpush1.msra.mxu0 0.0
      %3085 = vmatprep.subr.mxu0 0.0
      %3086 = vmatpush1.msra.mxu0 0.0
      %3087 = vmatprep.subr.mxu0 0.0
      %3088 = vmatpush1.msra.mxu0 0.0
      %3089 = vmatprep.subr.mxu0 0.0
      %3090 = vmatpush1.msra.mxu0 0.0
      %3091 = vmatprep.subr.mxu0 0.0
      %3092 = vmatpush1.msra.mxu0 0.0
      %3093 = vmatprep.subr.mxu0 0.0
      %3094 = vmatpush1.msra.mxu0 0.0
      %3095 = vmatprep.subr.mxu0 0.0
      %3096 = vmatpush1.msra.mxu0 0.0
      %3097 = vmatprep.subr.mxu0 0.0
      %3098 = vmatpush1.msra.mxu0 0.0
      %3099 = vmatprep.subr.mxu0 0.0
      %3100 = vmatpush1.msra.mxu0 0.0
      %3101 = vmatprep.subr.mxu0 0.0
      %3102 = vmatpush1.msra.mxu0 0.0
      %3103 = vmatprep.subr.mxu0 0.0
      %3104 = vmatpush1.msra.mxu0 0.0
      %3105 = vmatprep.subr.mxu0 0.0
      %3106 = vmatpush1.msra.mxu0 0.0
      %3107 = vmatprep.subr.mxu0 0.0
      %3108 = vmatpush1.msra.mxu0 0.0
      %3109 = vmatprep.subr.mxu0 0.0
      %3110 = vmatpush1.msra.mxu0 0.0
      %3111 = vmatprep.mubr.f32.mxu0 0.0
      %3112 = vmatmul.mubr.f32.gmra.mrb[0].mxu0 %v2965
      %v3113 = vpop.f32.mrb[0].mxu0
      %v3114 = vadd.f32 %v2957, %v3113
      %v3115 = vpop.f32.mrb[0].mxu0
      %3116 = vmatprep.mubr.f32.mxu0 0.0
      %3117 = vmatmul.mubr.f32.gmra.mrb[0].mxu0 %v2968
      %v3118 = vpop.f32.mrb[0].mxu0
      %v3119 = vadd.f32 %v2962, %v3118
      %v3120 = vpop.f32.mrb[0].mxu0
      %3121 = vdwg.mxu0
      %v3122 = vadd.f32 %v2944, %v3037
      %v3123 = vadd.f32 %v2945, %v3039
      %v3124 = vadd.f32 %v2946, %v3114
      %v3125 = vadd.f32 %v2947, %v3043
      %v3126 = vadd.f32 %v2948, %v3045
      %v3127 = vadd.f32 %v2949, %v3119
      %v3128 = vld [vmem:[%s1 + $0xc8] sm:$0xff]
      %v3129 = vld [vmem:[%s1 + $0xd0] sm:$0xff]
      %v3130 = vld [vmem:[%s1 + $0xd8] sm:$0xff]
      %v3132 = vsel %vm201, %v3124, 0
      %v3135 = vsel %vm201, %v3127, 0
      %3137 = vmatprep.subr.mxu0 0.0
      %3138 = vmatpush1.msra.mxu0 %v222
      %3139 = vmatprep.subr.mxu0 0.0
      %3140 = vmatpush1.msra.mxu0 %v223
      %3141 = vmatprep.subr.mxu0 0.0
      %3142 = vmatpush1.msra.mxu0 %v224
      %3143 = vmatprep.subr.mxu0 0.0
      %3144 = vmatpush1.msra.mxu0 %v225
      %3145 = vmatprep.subr.mxu0 0.0
      %3146 = vmatpush1.msra.mxu0 %v226
      %3147 = vmatprep.subr.mxu0 0.0
      %3148 = vmatpush1.msra.mxu0 %v227
      %3149 = vmatprep.subr.mxu0 0.0
      %3150 = vmatpush1.msra.mxu0 %v228
      %3151 = vmatprep.subr.mxu0 0.0
      %3152 = vmatpush1.msra.mxu0 %v229
      %3153 = vmatprep.subr.mxu0 0.0
      %3154 = vmatpush1.msra.mxu0 %v230
      %3155 = vmatprep.subr.mxu0 0.0
      %3156 = vmatpush1.msra.mxu0 %v231
      %3157 = vmatprep.subr.mxu0 0.0
      %3158 = vmatpush1.msra.mxu0 %v232
      %3159 = vmatprep.subr.mxu0 0.0
      %3160 = vmatpush1.msra.mxu0 %v233
      %3161 = vmatprep.subr.mxu0 0.0
      %3162 = vmatpush1.msra.mxu0 %v234
      %3163 = vmatprep.subr.mxu0 0.0
      %3164 = vmatpush1.msra.mxu0 %v235
      %3165 = vmatprep.subr.mxu0 0.0
      %3166 = vmatpush1.msra.mxu0 %v236
      %3167 = vmatprep.subr.mxu0 0.0
      %3168 = vmatpush1.msra.mxu0 %v237
      %3169 = vmatprep.subr.mxu0 0.0
      %3170 = vmatpush1.msra.mxu0 %v238
      %3171 = vmatprep.subr.mxu0 0.0
      %3172 = vmatpush1.msra.mxu0 %v239
      %3173 = vmatprep.subr.mxu0 0.0
      %3174 = vmatpush1.msra.mxu0 %v240
      %3175 = vmatprep.subr.mxu0 0.0
      %3176 = vmatpush1.msra.mxu0 %v241
      %3177 = vmatprep.subr.mxu0 0.0
      %3178 = vmatpush1.msra.mxu0 %v242
      %3179 = vmatprep.subr.mxu0 0.0
      %3180 = vmatpush1.msra.mxu0 %v243
      %3181 = vmatprep.subr.mxu0 0.0
      %3182 = vmatpush1.msra.mxu0 %v244
      %3183 = vmatprep.subr.mxu0 0.0
      %3184 = vmatpush1.msra.mxu0 %v245
      %3185 = vmatprep.subr.mxu0 0.0
      %3186 = vmatpush1.msra.mxu0 %v246
      %3187 = vmatprep.subr.mxu0 0.0
      %3188 = vmatpush1.msra.mxu0 %v247
      %3189 = vmatprep.subr.mxu0 0.0
      %3190 = vmatpush1.msra.mxu0 %v248
      %3191 = vmatprep.subr.mxu0 0.0
      %3192 = vmatpush1.msra.mxu0 %v249
      %3193 = vmatprep.subr.mxu0 0.0
      %3194 = vmatpush1.msra.mxu0 %v250
      %3195 = vmatprep.subr.mxu0 0.0
      %3196 = vmatpush1.msra.mxu0 %v251
      %3197 = vmatprep.subr.mxu0 0.0
      %3198 = vmatpush1.msra.mxu0 %v252
      %3199 = vmatprep.subr.mxu0 0.0
      %3200 = vmatpush1.msra.mxu0 %v253
      %3201 = vmatprep.mubr.f32.mxu0 %v3123
      %3202 = vmatmul.mubr.f32.gmra.mrb[0].mxu0 %v3122
      %v3203 = vpop.f32.mrb[0].mxu0
      %v3204 = vadd.f32 0.0, %v3203
      %v3205 = vpop.f32.mrb[0].mxu0
      %3206 = vmatprep.mubr.f32.mxu0 %v3126
      %3207 = vmatmul.mubr.f32.gmra.mrb[0].mxu0 %v3125
      %v3208 = vpop.f32.mrb[0].mxu0
      %v3209 = vadd.f32 0.0, %v3208
      %v3210 = vpop.f32.mrb[0].mxu0
      %3211 = vdwg.mxu0
      %3212 = vmatprep.subr.mxu0 0.0
      %3213 = vmatpush1.msra.mxu0 %v254
      %3214 = vmatprep.subr.mxu0 0.0
      %3215 = vmatpush1.msra.mxu0 %v255
      %3216 = vmatprep.subr.mxu0 0.0
      %3217 = vmatpush1.msra.mxu0 %v256
      %3218 = vmatprep.subr.mxu0 0.0
      %3219 = vmatpush1.msra.mxu0 %v257
      %3220 = vmatprep.subr.mxu0 0.0
      %3221 = vmatpush1.msra.mxu0 %v258
      %3222 = vmatprep.subr.mxu0 0.0
      %3223 = vmatpush1.msra.mxu0 %v259
      %3224 = vmatprep.subr.mxu0 0.0
      %3225 = vmatpush1.msra.mxu0 0.0
      %3226 = vmatprep.subr.mxu0 0.0
      %3227 = vmatpush1.msra.mxu0 0.0
      %3228 = vmatprep.subr.mxu0 0.0
      %3229 = vmatpush1.msra.mxu0 0.0
      %3230 = vmatprep.subr.mxu0 0.0
      %3231 = vmatpush1.msra.mxu0 0.0
      %3232 = vmatprep.subr.mxu0 0.0
      %3233 = vmatpush1.msra.mxu0 0.0
      %3234 = vmatprep.subr.mxu0 0.0
      %3235 = vmatpush1.msra.mxu0 0.0
      %3236 = vmatprep.subr.mxu0 0.0
      %3237 = vmatpush1.msra.mxu0 0.0
      %3238 = vmatprep.subr.mxu0 0.0
      %3239 = vmatpush1.msra.mxu0 0.0
      %3240 = vmatprep.subr.mxu0 0.0
      %3241 = vmatpush1.msra.mxu0 0.0
      %3242 = vmatprep.subr.mxu0 0.0
      %3243 = vmatpush1.msra.mxu0 0.0
      %3244 = vmatprep.subr.mxu0 0.0
      %3245 = vmatpush1.msra.mxu0 0.0
      %3246 = vmatprep.subr.mxu0 0.0
      %3247 = vmatpush1.msra.mxu0 0.0
      %3248 = vmatprep.subr.mxu0 0.0
      %3249 = vmatpush1.msra.mxu0 0.0
      %3250 = vmatprep.subr.mxu0 0.0
      %3251 = vmatpush1.msra.mxu0 0.0
      %3252 = vmatprep.subr.mxu0 0.0
      %3253 = vmatpush1.msra.mxu0 0.0
      %3254 = vmatprep.subr.mxu0 0.0
      %3255 = vmatpush1.msra.mxu0 0.0
      %3256 = vmatprep.subr.mxu0 0.0
      %3257 = vmatpush1.msra.mxu0 0.0
      %3258 = vmatprep.subr.mxu0 0.0
      %3259 = vmatpush1.msra.mxu0 0.0
      %3260 = vmatprep.subr.mxu0 0.0
      %3261 = vmatpush1.msra.mxu0 0.0
      %3262 = vmatprep.subr.mxu0 0.0
      %3263 = vmatpush1.msra.mxu0 0.0
      %3264 = vmatprep.subr.mxu0 0.0
      %3265 = vmatpush1.msra.mxu0 0.0
      %3266 = vmatprep.subr.mxu0 0.0
      %3267 = vmatpush1.msra.mxu0 0.0
      %3268 = vmatprep.subr.mxu0 0.0
      %3269 = vmatpush1.msra.mxu0 0.0
      %3270 = vmatprep.subr.mxu0 0.0
      %3271 = vmatpush1.msra.mxu0 0.0
      %3272 = vmatprep.subr.mxu0 0.0
      %3273 = vmatpush1.msra.mxu0 0.0
      %3274 = vmatprep.subr.mxu0 0.0
      %3275 = vmatpush1.msra.mxu0 0.0
      %3276 = vmatprep.mubr.f32.mxu0 0.0
      %3277 = vmatmul.mubr.f32.gmra.mrb[0].mxu0 %v3132
      %v3278 = vpop.f32.mrb[0].mxu0
      %v3279 = vadd.f32 %v3204, %v3278
      %v3280 = vpop.f32.mrb[0].mxu0
      %3281 = vmatprep.mubr.f32.mxu0 0.0
      %3282 = vmatmul.mubr.f32.gmra.mrb[0].mxu0 %v3135
      %v3283 = vpop.f32.mrb[0].mxu0
      %v3284 = vadd.f32 %v3209, %v3283
      %v3285 = vpop.f32.mrb[0].mxu0
      %3286 = vdwg.mxu0
      %3287 = vst [vmem:[#allocation2 + $0x8] sm:$0xff] %v3122
      %3288 = vst [vmem:[#allocation2 + $0x10] sm:$0xff] %v3123
      %3289 = vst.msk [vmem:[#allocation2 + $0x18] sm:$0xff] %vm201, %v3124
      %3290 = vst [vmem:[#allocation2 + $0x30] sm:$0xff] %v3125
      %3291 = vst [vmem:[#allocation2 + $0x38] sm:$0xff] %v3126
      %3292 = vst.msk [vmem:[#allocation2 + $0x40] sm:$0xff] %vm201, %v3127
      %v3293 = vld [vmem:[#allocation2 + $0x8] sm:$0xff]
      %v3294 = vld [vmem:[#allocation2 + $0x10] sm:$0xff]
      %v3295 = vld [vmem:[#allocation2 + $0x18] sm:$0xff]
      %v3296 = vld [vmem:[#allocation2 + $0x30] sm:$0xff]
      %v3297 = vld [vmem:[#allocation2 + $0x38] sm:$0xff]
      %v3298 = vld [vmem:[#allocation2 + $0x40] sm:$0xff]
      %3305 = vrot.lane.b32.xlu0 %v3293, 127
      %v3306 = vpop.permute.xlu0 %3305
      %3307 = vrot.lane.b32.xlu0 %v3294, 127
      %v3308 = vpop.permute.xlu0 %3307
      %3309 = vrot.lane.b32.xlu0 %v3295, 127
      %v3310 = vpop.permute.xlu0 %3309
      %3311 = vrot.lane.b32.xlu0 %v3296, 127
      %v3312 = vpop.permute.xlu0 %3311
      %3313 = vrot.lane.b32.xlu0 %v3297, 127
      %v3314 = vpop.permute.xlu0 %3313
      %3315 = vrot.lane.b32.xlu0 %v3298, 127
      %v3316 = vpop.permute.xlu0 %3315
      %v3317 = vsel %vm505, %v3306, %v3308
      %v3318 = vsel %vm505, %v3308, %v3310
      %v3319 = vsel %vm505, %v3312, %v3314
      %v3320 = vsel %vm505, %v3314, %v3316
      %v3327 = vmax.f32 %v3122, %v3317
      %v3328 = vmax.f32 %v3123, %v3318
      %v3329 = vmax.f32 %v3124, %v3310
      %v3330 = vmax.f32 %v3125, %v3319
      %v3331 = vmax.f32 %v3126, %v3320
      %v3332 = vmax.f32 %v3127, %v3316
      %3333 = vst [vmem:[#allocation2 + $0x8] sm:$0xff] %v3327
      %3334 = vst [vmem:[#allocation2 + $0x10] sm:$0xff] %v3328
      %3335 = vst.msk [vmem:[#allocation2 + $0x18] sm:$0xff] %vm201, %v3329
      %3336 = vst [vmem:[#allocation2 + $0x30] sm:$0xff] %v3330
      %3337 = vst [vmem:[#allocation2 + $0x38] sm:$0xff] %v3331
      %3338 = vst.msk [vmem:[#allocation2 + $0x40] sm:$0xff] %vm201, %v3332
      %v3339 = vld [vmem:[#allocation2 + $0x8] sm:$0xff]
      %v3340 = vld [vmem:[#allocation2 + $0x10] sm:$0xff]
      %v3341 = vld [vmem:[#allocation2 + $0x18] sm:$0xff]
      %v3342 = vld [vmem:[#allocation2 + $0x30] sm:$0xff]
      %v3343 = vld [vmem:[#allocation2 + $0x38] sm:$0xff]
      %v3344 = vld [vmem:[#allocation2 + $0x40] sm:$0xff]
      %3351 = vrot.lane.b32.xlu0 %v3339, 126
      %v3352 = vpop.permute.xlu0 %3351
      %3353 = vrot.lane.b32.xlu0 %v3340, 126
      %v3354 = vpop.permute.xlu0 %3353
      %3355 = vrot.lane.b32.xlu0 %v3341, 126
      %v3356 = vpop.permute.xlu0 %3355
      %3357 = vrot.lane.b32.xlu0 %v3342, 126
      %v3358 = vpop.permute.xlu0 %3357
      %3359 = vrot.lane.b32.xlu0 %v3343, 126
      %v3360 = vpop.permute.xlu0 %3359
      %3361 = vrot.lane.b32.xlu0 %v3344, 126
      %v3362 = vpop.permute.xlu0 %3361
      %v3363 = vsel %vm1229, %v3352, %v3354
      %v3364 = vsel %vm1229, %v3354, %v3356
      %v3365 = vsel %vm1229, %v3358, %v3360
      %v3366 = vsel %vm1229, %v3360, %v3362
      %v3373 = vmax.f32 %v3327, %v3363
      %v3374 = vmax.f32 %v3328, %v3364
      %v3375 = vmax.f32 %v3329, %v3356
      %v3376 = vmax.f32 %v3330, %v3365
      %v3377 = vmax.f32 %v3331, %v3366
      %v3378 = vmax.f32 %v3332, %v3362
      %3379 = vst [vmem:[#allocation2 + $0x8] sm:$0xff] %v3373
      %3380 = vst [vmem:[#allocation2 + $0x10] sm:$0xff] %v3374
      %3381 = vst.msk [vmem:[#allocation2 + $0x18] sm:$0xff] %vm201, %v3375
      %3382 = vst [vmem:[#allocation2 + $0x30] sm:$0xff] %v3376
      %3383 = vst [vmem:[#allocation2 + $0x38] sm:$0xff] %v3377
      %3384 = vst.msk [vmem:[#allocation2 + $0x40] sm:$0xff] %vm201, %v3378
      %v3385 = vld [vmem:[#allocation2 + $0x8] sm:$0xff]
      %v3386 = vld [vmem:[#allocation2 + $0x10] sm:$0xff]
      %v3387 = vld [vmem:[#allocation2 + $0x18] sm:$0xff]
      %v3388 = vld [vmem:[#allocation2 + $0x30] sm:$0xff]
      %v3389 = vld [vmem:[#allocation2 + $0x38] sm:$0xff]
      %v3390 = vld [vmem:[#allocation2 + $0x40] sm:$0xff]
      %3397 = vrot.lane.b32.xlu0 %v3385, 124
      %v3398 = vpop.permute.xlu0 %3397
      %3399 = vrot.lane.b32.xlu0 %v3386, 124
      %v3400 = vpop.permute.xlu0 %3399
      %3401 = vrot.lane.b32.xlu0 %v3387, 124
      %v3402 = vpop.permute.xlu0 %3401
      %3403 = vrot.lane.b32.xlu0 %v3388, 124
      %v3404 = vpop.permute.xlu0 %3403
      %3405 = vrot.lane.b32.xlu0 %v3389, 124
      %v3406 = vpop.permute.xlu0 %3405
      %3407 = vrot.lane.b32.xlu0 %v3390, 124
      %v3408 = vpop.permute.xlu0 %3407
      %v3409 = vsel %vm1253, %v3398, %v3400
      %v3410 = vsel %vm1253, %v3400, %v3402
      %v3411 = vsel %vm1253, %v3404, %v3406
      %v3412 = vsel %vm1253, %v3406, %v3408
      %v3419 = vmax.f32 %v3373, %v3409
      %v3420 = vmax.f32 %v3374, %v3410
      %v3421 = vmax.f32 %v3375, %v3402
      %v3422 = vmax.f32 %v3376, %v3411
      %v3423 = vmax.f32 %v3377, %v3412
      %v3424 = vmax.f32 %v3378, %v3408
      %3425 = vst [vmem:[#allocation2 + $0x8] sm:$0xff] %v3419
      %3426 = vst [vmem:[#allocation2 + $0x10] sm:$0xff] %v3420
      %3427 = vst.msk [vmem:[#allocation2 + $0x18] sm:$0xff] %vm201, %v3421
      %3428 = vst [vmem:[#allocation2 + $0x30] sm:$0xff] %v3422
      %3429 = vst [vmem:[#allocation2 + $0x38] sm:$0xff] %v3423
      %3430 = vst.msk [vmem:[#allocation2 + $0x40] sm:$0xff] %vm201, %v3424
      %v3431 = vld [vmem:[#allocation2 + $0x8] sm:$0xff]
      %v3432 = vld [vmem:[#allocation2 + $0x10] sm:$0xff]
      %v3433 = vld [vmem:[#allocation2 + $0x18] sm:$0xff]
      %v3434 = vld [vmem:[#allocation2 + $0x30] sm:$0xff]
      %v3435 = vld [vmem:[#allocation2 + $0x38] sm:$0xff]
      %v3436 = vld [vmem:[#allocation2 + $0x40] sm:$0xff]
      %3443 = vrot.lane.b32.xlu0 %v3431, 120
      %v3444 = vpop.permute.xlu0 %3443
      %3445 = vrot.lane.b32.xlu0 %v3432, 120
      %v3446 = vpop.permute.xlu0 %3445
      %3447 = vrot.lane.b32.xlu0 %v3433, 120
      %v3448 = vpop.permute.xlu0 %3447
      %3449 = vrot.lane.b32.xlu0 %v3434, 120
      %v3450 = vpop.permute.xlu0 %3449
      %3451 = vrot.lane.b32.xlu0 %v3435, 120
      %v3452 = vpop.permute.xlu0 %3451
      %3453 = vrot.lane.b32.xlu0 %v3436, 120
      %v3454 = vpop.permute.xlu0 %3453
      %v3455 = vsel %vm1277, %v3444, %v3446
      %v3456 = vsel %vm1277, %v3446, %v3448
      %v3457 = vsel %vm1277, %v3450, %v3452
      %v3458 = vsel %vm1277, %v3452, %v3454
      %v3465 = vmax.f32 %v3419, %v3455
      %v3466 = vmax.f32 %v3420, %v3456
      %v3467 = vmax.f32 %v3421, %v3448
      %v3468 = vmax.f32 %v3422, %v3457
      %v3469 = vmax.f32 %v3423, %v3458
      %v3470 = vmax.f32 %v3424, %v3454
      %v3472 = vsel %vm201, %v3467, 0
      %v3475 = vsel %vm201, %v3470, 0
      %3477 = vmatprep.subr.mxu0 0.0
      %3478 = vmatpush1.msra.mxu0 %v261
      %3479 = vmatprep.subr.mxu0 0.0
      %3480 = vmatpush1.msra.mxu0 %v262
      %3481 = vmatprep.subr.mxu0 0.0
      %3482 = vmatpush1.msra.mxu0 %v263
      %3483 = vmatprep.subr.mxu0 0.0
      %3484 = vmatpush1.msra.mxu0 %v264
      %3485 = vmatprep.subr.mxu0 0.0
      %3486 = vmatpush1.msra.mxu0 %v265
      %3487 = vmatprep.subr.mxu0 0.0
      %3488 = vmatpush1.msra.mxu0 %v266
      %3489 = vmatprep.subr.mxu0 0.0
      %3490 = vmatpush1.msra.mxu0 %v267
      %3491 = vmatprep.subr.mxu0 0.0
      %3492 = vmatpush1.msra.mxu0 %v268
      %3493 = vmatprep.subr.mxu0 0.0
      %3494 = vmatpush1.msra.mxu0 %v269
      %3495 = vmatprep.subr.mxu0 0.0
      %3496 = vmatpush1.msra.mxu0 %v270
      %3497 = vmatprep.subr.mxu0 0.0
      %3498 = vmatpush1.msra.mxu0 %v271
      %3499 = vmatprep.subr.mxu0 0.0
      %3500 = vmatpush1.msra.mxu0 %v272
      %3501 = vmatprep.subr.mxu0 0.0
      %3502 = vmatpush1.msra.mxu0 %v273
      %3503 = vmatprep.subr.mxu0 0.0
      %3504 = vmatpush1.msra.mxu0 %v274
      %3505 = vmatprep.subr.mxu0 0.0
      %3506 = vmatpush1.msra.mxu0 %v275
      %3507 = vmatprep.subr.mxu0 0.0
      %3508 = vmatpush1.msra.mxu0 %v276
      %3509 = vmatprep.subr.mxu0 0.0
      %3510 = vmatpush1.msra.mxu0 %v277
      %3511 = vmatprep.subr.mxu0 0.0
      %3512 = vmatpush1.msra.mxu0 %v278
      %3513 = vmatprep.subr.mxu0 0.0
      %3514 = vmatpush1.msra.mxu0 %v279
      %3515 = vmatprep.subr.mxu0 0.0
      %3516 = vmatpush1.msra.mxu0 %v280
      %3517 = vmatprep.subr.mxu0 0.0
      %3518 = vmatpush1.msra.mxu0 %v281
      %3519 = vmatprep.subr.mxu0 0.0
      %3520 = vmatpush1.msra.mxu0 %v282
      %3521 = vmatprep.subr.mxu0 0.0
      %3522 = vmatpush1.msra.mxu0 %v283
      %3523 = vmatprep.subr.mxu0 0.0
      %3524 = vmatpush1.msra.mxu0 %v284
      %3525 = vmatprep.subr.mxu0 0.0
      %3526 = vmatpush1.msra.mxu0 %v285
      %3527 = vmatprep.subr.mxu0 0.0
      %3528 = vmatpush1.msra.mxu0 %v286
      %3529 = vmatprep.subr.mxu0 0.0
      %3530 = vmatpush1.msra.mxu0 %v287
      %3531 = vmatprep.subr.mxu0 0.0
      %3532 = vmatpush1.msra.mxu0 %v288
      %3533 = vmatprep.subr.mxu0 0.0
      %3534 = vmatpush1.msra.mxu0 %v289
      %3535 = vmatprep.subr.mxu0 0.0
      %3536 = vmatpush1.msra.mxu0 %v290
      %3537 = vmatprep.subr.mxu0 0.0
      %3538 = vmatpush1.msra.mxu0 %v291
      %3539 = vmatprep.subr.mxu0 0.0
      %3540 = vmatpush1.msra.mxu0 %v292
      %3541 = vmatprep.mubr.f32.mxu0 %v3466
      %3542 = vmatmul.mubr.f32.gmra.mrb[0].mxu0 %v3465
      %v3543 = vpop.f32.mrb[0].mxu0
      %v3544 = vadd.f32 0.0, %v3543
      %v3545 = vpop.f32.mrb[0].mxu0
      %3546 = vmatprep.mubr.f32.mxu0 %v3469
      %3547 = vmatmul.mubr.f32.gmra.mrb[0].mxu0 %v3468
      %v3548 = vpop.f32.mrb[0].mxu0
      %v3549 = vadd.f32 0.0, %v3548
      %v3550 = vpop.f32.mrb[0].mxu0
      %3551 = vdwg.mxu0
      %3552 = vmatprep.subr.mxu0 0.0
      %3553 = vmatpush1.msra.mxu0 %v293
      %3554 = vmatprep.subr.mxu0 0.0
      %3555 = vmatpush1.msra.mxu0 %v294
      %3556 = vmatprep.subr.mxu0 0.0
      %3557 = vmatpush1.msra.mxu0 %v295
      %3558 = vmatprep.subr.mxu0 0.0
      %3559 = vmatpush1.msra.mxu0 %v296
      %3560 = vmatprep.subr.mxu0 0.0
      %3561 = vmatpush1.msra.mxu0 %v297
      %3562 = vmatprep.subr.mxu0 0.0
      %3563 = vmatpush1.msra.mxu0 %v298
      %3564 = vmatprep.subr.mxu0 0.0
      %3565 = vmatpush1.msra.mxu0 0.0
      %3566 = vmatprep.subr.mxu0 0.0
      %3567 = vmatpush1.msra.mxu0 0.0
      %3568 = vmatprep.subr.mxu0 0.0
      %3569 = vmatpush1.msra.mxu0 0.0
      %3570 = vmatprep.subr.mxu0 0.0
      %3571 = vmatpush1.msra.mxu0 0.0
      %3572 = vmatprep.subr.mxu0 0.0
      %3573 = vmatpush1.msra.mxu0 0.0
      %3574 = vmatprep.subr.mxu0 0.0
      %3575 = vmatpush1.msra.mxu0 0.0
      %3576 = vmatprep.subr.mxu0 0.0
      %3577 = vmatpush1.msra.mxu0 0.0
      %3578 = vmatprep.subr.mxu0 0.0
      %3579 = vmatpush1.msra.mxu0 0.0
      %3580 = vmatprep.subr.mxu0 0.0
      %3581 = vmatpush1.msra.mxu0 0.0
      %3582 = vmatprep.subr.mxu0 0.0
      %3583 = vmatpush1.msra.mxu0 0.0
      %3584 = vmatprep.subr.mxu0 0.0
      %3585 = vmatpush1.msra.mxu0 0.0
      %3586 = vmatprep.subr.mxu0 0.0
      %3587 = vmatpush1.msra.mxu0 0.0
      %3588 = vmatprep.subr.mxu0 0.0
      %3589 = vmatpush1.msra.mxu0 0.0
      %3590 = vmatprep.subr.mxu0 0.0
      %3591 = vmatpush1.msra.mxu0 0.0
      %3592 = vmatprep.subr.mxu0 0.0
      %3593 = vmatpush1.msra.mxu0 0.0
      %3594 = vmatprep.subr.mxu0 0.0
      %3595 = vmatpush1.msra.mxu0 0.0
      %3596 = vmatprep.subr.mxu0 0.0
      %3597 = vmatpush1.msra.mxu0 0.0
      %3598 = vmatprep.subr.mxu0 0.0
      %3599 = vmatpush1.msra.mxu0 0.0
      %3600 = vmatprep.subr.mxu0 0.0
      %3601 = vmatpush1.msra.mxu0 0.0
      %3602 = vmatprep.subr.mxu0 0.0
      %3603 = vmatpush1.msra.mxu0 0.0
      %3604 = vmatprep.subr.mxu0 0.0
      %3605 = vmatpush1.msra.mxu0 0.0
      %3606 = vmatprep.subr.mxu0 0.0
      %3607 = vmatpush1.msra.mxu0 0.0
      %3608 = vmatprep.subr.mxu0 0.0
      %3609 = vmatpush1.msra.mxu0 0.0
      %3610 = vmatprep.subr.mxu0 0.0
      %3611 = vmatpush1.msra.mxu0 0.0
      %3612 = vmatprep.subr.mxu0 0.0
      %3613 = vmatpush1.msra.mxu0 0.0
      %3614 = vmatprep.subr.mxu0 0.0
      %3615 = vmatpush1.msra.mxu0 0.0
      %3616 = vmatprep.mubr.f32.mxu0 0.0
      %3617 = vmatmul.mubr.f32.gmra.mrb[0].mxu0 %v3472
      %v3618 = vpop.f32.mrb[0].mxu0
      %v3619 = vadd.f32 %v3544, %v3618
      %v3620 = vpop.f32.mrb[0].mxu0
      %3621 = vmatprep.mubr.f32.mxu0 0.0
      %3622 = vmatmul.mubr.f32.gmra.mrb[0].mxu0 %v3475
      %v3623 = vpop.f32.mrb[0].mxu0
      %v3624 = vadd.f32 %v3549, %v3623
      %v3625 = vpop.f32.mrb[0].mxu0
      %3626 = vdwg.mxu0
      %v3628 = vsel %vm380, %v3128, 0
      %3630 = vmatprep.subr.mxu0 0.0
      %3631 = vmatpush1.msra.mxu0 %v3279
      %3632 = vmatprep.subr.mxu0 0.0
      %3633 = vmatpush1.msra.mxu0 %v3284
      %3634 = vmatprep.subr.mxu0 0.0
      %3635 = vmatpush1.msra.mxu0 0.0
      %3636 = vmatprep.subr.mxu0 0.0
      %3637 = vmatpush1.msra.mxu0 0.0
      %3638 = vmatprep.subr.mxu0 0.0
      %3639 = vmatpush1.msra.mxu0 0.0
      %3640 = vmatprep.subr.mxu0 0.0
      %3641 = vmatpush1.msra.mxu0 0.0
      %3642 = vmatprep.subr.mxu0 0.0
      %3643 = vmatpush1.msra.mxu0 0.0
      %3644 = vmatprep.subr.mxu0 0.0
      %3645 = vmatpush1.msra.mxu0 0.0
      %3646 = vmatprep.subr.mxu0 0.0
      %3647 = vmatpush1.msra.mxu0 0.0
      %3648 = vmatprep.subr.mxu0 0.0
      %3649 = vmatpush1.msra.mxu0 0.0
      %3650 = vmatprep.subr.mxu0 0.0
      %3651 = vmatpush1.msra.mxu0 0.0
      %3652 = vmatprep.subr.mxu0 0.0
      %3653 = vmatpush1.msra.mxu0 0.0
      %3654 = vmatprep.subr.mxu0 0.0
      %3655 = vmatpush1.msra.mxu0 0.0
      %3656 = vmatprep.subr.mxu0 0.0
      %3657 = vmatpush1.msra.mxu0 0.0
      %3658 = vmatprep.subr.mxu0 0.0
      %3659 = vmatpush1.msra.mxu0 0.0
      %3660 = vmatprep.subr.mxu0 0.0
      %3661 = vmatpush1.msra.mxu0 0.0
      %3662 = vmatprep.subr.mxu0 0.0
      %3663 = vmatpush1.msra.mxu0 0.0
      %3664 = vmatprep.subr.mxu0 0.0
      %3665 = vmatpush1.msra.mxu0 0.0
      %3666 = vmatprep.subr.mxu0 0.0
      %3667 = vmatpush1.msra.mxu0 0.0
      %3668 = vmatprep.subr.mxu0 0.0
      %3669 = vmatpush1.msra.mxu0 0.0
      %3670 = vmatprep.subr.mxu0 0.0
      %3671 = vmatpush1.msra.mxu0 0.0
      %3672 = vmatprep.subr.mxu0 0.0
      %3673 = vmatpush1.msra.mxu0 0.0
      %3674 = vmatprep.subr.mxu0 0.0
      %3675 = vmatpush1.msra.mxu0 0.0
      %3676 = vmatprep.subr.mxu0 0.0
      %3677 = vmatpush1.msra.mxu0 0.0
      %3678 = vmatprep.subr.mxu0 0.0
      %3679 = vmatpush1.msra.mxu0 0.0
      %3680 = vmatprep.subr.mxu0 0.0
      %3681 = vmatpush1.msra.mxu0 0.0
      %3682 = vmatprep.subr.mxu0 0.0
      %3683 = vmatpush1.msra.mxu0 0.0
      %3684 = vmatprep.subr.mxu0 0.0
      %3685 = vmatpush1.msra.mxu0 0.0
      %3686 = vmatprep.subr.mxu0 0.0
      %3687 = vmatpush1.msra.mxu0 0.0
      %3688 = vmatprep.subr.mxu0 0.0
      %3689 = vmatpush1.msra.mxu0 0.0
      %3690 = vmatprep.subr.mxu0 0.0
      %3691 = vmatpush1.msra.mxu0 0.0
      %3692 = vmatprep.subr.mxu0 0.0
      %3693 = vmatpush1.msra.mxu0 0.0
      %3694 = vmatprep.mubr.f32.mxu0 0.0
      %3695 = vmatmul.mubr.f32.gmra.mrb[0].mxu0 %v3628
      %v3696 = vpop.f32.mrb[0].mxu0
      %v3697 = vadd.f32 0.0, %v3696
      %v3698 = vpop.f32.mrb[0].mxu0
      %3699 = vdwg.mxu0
      %v3700 = vmax.f32 %v3697, 0.0
      %3701 = vmatprep.subr.mxu0 0.0
      %3702 = vmatpush1.msra.mxu0 %v3619
      %3703 = vmatprep.subr.mxu0 0.0
      %3704 = vmatpush1.msra.mxu0 %v3624
      %3705 = vmatprep.subr.mxu0 0.0
      %3706 = vmatpush1.msra.mxu0 0.0
      %3707 = vmatprep.subr.mxu0 0.0
      %3708 = vmatpush1.msra.mxu0 0.0
      %3709 = vmatprep.subr.mxu0 0.0
      %3710 = vmatpush1.msra.mxu0 0.0
      %3711 = vmatprep.subr.mxu0 0.0
      %3712 = vmatpush1.msra.mxu0 0.0
      %3713 = vmatprep.subr.mxu0 0.0
      %3714 = vmatpush1.msra.mxu0 0.0
      %3715 = vmatprep.subr.mxu0 0.0
      %3716 = vmatpush1.msra.mxu0 0.0
      %3717 = vmatprep.subr.mxu0 0.0
      %3718 = vmatpush1.msra.mxu0 0.0
      %3719 = vmatprep.subr.mxu0 0.0
      %3720 = vmatpush1.msra.mxu0 0.0
      %3721 = vmatprep.subr.mxu0 0.0
      %3722 = vmatpush1.msra.mxu0 0.0
      %3723 = vmatprep.subr.mxu0 0.0
      %3724 = vmatpush1.msra.mxu0 0.0
      %3725 = vmatprep.subr.mxu0 0.0
      %3726 = vmatpush1.msra.mxu0 0.0
      %3727 = vmatprep.subr.mxu0 0.0
      %3728 = vmatpush1.msra.mxu0 0.0
      %3729 = vmatprep.subr.mxu0 0.0
      %3730 = vmatpush1.msra.mxu0 0.0
      %3731 = vmatprep.subr.mxu0 0.0
      %3732 = vmatpush1.msra.mxu0 0.0
      %3733 = vmatprep.subr.mxu0 0.0
      %3734 = vmatpush1.msra.mxu0 0.0
      %3735 = vmatprep.subr.mxu0 0.0
      %3736 = vmatpush1.msra.mxu0 0.0
      %3737 = vmatprep.subr.mxu0 0.0
      %3738 = vmatpush1.msra.mxu0 0.0
      %3739 = vmatprep.subr.mxu0 0.0
      %3740 = vmatpush1.msra.mxu0 0.0
      %3741 = vmatprep.subr.mxu0 0.0
      %3742 = vmatpush1.msra.mxu0 0.0
      %3743 = vmatprep.subr.mxu0 0.0
      %3744 = vmatpush1.msra.mxu0 0.0
      %3745 = vmatprep.subr.mxu0 0.0
      %3746 = vmatpush1.msra.mxu0 0.0
      %3747 = vmatprep.subr.mxu0 0.0
      %3748 = vmatpush1.msra.mxu0 0.0
      %3749 = vmatprep.subr.mxu0 0.0
      %3750 = vmatpush1.msra.mxu0 0.0
      %3751 = vmatprep.subr.mxu0 0.0
      %3752 = vmatpush1.msra.mxu0 0.0
      %3753 = vmatprep.subr.mxu0 0.0
      %3754 = vmatpush1.msra.mxu0 0.0
      %3755 = vmatprep.subr.mxu0 0.0
      %3756 = vmatpush1.msra.mxu0 0.0
      %3757 = vmatprep.subr.mxu0 0.0
      %3758 = vmatpush1.msra.mxu0 0.0
      %3759 = vmatprep.subr.mxu0 0.0
      %3760 = vmatpush1.msra.mxu0 0.0
      %3761 = vmatprep.subr.mxu0 0.0
      %3762 = vmatpush1.msra.mxu0 0.0
      %3763 = vmatprep.subr.mxu0 0.0
      %3764 = vmatpush1.msra.mxu0 0.0
      %3765 = vmatprep.mubr.f32.mxu0 0.0
      %3766 = vmatmul.mubr.f32.gmra.mrb[0].mxu0 %v3628
      %v3767 = vpop.f32.mrb[0].mxu0
      %v3768 = vadd.f32 0.0, %v3767
      %v3769 = vpop.f32.mrb[0].mxu0
      %3770 = vdwg.mxu0
      %v3771 = vmax.f32 %v3768, 0.0
      %v3773 = vsel %vm858, %v3129, 0
      %v3776 = vsel %vm858, %v3130, 0
      %3778 = vmatprep.subr.mxu0 0.0
      %3779 = vmatpush1.msra.mxu0 %v3771
      %3780 = vmatprep.subr.mxu0 0.0
      %3781 = vmatpush1.msra.mxu0 0.0
      %3782 = vmatprep.subr.mxu0 0.0
      %3783 = vmatpush1.msra.mxu0 0.0
      %3784 = vmatprep.subr.mxu0 0.0
      %3785 = vmatpush1.msra.mxu0 0.0
      %3786 = vmatprep.subr.mxu0 0.0
      %3787 = vmatpush1.msra.mxu0 0.0
      %3788 = vmatprep.subr.mxu0 0.0
      %3789 = vmatpush1.msra.mxu0 0.0
      %3790 = vmatprep.subr.mxu0 0.0
      %3791 = vmatpush1.msra.mxu0 0.0
      %3792 = vmatprep.subr.mxu0 0.0
      %3793 = vmatpush1.msra.mxu0 0.0
      %3794 = vmatprep.subr.mxu0 0.0
      %3795 = vmatpush1.msra.mxu0 0.0
      %3796 = vmatprep.subr.mxu0 0.0
      %3797 = vmatpush1.msra.mxu0 0.0
      %3798 = vmatprep.subr.mxu0 0.0
      %3799 = vmatpush1.msra.mxu0 0.0
      %3800 = vmatprep.subr.mxu0 0.0
      %3801 = vmatpush1.msra.mxu0 0.0
      %3802 = vmatprep.subr.mxu0 0.0
      %3803 = vmatpush1.msra.mxu0 0.0
      %3804 = vmatprep.subr.mxu0 0.0
      %3805 = vmatpush1.msra.mxu0 0.0
      %3806 = vmatprep.subr.mxu0 0.0
      %3807 = vmatpush1.msra.mxu0 0.0
      %3808 = vmatprep.subr.mxu0 0.0
      %3809 = vmatpush1.msra.mxu0 0.0
      %3810 = vmatprep.subr.mxu0 0.0
      %3811 = vmatpush1.msra.mxu0 0.0
      %3812 = vmatprep.subr.mxu0 0.0
      %3813 = vmatpush1.msra.mxu0 0.0
      %3814 = vmatprep.subr.mxu0 0.0
      %3815 = vmatpush1.msra.mxu0 0.0
      %3816 = vmatprep.subr.mxu0 0.0
      %3817 = vmatpush1.msra.mxu0 0.0
      %3818 = vmatprep.subr.mxu0 0.0
      %3819 = vmatpush1.msra.mxu0 0.0
      %3820 = vmatprep.subr.mxu0 0.0
      %3821 = vmatpush1.msra.mxu0 0.0
      %3822 = vmatprep.subr.mxu0 0.0
      %3823 = vmatpush1.msra.mxu0 0.0
      %3824 = vmatprep.subr.mxu0 0.0
      %3825 = vmatpush1.msra.mxu0 0.0
      %3826 = vmatprep.subr.mxu0 0.0
      %3827 = vmatpush1.msra.mxu0 0.0
      %3828 = vmatprep.subr.mxu0 0.0
      %3829 = vmatpush1.msra.mxu0 0.0
      %3830 = vmatprep.subr.mxu0 0.0
      %3831 = vmatpush1.msra.mxu0 0.0
      %3832 = vmatprep.subr.mxu0 0.0
      %3833 = vmatpush1.msra.mxu0 0.0
      %3834 = vmatprep.subr.mxu0 0.0
      %3835 = vmatpush1.msra.mxu0 0.0
      %3836 = vmatprep.subr.mxu0 0.0
      %3837 = vmatpush1.msra.mxu0 0.0
      %3838 = vmatprep.subr.mxu0 0.0
      %3839 = vmatpush1.msra.mxu0 0.0
      %3840 = vmatprep.subr.mxu0 0.0
      %3841 = vmatpush1.msra.mxu0 0.0
      %3842 = vmatprep.mubr.f32.mxu0 0.0
      %3843 = vmatmul.mubr.f32.gmra.mrb[0].mxu0 %v3773
      %v3844 = vpop.f32.mrb[0].mxu0
      %v3845 = vadd.f32 0.0, %v3844
      %v3846 = vpop.f32.mrb[0].mxu0
      %3847 = vmatprep.mubr.f32.mxu0 0.0
      %3848 = vmatmul.mubr.f32.gmra.mrb[0].mxu0 %v3776
      %v3849 = vpop.f32.mrb[0].mxu0
      %v3850 = vadd.f32 0.0, %v3849
      %v3851 = vpop.f32.mrb[0].mxu0
      %3852 = vdwg.mxu0
      %3853 = vmatprep.subr.mxu0 0.0
      %3854 = vmatpush1.msra.mxu0 %v3700
      %3855 = vmatprep.subr.mxu0 0.0
      %3856 = vmatpush1.msra.mxu0 0.0
      %3857 = vmatprep.subr.mxu0 0.0
      %3858 = vmatpush1.msra.mxu0 0.0
      %3859 = vmatprep.subr.mxu0 0.0
      %3860 = vmatpush1.msra.mxu0 0.0
      %3861 = vmatprep.subr.mxu0 0.0
      %3862 = vmatpush1.msra.mxu0 0.0
      %3863 = vmatprep.subr.mxu0 0.0
      %3864 = vmatpush1.msra.mxu0 0.0
      %3865 = vmatprep.subr.mxu0 0.0
      %3866 = vmatpush1.msra.mxu0 0.0
      %3867 = vmatprep.subr.mxu0 0.0
      %3868 = vmatpush1.msra.mxu0 0.0
      %3869 = vmatprep.subr.mxu0 0.0
      %3870 = vmatpush1.msra.mxu0 0.0
      %3871 = vmatprep.subr.mxu0 0.0
      %3872 = vmatpush1.msra.mxu0 0.0
      %3873 = vmatprep.subr.mxu0 0.0
      %3874 = vmatpush1.msra.mxu0 0.0
      %3875 = vmatprep.subr.mxu0 0.0
      %3876 = vmatpush1.msra.mxu0 0.0
      %3877 = vmatprep.subr.mxu0 0.0
      %3878 = vmatpush1.msra.mxu0 0.0
      %3879 = vmatprep.subr.mxu0 0.0
      %3880 = vmatpush1.msra.mxu0 0.0
      %3881 = vmatprep.subr.mxu0 0.0
      %3882 = vmatpush1.msra.mxu0 0.0
      %3883 = vmatprep.subr.mxu0 0.0
      %3884 = vmatpush1.msra.mxu0 0.0
      %3885 = vmatprep.subr.mxu0 0.0
      %3886 = vmatpush1.msra.mxu0 0.0
      %3887 = vmatprep.subr.mxu0 0.0
      %3888 = vmatpush1.msra.mxu0 0.0
      %3889 = vmatprep.subr.mxu0 0.0
      %3890 = vmatpush1.msra.mxu0 0.0
      %3891 = vmatprep.subr.mxu0 0.0
      %3892 = vmatpush1.msra.mxu0 0.0
      %3893 = vmatprep.subr.mxu0 0.0
      %3894 = vmatpush1.msra.mxu0 0.0
      %3895 = vmatprep.subr.mxu0 0.0
      %3896 = vmatpush1.msra.mxu0 0.0
      %3897 = vmatprep.subr.mxu0 0.0
      %3898 = vmatpush1.msra.mxu0 0.0
      %3899 = vmatprep.subr.mxu0 0.0
      %3900 = vmatpush1.msra.mxu0 0.0
      %3901 = vmatprep.subr.mxu0 0.0
      %3902 = vmatpush1.msra.mxu0 0.0
      %3903 = vmatprep.subr.mxu0 0.0
      %3904 = vmatpush1.msra.mxu0 0.0
      %3905 = vmatprep.subr.mxu0 0.0
      %3906 = vmatpush1.msra.mxu0 0.0
      %3907 = vmatprep.subr.mxu0 0.0
      %3908 = vmatpush1.msra.mxu0 0.0
      %3909 = vmatprep.subr.mxu0 0.0
      %3910 = vmatpush1.msra.mxu0 0.0
      %3911 = vmatprep.subr.mxu0 0.0
      %3912 = vmatpush1.msra.mxu0 0.0
      %3913 = vmatprep.subr.mxu0 0.0
      %3914 = vmatpush1.msra.mxu0 0.0
      %3915 = vmatprep.subr.mxu0 0.0
      %3916 = vmatpush1.msra.mxu0 0.0
      %3917 = vmatprep.mubr.f32.mxu0 0.0
      %3918 = vmatmul.mubr.f32.gmra.mrb[0].mxu0 %v3773
      %v3919 = vpop.f32.mrb[0].mxu0
      %v3920 = vadd.f32 %v3845, %v3919
      %v3921 = vpop.f32.mrb[0].mxu0
      %3922 = vmatprep.mubr.f32.mxu0 0.0
      %3923 = vmatmul.mubr.f32.gmra.mrb[0].mxu0 %v3776
      %v3924 = vpop.f32.mrb[0].mxu0
      %v3925 = vadd.f32 %v3850, %v3924
      %v3926 = vpop.f32.mrb[0].mxu0
      %3927 = vdwg.mxu0
      %v3928 = vsub.f32 0.0, %v3920
      %v3929 = vsub.f32 0.0, %v3925
      %v3930 = vmul.f32 %v3928, 1.442695
      %v3931 = vpow.pop %v3930
      %v3932 = vmul.f32 %v3929, 1.442695
      %v3933 = vpow.pop %v3932
      %v3934 = vadd.f32 %v3931, 1.0
      %v3935 = vadd.f32 %v3933, 1.0
      %v3936 = vrcp.pop %v3934
      %v3937 = vmul.f32 1.0, %v3936
      %v3938 = vrcp.pop %v3935
      %v3939 = vmul.f32 1.0, %v3938
      %v3940 = vsel %vm1731, %v3937, 0.0
      %v3941 = vsel %vm1731, %v3939, 0.0
      %v3942 = vadd.f32 %v3940, %v3941
      %v3943 = vrot.slane %v3942, 4
      %v3944 = vadd.f32 %v3942, %v3943
      %v3945 = vrot.slane %v3944, 2
      %v3946 = vadd.f32 %v3944, %v3945
      %v3947 = vrot.slane %v3946, 1
      %v3948 = vadd.f32 %v3946, %v3947
      %v3949 = vrcp.pop 16.0
      %v3950 = vmul.f32 %v3948, %v3949
      %v3952 = vsel %vm1731, %v3950, 0
      %3954 = vmatprep.subr.mxu0 %v210
      %3955 = vmatpush1.msra.mxu0 %v209
      %3956 = vmatprep.subr.mxu0 %v213
      %3957 = vmatpush1.msra.mxu0 %v212
      %3958 = vmatprep.subr.mxu0 %v1749
      %3959 = vmatpush1.msra.mxu0 %v1746
      %3960 = vmatprep.subr.mxu0 0.0
      %3961 = vmatpush1.msra.mxu0 0.0
      %3962 = vmatprep.subr.mxu0 0.0
      %3963 = vmatpush1.msra.mxu0 0.0
      %3964 = vmatprep.subr.mxu0 0.0
      %3965 = vmatpush1.msra.mxu0 0.0
      %3966 = vmatprep.subr.mxu0 0.0
      %3967 = vmatpush1.msra.mxu0 0.0
      %3968 = vmatprep.subr.mxu0 0.0
      %3969 = vmatpush1.msra.mxu0 0.0
      %3970 = vmatprep.subr.mxu0 0.0
      %3971 = vmatpush1.msra.mxu0 0.0
      %3972 = vmatprep.subr.mxu0 0.0
      %3973 = vmatpush1.msra.mxu0 0.0
      %3974 = vmatprep.subr.mxu0 0.0
      %3975 = vmatpush1.msra.mxu0 0.0
      %3976 = vmatprep.subr.mxu0 0.0
      %3977 = vmatpush1.msra.mxu0 0.0
      %3978 = vmatprep.subr.mxu0 0.0
      %3979 = vmatpush1.msra.mxu0 0.0
      %3980 = vmatprep.subr.mxu0 0.0
      %3981 = vmatpush1.msra.mxu0 0.0
      %3982 = vmatprep.subr.mxu0 0.0
      %3983 = vmatpush1.msra.mxu0 0.0
      %3984 = vmatprep.subr.mxu0 0.0
      %3985 = vmatpush1.msra.mxu0 0.0
      %3986 = vmatprep.subr.mxu0 0.0
      %3987 = vmatpush1.msra.mxu0 0.0
      %3988 = vmatprep.subr.mxu0 0.0
      %3989 = vmatpush1.msra.mxu0 0.0
      %3990 = vmatprep.subr.mxu0 0.0
      %3991 = vmatpush1.msra.mxu0 0.0
      %3992 = vmatprep.subr.mxu0 0.0
      %3993 = vmatpush1.msra.mxu0 0.0
      %3994 = vmatprep.subr.mxu0 0.0
      %3995 = vmatpush1.msra.mxu0 0.0
      %3996 = vmatprep.subr.mxu0 0.0
      %3997 = vmatpush1.msra.mxu0 0.0
      %3998 = vmatprep.subr.mxu0 0.0
      %3999 = vmatpush1.msra.mxu0 0.0
      %4000 = vmatprep.subr.mxu0 0.0
      %4001 = vmatpush1.msra.mxu0 0.0
      %4002 = vmatprep.subr.mxu0 0.0
      %4003 = vmatpush1.msra.mxu0 0.0
      %4004 = vmatprep.subr.mxu0 0.0
      %4005 = vmatpush1.msra.mxu0 0.0
      %4006 = vmatprep.subr.mxu0 0.0
      %4007 = vmatpush1.msra.mxu0 0.0
      %4008 = vmatprep.subr.mxu0 0.0
      %4009 = vmatpush1.msra.mxu0 0.0
      %4010 = vmatprep.subr.mxu0 0.0
      %4011 = vmatpush1.msra.mxu0 0.0
      %4012 = vmatprep.subr.mxu0 0.0
      %4013 = vmatpush1.msra.mxu0 0.0
      %4014 = vmatprep.subr.mxu0 0.0
      %4015 = vmatpush1.msra.mxu0 0.0
      %4016 = vmatprep.subr.mxu0 0.0
      %4017 = vmatpush1.msra.mxu0 0.0
      %4018 = vmatprep.mubr.f32.mxu0 0.0
      %4019 = vmatmul.mubr.f32.gmra.mrb[0].mxu0 %v3952
      %v4020 = vpop.f32.mrb[0].mxu0
      %v4021 = vadd.f32 0.0, %v4020
      %v4022 = vpop.f32.mrb[0].mxu0
      %v4023 = vadd.f32 0.0, %v4022
      %4024 = vmatprep.mubr.f32.mxu0 0.0
      %4025 = vmatmul.mubr.f32.gmra.mrb[0].mxu0 %v3952
      %v4026 = vpop.f32.mrb[0].mxu0
      %v4027 = vadd.f32 0.0, %v4026
      %v4028 = vpop.f32.mrb[0].mxu0
      %v4029 = vadd.f32 0.0, %v4028
      %4030 = vdwg.mxu0
      %4031 = vmatprep.subr.mxu0 0.0
      %4032 = vmatpush1.msra.mxu0 %v211
      %4033 = vmatprep.subr.mxu0 0.0
      %4034 = vmatpush1.msra.mxu0 %v214
      %4035 = vmatprep.subr.mxu0 0.0
      %4036 = vmatpush1.msra.mxu0 %v1752
      %4037 = vmatprep.subr.mxu0 0.0
      %4038 = vmatpush1.msra.mxu0 0.0
      %4039 = vmatprep.subr.mxu0 0.0
      %4040 = vmatpush1.msra.mxu0 0.0
      %4041 = vmatprep.subr.mxu0 0.0
      %4042 = vmatpush1.msra.mxu0 0.0
      %4043 = vmatprep.subr.mxu0 0.0
      %4044 = vmatpush1.msra.mxu0 0.0
      %4045 = vmatprep.subr.mxu0 0.0
      %4046 = vmatpush1.msra.mxu0 0.0
      %4047 = vmatprep.subr.mxu0 0.0
      %4048 = vmatpush1.msra.mxu0 0.0
      %4049 = vmatprep.subr.mxu0 0.0
      %4050 = vmatpush1.msra.mxu0 0.0
      %4051 = vmatprep.subr.mxu0 0.0
      %4052 = vmatpush1.msra.mxu0 0.0
      %4053 = vmatprep.subr.mxu0 0.0
      %4054 = vmatpush1.msra.mxu0 0.0
      %4055 = vmatprep.subr.mxu0 0.0
      %4056 = vmatpush1.msra.mxu0 0.0
      %4057 = vmatprep.subr.mxu0 0.0
      %4058 = vmatpush1.msra.mxu0 0.0
      %4059 = vmatprep.subr.mxu0 0.0
      %4060 = vmatpush1.msra.mxu0 0.0
      %4061 = vmatprep.subr.mxu0 0.0
      %4062 = vmatpush1.msra.mxu0 0.0
      %4063 = vmatprep.subr.mxu0 0.0
      %4064 = vmatpush1.msra.mxu0 0.0
      %4065 = vmatprep.subr.mxu0 0.0
      %4066 = vmatpush1.msra.mxu0 0.0
      %4067 = vmatprep.subr.mxu0 0.0
      %4068 = vmatpush1.msra.mxu0 0.0
      %4069 = vmatprep.subr.mxu0 0.0
      %4070 = vmatpush1.msra.mxu0 0.0
      %4071 = vmatprep.subr.mxu0 0.0
      %4072 = vmatpush1.msra.mxu0 0.0
      %4073 = vmatprep.subr.mxu0 0.0
      %4074 = vmatpush1.msra.mxu0 0.0
      %4075 = vmatprep.subr.mxu0 0.0
      %4076 = vmatpush1.msra.mxu0 0.0
      %4077 = vmatprep.subr.mxu0 0.0
      %4078 = vmatpush1.msra.mxu0 0.0
      %4079 = vmatprep.subr.mxu0 0.0
      %4080 = vmatpush1.msra.mxu0 0.0
      %4081 = vmatprep.subr.mxu0 0.0
      %4082 = vmatpush1.msra.mxu0 0.0
      %4083 = vmatprep.subr.mxu0 0.0
      %4084 = vmatpush1.msra.mxu0 0.0
      %4085 = vmatprep.subr.mxu0 0.0
      %4086 = vmatpush1.msra.mxu0 0.0
      %4087 = vmatprep.subr.mxu0 0.0
      %4088 = vmatpush1.msra.mxu0 0.0
      %4089 = vmatprep.subr.mxu0 0.0
      %4090 = vmatpush1.msra.mxu0 0.0
      %4091 = vmatprep.subr.mxu0 0.0
      %4092 = vmatpush1.msra.mxu0 0.0
      %4093 = vmatprep.subr.mxu0 0.0
      %4094 = vmatpush1.msra.mxu0 0.0
      %4095 = vmatprep.mubr.f32.mxu0 0.0
      %4096 = vmatmul.mubr.f32.gmra.mrb[0].mxu0 %v3952
      %v4097 = vpop.f32.mrb[0].mxu0
      %v4098 = vadd.f32 0.0, %v4097
      %v4099 = vpop.f32.mrb[0].mxu0
      %4100 = vmatprep.mubr.f32.mxu0 0.0
      %4101 = vmatmul.mubr.f32.gmra.mrb[0].mxu0 %v3952
      %v4102 = vpop.f32.mrb[0].mxu0
      %v4103 = vadd.f32 0.0, %v4102
      %v4104 = vpop.f32.mrb[0].mxu0
      %4105 = vdwg.mxu0
      %v4106 = vmul.f32 %v3122, %v4021
      %v4107 = vmul.f32 %v3123, %v4023
      %v4108 = vmul.f32 %v3124, %v4098
      %v4109 = vmul.f32 %v3125, %v4027
      %v4110 = vmul.f32 %v3126, %v4029
      %v4111 = vmul.f32 %v3127, %v4103
      %v4112 = vmul.f32 %v4106, 0.2
      %v4113 = vmul.f32 %v4107, 0.2
      %v4114 = vmul.f32 %v4108, 0.2
      %v4115 = vmul.f32 %v4109, 0.2
      %v4116 = vmul.f32 %v4110, 0.2
      %v4117 = vmul.f32 %v4111, 0.2
      %v4118 = vmax.f32 %v4106, %v4112
      %v4119 = vmax.f32 %v4107, %v4113
      %v4120 = vmax.f32 %v4108, %v4114
      %v4121 = vmax.f32 %v4109, %v4115
      %v4122 = vmax.f32 %v4110, %v4116
      %v4123 = vmax.f32 %v4111, %v4117
      %v4124 = vld [vmem:[%s1 + $0xe0] sm:$0xff]
      %v4125 = vld [vmem:[%s1 + $0xe8] sm:$0xff]
      %4126 = vst [vmem:[#allocation2 + $0x8] sm:$0xff] %v4118
      %4127 = vst [vmem:[#allocation2 + $0x10] sm:$0xff] %v4119
      %4128 = vst.msk [vmem:[#allocation2 + $0x18] sm:$0xff] %vm201, %v4120
      %4129 = vst [vmem:[#allocation2 + $0x30] sm:$0xff] %v4121
      %4130 = vst [vmem:[#allocation2 + $0x38] sm:$0xff] %v4122
      %4131 = vst.msk [vmem:[#allocation2 + $0x40] sm:$0xff] %vm201, %v4123
      %4133 = vset.pattern.permute.xlu0 0
      %4134 = vperm.xlu0 %4133, %v4124
      %v4135 = vpop.permute.xlu0 %4134
      %4138 = vset.pattern.permute.xlu0 0
      %4139 = vperm.xlu0 %4138, %v4125
      %v4140 = vpop.permute.xlu0 %4139
      %v4142 = vmul.f32 %v4135, %v317
      %v4143 = vmul.f32 %v4135, %v321
      %v4144 = vmul.f32 %v4135, %v325
      %v4145 = vmul.f32 %v4140, %v317
      %v4146 = vmul.f32 %v4140, %v321
      %v4147 = vmul.f32 %v4140, %v325
      %v4148 = vld [vmem:[#allocation2] sm:$0xff]
      %v4149 = vld [vmem:[#allocation2 + $0x8] sm:$0xff]
      %v4150 = vld [vmem:[#allocation2 + $0x10] sm:$0xff]
      %v4151 = vld [vmem:[#allocation2 + $0x18] sm:$0xff]
      %v4152 = vld [vmem:[#allocation2 + $0x28] sm:$0xff]
      %v4153 = vld [vmem:[#allocation2 + $0x30] sm:$0xff]
      %v4154 = vld [vmem:[#allocation2 + $0x38] sm:$0xff]
      %v4155 = vld [vmem:[#allocation2 + $0x40] sm:$0xff]
      %4164 = vrot.lane.b32.xlu0 %v4148, 17
      %v4165 = vpop.permute.xlu0 %4164
      %4166 = vrot.lane.b32.xlu0 %v4149, 17
      %v4167 = vpop.permute.xlu0 %4166
      %4168 = vrot.lane.b32.xlu0 %v4150, 17
      %v4169 = vpop.permute.xlu0 %4168
      %4170 = vrot.lane.b32.xlu0 %v4151, 17
      %v4171 = vpop.permute.xlu0 %4170
      %4172 = vrot.lane.b32.xlu0 %v4152, 17
      %v4173 = vpop.permute.xlu0 %4172
      %4174 = vrot.lane.b32.xlu0 %v4153, 17
      %v4175 = vpop.permute.xlu0 %4174
      %4176 = vrot.lane.b32.xlu0 %v4154, 17
      %v4177 = vpop.permute.xlu0 %4176
      %4178 = vrot.lane.b32.xlu0 %v4155, 17
      %v4179 = vpop.permute.xlu0 %4178
      %v4180 = vsel %vm358, %v4165, %v4167
      %v4181 = vsel %vm358, %v4167, %v4169
      %v4182 = vsel %vm358, %v4169, %v4171
      %v4183 = vsel %vm358, %v4173, %v4175
      %v4184 = vsel %vm358, %v4175, %v4177
      %v4185 = vsel %vm358, %v4177, %v4179
      %v4192 = vmul.f32 %v4142, %v4180
      %v4193 = vmul.f32 %v4143, %v4181
      %v4194 = vmul.f32 %v4144, %v4182
      %v4195 = vmul.f32 %v4145, %v4183
      %v4196 = vmul.f32 %v4146, %v4184
      %v4197 = vmul.f32 %v4147, %v4185
      %4198 = vset.pattern.permute.xlu0 1
      %4199 = vperm.xlu0 %4198, %v4124
      %v4200 = vpop.permute.xlu0 %4199
      %4202 = vset.pattern.permute.xlu0 1
      %4203 = vperm.xlu0 %4202, %v4125
      %v4204 = vpop.permute.xlu0 %4203
      %v4206 = vmul.f32 %v4200, %v4148
      %v4207 = vmul.f32 %v4200, %v4149
      %v4208 = vmul.f32 %v4200, %v4150
      %v4209 = vmul.f32 %v4200, %v4151
      %v4210 = vmul.f32 %v4204, %v4152
      %v4211 = vmul.f32 %v4204, %v4153
      %v4212 = vmul.f32 %v4204, %v4154
      %v4213 = vmul.f32 %v4204, %v4155
      %4222 = vrot.lane.b32.xlu0 %v4206, 16
      %v4223 = vpop.permute.xlu0 %4222
      %4224 = vrot.lane.b32.xlu0 %v4207, 16
      %v4225 = vpop.permute.xlu0 %4224
      %4226 = vrot.lane.b32.xlu0 %v4208, 16
      %v4227 = vpop.permute.xlu0 %4226
      %4228 = vrot.lane.b32.xlu0 %v4209, 16
      %v4229 = vpop.permute.xlu0 %4228
      %4230 = vrot.lane.b32.xlu0 %v4210, 16
      %v4231 = vpop.permute.xlu0 %4230
      %4232 = vrot.lane.b32.xlu0 %v4211, 16
      %v4233 = vpop.permute.xlu0 %4232
      %4234 = vrot.lane.b32.xlu0 %v4212, 16
      %v4235 = vpop.permute.xlu0 %4234
      %4236 = vrot.lane.b32.xlu0 %v4213, 16
      %v4237 = vpop.permute.xlu0 %4236
      %v4238 = vsel %vm380, %v4223, %v4225
      %v4239 = vsel %vm380, %v4225, %v4227
      %v4240 = vsel %vm380, %v4227, %v4229
      %v4241 = vsel %vm380, %v4231, %v4233
      %v4242 = vsel %vm380, %v4233, %v4235
      %v4243 = vsel %vm380, %v4235, %v4237
      %v4250 = vadd.f32 %v4192, %v4238
      %v4251 = vadd.f32 %v4193, %v4239
      %v4252 = vadd.f32 %v4194, %v4240
      %v4253 = vadd.f32 %v4195, %v4241
      %v4254 = vadd.f32 %v4196, %v4242
      %v4255 = vadd.f32 %v4197, %v4243
      %4256 = vset.pattern.permute.xlu0 2
      %4257 = vperm.xlu0 %4256, %v4124
      %v4258 = vpop.permute.xlu0 %4257
      %4260 = vset.pattern.permute.xlu0 2
      %4261 = vperm.xlu0 %4260, %v4125
      %v4262 = vpop.permute.xlu0 %4261
      %v4264 = vmul.f32 %v4258, %v401
      %v4265 = vmul.f32 %v4258, %v405
      %v4266 = vmul.f32 %v4258, %v409
      %v4267 = vmul.f32 %v4262, %v401
      %v4268 = vmul.f32 %v4262, %v405
      %v4269 = vmul.f32 %v4262, %v409
      %4270 = vrot.lane.b32.xlu0 %v4148, 15
      %v4271 = vpop.permute.xlu0 %4270
      %4272 = vrot.lane.b32.xlu0 %v4149, 15
      %v4273 = vpop.permute.xlu0 %4272
      %4274 = vrot.lane.b32.xlu0 %v4150, 15
      %v4275 = vpop.permute.xlu0 %4274
      %4276 = vrot.lane.b32.xlu0 %v4151, 15
      %v4277 = vpop.permute.xlu0 %4276
      %4278 = vrot.lane.b32.xlu0 %v4152, 15
      %v4279 = vpop.permute.xlu0 %4278
      %4280 = vrot.lane.b32.xlu0 %v4153, 15
      %v4281 = vpop.permute.xlu0 %4280
      %4282 = vrot.lane.b32.xlu0 %v4154, 15
      %v4283 = vpop.permute.xlu0 %4282
      %4284 = vrot.lane.b32.xlu0 %v4155, 15
      %v4285 = vpop.permute.xlu0 %4284
      %v4286 = vsel %vm424, %v4271, %v4273
      %v4287 = vsel %vm424, %v4273, %v4275
      %v4288 = vsel %vm424, %v4275, %v4277
      %v4289 = vsel %vm424, %v4279, %v4281
      %v4290 = vsel %vm424, %v4281, %v4283
      %v4291 = vsel %vm424, %v4283, %v4285
      %v4298 = vmul.f32 %v4264, %v4286
      %v4299 = vmul.f32 %v4265, %v4287
      %v4300 = vmul.f32 %v4266, %v4288
      %v4301 = vmul.f32 %v4267, %v4289
      %v4302 = vmul.f32 %v4268, %v4290
      %v4303 = vmul.f32 %v4269, %v4291
      %v4304 = vadd.f32 %v4250, %v4298
      %v4305 = vadd.f32 %v4251, %v4299
      %v4306 = vadd.f32 %v4252, %v4300
      %v4307 = vadd.f32 %v4253, %v4301
      %v4308 = vadd.f32 %v4254, %v4302
      %v4309 = vadd.f32 %v4255, %v4303
      %4310 = vset.pattern.permute.xlu0 3
      %4311 = vperm.xlu0 %4310, %v4124
      %v4312 = vpop.permute.xlu0 %4311
      %4314 = vset.pattern.permute.xlu0 3
      %4315 = vperm.xlu0 %4314, %v4125
      %v4316 = vpop.permute.xlu0 %4315
      %v4318 = vmul.f32 %v4312, %v317
      %v4319 = vmul.f32 %v4312, %v321
      %v4320 = vmul.f32 %v4312, %v325
      %v4321 = vmul.f32 %v4316, %v317
      %v4322 = vmul.f32 %v4316, %v321
      %v4323 = vmul.f32 %v4316, %v325
      %4324 = vrot.lane.b32.xlu0 %v4148, 1
      %v4325 = vpop.permute.xlu0 %4324
      %4326 = vrot.lane.b32.xlu0 %v4149, 1
      %v4327 = vpop.permute.xlu0 %4326
      %4328 = vrot.lane.b32.xlu0 %v4150, 1
      %v4329 = vpop.permute.xlu0 %4328
      %4330 = vrot.lane.b32.xlu0 %v4151, 1
      %v4331 = vpop.permute.xlu0 %4330
      %4332 = vrot.lane.b32.xlu0 %v4152, 1
      %v4333 = vpop.permute.xlu0 %4332
      %4334 = vrot.lane.b32.xlu0 %v4153, 1
      %v4335 = vpop.permute.xlu0 %4334
      %4336 = vrot.lane.b32.xlu0 %v4154, 1
      %v4337 = vpop.permute.xlu0 %4336
      %4338 = vrot.lane.b32.xlu0 %v4155, 1
      %v4339 = vpop.permute.xlu0 %4338
      %v4340 = vsel %vm452, %v4325, %v4327
      %v4341 = vsel %vm452, %v4327, %v4329
      %v4342 = vsel %vm452, %v4329, %v4331
      %v4343 = vsel %vm452, %v4333, %v4335
      %v4344 = vsel %vm452, %v4335, %v4337
      %v4345 = vsel %vm452, %v4337, %v4339
      %v4352 = vmul.f32 %v4318, %v4340
      %v4353 = vmul.f32 %v4319, %v4341
      %v4354 = vmul.f32 %v4320, %v4342
      %v4355 = vmul.f32 %v4321, %v4343
      %v4356 = vmul.f32 %v4322, %v4344
      %v4357 = vmul.f32 %v4323, %v4345
      %v4358 = vadd.f32 %v4304, %v4352
      %v4359 = vadd.f32 %v4305, %v4353
      %v4360 = vadd.f32 %v4306, %v4354
      %v4361 = vadd.f32 %v4307, %v4355
      %v4362 = vadd.f32 %v4308, %v4356
      %v4363 = vadd.f32 %v4309, %v4357
      %4364 = vset.pattern.permute.xlu0 4
      %4365 = vperm.xlu0 %4364, %v4124
      %v4366 = vpop.permute.xlu0 %4365
      %4368 = vset.pattern.permute.xlu0 4
      %4369 = vperm.xlu0 %4368, %v4125
      %v4370 = vpop.permute.xlu0 %4369
      %v4372 = vmul.f32 %v4366, %v4149
      %v4373 = vmul.f32 %v4366, %v4150
      %v4374 = vmul.f32 %v4366, %v4151
      %v4375 = vmul.f32 %v4370, %v4153
      %v4376 = vmul.f32 %v4370, %v4154
      %v4377 = vmul.f32 %v4370, %v4155
      %v4378 = vadd.f32 %v4358, %v4372
      %v4379 = vadd.f32 %v4359, %v4373
      %v4380 = vadd.f32 %v4360, %v4374
      %v4381 = vadd.f32 %v4361, %v4375
      %v4382 = vadd.f32 %v4362, %v4376
      %v4383 = vadd.f32 %v4363, %v4377
      %4384 = vset.pattern.permute.xlu0 5
      %4385 = vperm.xlu0 %4384, %v4124
      %v4386 = vpop.permute.xlu0 %4385
      %4388 = vset.pattern.permute.xlu0 5
      %4389 = vperm.xlu0 %4388, %v4125
      %v4390 = vpop.permute.xlu0 %4389
      %v4392 = vmul.f32 %v4386, %v401
      %v4393 = vmul.f32 %v4386, %v405
      %v4394 = vmul.f32 %v4386, %v409
      %v4395 = vmul.f32 %v4390, %v401
      %v4396 = vmul.f32 %v4390, %v405
      %v4397 = vmul.f32 %v4390, %v409
      %4398 = vrot.lane.b32.xlu0 %v4149, 127
      %v4399 = vpop.permute.xlu0 %4398
      %4400 = vrot.lane.b32.xlu0 %v4150, 127
      %v4401 = vpop.permute.xlu0 %4400
      %4402 = vrot.lane.b32.xlu0 %v4151, 127
      %v4403 = vpop.permute.xlu0 %4402
      %4404 = vrot.lane.b32.xlu0 %v4153, 127
      %v4405 = vpop.permute.xlu0 %4404
      %4406 = vrot.lane.b32.xlu0 %v4154, 127
      %v4407 = vpop.permute.xlu0 %4406
      %4408 = vrot.lane.b32.xlu0 %v4155, 127
      %v4409 = vpop.permute.xlu0 %4408
      %v4410 = vsel %vm505, %v4399, %v4401
      %v4411 = vsel %vm505, %v4401, %v4403
      %v4412 = vsel %vm505, %v4405, %v4407
      %v4413 = vsel %vm505, %v4407, %v4409
      %v4420 = vmul.f32 %v4392, %v4410
      %v4421 = vmul.f32 %v4393, %v4411
      %v4422 = vmul.f32 %v4394, %v4403
      %v4423 = vmul.f32 %v4395, %v4412
      %v4424 = vmul.f32 %v4396, %v4413
      %v4425 = vmul.f32 %v4397, %v4409
      %v4426 = vadd.f32 %v4378, %v4420
      %v4427 = vadd.f32 %v4379, %v4421
      %v4428 = vadd.f32 %v4380, %v4422
      %v4429 = vadd.f32 %v4381, %v4423
      %v4430 = vadd.f32 %v4382, %v4424
      %v4431 = vadd.f32 %v4383, %v4425
      %4432 = vset.pattern.permute.xlu0 6
      %4433 = vperm.xlu0 %4432, %v4124
      %v4434 = vpop.permute.xlu0 %4433
      %4436 = vset.pattern.permute.xlu0 6
      %4437 = vperm.xlu0 %4436, %v4125
      %v4438 = vpop.permute.xlu0 %4437
      %v4440 = vmul.f32 %v4434, %v317
      %v4441 = vmul.f32 %v4434, %v321
      %v4442 = vmul.f32 %v4434, %v325
      %v4443 = vmul.f32 %v4438, %v317
      %v4444 = vmul.f32 %v4438, %v321
      %v4445 = vmul.f32 %v4438, %v325
      %4446 = vrot.lane.b32.xlu0 %v4149, 113
      %v4447 = vpop.permute.xlu0 %4446
      %4448 = vrot.lane.b32.xlu0 %v4150, 113
      %v4449 = vpop.permute.xlu0 %4448
      %4450 = vrot.lane.b32.xlu0 %v4151, 113
      %v4451 = vpop.permute.xlu0 %4450
      %4452 = vrot.lane.b32.xlu0 %v4153, 113
      %v4453 = vpop.permute.xlu0 %4452
      %4454 = vrot.lane.b32.xlu0 %v4154, 113
      %v4455 = vpop.permute.xlu0 %4454
      %4456 = vrot.lane.b32.xlu0 %v4155, 113
      %v4457 = vpop.permute.xlu0 %4456
      %v4458 = vsel %vm530, %v4447, %v4449
      %v4459 = vsel %vm530, %v4449, %v4451
      %v4460 = vsel %vm530, %v4453, %v4455
      %v4461 = vsel %vm530, %v4455, %v4457
      %v4468 = vmul.f32 %v4440, %v4458
      %v4469 = vmul.f32 %v4441, %v4459
      %v4470 = vmul.f32 %v4442, %v4451
      %v4471 = vmul.f32 %v4443, %v4460
      %v4472 = vmul.f32 %v4444, %v4461
      %v4473 = vmul.f32 %v4445, %v4457
      %v4474 = vadd.f32 %v4426, %v4468
      %v4475 = vadd.f32 %v4427, %v4469
      %v4476 = vadd.f32 %v4428, %v4470
      %v4477 = vadd.f32 %v4429, %v4471
      %v4478 = vadd.f32 %v4430, %v4472
      %v4479 = vadd.f32 %v4431, %v4473
      %4480 = vset.pattern.permute.xlu0 7
      %4481 = vperm.xlu0 %4480, %v4124
      %v4482 = vpop.permute.xlu0 %4481
      %4484 = vset.pattern.permute.xlu0 7
      %4485 = vperm.xlu0 %4484, %v4125
      %v4486 = vpop.permute.xlu0 %4485
      %v4488 = vmul.f32 %v4482, %v4149
      %v4489 = vmul.f32 %v4482, %v4150
      %v4490 = vmul.f32 %v4482, %v4151
      %v4491 = vmul.f32 %v4486, %v4153
      %v4492 = vmul.f32 %v4486, %v4154
      %v4493 = vmul.f32 %v4486, %v4155
      %4500 = vrot.lane.b32.xlu0 %v4488, 112
      %v4501 = vpop.permute.xlu0 %4500
      %4502 = vrot.lane.b32.xlu0 %v4489, 112
      %v4503 = vpop.permute.xlu0 %4502
      %4504 = vrot.lane.b32.xlu0 %v4490, 112
      %v4505 = vpop.permute.xlu0 %4504
      %4506 = vrot.lane.b32.xlu0 %v4491, 112
      %v4507 = vpop.permute.xlu0 %4506
      %4508 = vrot.lane.b32.xlu0 %v4492, 112
      %v4509 = vpop.permute.xlu0 %4508
      %4510 = vrot.lane.b32.xlu0 %v4493, 112
      %v4511 = vpop.permute.xlu0 %4510
      %v4512 = vsel %vm552, %v4501, %v4503
      %v4513 = vsel %vm552, %v4503, %v4505
      %v4514 = vsel %vm552, %v4507, %v4509
      %v4515 = vsel %vm552, %v4509, %v4511
      %v4522 = vadd.f32 %v4474, %v4512
      %v4523 = vadd.f32 %v4475, %v4513
      %v4524 = vadd.f32 %v4476, %v4505
      %v4525 = vadd.f32 %v4477, %v4514
      %v4526 = vadd.f32 %v4478, %v4515
      %v4527 = vadd.f32 %v4479, %v4511
      %4528 = vset.pattern.permute.xlu0 8
      %4529 = vperm.xlu0 %4528, %v4124
      %v4530 = vpop.permute.xlu0 %4529
      %4532 = vset.pattern.permute.xlu0 8
      %4533 = vperm.xlu0 %4532, %v4125
      %v4534 = vpop.permute.xlu0 %4533
      %v4536 = vmul.f32 %v4530, %v401
      %v4537 = vmul.f32 %v4530, %v405
      %v4538 = vmul.f32 %v4530, %v409
      %v4539 = vmul.f32 %v4534, %v401
      %v4540 = vmul.f32 %v4534, %v405
      %v4541 = vmul.f32 %v4534, %v409
      %4542 = vrot.lane.b32.xlu0 %v4149, 111
      %v4543 = vpop.permute.xlu0 %4542
      %4544 = vrot.lane.b32.xlu0 %v4150, 111
      %v4545 = vpop.permute.xlu0 %4544
      %4546 = vrot.lane.b32.xlu0 %v4151, 111
      %v4547 = vpop.permute.xlu0 %4546
      %4548 = vrot.lane.b32.xlu0 %v4153, 111
      %v4549 = vpop.permute.xlu0 %4548
      %4550 = vrot.lane.b32.xlu0 %v4154, 111
      %v4551 = vpop.permute.xlu0 %4550
      %4552 = vrot.lane.b32.xlu0 %v4155, 111
      %v4553 = vpop.permute.xlu0 %4552
      %v4554 = vsel %vm577, %v4543, %v4545
      %v4555 = vsel %vm577, %v4545, %v4547
      %v4556 = vsel %vm577, %v4549, %v4551
      %v4557 = vsel %vm577, %v4551, %v4553
      %v4564 = vmul.f32 %v4536, %v4554
      %v4565 = vmul.f32 %v4537, %v4555
      %v4566 = vmul.f32 %v4538, %v4547
      %v4567 = vmul.f32 %v4539, %v4556
      %v4568 = vmul.f32 %v4540, %v4557
      %v4569 = vmul.f32 %v4541, %v4553
      %v4570 = vadd.f32 %v4522, %v4564
      %v4571 = vadd.f32 %v4523, %v4565
      %v4572 = vadd.f32 %v4524, %v4566
      %v4573 = vadd.f32 %v4525, %v4567
      %v4574 = vadd.f32 %v4526, %v4568
      %v4575 = vadd.f32 %v4527, %v4569
      %v4576 = vld [vmem:[%s1 + $0xf0] sm:$0xff]
      %v4577 = vld [vmem:[%s1 + $0xf8] sm:$0xff]
      %v4578 = vld [vmem:[%s1 + $0x100] sm:$0xff]
      %v4579 = vld [vmem:[%s1 + $0x108] sm:$0xff]
      %v4580 = vld [vmem:[%s1 + $0x110] sm:$0xff]
      %v4581 = vld [vmem:[%s1 + $0x118] sm:$0xff]
      %v4582 = vld [vmem:[%s1 + $0x120] sm:$0xff]
      %v4583 = vld [vmem:[%s1 + $0x128] sm:$0xff]
      %4585 = vset.pattern.permute.xlu0 0
      %4586 = vperm.xlu0 %4585, %v4580
      %v4587 = vpop.permute.xlu0 %4586
      %4590 = vset.pattern.permute.xlu0 0
      %4591 = vperm.xlu0 %4590, %v4581
      %v4592 = vpop.permute.xlu0 %4591
      %4595 = vset.pattern.permute.xlu0 0
      %4596 = vperm.xlu0 %4595, %v4582
      %v4597 = vpop.permute.xlu0 %4596
      %4600 = vset.pattern.permute.xlu0 0
      %4601 = vperm.xlu0 %4600, %v4583
      %v4602 = vpop.permute.xlu0 %4601
      %v4605 = vsel %vm380, %v4576, 0
      %v4608 = vsel %vm380, %v4577, 0
      %v4611 = vsel %vm380, %v4578, 0
      %v4614 = vsel %vm380, %v4579, 0
      %4616 = vmatprep.subr.mxu0 %v4571
      %4617 = vmatpush1.msra.mxu0 %v4570
      %4618 = vmatprep.subr.mxu0 %v4574
      %4619 = vmatpush1.msra.mxu0 %v4573
      %4620 = vmatprep.subr.mxu0 0.0
      %4621 = vmatpush1.msra.mxu0 0.0
      %4622 = vmatprep.subr.mxu0 0.0
      %4623 = vmatpush1.msra.mxu0 0.0
      %4624 = vmatprep.subr.mxu0 0.0
      %4625 = vmatpush1.msra.mxu0 0.0
      %4626 = vmatprep.subr.mxu0 0.0
      %4627 = vmatpush1.msra.mxu0 0.0
      %4628 = vmatprep.subr.mxu0 0.0
      %4629 = vmatpush1.msra.mxu0 0.0
      %4630 = vmatprep.subr.mxu0 0.0
      %4631 = vmatpush1.msra.mxu0 0.0
      %4632 = vmatprep.subr.mxu0 0.0
      %4633 = vmatpush1.msra.mxu0 0.0
      %4634 = vmatprep.subr.mxu0 0.0
      %4635 = vmatpush1.msra.mxu0 0.0
      %4636 = vmatprep.subr.mxu0 0.0
      %4637 = vmatpush1.msra.mxu0 0.0
      %4638 = vmatprep.subr.mxu0 0.0
      %4639 = vmatpush1.msra.mxu0 0.0
      %4640 = vmatprep.subr.mxu0 0.0
      %4641 = vmatpush1.msra.mxu0 0.0
      %4642 = vmatprep.subr.mxu0 0.0
      %4643 = vmatpush1.msra.mxu0 0.0
      %4644 = vmatprep.subr.mxu0 0.0
      %4645 = vmatpush1.msra.mxu0 0.0
      %4646 = vmatprep.subr.mxu0 0.0
      %4647 = vmatpush1.msra.mxu0 0.0
      %4648 = vmatprep.subr.mxu0 0.0
      %4649 = vmatpush1.msra.mxu0 0.0
      %4650 = vmatprep.subr.mxu0 0.0
      %4651 = vmatpush1.msra.mxu0 0.0
      %4652 = vmatprep.subr.mxu0 0.0
      %4653 = vmatpush1.msra.mxu0 0.0
      %4654 = vmatprep.subr.mxu0 0.0
      %4655 = vmatpush1.msra.mxu0 0.0
      %4656 = vmatprep.subr.mxu0 0.0
      %4657 = vmatpush1.msra.mxu0 0.0
      %4658 = vmatprep.subr.mxu0 0.0
      %4659 = vmatpush1.msra.mxu0 0.0
      %4660 = vmatprep.subr.mxu0 0.0
      %4661 = vmatpush1.msra.mxu0 0.0
      %4662 = vmatprep.subr.mxu0 0.0
      %4663 = vmatpush1.msra.mxu0 0.0
      %4664 = vmatprep.subr.mxu0 0.0
      %4665 = vmatpush1.msra.mxu0 0.0
      %4666 = vmatprep.subr.mxu0 0.0
      %4667 = vmatpush1.msra.mxu0 0.0
      %4668 = vmatprep.subr.mxu0 0.0
      %4669 = vmatpush1.msra.mxu0 0.0
      %4670 = vmatprep.subr.mxu0 0.0
      %4671 = vmatpush1.msra.mxu0 0.0
      %4672 = vmatprep.subr.mxu0 0.0
      %4673 = vmatpush1.msra.mxu0 0.0
      %4674 = vmatprep.subr.mxu0 0.0
      %4675 = vmatpush1.msra.mxu0 0.0
      %4676 = vmatprep.subr.mxu0 0.0
      %4677 = vmatpush1.msra.mxu0 0.0
      %4678 = vmatprep.subr.mxu0 0.0
      %4679 = vmatpush1.msra.mxu0 0.0
      %4680 = vmatprep.mubr.f32.mxu0 0.0
      %4681 = vmatmul.mubr.f32.gmra.mrb[0].mxu0 %v4605
      %v4682 = vpop.f32.mrb[0].mxu0
      %v4683 = vadd.f32 %v4587, %v4682
      %v4684 = vpop.f32.mrb[0].mxu0
      %v4685 = vadd.f32 %v4587, %v4684
      %4686 = vmatprep.mubr.f32.mxu0 0.0
      %4687 = vmatmul.mubr.f32.gmra.mrb[0].mxu0 %v4608
      %v4688 = vpop.f32.mrb[0].mxu0
      %v4689 = vadd.f32 %v4592, %v4688
      %v4690 = vpop.f32.mrb[0].mxu0
      %v4691 = vadd.f32 %v4592, %v4690
      %4692 = vmatprep.mubr.f32.mxu0 0.0
      %4693 = vmatmul.mubr.f32.gmra.mrb[0].mxu0 %v4611
      %v4694 = vpop.f32.mrb[0].mxu0
      %v4695 = vadd.f32 %v4597, %v4694
      %v4696 = vpop.f32.mrb[0].mxu0
      %v4697 = vadd.f32 %v4597, %v4696
      %4698 = vmatprep.mubr.f32.mxu0 0.0
      %4699 = vmatmul.mubr.f32.gmra.mrb[0].mxu0 %v4614
      %v4700 = vpop.f32.mrb[0].mxu0
      %v4701 = vadd.f32 %v4602, %v4700
      %v4702 = vpop.f32.mrb[0].mxu0
      %v4703 = vadd.f32 %v4602, %v4702
      %4704 = vdwg.mxu0
      %4705 = vmatprep.subr.mxu0 0.0
      %4706 = vmatpush1.msra.mxu0 %v4572
      %4707 = vmatprep.subr.mxu0 0.0
      %4708 = vmatpush1.msra.mxu0 %v4575
      %4709 = vmatprep.subr.mxu0 0.0
      %4710 = vmatpush1.msra.mxu0 0.0
      %4711 = vmatprep.subr.mxu0 0.0
      %4712 = vmatpush1.msra.mxu0 0.0
      %4713 = vmatprep.subr.mxu0 0.0
      %4714 = vmatpush1.msra.mxu0 0.0
      %4715 = vmatprep.subr.mxu0 0.0
      %4716 = vmatpush1.msra.mxu0 0.0
      %4717 = vmatprep.subr.mxu0 0.0
      %4718 = vmatpush1.msra.mxu0 0.0
      %4719 = vmatprep.subr.mxu0 0.0
      %4720 = vmatpush1.msra.mxu0 0.0
      %4721 = vmatprep.subr.mxu0 0.0
      %4722 = vmatpush1.msra.mxu0 0.0
      %4723 = vmatprep.subr.mxu0 0.0
      %4724 = vmatpush1.msra.mxu0 0.0
      %4725 = vmatprep.subr.mxu0 0.0
      %4726 = vmatpush1.msra.mxu0 0.0
      %4727 = vmatprep.subr.mxu0 0.0
      %4728 = vmatpush1.msra.mxu0 0.0
      %4729 = vmatprep.subr.mxu0 0.0
      %4730 = vmatpush1.msra.mxu0 0.0
      %4731 = vmatprep.subr.mxu0 0.0
      %4732 = vmatpush1.msra.mxu0 0.0
      %4733 = vmatprep.subr.mxu0 0.0
      %4734 = vmatpush1.msra.mxu0 0.0
      %4735 = vmatprep.subr.mxu0 0.0
      %4736 = vmatpush1.msra.mxu0 0.0
      %4737 = vmatprep.subr.mxu0 0.0
      %4738 = vmatpush1.msra.mxu0 0.0
      %4739 = vmatprep.subr.mxu0 0.0
      %4740 = vmatpush1.msra.mxu0 0.0
      %4741 = vmatprep.subr.mxu0 0.0
      %4742 = vmatpush1.msra.mxu0 0.0
      %4743 = vmatprep.subr.mxu0 0.0
      %4744 = vmatpush1.msra.mxu0 0.0
      %4745 = vmatprep.subr.mxu0 0.0
      %4746 = vmatpush1.msra.mxu0 0.0
      %4747 = vmatprep.subr.mxu0 0.0
      %4748 = vmatpush1.msra.mxu0 0.0
      %4749 = vmatprep.subr.mxu0 0.0
      %4750 = vmatpush1.msra.mxu0 0.0
      %4751 = vmatprep.subr.mxu0 0.0
      %4752 = vmatpush1.msra.mxu0 0.0
      %4753 = vmatprep.subr.mxu0 0.0
      %4754 = vmatpush1.msra.mxu0 0.0
      %4755 = vmatprep.subr.mxu0 0.0
      %4756 = vmatpush1.msra.mxu0 0.0
      %4757 = vmatprep.subr.mxu0 0.0
      %4758 = vmatpush1.msra.mxu0 0.0
      %4759 = vmatprep.subr.mxu0 0.0
      %4760 = vmatpush1.msra.mxu0 0.0
      %4761 = vmatprep.subr.mxu0 0.0
      %4762 = vmatpush1.msra.mxu0 0.0
      %4763 = vmatprep.subr.mxu0 0.0
      %4764 = vmatpush1.msra.mxu0 0.0
      %4765 = vmatprep.subr.mxu0 0.0
      %4766 = vmatpush1.msra.mxu0 0.0
      %4767 = vmatprep.subr.mxu0 0.0
      %4768 = vmatpush1.msra.mxu0 0.0
      %4769 = vmatprep.mubr.f32.mxu0 0.0
      %4770 = vmatmul.mubr.f32.gmra.mrb[0].mxu0 %v4605
      %v4771 = vpop.f32.mrb[0].mxu0
      %v4772 = vadd.f32 %v4587, %v4771
      %v4773 = vpop.f32.mrb[0].mxu0
      %4774 = vmatprep.mubr.f32.mxu0 0.0
      %4775 = vmatmul.mubr.f32.gmra.mrb[0].mxu0 %v4608
      %v4776 = vpop.f32.mrb[0].mxu0
      %v4777 = vadd.f32 %v4592, %v4776
      %v4778 = vpop.f32.mrb[0].mxu0
      %4779 = vmatprep.mubr.f32.mxu0 0.0
      %4780 = vmatmul.mubr.f32.gmra.mrb[0].mxu0 %v4611
      %v4781 = vpop.f32.mrb[0].mxu0
      %v4782 = vadd.f32 %v4597, %v4781
      %v4783 = vpop.f32.mrb[0].mxu0
      %4784 = vmatprep.mubr.f32.mxu0 0.0
      %4785 = vmatmul.mubr.f32.gmra.mrb[0].mxu0 %v4614
      %v4786 = vpop.f32.mrb[0].mxu0
      %v4787 = vadd.f32 %v4602, %v4786
      %v4788 = vpop.f32.mrb[0].mxu0
      %4789 = vdwg.mxu0
      %v4790 = vmul.f32 %v4683, 0.2
      %v4791 = vmul.f32 %v4685, 0.2
      %v4792 = vmul.f32 %v4772, 0.2
      %v4793 = vmul.f32 %v4689, 0.2
      %v4794 = vmul.f32 %v4691, 0.2
      %v4795 = vmul.f32 %v4777, 0.2
      %v4796 = vmul.f32 %v4695, 0.2
      %v4797 = vmul.f32 %v4697, 0.2
      %v4798 = vmul.f32 %v4782, 0.2
      %v4799 = vmul.f32 %v4701, 0.2
      %v4800 = vmul.f32 %v4703, 0.2
      %v4801 = vmul.f32 %v4787, 0.2
      %v4802 = vmax.f32 %v4683, %v4790
      %v4803 = vmax.f32 %v4685, %v4791
      %v4804 = vmax.f32 %v4772, %v4792
      %v4805 = vmax.f32 %v4689, %v4793
      %v4806 = vmax.f32 %v4691, %v4794
      %v4807 = vmax.f32 %v4777, %v4795
      %v4808 = vmax.f32 %v4695, %v4796
      %v4809 = vmax.f32 %v4697, %v4797
      %v4810 = vmax.f32 %v4782, %v4798
      %v4811 = vmax.f32 %v4701, %v4799
      %v4812 = vmax.f32 %v4703, %v4800
      %v4813 = vmax.f32 %v4787, %v4801
      %v4814 = vld [vmem:[%s1 + $0x130] sm:$0xff]
      %v4815 = vld [vmem:[%s1 + $0x138] sm:$0xff]
      %v4816 = vld [vmem:[%s1 + $0x140] sm:$0xff]
      %v4817 = vld [vmem:[%s1 + $0x148] sm:$0xff]
      %4818 = vst [vmem:[#allocation2 + $0x8] sm:$0xff] %v4802
      %4819 = vst [vmem:[#allocation2 + $0x10] sm:$0xff] %v4803
      %4820 = vst.msk [vmem:[#allocation2 + $0x18] sm:$0xff] %vm201, %v4804
      %4821 = vst [vmem:[#allocation2 + $0x30] sm:$0xff] %v4805
      %4822 = vst [vmem:[#allocation2 + $0x38] sm:$0xff] %v4806
      %4823 = vst.msk [vmem:[#allocation2 + $0x40] sm:$0xff] %vm201, %v4807
      %4824 = vst [vmem:[#allocation2 + $0x58] sm:$0xff] %v4808
      %4825 = vst [vmem:[#allocation2 + $0x60] sm:$0xff] %v4809
      %4826 = vst.msk [vmem:[#allocation2 + $0x68] sm:$0xff] %vm201, %v4810
      %4827 = vst [vmem:[#allocation2 + $0x80] sm:$0xff] %v4811
      %4828 = vst [vmem:[#allocation2 + $0x88] sm:$0xff] %v4812
      %4829 = vst.msk [vmem:[#allocation2 + $0x90] sm:$0xff] %vm201, %v4813
      %4831 = vset.pattern.permute.xlu0 0
      %4832 = vperm.xlu0 %4831, %v4814
      %v4833 = vpop.permute.xlu0 %4832
      %4836 = vset.pattern.permute.xlu0 0
      %4837 = vperm.xlu0 %4836, %v4815
      %v4838 = vpop.permute.xlu0 %4837
      %4841 = vset.pattern.permute.xlu0 0
      %4842 = vperm.xlu0 %4841, %v4816
      %v4843 = vpop.permute.xlu0 %4842
      %4846 = vset.pattern.permute.xlu0 0
      %4847 = vperm.xlu0 %4846, %v4817
      %v4848 = vpop.permute.xlu0 %4847
      %v4850 = vmul.f32 %v4833, %v317
      %v4851 = vmul.f32 %v4833, %v321
      %v4852 = vmul.f32 %v4833, %v325
      %v4853 = vmul.f32 %v4838, %v317
      %v4854 = vmul.f32 %v4838, %v321
      %v4855 = vmul.f32 %v4838, %v325
      %v4856 = vmul.f32 %v4843, %v317
      %v4857 = vmul.f32 %v4843, %v321
      %v4858 = vmul.f32 %v4843, %v325
      %v4859 = vmul.f32 %v4848, %v317
      %v4860 = vmul.f32 %v4848, %v321
      %v4861 = vmul.f32 %v4848, %v325
      %v4862 = vld [vmem:[#allocation2] sm:$0xff]
      %v4863 = vld [vmem:[#allocation2 + $0x8] sm:$0xff]
      %v4864 = vld [vmem:[#allocation2 + $0x10] sm:$0xff]
      %v4865 = vld [vmem:[#allocation2 + $0x18] sm:$0xff]
      %v4866 = vld [vmem:[#allocation2 + $0x28] sm:$0xff]
      %v4867 = vld [vmem:[#allocation2 + $0x30] sm:$0xff]
      %v4868 = vld [vmem:[#allocation2 + $0x38] sm:$0xff]
      %v4869 = vld [vmem:[#allocation2 + $0x40] sm:$0xff]
      %v4870 = vld [vmem:[#allocation2 + $0x50] sm:$0xff]
      %v4871 = vld [vmem:[#allocation2 + $0x58] sm:$0xff]
      %v4872 = vld [vmem:[#allocation2 + $0x60] sm:$0xff]
      %v4873 = vld [vmem:[#allocation2 + $0x68] sm:$0xff]
      %v4874 = vld [vmem:[#allocation2 + $0x78] sm:$0xff]
      %v4875 = vld [vmem:[#allocation2 + $0x80] sm:$0xff]
      %v4876 = vld [vmem:[#allocation2 + $0x88] sm:$0xff]
      %v4877 = vld [vmem:[#allocation2 + $0x90] sm:$0xff]
      %4894 = vrot.lane.b32.xlu0 %v4862, 17
      %v4895 = vpop.permute.xlu0 %4894
      %4896 = vrot.lane.b32.xlu0 %v4863, 17
      %v4897 = vpop.permute.xlu0 %4896
      %4898 = vrot.lane.b32.xlu0 %v4864, 17
      %v4899 = vpop.permute.xlu0 %4898
      %4900 = vrot.lane.b32.xlu0 %v4865, 17
      %v4901 = vpop.permute.xlu0 %4900
      %4902 = vrot.lane.b32.xlu0 %v4866, 17
      %v4903 = vpop.permute.xlu0 %4902
      %4904 = vrot.lane.b32.xlu0 %v4867, 17
      %v4905 = vpop.permute.xlu0 %4904
      %4906 = vrot.lane.b32.xlu0 %v4868, 17
      %v4907 = vpop.permute.xlu0 %4906
      %4908 = vrot.lane.b32.xlu0 %v4869, 17
      %v4909 = vpop.permute.xlu0 %4908
      %4910 = vrot.lane.b32.xlu0 %v4870, 17
      %v4911 = vpop.permute.xlu0 %4910
      %4912 = vrot.lane.b32.xlu0 %v4871, 17
      %v4913 = vpop.permute.xlu0 %4912
      %4914 = vrot.lane.b32.xlu0 %v4872, 17
      %v4915 = vpop.permute.xlu0 %4914
      %4916 = vrot.lane.b32.xlu0 %v4873, 17
      %v4917 = vpop.permute.xlu0 %4916
      %4918 = vrot.lane.b32.xlu0 %v4874, 17
      %v4919 = vpop.permute.xlu0 %4918
      %4920 = vrot.lane.b32.xlu0 %v4875, 17
      %v4921 = vpop.permute.xlu0 %4920
      %4922 = vrot.lane.b32.xlu0 %v4876, 17
      %v4923 = vpop.permute.xlu0 %4922
      %4924 = vrot.lane.b32.xlu0 %v4877, 17
      %v4925 = vpop.permute.xlu0 %4924
      %v4926 = vsel %vm358, %v4895, %v4897
      %v4927 = vsel %vm358, %v4897, %v4899
      %v4928 = vsel %vm358, %v4899, %v4901
      %v4929 = vsel %vm358, %v4903, %v4905
      %v4930 = vsel %vm358, %v4905, %v4907
      %v4931 = vsel %vm358, %v4907, %v4909
      %v4932 = vsel %vm358, %v4911, %v4913
      %v4933 = vsel %vm358, %v4913, %v4915
      %v4934 = vsel %vm358, %v4915, %v4917
      %v4935 = vsel %vm358, %v4919, %v4921
      %v4936 = vsel %vm358, %v4921, %v4923
      %v4937 = vsel %vm358, %v4923, %v4925
      %v4950 = vmul.f32 %v4850, %v4926
      %v4951 = vmul.f32 %v4851, %v4927
      %v4952 = vmul.f32 %v4852, %v4928
      %v4953 = vmul.f32 %v4853, %v4929
      %v4954 = vmul.f32 %v4854, %v4930
      %v4955 = vmul.f32 %v4855, %v4931
      %v4956 = vmul.f32 %v4856, %v4932
      %v4957 = vmul.f32 %v4857, %v4933
      %v4958 = vmul.f32 %v4858, %v4934
      %v4959 = vmul.f32 %v4859, %v4935
      %v4960 = vmul.f32 %v4860, %v4936
      %v4961 = vmul.f32 %v4861, %v4937
      %4962 = vset.pattern.permute.xlu0 1
      %4963 = vperm.xlu0 %4962, %v4814
      %v4964 = vpop.permute.xlu0 %4963
      %4966 = vset.pattern.permute.xlu0 1
      %4967 = vperm.xlu0 %4966, %v4815
      %v4968 = vpop.permute.xlu0 %4967
      %4970 = vset.pattern.permute.xlu0 1
      %4971 = vperm.xlu0 %4970, %v4816
      %v4972 = vpop.permute.xlu0 %4971
      %4974 = vset.pattern.permute.xlu0 1
      %4975 = vperm.xlu0 %4974, %v4817
      %v4976 = vpop.permute.xlu0 %4975
      %v4978 = vmul.f32 %v4964, %v4862
      %v4979 = vmul.f32 %v4964, %v4863
      %v4980 = vmul.f32 %v4964, %v4864
      %v4981 = vmul.f32 %v4964, %v4865
      %v4982 = vmul.f32 %v4968, %v4866
      %v4983 = vmul.f32 %v4968, %v4867
      %v4984 = vmul.f32 %v4968, %v4868
      %v4985 = vmul.f32 %v4968, %v4869
      %v4986 = vmul.f32 %v4972, %v4870
      %v4987 = vmul.f32 %v4972, %v4871
      %v4988 = vmul.f32 %v4972, %v4872
      %v4989 = vmul.f32 %v4972, %v4873
      %v4990 = vmul.f32 %v4976, %v4874
      %v4991 = vmul.f32 %v4976, %v4875
      %v4992 = vmul.f32 %v4976, %v4876
      %v4993 = vmul.f32 %v4976, %v4877
      %5010 = vrot.lane.b32.xlu0 %v4978, 16
      %v5011 = vpop.permute.xlu0 %5010
      %5012 = vrot.lane.b32.xlu0 %v4979, 16
      %v5013 = vpop.permute.xlu0 %5012
      %5014 = vrot.lane.b32.xlu0 %v4980, 16
      %v5015 = vpop.permute.xlu0 %5014
      %5016 = vrot.lane.b32.xlu0 %v4981, 16
      %v5017 = vpop.permute.xlu0 %5016
      %5018 = vrot.lane.b32.xlu0 %v4982, 16
      %v5019 = vpop.permute.xlu0 %5018
      %5020 = vrot.lane.b32.xlu0 %v4983, 16
      %v5021 = vpop.permute.xlu0 %5020
      %5022 = vrot.lane.b32.xlu0 %v4984, 16
      %v5023 = vpop.permute.xlu0 %5022
      %5024 = vrot.lane.b32.xlu0 %v4985, 16
      %v5025 = vpop.permute.xlu0 %5024
      %5026 = vrot.lane.b32.xlu0 %v4986, 16
      %v5027 = vpop.permute.xlu0 %5026
      %5028 = vrot.lane.b32.xlu0 %v4987, 16
      %v5029 = vpop.permute.xlu0 %5028
      %5030 = vrot.lane.b32.xlu0 %v4988, 16
      %v5031 = vpop.permute.xlu0 %5030
      %5032 = vrot.lane.b32.xlu0 %v4989, 16
      %v5033 = vpop.permute.xlu0 %5032
      %5034 = vrot.lane.b32.xlu0 %v4990, 16
      %v5035 = vpop.permute.xlu0 %5034
      %5036 = vrot.lane.b32.xlu0 %v4991, 16
      %v5037 = vpop.permute.xlu0 %5036
      %5038 = vrot.lane.b32.xlu0 %v4992, 16
      %v5039 = vpop.permute.xlu0 %5038
      %5040 = vrot.lane.b32.xlu0 %v4993, 16
      %v5041 = vpop.permute.xlu0 %5040
      %v5042 = vsel %vm380, %v5011, %v5013
      %v5043 = vsel %vm380, %v5013, %v5015
      %v5044 = vsel %vm380, %v5015, %v5017
      %v5045 = vsel %vm380, %v5019, %v5021
      %v5046 = vsel %vm380, %v5021, %v5023
      %v5047 = vsel %vm380, %v5023, %v5025
      %v5048 = vsel %vm380, %v5027, %v5029
      %v5049 = vsel %vm380, %v5029, %v5031
      %v5050 = vsel %vm380, %v5031, %v5033
      %v5051 = vsel %vm380, %v5035, %v5037
      %v5052 = vsel %vm380, %v5037, %v5039
      %v5053 = vsel %vm380, %v5039, %v5041
      %v5066 = vadd.f32 %v4950, %v5042
      %v5067 = vadd.f32 %v4951, %v5043
      %v5068 = vadd.f32 %v4952, %v5044
      %v5069 = vadd.f32 %v4953, %v5045
      %v5070 = vadd.f32 %v4954, %v5046
      %v5071 = vadd.f32 %v4955, %v5047
      %v5072 = vadd.f32 %v4956, %v5048
      %v5073 = vadd.f32 %v4957, %v5049
      %v5074 = vadd.f32 %v4958, %v5050
      %v5075 = vadd.f32 %v4959, %v5051
      %v5076 = vadd.f32 %v4960, %v5052
      %v5077 = vadd.f32 %v4961, %v5053
      %5078 = vset.pattern.permute.xlu0 2
      %5079 = vperm.xlu0 %5078, %v4814
      %v5080 = vpop.permute.xlu0 %5079
      %5082 = vset.pattern.permute.xlu0 2
      %5083 = vperm.xlu0 %5082, %v4815
      %v5084 = vpop.permute.xlu0 %5083
      %5086 = vset.pattern.permute.xlu0 2
      %5087 = vperm.xlu0 %5086, %v4816
      %v5088 = vpop.permute.xlu0 %5087
      %5090 = vset.pattern.permute.xlu0 2
      %5091 = vperm.xlu0 %5090, %v4817
      %v5092 = vpop.permute.xlu0 %5091
      %v5094 = vmul.f32 %v5080, %v401
      %v5095 = vmul.f32 %v5080, %v405
      %v5096 = vmul.f32 %v5080, %v409
      %v5097 = vmul.f32 %v5084, %v401
      %v5098 = vmul.f32 %v5084, %v405
      %v5099 = vmul.f32 %v5084, %v409
      %v5100 = vmul.f32 %v5088, %v401
      %v5101 = vmul.f32 %v5088, %v405
      %v5102 = vmul.f32 %v5088, %v409
      %v5103 = vmul.f32 %v5092, %v401
      %v5104 = vmul.f32 %v5092, %v405
      %v5105 = vmul.f32 %v5092, %v409
      %5106 = vrot.lane.b32.xlu0 %v4862, 15
      %v5107 = vpop.permute.xlu0 %5106
      %5108 = vrot.lane.b32.xlu0 %v4863, 15
      %v5109 = vpop.permute.xlu0 %5108
      %5110 = vrot.lane.b32.xlu0 %v4864, 15
      %v5111 = vpop.permute.xlu0 %5110
      %5112 = vrot.lane.b32.xlu0 %v4865, 15
      %v5113 = vpop.permute.xlu0 %5112
      %5114 = vrot.lane.b32.xlu0 %v4866, 15
      %v5115 = vpop.permute.xlu0 %5114
      %5116 = vrot.lane.b32.xlu0 %v4867, 15
      %v5117 = vpop.permute.xlu0 %5116
      %5118 = vrot.lane.b32.xlu0 %v4868, 15
      %v5119 = vpop.permute.xlu0 %5118
      %5120 = vrot.lane.b32.xlu0 %v4869, 15
      %v5121 = vpop.permute.xlu0 %5120
      %5122 = vrot.lane.b32.xlu0 %v4870, 15
      %v5123 = vpop.permute.xlu0 %5122
      %5124 = vrot.lane.b32.xlu0 %v4871, 15
      %v5125 = vpop.permute.xlu0 %5124
      %5126 = vrot.lane.b32.xlu0 %v4872, 15
      %v5127 = vpop.permute.xlu0 %5126
      %5128 = vrot.lane.b32.xlu0 %v4873, 15
      %v5129 = vpop.permute.xlu0 %5128
      %5130 = vrot.lane.b32.xlu0 %v4874, 15
      %v5131 = vpop.permute.xlu0 %5130
      %5132 = vrot.lane.b32.xlu0 %v4875, 15
      %v5133 = vpop.permute.xlu0 %5132
      %5134 = vrot.lane.b32.xlu0 %v4876, 15
      %v5135 = vpop.permute.xlu0 %5134
      %5136 = vrot.lane.b32.xlu0 %v4877, 15
      %v5137 = vpop.permute.xlu0 %5136
      %v5138 = vsel %vm424, %v5107, %v5109
      %v5139 = vsel %vm424, %v5109, %v5111
      %v5140 = vsel %vm424, %v5111, %v5113
      %v5141 = vsel %vm424, %v5115, %v5117
      %v5142 = vsel %vm424, %v5117, %v5119
      %v5143 = vsel %vm424, %v5119, %v5121
      %v5144 = vsel %vm424, %v5123, %v5125
      %v5145 = vsel %vm424, %v5125, %v5127
      %v5146 = vsel %vm424, %v5127, %v5129
      %v5147 = vsel %vm424, %v5131, %v5133
      %v5148 = vsel %vm424, %v5133, %v5135
      %v5149 = vsel %vm424, %v5135, %v5137
      %v5162 = vmul.f32 %v5094, %v5138
      %v5163 = vmul.f32 %v5095, %v5139
      %v5164 = vmul.f32 %v5096, %v5140
      %v5165 = vmul.f32 %v5097, %v5141
      %v5166 = vmul.f32 %v5098, %v5142
      %v5167 = vmul.f32 %v5099, %v5143
      %v5168 = vmul.f32 %v5100, %v5144
      %v5169 = vmul.f32 %v5101, %v5145
      %v5170 = vmul.f32 %v5102, %v5146
      %v5171 = vmul.f32 %v5103, %v5147
      %v5172 = vmul.f32 %v5104, %v5148
      %v5173 = vmul.f32 %v5105, %v5149
      %v5174 = vadd.f32 %v5066, %v5162
      %v5175 = vadd.f32 %v5067, %v5163
      %v5176 = vadd.f32 %v5068, %v5164
      %v5177 = vadd.f32 %v5069, %v5165
      %v5178 = vadd.f32 %v5070, %v5166
      %v5179 = vadd.f32 %v5071, %v5167
      %v5180 = vadd.f32 %v5072, %v5168
      %v5181 = vadd.f32 %v5073, %v5169
      %v5182 = vadd.f32 %v5074, %v5170
      %v5183 = vadd.f32 %v5075, %v5171
      %v5184 = vadd.f32 %v5076, %v5172
      %v5185 = vadd.f32 %v5077, %v5173
      %5186 = vset.pattern.permute.xlu0 3
      %5187 = vperm.xlu0 %5186, %v4814
      %v5188 = vpop.permute.xlu0 %5187
      %5190 = vset.pattern.permute.xlu0 3
      %5191 = vperm.xlu0 %5190, %v4815
      %v5192 = vpop.permute.xlu0 %5191
      %5194 = vset.pattern.permute.xlu0 3
      %5195 = vperm.xlu0 %5194, %v4816
      %v5196 = vpop.permute.xlu0 %5195
      %5198 = vset.pattern.permute.xlu0 3
      %5199 = vperm.xlu0 %5198, %v4817
      %v5200 = vpop.permute.xlu0 %5199
      %v5202 = vmul.f32 %v5188, %v317
      %v5203 = vmul.f32 %v5188, %v321
      %v5204 = vmul.f32 %v5188, %v325
      %v5205 = vmul.f32 %v5192, %v317
      %v5206 = vmul.f32 %v5192, %v321
      %v5207 = vmul.f32 %v5192, %v325
      %v5208 = vmul.f32 %v5196, %v317
      %v5209 = vmul.f32 %v5196, %v321
      %v5210 = vmul.f32 %v5196, %v325
      %v5211 = vmul.f32 %v5200, %v317
      %v5212 = vmul.f32 %v5200, %v321
      %v5213 = vmul.f32 %v5200, %v325
      %5214 = vrot.lane.b32.xlu0 %v4862, 1
      %v5215 = vpop.permute.xlu0 %5214
      %5216 = vrot.lane.b32.xlu0 %v4863, 1
      %v5217 = vpop.permute.xlu0 %5216
      %5218 = vrot.lane.b32.xlu0 %v4864, 1
      %v5219 = vpop.permute.xlu0 %5218
      %5220 = vrot.lane.b32.xlu0 %v4865, 1
      %v5221 = vpop.permute.xlu0 %5220
      %5222 = vrot.lane.b32.xlu0 %v4866, 1
      %v5223 = vpop.permute.xlu0 %5222
      %5224 = vrot.lane.b32.xlu0 %v4867, 1
      %v5225 = vpop.permute.xlu0 %5224
      %5226 = vrot.lane.b32.xlu0 %v4868, 1
      %v5227 = vpop.permute.xlu0 %5226
      %5228 = vrot.lane.b32.xlu0 %v4869, 1
      %v5229 = vpop.permute.xlu0 %5228
      %5230 = vrot.lane.b32.xlu0 %v4870, 1
      %v5231 = vpop.permute.xlu0 %5230
      %5232 = vrot.lane.b32.xlu0 %v4871, 1
      %v5233 = vpop.permute.xlu0 %5232
      %5234 = vrot.lane.b32.xlu0 %v4872, 1
      %v5235 = vpop.permute.xlu0 %5234
      %5236 = vrot.lane.b32.xlu0 %v4873, 1
      %v5237 = vpop.permute.xlu0 %5236
      %5238 = vrot.lane.b32.xlu0 %v4874, 1
      %v5239 = vpop.permute.xlu0 %5238
      %5240 = vrot.lane.b32.xlu0 %v4875, 1
      %v5241 = vpop.permute.xlu0 %5240
      %5242 = vrot.lane.b32.xlu0 %v4876, 1
      %v5243 = vpop.permute.xlu0 %5242
      %5244 = vrot.lane.b32.xlu0 %v4877, 1
      %v5245 = vpop.permute.xlu0 %5244
      %v5246 = vsel %vm452, %v5215, %v5217
      %v5247 = vsel %vm452, %v5217, %v5219
      %v5248 = vsel %vm452, %v5219, %v5221
      %v5249 = vsel %vm452, %v5223, %v5225
      %v5250 = vsel %vm452, %v5225, %v5227
      %v5251 = vsel %vm452, %v5227, %v5229
      %v5252 = vsel %vm452, %v5231, %v5233
      %v5253 = vsel %vm452, %v5233, %v5235
      %v5254 = vsel %vm452, %v5235, %v5237
      %v5255 = vsel %vm452, %v5239, %v5241
      %v5256 = vsel %vm452, %v5241, %v5243
      %v5257 = vsel %vm452, %v5243, %v5245
      %v5270 = vmul.f32 %v5202, %v5246
      %v5271 = vmul.f32 %v5203, %v5247
      %v5272 = vmul.f32 %v5204, %v5248
      %v5273 = vmul.f32 %v5205, %v5249
      %v5274 = vmul.f32 %v5206, %v5250
      %v5275 = vmul.f32 %v5207, %v5251
      %v5276 = vmul.f32 %v5208, %v5252
      %v5277 = vmul.f32 %v5209, %v5253
      %v5278 = vmul.f32 %v5210, %v5254
      %v5279 = vmul.f32 %v5211, %v5255
      %v5280 = vmul.f32 %v5212, %v5256
      %v5281 = vmul.f32 %v5213, %v5257
      %v5282 = vadd.f32 %v5174, %v5270
      %v5283 = vadd.f32 %v5175, %v5271
      %v5284 = vadd.f32 %v5176, %v5272
      %v5285 = vadd.f32 %v5177, %v5273
      %v5286 = vadd.f32 %v5178, %v5274
      %v5287 = vadd.f32 %v5179, %v5275
      %v5288 = vadd.f32 %v5180, %v5276
      %v5289 = vadd.f32 %v5181, %v5277
      %v5290 = vadd.f32 %v5182, %v5278
      %v5291 = vadd.f32 %v5183, %v5279
      %v5292 = vadd.f32 %v5184, %v5280
      %v5293 = vadd.f32 %v5185, %v5281
      %5294 = vset.pattern.permute.xlu0 4
      %5295 = vperm.xlu0 %5294, %v4814
      %v5296 = vpop.permute.xlu0 %5295
      %5298 = vset.pattern.permute.xlu0 4
      %5299 = vperm.xlu0 %5298, %v4815
      %v5300 = vpop.permute.xlu0 %5299
      %5302 = vset.pattern.permute.xlu0 4
      %5303 = vperm.xlu0 %5302, %v4816
      %v5304 = vpop.permute.xlu0 %5303
      %5306 = vset.pattern.permute.xlu0 4
      %5307 = vperm.xlu0 %5306, %v4817
      %v5308 = vpop.permute.xlu0 %5307
      %v5310 = vmul.f32 %v5296, %v4863
      %v5311 = vmul.f32 %v5296, %v4864
      %v5312 = vmul.f32 %v5296, %v4865
      %v5313 = vmul.f32 %v5300, %v4867
      %v5314 = vmul.f32 %v5300, %v4868
      %v5315 = vmul.f32 %v5300, %v4869
      %v5316 = vmul.f32 %v5304, %v4871
      %v5317 = vmul.f32 %v5304, %v4872
      %v5318 = vmul.f32 %v5304, %v4873
      %v5319 = vmul.f32 %v5308, %v4875
      %v5320 = vmul.f32 %v5308, %v4876
      %v5321 = vmul.f32 %v5308, %v4877
      %v5322 = vadd.f32 %v5282, %v5310
      %v5323 = vadd.f32 %v5283, %v5311
      %v5324 = vadd.f32 %v5284, %v5312
      %v5325 = vadd.f32 %v5285, %v5313
      %v5326 = vadd.f32 %v5286, %v5314
      %v5327 = vadd.f32 %v5287, %v5315
      %v5328 = vadd.f32 %v5288, %v5316
      %v5329 = vadd.f32 %v5289, %v5317
      %v5330 = vadd.f32 %v5290, %v5318
      %v5331 = vadd.f32 %v5291, %v5319
      %v5332 = vadd.f32 %v5292, %v5320
      %v5333 = vadd.f32 %v5293, %v5321
      %5334 = vset.pattern.permute.xlu0 5
      %5335 = vperm.xlu0 %5334, %v4814
      %v5336 = vpop.permute.xlu0 %5335
      %5338 = vset.pattern.permute.xlu0 5
      %5339 = vperm.xlu0 %5338, %v4815
      %v5340 = vpop.permute.xlu0 %5339
      %5342 = vset.pattern.permute.xlu0 5
      %5343 = vperm.xlu0 %5342, %v4816
      %v5344 = vpop.permute.xlu0 %5343
      %5346 = vset.pattern.permute.xlu0 5
      %5347 = vperm.xlu0 %5346, %v4817
      %v5348 = vpop.permute.xlu0 %5347
      %v5350 = vmul.f32 %v5336, %v401
      %v5351 = vmul.f32 %v5336, %v405
      %v5352 = vmul.f32 %v5336, %v409
      %v5353 = vmul.f32 %v5340, %v401
      %v5354 = vmul.f32 %v5340, %v405
      %v5355 = vmul.f32 %v5340, %v409
      %v5356 = vmul.f32 %v5344, %v401
      %v5357 = vmul.f32 %v5344, %v405
      %v5358 = vmul.f32 %v5344, %v409
      %v5359 = vmul.f32 %v5348, %v401
      %v5360 = vmul.f32 %v5348, %v405
      %v5361 = vmul.f32 %v5348, %v409
      %5362 = vrot.lane.b32.xlu0 %v4863, 127
      %v5363 = vpop.permute.xlu0 %5362
      %5364 = vrot.lane.b32.xlu0 %v4864, 127
      %v5365 = vpop.permute.xlu0 %5364
      %5366 = vrot.lane.b32.xlu0 %v4865, 127
      %v5367 = vpop.permute.xlu0 %5366
      %5368 = vrot.lane.b32.xlu0 %v4867, 127
      %v5369 = vpop.permute.xlu0 %5368
      %5370 = vrot.lane.b32.xlu0 %v4868, 127
      %v5371 = vpop.permute.xlu0 %5370
      %5372 = vrot.lane.b32.xlu0 %v4869, 127
      %v5373 = vpop.permute.xlu0 %5372
      %5374 = vrot.lane.b32.xlu0 %v4871, 127
      %v5375 = vpop.permute.xlu0 %5374
      %5376 = vrot.lane.b32.xlu0 %v4872, 127
      %v5377 = vpop.permute.xlu0 %5376
      %5378 = vrot.lane.b32.xlu0 %v4873, 127
      %v5379 = vpop.permute.xlu0 %5378
      %5380 = vrot.lane.b32.xlu0 %v4875, 127
      %v5381 = vpop.permute.xlu0 %5380
      %5382 = vrot.lane.b32.xlu0 %v4876, 127
      %v5383 = vpop.permute.xlu0 %5382
      %5384 = vrot.lane.b32.xlu0 %v4877, 127
      %v5385 = vpop.permute.xlu0 %5384
      %v5386 = vsel %vm505, %v5363, %v5365
      %v5387 = vsel %vm505, %v5365, %v5367
      %v5388 = vsel %vm505, %v5369, %v5371
      %v5389 = vsel %vm505, %v5371, %v5373
      %v5390 = vsel %vm505, %v5375, %v5377
      %v5391 = vsel %vm505, %v5377, %v5379
      %v5392 = vsel %vm505, %v5381, %v5383
      %v5393 = vsel %vm505, %v5383, %v5385
      %v5406 = vmul.f32 %v5350, %v5386
      %v5407 = vmul.f32 %v5351, %v5387
      %v5408 = vmul.f32 %v5352, %v5367
      %v5409 = vmul.f32 %v5353, %v5388
      %v5410 = vmul.f32 %v5354, %v5389
      %v5411 = vmul.f32 %v5355, %v5373
      %v5412 = vmul.f32 %v5356, %v5390
      %v5413 = vmul.f32 %v5357, %v5391
      %v5414 = vmul.f32 %v5358, %v5379
      %v5415 = vmul.f32 %v5359, %v5392
      %v5416 = vmul.f32 %v5360, %v5393
      %v5417 = vmul.f32 %v5361, %v5385
      %v5418 = vadd.f32 %v5322, %v5406
      %v5419 = vadd.f32 %v5323, %v5407
      %v5420 = vadd.f32 %v5324, %v5408
      %v5421 = vadd.f32 %v5325, %v5409
      %v5422 = vadd.f32 %v5326, %v5410
      %v5423 = vadd.f32 %v5327, %v5411
      %v5424 = vadd.f32 %v5328, %v5412
      %v5425 = vadd.f32 %v5329, %v5413
      %v5426 = vadd.f32 %v5330, %v5414
      %v5427 = vadd.f32 %v5331, %v5415
      %v5428 = vadd.f32 %v5332, %v5416
      %v5429 = vadd.f32 %v5333, %v5417
      %5430 = vset.pattern.permute.xlu0 6
      %5431 = vperm.xlu0 %5430, %v4814
      %v5432 = vpop.permute.xlu0 %5431
      %5434 = vset.pattern.permute.xlu0 6
      %5435 = vperm.xlu0 %5434, %v4815
      %v5436 = vpop.permute.xlu0 %5435
      %5438 = vset.pattern.permute.xlu0 6
      %5439 = vperm.xlu0 %5438, %v4816
      %v5440 = vpop.permute.xlu0 %5439
      %5442 = vset.pattern.permute.xlu0 6
      %5443 = vperm.xlu0 %5442, %v4817
      %v5444 = vpop.permute.xlu0 %5443
      %v5446 = vmul.f32 %v5432, %v317
      %v5447 = vmul.f32 %v5432, %v321
      %v5448 = vmul.f32 %v5432, %v325
      %v5449 = vmul.f32 %v5436, %v317
      %v5450 = vmul.f32 %v5436, %v321
      %v5451 = vmul.f32 %v5436, %v325
      %v5452 = vmul.f32 %v5440, %v317
      %v5453 = vmul.f32 %v5440, %v321
      %v5454 = vmul.f32 %v5440, %v325
      %v5455 = vmul.f32 %v5444, %v317
      %v5456 = vmul.f32 %v5444, %v321
      %v5457 = vmul.f32 %v5444, %v325
      %5458 = vrot.lane.b32.xlu0 %v4863, 113
      %v5459 = vpop.permute.xlu0 %5458
      %5460 = vrot.lane.b32.xlu0 %v4864, 113
      %v5461 = vpop.permute.xlu0 %5460
      %5462 = vrot.lane.b32.xlu0 %v4865, 113
      %v5463 = vpop.permute.xlu0 %5462
      %5464 = vrot.lane.b32.xlu0 %v4867, 113
      %v5465 = vpop.permute.xlu0 %5464
      %5466 = vrot.lane.b32.xlu0 %v4868, 113
      %v5467 = vpop.permute.xlu0 %5466
      %5468 = vrot.lane.b32.xlu0 %v4869, 113
      %v5469 = vpop.permute.xlu0 %5468
      %5470 = vrot.lane.b32.xlu0 %v4871, 113
      %v5471 = vpop.permute.xlu0 %5470
      %5472 = vrot.lane.b32.xlu0 %v4872, 113
      %v5473 = vpop.permute.xlu0 %5472
      %5474 = vrot.lane.b32.xlu0 %v4873, 113
      %v5475 = vpop.permute.xlu0 %5474
      %5476 = vrot.lane.b32.xlu0 %v4875, 113
      %v5477 = vpop.permute.xlu0 %5476
      %5478 = vrot.lane.b32.xlu0 %v4876, 113
      %v5479 = vpop.permute.xlu0 %5478
      %5480 = vrot.lane.b32.xlu0 %v4877, 113
      %v5481 = vpop.permute.xlu0 %5480
      %v5482 = vsel %vm530, %v5459, %v5461
      %v5483 = vsel %vm530, %v5461, %v5463
      %v5484 = vsel %vm530, %v5465, %v5467
      %v5485 = vsel %vm530, %v5467, %v5469
      %v5486 = vsel %vm530, %v5471, %v5473
      %v5487 = vsel %vm530, %v5473, %v5475
      %v5488 = vsel %vm530, %v5477, %v5479
      %v5489 = vsel %vm530, %v5479, %v5481
      %v5502 = vmul.f32 %v5446, %v5482
      %v5503 = vmul.f32 %v5447, %v5483
      %v5504 = vmul.f32 %v5448, %v5463
      %v5505 = vmul.f32 %v5449, %v5484
      %v5506 = vmul.f32 %v5450, %v5485
      %v5507 = vmul.f32 %v5451, %v5469
      %v5508 = vmul.f32 %v5452, %v5486
      %v5509 = vmul.f32 %v5453, %v5487
      %v5510 = vmul.f32 %v5454, %v5475
      %v5511 = vmul.f32 %v5455, %v5488
      %v5512 = vmul.f32 %v5456, %v5489
      %v5513 = vmul.f32 %v5457, %v5481
      %v5514 = vadd.f32 %v5418, %v5502
      %v5515 = vadd.f32 %v5419, %v5503
      %v5516 = vadd.f32 %v5420, %v5504
      %v5517 = vadd.f32 %v5421, %v5505
      %v5518 = vadd.f32 %v5422, %v5506
      %v5519 = vadd.f32 %v5423, %v5507
      %v5520 = vadd.f32 %v5424, %v5508
      %v5521 = vadd.f32 %v5425, %v5509
      %v5522 = vadd.f32 %v5426, %v5510
      %v5523 = vadd.f32 %v5427, %v5511
      %v5524 = vadd.f32 %v5428, %v5512
      %v5525 = vadd.f32 %v5429, %v5513
      %5526 = vset.pattern.permute.xlu0 7
      %5527 = vperm.xlu0 %5526, %v4814
      %v5528 = vpop.permute.xlu0 %5527
      %5530 = vset.pattern.permute.xlu0 7
      %5531 = vperm.xlu0 %5530, %v4815
      %v5532 = vpop.permute.xlu0 %5531
      %5534 = vset.pattern.permute.xlu0 7
      %5535 = vperm.xlu0 %5534, %v4816
      %v5536 = vpop.permute.xlu0 %5535
      %5538 = vset.pattern.permute.xlu0 7
      %5539 = vperm.xlu0 %5538, %v4817
      %v5540 = vpop.permute.xlu0 %5539
      %v5542 = vmul.f32 %v5528, %v4863
      %v5543 = vmul.f32 %v5528, %v4864
      %v5544 = vmul.f32 %v5528, %v4865
      %v5545 = vmul.f32 %v5532, %v4867
      %v5546 = vmul.f32 %v5532, %v4868
      %v5547 = vmul.f32 %v5532, %v4869
      %v5548 = vmul.f32 %v5536, %v4871
      %v5549 = vmul.f32 %v5536, %v4872
      %v5550 = vmul.f32 %v5536, %v4873
      %v5551 = vmul.f32 %v5540, %v4875
      %v5552 = vmul.f32 %v5540, %v4876
      %v5553 = vmul.f32 %v5540, %v4877
      %5566 = vrot.lane.b32.xlu0 %v5542, 112
      %v5567 = vpop.permute.xlu0 %5566
      %5568 = vrot.lane.b32.xlu0 %v5543, 112
      %v5569 = vpop.permute.xlu0 %5568
      %5570 = vrot.lane.b32.xlu0 %v5544, 112
      %v5571 = vpop.permute.xlu0 %5570
      %5572 = vrot.lane.b32.xlu0 %v5545, 112
      %v5573 = vpop.permute.xlu0 %5572
      %5574 = vrot.lane.b32.xlu0 %v5546, 112
      %v5575 = vpop.permute.xlu0 %5574
      %5576 = vrot.lane.b32.xlu0 %v5547, 112
      %v5577 = vpop.permute.xlu0 %5576
      %5578 = vrot.lane.b32.xlu0 %v5548, 112
      %v5579 = vpop.permute.xlu0 %5578
      %5580 = vrot.lane.b32.xlu0 %v5549, 112
      %v5581 = vpop.permute.xlu0 %5580
      %5582 = vrot.lane.b32.xlu0 %v5550, 112
      %v5583 = vpop.permute.xlu0 %5582
      %5584 = vrot.lane.b32.xlu0 %v5551, 112
      %v5585 = vpop.permute.xlu0 %5584
      %5586 = vrot.lane.b32.xlu0 %v5552, 112
      %v5587 = vpop.permute.xlu0 %5586
      %5588 = vrot.lane.b32.xlu0 %v5553, 112
      %v5589 = vpop.permute.xlu0 %5588
      %v5590 = vsel %vm552, %v5567, %v5569
      %v5591 = vsel %vm552, %v5569, %v5571
      %v5592 = vsel %vm552, %v5573, %v5575
      %v5593 = vsel %vm552, %v5575, %v5577
      %v5594 = vsel %vm552, %v5579, %v5581
      %v5595 = vsel %vm552, %v5581, %v5583
      %v5596 = vsel %vm552, %v5585, %v5587
      %v5597 = vsel %vm552, %v5587, %v5589
      %v5610 = vadd.f32 %v5514, %v5590
      %v5611 = vadd.f32 %v5515, %v5591
      %v5612 = vadd.f32 %v5516, %v5571
      %v5613 = vadd.f32 %v5517, %v5592
      %v5614 = vadd.f32 %v5518, %v5593
      %v5615 = vadd.f32 %v5519, %v5577
      %v5616 = vadd.f32 %v5520, %v5594
      %v5617 = vadd.f32 %v5521, %v5595
      %v5618 = vadd.f32 %v5522, %v5583
      %v5619 = vadd.f32 %v5523, %v5596
      %v5620 = vadd.f32 %v5524, %v5597
      %v5621 = vadd.f32 %v5525, %v5589
      %5622 = vset.pattern.permute.xlu0 8
      %5623 = vperm.xlu0 %5622, %v4814
      %v5624 = vpop.permute.xlu0 %5623
      %5626 = vset.pattern.permute.xlu0 8
      %5627 = vperm.xlu0 %5626, %v4815
      %v5628 = vpop.permute.xlu0 %5627
      %5630 = vset.pattern.permute.xlu0 8
      %5631 = vperm.xlu0 %5630, %v4816
      %v5632 = vpop.permute.xlu0 %5631
      %5634 = vset.pattern.permute.xlu0 8
      %5635 = vperm.xlu0 %5634, %v4817
      %v5636 = vpop.permute.xlu0 %5635
      %v5638 = vmul.f32 %v5624, %v401
      %v5639 = vmul.f32 %v5624, %v405
      %v5640 = vmul.f32 %v5624, %v409
      %v5641 = vmul.f32 %v5628, %v401
      %v5642 = vmul.f32 %v5628, %v405
      %v5643 = vmul.f32 %v5628, %v409
      %v5644 = vmul.f32 %v5632, %v401
      %v5645 = vmul.f32 %v5632, %v405
      %v5646 = vmul.f32 %v5632, %v409
      %v5647 = vmul.f32 %v5636, %v401
      %v5648 = vmul.f32 %v5636, %v405
      %v5649 = vmul.f32 %v5636, %v409
      %5650 = vrot.lane.b32.xlu0 %v4863, 111
      %v5651 = vpop.permute.xlu0 %5650
      %5652 = vrot.lane.b32.xlu0 %v4864, 111
      %v5653 = vpop.permute.xlu0 %5652
      %5654 = vrot.lane.b32.xlu0 %v4865, 111
      %v5655 = vpop.permute.xlu0 %5654
      %5656 = vrot.lane.b32.xlu0 %v4867, 111
      %v5657 = vpop.permute.xlu0 %5656
      %5658 = vrot.lane.b32.xlu0 %v4868, 111
      %v5659 = vpop.permute.xlu0 %5658
      %5660 = vrot.lane.b32.xlu0 %v4869, 111
      %v5661 = vpop.permute.xlu0 %5660
      %5662 = vrot.lane.b32.xlu0 %v4871, 111
      %v5663 = vpop.permute.xlu0 %5662
      %5664 = vrot.lane.b32.xlu0 %v4872, 111
      %v5665 = vpop.permute.xlu0 %5664
      %5666 = vrot.lane.b32.xlu0 %v4873, 111
      %v5667 = vpop.permute.xlu0 %5666
      %5668 = vrot.lane.b32.xlu0 %v4875, 111
      %v5669 = vpop.permute.xlu0 %5668
      %5670 = vrot.lane.b32.xlu0 %v4876, 111
      %v5671 = vpop.permute.xlu0 %5670
      %5672 = vrot.lane.b32.xlu0 %v4877, 111
      %v5673 = vpop.permute.xlu0 %5672
      %v5674 = vsel %vm577, %v5651, %v5653
      %v5675 = vsel %vm577, %v5653, %v5655
      %v5676 = vsel %vm577, %v5657, %v5659
      %v5677 = vsel %vm577, %v5659, %v5661
      %v5678 = vsel %vm577, %v5663, %v5665
      %v5679 = vsel %vm577, %v5665, %v5667
      %v5680 = vsel %vm577, %v5669, %v5671
      %v5681 = vsel %vm577, %v5671, %v5673
      %v5694 = vmul.f32 %v5638, %v5674
      %v5695 = vmul.f32 %v5639, %v5675
      %v5696 = vmul.f32 %v5640, %v5655
      %v5697 = vmul.f32 %v5641, %v5676
      %v5698 = vmul.f32 %v5642, %v5677
      %v5699 = vmul.f32 %v5643, %v5661
      %v5700 = vmul.f32 %v5644, %v5678
      %v5701 = vmul.f32 %v5645, %v5679
      %v5702 = vmul.f32 %v5646, %v5667
      %v5703 = vmul.f32 %v5647, %v5680
      %v5704 = vmul.f32 %v5648, %v5681
      %v5705 = vmul.f32 %v5649, %v5673
      %v5706 = vadd.f32 %v5610, %v5694
      %v5707 = vadd.f32 %v5611, %v5695
      %v5708 = vadd.f32 %v5612, %v5696
      %v5709 = vadd.f32 %v5613, %v5697
      %v5710 = vadd.f32 %v5614, %v5698
      %v5711 = vadd.f32 %v5615, %v5699
      %v5712 = vadd.f32 %v5616, %v5700
      %v5713 = vadd.f32 %v5617, %v5701
      %v5714 = vadd.f32 %v5618, %v5702
      %v5715 = vadd.f32 %v5619, %v5703
      %v5716 = vadd.f32 %v5620, %v5704
      %v5717 = vadd.f32 %v5621, %v5705
      %v5718 = vld [vmem:[%s1 + $0x150] sm:$0xff]
      %v5719 = vld [vmem:[%s1 + $0x158] sm:$0xff]
      %v5720 = vld [vmem:[%s1 + $0x160] sm:$0xff]
      %v5721 = vld [vmem:[%s1 + $0x168] sm:$0xff]
      %v5722 = vld [vmem:[%s1 + $0x170] sm:$0xff]
      %v5723 = vld [vmem:[%s1 + $0x178] sm:$0xff]
      %v5724 = vld [vmem:[%s1 + $0x180] sm:$0xff]
      %v5725 = vld [vmem:[%s1 + $0x188] sm:$0xff]
      %5727 = vset.pattern.permute.xlu0 0
      %5728 = vperm.xlu0 %5727, %v5722
      %v5729 = vpop.permute.xlu0 %5728
      %5732 = vset.pattern.permute.xlu0 0
      %5733 = vperm.xlu0 %5732, %v5723
      %v5734 = vpop.permute.xlu0 %5733
      %5737 = vset.pattern.permute.xlu0 0
      %5738 = vperm.xlu0 %5737, %v5724
      %v5739 = vpop.permute.xlu0 %5738
      %5742 = vset.pattern.permute.xlu0 0
      %5743 = vperm.xlu0 %5742, %v5725
      %v5744 = vpop.permute.xlu0 %5743
      %vm5746 = vcmask 261120
      %v5748 = vsel %vm5746, %v5718, 0
      %v5751 = vsel %vm5746, %v5719, 0
      %v5754 = vsel %vm5746, %v5720, 0
      %v5757 = vsel %vm5746, %v5721, 0
      %5759 = vmatprep.subr.mxu0 %v5707
      %5760 = vmatpush1.msra.mxu0 %v5706
      %5761 = vmatprep.subr.mxu0 %v5710
      %5762 = vmatpush1.msra.mxu0 %v5709
      %5763 = vmatprep.subr.mxu0 %v5713
      %5764 = vmatpush1.msra.mxu0 %v5712
      %5765 = vmatprep.subr.mxu0 %v5716
      %5766 = vmatpush1.msra.mxu0 %v5715
      %5767 = vmatprep.subr.mxu0 0.0
      %5768 = vmatpush1.msra.mxu0 0.0
      %5769 = vmatprep.subr.mxu0 0.0
      %5770 = vmatpush1.msra.mxu0 0.0
      %5771 = vmatprep.subr.mxu0 0.0
      %5772 = vmatpush1.msra.mxu0 0.0
      %5773 = vmatprep.subr.mxu0 0.0
      %5774 = vmatpush1.msra.mxu0 0.0
      %5775 = vmatprep.subr.mxu0 0.0
      %5776 = vmatpush1.msra.mxu0 0.0
      %5777 = vmatprep.subr.mxu0 0.0
      %5778 = vmatpush1.msra.mxu0 0.0
      %5779 = vmatprep.subr.mxu0 0.0
      %5780 = vmatpush1.msra.mxu0 0.0
      %5781 = vmatprep.subr.mxu0 0.0
      %5782 = vmatpush1.msra.mxu0 0.0
      %5783 = vmatprep.subr.mxu0 0.0
      %5784 = vmatpush1.msra.mxu0 0.0
      %5785 = vmatprep.subr.mxu0 0.0
      %5786 = vmatpush1.msra.mxu0 0.0
      %5787 = vmatprep.subr.mxu0 0.0
      %5788 = vmatpush1.msra.mxu0 0.0
      %5789 = vmatprep.subr.mxu0 0.0
      %5790 = vmatpush1.msra.mxu0 0.0
      %5791 = vmatprep.subr.mxu0 0.0
      %5792 = vmatpush1.msra.mxu0 0.0
      %5793 = vmatprep.subr.mxu0 0.0
      %5794 = vmatpush1.msra.mxu0 0.0
      %5795 = vmatprep.subr.mxu0 0.0
      %5796 = vmatpush1.msra.mxu0 0.0
      %5797 = vmatprep.subr.mxu0 0.0
      %5798 = vmatpush1.msra.mxu0 0.0
      %5799 = vmatprep.subr.mxu0 0.0
      %5800 = vmatpush1.msra.mxu0 0.0
      %5801 = vmatprep.subr.mxu0 0.0
      %5802 = vmatpush1.msra.mxu0 0.0
      %5803 = vmatprep.subr.mxu0 0.0
      %5804 = vmatpush1.msra.mxu0 0.0
      %5805 = vmatprep.subr.mxu0 0.0
      %5806 = vmatpush1.msra.mxu0 0.0
      %5807 = vmatprep.subr.mxu0 0.0
      %5808 = vmatpush1.msra.mxu0 0.0
      %5809 = vmatprep.subr.mxu0 0.0
      %5810 = vmatpush1.msra.mxu0 0.0
      %5811 = vmatprep.subr.mxu0 0.0
      %5812 = vmatpush1.msra.mxu0 0.0
      %5813 = vmatprep.subr.mxu0 0.0
      %5814 = vmatpush1.msra.mxu0 0.0
      %5815 = vmatprep.subr.mxu0 0.0
      %5816 = vmatpush1.msra.mxu0 0.0
      %5817 = vmatprep.subr.mxu0 0.0
      %5818 = vmatpush1.msra.mxu0 0.0
      %5819 = vmatprep.subr.mxu0 0.0
      %5820 = vmatpush1.msra.mxu0 0.0
      %5821 = vmatprep.subr.mxu0 0.0
      %5822 = vmatpush1.msra.mxu0 0.0
      %5823 = vmatprep.mubr.f32.mxu0 0.0
      %5824 = vmatmul.mubr.f32.gmra.mrb[0].mxu0 %v5748
      %v5825 = vpop.f32.mrb[0].mxu0
      %v5826 = vadd.f32 %v5729, %v5825
      %v5827 = vpop.f32.mrb[0].mxu0
      %v5828 = vadd.f32 %v5729, %v5827
      %5829 = vmatprep.mubr.f32.mxu0 0.0
      %5830 = vmatmul.mubr.f32.gmra.mrb[0].mxu0 %v5751
      %v5831 = vpop.f32.mrb[0].mxu0
      %v5832 = vadd.f32 %v5734, %v5831
      %v5833 = vpop.f32.mrb[0].mxu0
      %v5834 = vadd.f32 %v5734, %v5833
      %5835 = vmatprep.mubr.f32.mxu0 0.0
      %5836 = vmatmul.mubr.f32.gmra.mrb[0].mxu0 %v5754
      %v5837 = vpop.f32.mrb[0].mxu0
      %v5838 = vadd.f32 %v5739, %v5837
      %v5839 = vpop.f32.mrb[0].mxu0
      %v5840 = vadd.f32 %v5739, %v5839
      %5841 = vmatprep.mubr.f32.mxu0 0.0
      %5842 = vmatmul.mubr.f32.gmra.mrb[0].mxu0 %v5757
      %v5843 = vpop.f32.mrb[0].mxu0
      %v5844 = vadd.f32 %v5744, %v5843
      %v5845 = vpop.f32.mrb[0].mxu0
      %v5846 = vadd.f32 %v5744, %v5845
      %5847 = vdwg.mxu0
      %5848 = vmatprep.subr.mxu0 0.0
      %5849 = vmatpush1.msra.mxu0 %v5708
      %5850 = vmatprep.subr.mxu0 0.0
      %5851 = vmatpush1.msra.mxu0 %v5711
      %5852 = vmatprep.subr.mxu0 0.0
      %5853 = vmatpush1.msra.mxu0 %v5714
      %5854 = vmatprep.subr.mxu0 0.0
      %5855 = vmatpush1.msra.mxu0 %v5717
      %5856 = vmatprep.subr.mxu0 0.0
      %5857 = vmatpush1.msra.mxu0 0.0
      %5858 = vmatprep.subr.mxu0 0.0
      %5859 = vmatpush1.msra.mxu0 0.0
      %5860 = vmatprep.subr.mxu0 0.0
      %5861 = vmatpush1.msra.mxu0 0.0
      %5862 = vmatprep.subr.mxu0 0.0
      %5863 = vmatpush1.msra.mxu0 0.0
      %5864 = vmatprep.subr.mxu0 0.0
      %5865 = vmatpush1.msra.mxu0 0.0
      %5866 = vmatprep.subr.mxu0 0.0
      %5867 = vmatpush1.msra.mxu0 0.0
      %5868 = vmatprep.subr.mxu0 0.0
      %5869 = vmatpush1.msra.mxu0 0.0
      %5870 = vmatprep.subr.mxu0 0.0
      %5871 = vmatpush1.msra.mxu0 0.0
      %5872 = vmatprep.subr.mxu0 0.0
      %5873 = vmatpush1.msra.mxu0 0.0
      %5874 = vmatprep.subr.mxu0 0.0
      %5875 = vmatpush1.msra.mxu0 0.0
      %5876 = vmatprep.subr.mxu0 0.0
      %5877 = vmatpush1.msra.mxu0 0.0
      %5878 = vmatprep.subr.mxu0 0.0
      %5879 = vmatpush1.msra.mxu0 0.0
      %5880 = vmatprep.subr.mxu0 0.0
      %5881 = vmatpush1.msra.mxu0 0.0
      %5882 = vmatprep.subr.mxu0 0.0
      %5883 = vmatpush1.msra.mxu0 0.0
      %5884 = vmatprep.subr.mxu0 0.0
      %5885 = vmatpush1.msra.mxu0 0.0
      %5886 = vmatprep.subr.mxu0 0.0
      %5887 = vmatpush1.msra.mxu0 0.0
      %5888 = vmatprep.subr.mxu0 0.0
      %5889 = vmatpush1.msra.mxu0 0.0
      %5890 = vmatprep.subr.mxu0 0.0
      %5891 = vmatpush1.msra.mxu0 0.0
      %5892 = vmatprep.subr.mxu0 0.0
      %5893 = vmatpush1.msra.mxu0 0.0
      %5894 = vmatprep.subr.mxu0 0.0
      %5895 = vmatpush1.msra.mxu0 0.0
      %5896 = vmatprep.subr.mxu0 0.0
      %5897 = vmatpush1.msra.mxu0 0.0
      %5898 = vmatprep.subr.mxu0 0.0
      %5899 = vmatpush1.msra.mxu0 0.0
      %5900 = vmatprep.subr.mxu0 0.0
      %5901 = vmatpush1.msra.mxu0 0.0
      %5902 = vmatprep.subr.mxu0 0.0
      %5903 = vmatpush1.msra.mxu0 0.0
      %5904 = vmatprep.subr.mxu0 0.0
      %5905 = vmatpush1.msra.mxu0 0.0
      %5906 = vmatprep.subr.mxu0 0.0
      %5907 = vmatpush1.msra.mxu0 0.0
      %5908 = vmatprep.subr.mxu0 0.0
      %5909 = vmatpush1.msra.mxu0 0.0
      %5910 = vmatprep.subr.mxu0 0.0
      %5911 = vmatpush1.msra.mxu0 0.0
      %5912 = vmatprep.mubr.f32.mxu0 0.0
      %5913 = vmatmul.mubr.f32.gmra.mrb[0].mxu0 %v5748
      %v5914 = vpop.f32.mrb[0].mxu0
      %v5915 = vadd.f32 %v5729, %v5914
      %v5916 = vpop.f32.mrb[0].mxu0
      %5917 = vmatprep.mubr.f32.mxu0 0.0
      %5918 = vmatmul.mubr.f32.gmra.mrb[0].mxu0 %v5751
      %v5919 = vpop.f32.mrb[0].mxu0
      %v5920 = vadd.f32 %v5734, %v5919
      %v5921 = vpop.f32.mrb[0].mxu0
      %5922 = vmatprep.mubr.f32.mxu0 0.0
      %5923 = vmatmul.mubr.f32.gmra.mrb[0].mxu0 %v5754
      %v5924 = vpop.f32.mrb[0].mxu0
      %v5925 = vadd.f32 %v5739, %v5924
      %v5926 = vpop.f32.mrb[0].mxu0
      %5927 = vmatprep.mubr.f32.mxu0 0.0
      %5928 = vmatmul.mubr.f32.gmra.mrb[0].mxu0 %v5757
      %v5929 = vpop.f32.mrb[0].mxu0
      %v5930 = vadd.f32 %v5744, %v5929
      %v5931 = vpop.f32.mrb[0].mxu0
      %5932 = vdwg.mxu0
      %v5933 = vmul.f32 %v5826, 0.2
      %v5934 = vmul.f32 %v5828, 0.2
      %v5935 = vmul.f32 %v5915, 0.2
      %v5936 = vmul.f32 %v5832, 0.2
      %v5937 = vmul.f32 %v5834, 0.2
      %v5938 = vmul.f32 %v5920, 0.2
      %v5939 = vmul.f32 %v5838, 0.2
      %v5940 = vmul.f32 %v5840, 0.2
      %v5941 = vmul.f32 %v5925, 0.2
      %v5942 = vmul.f32 %v5844, 0.2
      %v5943 = vmul.f32 %v5846, 0.2
      %v5944 = vmul.f32 %v5930, 0.2
      %v5945 = vmax.f32 %v5826, %v5933
      %v5946 = vmax.f32 %v5828, %v5934
      %v5947 = vmax.f32 %v5915, %v5935
      %v5948 = vmax.f32 %v5832, %v5936
      %v5949 = vmax.f32 %v5834, %v5937
      %v5950 = vmax.f32 %v5920, %v5938
      %v5951 = vmax.f32 %v5838, %v5939
      %v5952 = vmax.f32 %v5840, %v5940
      %v5953 = vmax.f32 %v5925, %v5941
      %v5954 = vmax.f32 %v5844, %v5942
      %v5955 = vmax.f32 %v5846, %v5943
      %v5956 = vmax.f32 %v5930, %v5944
      %v5957 = vld [vmem:[%s1 + $0x190] sm:$0xff]
      %v5958 = vld [vmem:[%s1 + $0x198] sm:$0xff]
      %v5959 = vld [vmem:[%s1 + $0x1a0] sm:$0xff]
      %v5960 = vld [vmem:[%s1 + $0x1a8] sm:$0xff]
      %v5961 = vld [vmem:[%s1 + $0x1b0] sm:$0xff]
      %v5962 = vld [vmem:[%s1 + $0x1b8] sm:$0xff]
      %v5963 = vld [vmem:[%s1 + $0x1c0] sm:$0xff]
      %v5964 = vld [vmem:[%s1 + $0x1c8] sm:$0xff]
      %5966 = vset.pattern.permute.xlu0 0
      %5967 = vperm.xlu0 %5966, %v5961
      %v5968 = vpop.permute.xlu0 %5967
      %5971 = vset.pattern.permute.xlu0 0
      %5972 = vperm.xlu0 %5971, %v5962
      %v5973 = vpop.permute.xlu0 %5972
      %5976 = vset.pattern.permute.xlu0 0
      %5977 = vperm.xlu0 %5976, %v5963
      %v5978 = vpop.permute.xlu0 %5977
      %5981 = vset.pattern.permute.xlu0 0
      %5982 = vperm.xlu0 %5981, %v5964
      %v5983 = vpop.permute.xlu0 %5982
      %v5986 = vsel %vm380, %v5957, 0
      %v5989 = vsel %vm380, %v5958, 0
      %v5992 = vsel %vm380, %v5959, 0
      %v5995 = vsel %vm380, %v5960, 0
      %5997 = vmatprep.subr.mxu0 %v4119
      %5998 = vmatpush1.msra.mxu0 %v4118
      %5999 = vmatprep.subr.mxu0 %v4122
      %6000 = vmatpush1.msra.mxu0 %v4121
      %6001 = vmatprep.subr.mxu0 0.0
      %6002 = vmatpush1.msra.mxu0 0.0
      %6003 = vmatprep.subr.mxu0 0.0
      %6004 = vmatpush1.msra.mxu0 0.0
      %6005 = vmatprep.subr.mxu0 0.0
      %6006 = vmatpush1.msra.mxu0 0.0
      %6007 = vmatprep.subr.mxu0 0.0
      %6008 = vmatpush1.msra.mxu0 0.0
      %6009 = vmatprep.subr.mxu0 0.0
      %6010 = vmatpush1.msra.mxu0 0.0
      %6011 = vmatprep.subr.mxu0 0.0
      %6012 = vmatpush1.msra.mxu0 0.0
      %6013 = vmatprep.subr.mxu0 0.0
      %6014 = vmatpush1.msra.mxu0 0.0
      %6015 = vmatprep.subr.mxu0 0.0
      %6016 = vmatpush1.msra.mxu0 0.0
      %6017 = vmatprep.subr.mxu0 0.0
      %6018 = vmatpush1.msra.mxu0 0.0
      %6019 = vmatprep.subr.mxu0 0.0
      %6020 = vmatpush1.msra.mxu0 0.0
      %6021 = vmatprep.subr.mxu0 0.0
      %6022 = vmatpush1.msra.mxu0 0.0
      %6023 = vmatprep.subr.mxu0 0.0
      %6024 = vmatpush1.msra.mxu0 0.0
      %6025 = vmatprep.subr.mxu0 0.0
      %6026 = vmatpush1.msra.mxu0 0.0
      %6027 = vmatprep.subr.mxu0 0.0
      %6028 = vmatpush1.msra.mxu0 0.0
      %6029 = vmatprep.subr.mxu0 0.0
      %6030 = vmatpush1.msra.mxu0 0.0
      %6031 = vmatprep.subr.mxu0 0.0
      %6032 = vmatpush1.msra.mxu0 0.0
      %6033 = vmatprep.subr.mxu0 0.0
      %6034 = vmatpush1.msra.mxu0 0.0
      %6035 = vmatprep.subr.mxu0 0.0
      %6036 = vmatpush1.msra.mxu0 0.0
      %6037 = vmatprep.subr.mxu0 0.0
      %6038 = vmatpush1.msra.mxu0 0.0
      %6039 = vmatprep.subr.mxu0 0.0
      %6040 = vmatpush1.msra.mxu0 0.0
      %6041 = vmatprep.subr.mxu0 0.0
      %6042 = vmatpush1.msra.mxu0 0.0
      %6043 = vmatprep.subr.mxu0 0.0
      %6044 = vmatpush1.msra.mxu0 0.0
      %6045 = vmatprep.subr.mxu0 0.0
      %6046 = vmatpush1.msra.mxu0 0.0
      %6047 = vmatprep.subr.mxu0 0.0
      %6048 = vmatpush1.msra.mxu0 0.0
      %6049 = vmatprep.subr.mxu0 0.0
      %6050 = vmatpush1.msra.mxu0 0.0
      %6051 = vmatprep.subr.mxu0 0.0
      %6052 = vmatpush1.msra.mxu0 0.0
      %6053 = vmatprep.subr.mxu0 0.0
      %6054 = vmatpush1.msra.mxu0 0.0
      %6055 = vmatprep.subr.mxu0 0.0
      %6056 = vmatpush1.msra.mxu0 0.0
      %6057 = vmatprep.subr.mxu0 0.0
      %6058 = vmatpush1.msra.mxu0 0.0
      %6059 = vmatprep.subr.mxu0 0.0
      %6060 = vmatpush1.msra.mxu0 0.0
      %6061 = vmatprep.mubr.f32.mxu0 0.0
      %6062 = vmatmul.mubr.f32.gmra.mrb[0].mxu0 %v5986
      %v6063 = vpop.f32.mrb[0].mxu0
      %v6064 = vadd.f32 %v5968, %v6063
      %v6065 = vpop.f32.mrb[0].mxu0
      %v6066 = vadd.f32 %v5968, %v6065
      %6067 = vmatprep.mubr.f32.mxu0 0.0
      %6068 = vmatmul.mubr.f32.gmra.mrb[0].mxu0 %v5989
      %v6069 = vpop.f32.mrb[0].mxu0
      %v6070 = vadd.f32 %v5973, %v6069
      %v6071 = vpop.f32.mrb[0].mxu0
      %v6072 = vadd.f32 %v5973, %v6071
      %6073 = vmatprep.mubr.f32.mxu0 0.0
      %6074 = vmatmul.mubr.f32.gmra.mrb[0].mxu0 %v5992
      %v6075 = vpop.f32.mrb[0].mxu0
      %v6076 = vadd.f32 %v5978, %v6075
      %v6077 = vpop.f32.mrb[0].mxu0
      %v6078 = vadd.f32 %v5978, %v6077
      %6079 = vmatprep.mubr.f32.mxu0 0.0
      %6080 = vmatmul.mubr.f32.gmra.mrb[0].mxu0 %v5995
      %v6081 = vpop.f32.mrb[0].mxu0
      %v6082 = vadd.f32 %v5983, %v6081
      %v6083 = vpop.f32.mrb[0].mxu0
      %v6084 = vadd.f32 %v5983, %v6083
      %6085 = vdwg.mxu0
      %6086 = vmatprep.subr.mxu0 0.0
      %6087 = vmatpush1.msra.mxu0 %v4120
      %6088 = vmatprep.subr.mxu0 0.0
      %6089 = vmatpush1.msra.mxu0 %v4123
      %6090 = vmatprep.subr.mxu0 0.0
      %6091 = vmatpush1.msra.mxu0 0.0
      %6092 = vmatprep.subr.mxu0 0.0
      %6093 = vmatpush1.msra.mxu0 0.0
      %6094 = vmatprep.subr.mxu0 0.0
      %6095 = vmatpush1.msra.mxu0 0.0
      %6096 = vmatprep.subr.mxu0 0.0
      %6097 = vmatpush1.msra.mxu0 0.0
      %6098 = vmatprep.subr.mxu0 0.0
      %6099 = vmatpush1.msra.mxu0 0.0
      %6100 = vmatprep.subr.mxu0 0.0
      %6101 = vmatpush1.msra.mxu0 0.0
      %6102 = vmatprep.subr.mxu0 0.0
      %6103 = vmatpush1.msra.mxu0 0.0
      %6104 = vmatprep.subr.mxu0 0.0
      %6105 = vmatpush1.msra.mxu0 0.0
      %6106 = vmatprep.subr.mxu0 0.0
      %6107 = vmatpush1.msra.mxu0 0.0
      %6108 = vmatprep.subr.mxu0 0.0
      %6109 = vmatpush1.msra.mxu0 0.0
      %6110 = vmatprep.subr.mxu0 0.0
      %6111 = vmatpush1.msra.mxu0 0.0
      %6112 = vmatprep.subr.mxu0 0.0
      %6113 = vmatpush1.msra.mxu0 0.0
      %6114 = vmatprep.subr.mxu0 0.0
      %6115 = vmatpush1.msra.mxu0 0.0
      %6116 = vmatprep.subr.mxu0 0.0
      %6117 = vmatpush1.msra.mxu0 0.0
      %6118 = vmatprep.subr.mxu0 0.0
      %6119 = vmatpush1.msra.mxu0 0.0
      %6120 = vmatprep.subr.mxu0 0.0
      %6121 = vmatpush1.msra.mxu0 0.0
      %6122 = vmatprep.subr.mxu0 0.0
      %6123 = vmatpush1.msra.mxu0 0.0
      %6124 = vmatprep.subr.mxu0 0.0
      %6125 = vmatpush1.msra.mxu0 0.0
      %6126 = vmatprep.subr.mxu0 0.0
      %6127 = vmatpush1.msra.mxu0 0.0
      %6128 = vmatprep.subr.mxu0 0.0
      %6129 = vmatpush1.msra.mxu0 0.0
      %6130 = vmatprep.subr.mxu0 0.0
      %6131 = vmatpush1.msra.mxu0 0.0
      %6132 = vmatprep.subr.mxu0 0.0
      %6133 = vmatpush1.msra.mxu0 0.0
      %6134 = vmatprep.subr.mxu0 0.0
      %6135 = vmatpush1.msra.mxu0 0.0
      %6136 = vmatprep.subr.mxu0 0.0
      %6137 = vmatpush1.msra.mxu0 0.0
      %6138 = vmatprep.subr.mxu0 0.0
      %6139 = vmatpush1.msra.mxu0 0.0
      %6140 = vmatprep.subr.mxu0 0.0
      %6141 = vmatpush1.msra.mxu0 0.0
      %6142 = vmatprep.subr.mxu0 0.0
      %6143 = vmatpush1.msra.mxu0 0.0
      %6144 = vmatprep.subr.mxu0 0.0
      %6145 = vmatpush1.msra.mxu0 0.0
      %6146 = vmatprep.subr.mxu0 0.0
      %6147 = vmatpush1.msra.mxu0 0.0
      %6148 = vmatprep.subr.mxu0 0.0
      %6149 = vmatpush1.msra.mxu0 0.0
      %6150 = vmatprep.mubr.f32.mxu0 0.0
      %6151 = vmatmul.mubr.f32.gmra.mrb[0].mxu0 %v5986
      %v6152 = vpop.f32.mrb[0].mxu0
      %v6153 = vadd.f32 %v5968, %v6152
      %v6154 = vpop.f32.mrb[0].mxu0
      %6155 = vmatprep.mubr.f32.mxu0 0.0
      %6156 = vmatmul.mubr.f32.gmra.mrb[0].mxu0 %v5989
      %v6157 = vpop.f32.mrb[0].mxu0
      %v6158 = vadd.f32 %v5973, %v6157
      %v6159 = vpop.f32.mrb[0].mxu0
      %6160 = vmatprep.mubr.f32.mxu0 0.0
      %6161 = vmatmul.mubr.f32.gmra.mrb[0].mxu0 %v5992
      %v6162 = vpop.f32.mrb[0].mxu0
      %v6163 = vadd.f32 %v5978, %v6162
      %v6164 = vpop.f32.mrb[0].mxu0
      %6165 = vmatprep.mubr.f32.mxu0 0.0
      %6166 = vmatmul.mubr.f32.gmra.mrb[0].mxu0 %v5995
      %v6167 = vpop.f32.mrb[0].mxu0
      %v6168 = vadd.f32 %v5983, %v6167
      %v6169 = vpop.f32.mrb[0].mxu0
      %6170 = vdwg.mxu0
      %v6171 = vadd.f32 %v5945, %v6064
      %v6172 = vadd.f32 %v5946, %v6066
      %v6173 = vadd.f32 %v5947, %v6153
      %v6174 = vadd.f32 %v5948, %v6070
      %v6175 = vadd.f32 %v5949, %v6072
      %v6176 = vadd.f32 %v5950, %v6158
      %v6177 = vadd.f32 %v5951, %v6076
      %v6178 = vadd.f32 %v5952, %v6078
      %v6179 = vadd.f32 %v5953, %v6163
      %v6180 = vadd.f32 %v5954, %v6082
      %v6181 = vadd.f32 %v5955, %v6084
      %v6182 = vadd.f32 %v5956, %v6168
      %v6183 = vld [vmem:[%s1 + $0x1d0] sm:$0xff]
      %v6184 = vld [vmem:[%s1 + $0x1d8] sm:$0xff]
      %v6185 = vld [vmem:[%s1 + $0x1e0] sm:$0xff]
      %v6186 = vld [vmem:[%s1 + $0x1e8] sm:$0xff]
      %v6187 = vld [vmem:[%s1 + $0x1f0] sm:$0xff]
      %v6188 = vld [vmem:[%s1 + $0x1f8] sm:$0xff]
      %v6190 = vsel %vm201, %v6173, 0
      %v6193 = vsel %vm201, %v6176, 0
      %v6196 = vsel %vm201, %v6179, 0
      %v6199 = vsel %vm201, %v6182, 0
      %6201 = vmatprep.subr.mxu0 0.0
      %6202 = vmatpush1.msra.mxu0 %v222
      %6203 = vmatprep.subr.mxu0 0.0
      %6204 = vmatpush1.msra.mxu0 %v223
      %6205 = vmatprep.subr.mxu0 0.0
      %6206 = vmatpush1.msra.mxu0 %v224
      %6207 = vmatprep.subr.mxu0 0.0
      %6208 = vmatpush1.msra.mxu0 %v225
      %6209 = vmatprep.subr.mxu0 0.0
      %6210 = vmatpush1.msra.mxu0 %v226
      %6211 = vmatprep.subr.mxu0 0.0
      %6212 = vmatpush1.msra.mxu0 %v227
      %6213 = vmatprep.subr.mxu0 0.0
      %6214 = vmatpush1.msra.mxu0 %v228
      %6215 = vmatprep.subr.mxu0 0.0
      %6216 = vmatpush1.msra.mxu0 %v229
      %6217 = vmatprep.subr.mxu0 0.0
      %6218 = vmatpush1.msra.mxu0 %v230
      %6219 = vmatprep.subr.mxu0 0.0
      %6220 = vmatpush1.msra.mxu0 %v231
      %6221 = vmatprep.subr.mxu0 0.0
      %6222 = vmatpush1.msra.mxu0 %v232
      %6223 = vmatprep.subr.mxu0 0.0
      %6224 = vmatpush1.msra.mxu0 %v233
      %6225 = vmatprep.subr.mxu0 0.0
      %6226 = vmatpush1.msra.mxu0 %v234
      %6227 = vmatprep.subr.mxu0 0.0
      %6228 = vmatpush1.msra.mxu0 %v235
      %6229 = vmatprep.subr.mxu0 0.0
      %6230 = vmatpush1.msra.mxu0 %v236
      %6231 = vmatprep.subr.mxu0 0.0
      %6232 = vmatpush1.msra.mxu0 %v237
      %6233 = vmatprep.subr.mxu0 0.0
      %6234 = vmatpush1.msra.mxu0 %v238
      %6235 = vmatprep.subr.mxu0 0.0
      %6236 = vmatpush1.msra.mxu0 %v239
      %6237 = vmatprep.subr.mxu0 0.0
      %6238 = vmatpush1.msra.mxu0 %v240
      %6239 = vmatprep.subr.mxu0 0.0
      %6240 = vmatpush1.msra.mxu0 %v241
      %6241 = vmatprep.subr.mxu0 0.0
      %6242 = vmatpush1.msra.mxu0 %v242
      %6243 = vmatprep.subr.mxu0 0.0
      %6244 = vmatpush1.msra.mxu0 %v243
      %6245 = vmatprep.subr.mxu0 0.0
      %6246 = vmatpush1.msra.mxu0 %v244
      %6247 = vmatprep.subr.mxu0 0.0
      %6248 = vmatpush1.msra.mxu0 %v245
      %6249 = vmatprep.subr.mxu0 0.0
      %6250 = vmatpush1.msra.mxu0 %v246
      %6251 = vmatprep.subr.mxu0 0.0
      %6252 = vmatpush1.msra.mxu0 %v247
      %6253 = vmatprep.subr.mxu0 0.0
      %6254 = vmatpush1.msra.mxu0 %v248
      %6255 = vmatprep.subr.mxu0 0.0
      %6256 = vmatpush1.msra.mxu0 %v249
      %6257 = vmatprep.subr.mxu0 0.0
      %6258 = vmatpush1.msra.mxu0 %v250
      %6259 = vmatprep.subr.mxu0 0.0
      %6260 = vmatpush1.msra.mxu0 %v251
      %6261 = vmatprep.subr.mxu0 0.0
      %6262 = vmatpush1.msra.mxu0 %v252
      %6263 = vmatprep.subr.mxu0 0.0
      %6264 = vmatpush1.msra.mxu0 %v253
      %6265 = vmatprep.mubr.f32.mxu0 %v6172
      %6266 = vmatmul.mubr.f32.gmra.mrb[0].mxu0 %v6171
      %v6267 = vpop.f32.mrb[0].mxu0
      %v6268 = vadd.f32 0.0, %v6267
      %v6269 = vpop.f32.mrb[0].mxu0
      %6270 = vmatprep.mubr.f32.mxu0 %v6175
      %6271 = vmatmul.mubr.f32.gmra.mrb[0].mxu0 %v6174
      %v6272 = vpop.f32.mrb[0].mxu0
      %v6273 = vadd.f32 0.0, %v6272
      %v6274 = vpop.f32.mrb[0].mxu0
      %6275 = vmatprep.mubr.f32.mxu0 %v6178
      %6276 = vmatmul.mubr.f32.gmra.mrb[0].mxu0 %v6177
      %v6277 = vpop.f32.mrb[0].mxu0
      %v6278 = vadd.f32 0.0, %v6277
      %v6279 = vpop.f32.mrb[0].mxu0
      %6280 = vmatprep.mubr.f32.mxu0 %v6181
      %6281 = vmatmul.mubr.f32.gmra.mrb[0].mxu0 %v6180
      %v6282 = vpop.f32.mrb[0].mxu0
      %v6283 = vadd.f32 0.0, %v6282
      %v6284 = vpop.f32.mrb[0].mxu0
      %6285 = vdwg.mxu0
      %6286 = vmatprep.subr.mxu0 0.0
      %6287 = vmatpush1.msra.mxu0 %v254
      %6288 = vmatprep.subr.mxu0 0.0
      %6289 = vmatpush1.msra.mxu0 %v255
      %6290 = vmatprep.subr.mxu0 0.0
      %6291 = vmatpush1.msra.mxu0 %v256
      %6292 = vmatprep.subr.mxu0 0.0
      %6293 = vmatpush1.msra.mxu0 %v257
      %6294 = vmatprep.subr.mxu0 0.0
      %6295 = vmatpush1.msra.mxu0 %v258
      %6296 = vmatprep.subr.mxu0 0.0
      %6297 = vmatpush1.msra.mxu0 %v259
      %6298 = vmatprep.subr.mxu0 0.0
      %6299 = vmatpush1.msra.mxu0 0.0
      %6300 = vmatprep.subr.mxu0 0.0
      %6301 = vmatpush1.msra.mxu0 0.0
      %6302 = vmatprep.subr.mxu0 0.0
      %6303 = vmatpush1.msra.mxu0 0.0
      %6304 = vmatprep.subr.mxu0 0.0
      %6305 = vmatpush1.msra.mxu0 0.0
      %6306 = vmatprep.subr.mxu0 0.0
      %6307 = vmatpush1.msra.mxu0 0.0
      %6308 = vmatprep.subr.mxu0 0.0
      %6309 = vmatpush1.msra.mxu0 0.0
      %6310 = vmatprep.subr.mxu0 0.0
      %6311 = vmatpush1.msra.mxu0 0.0
      %6312 = vmatprep.subr.mxu0 0.0
      %6313 = vmatpush1.msra.mxu0 0.0
      %6314 = vmatprep.subr.mxu0 0.0
      %6315 = vmatpush1.msra.mxu0 0.0
      %6316 = vmatprep.subr.mxu0 0.0
      %6317 = vmatpush1.msra.mxu0 0.0
      %6318 = vmatprep.subr.mxu0 0.0
      %6319 = vmatpush1.msra.mxu0 0.0
      %6320 = vmatprep.subr.mxu0 0.0
      %6321 = vmatpush1.msra.mxu0 0.0
      %6322 = vmatprep.subr.mxu0 0.0
      %6323 = vmatpush1.msra.mxu0 0.0
      %6324 = vmatprep.subr.mxu0 0.0
      %6325 = vmatpush1.msra.mxu0 0.0
      %6326 = vmatprep.subr.mxu0 0.0
      %6327 = vmatpush1.msra.mxu0 0.0
      %6328 = vmatprep.subr.mxu0 0.0
      %6329 = vmatpush1.msra.mxu0 0.0
      %6330 = vmatprep.subr.mxu0 0.0
      %6331 = vmatpush1.msra.mxu0 0.0
      %6332 = vmatprep.subr.mxu0 0.0
      %6333 = vmatpush1.msra.mxu0 0.0
      %6334 = vmatprep.subr.mxu0 0.0
      %6335 = vmatpush1.msra.mxu0 0.0
      %6336 = vmatprep.subr.mxu0 0.0
      %6337 = vmatpush1.msra.mxu0 0.0
      %6338 = vmatprep.subr.mxu0 0.0
      %6339 = vmatpush1.msra.mxu0 0.0
      %6340 = vmatprep.subr.mxu0 0.0
      %6341 = vmatpush1.msra.mxu0 0.0
      %6342 = vmatprep.subr.mxu0 0.0
      %6343 = vmatpush1.msra.mxu0 0.0
      %6344 = vmatprep.subr.mxu0 0.0
      %6345 = vmatpush1.msra.mxu0 0.0
      %6346 = vmatprep.subr.mxu0 0.0
      %6347 = vmatpush1.msra.mxu0 0.0
      %6348 = vmatprep.subr.mxu0 0.0
      %6349 = vmatpush1.msra.mxu0 0.0
      %6350 = vmatprep.mubr.f32.mxu0 0.0
      %6351 = vmatmul.mubr.f32.gmra.mrb[0].mxu0 %v6190
      %v6352 = vpop.f32.mrb[0].mxu0
      %v6353 = vadd.f32 %v6268, %v6352
      %v6354 = vpop.f32.mrb[0].mxu0
      %6355 = vmatprep.mubr.f32.mxu0 0.0
      %6356 = vmatmul.mubr.f32.gmra.mrb[0].mxu0 %v6193
      %v6357 = vpop.f32.mrb[0].mxu0
      %v6358 = vadd.f32 %v6273, %v6357
      %v6359 = vpop.f32.mrb[0].mxu0
      %6360 = vmatprep.mubr.f32.mxu0 0.0
      %6361 = vmatmul.mubr.f32.gmra.mrb[0].mxu0 %v6196
      %v6362 = vpop.f32.mrb[0].mxu0
      %v6363 = vadd.f32 %v6278, %v6362
      %v6364 = vpop.f32.mrb[0].mxu0
      %6365 = vmatprep.mubr.f32.mxu0 0.0
      %6366 = vmatmul.mubr.f32.gmra.mrb[0].mxu0 %v6199
      %v6367 = vpop.f32.mrb[0].mxu0
      %v6368 = vadd.f32 %v6283, %v6367
      %v6369 = vpop.f32.mrb[0].mxu0
      %6370 = vdwg.mxu0
      %6371 = vst [vmem:[#allocation2 + $0x8] sm:$0xff] %v6171
      %6372 = vst [vmem:[#allocation2 + $0x10] sm:$0xff] %v6172
      %6373 = vst.msk [vmem:[#allocation2 + $0x18] sm:$0xff] %vm201, %v6173
      %6374 = vst [vmem:[#allocation2 + $0x30] sm:$0xff] %v6174
      %6375 = vst [vmem:[#allocation2 + $0x38] sm:$0xff] %v6175
      %6376 = vst.msk [vmem:[#allocation2 + $0x40] sm:$0xff] %vm201, %v6176
      %6377 = vst [vmem:[#allocation2 + $0x58] sm:$0xff] %v6177
      %6378 = vst [vmem:[#allocation2 + $0x60] sm:$0xff] %v6178
      %6379 = vst.msk [vmem:[#allocation2 + $0x68] sm:$0xff] %vm201, %v6179
      %6380 = vst [vmem:[#allocation2 + $0x80] sm:$0xff] %v6180
      %6381 = vst [vmem:[#allocation2 + $0x88] sm:$0xff] %v6181
      %6382 = vst.msk [vmem:[#allocation2 + $0x90] sm:$0xff] %vm201, %v6182
      %v6383 = vld [vmem:[#allocation2 + $0x8] sm:$0xff]
      %v6384 = vld [vmem:[#allocation2 + $0x10] sm:$0xff]
      %v6385 = vld [vmem:[#allocation2 + $0x18] sm:$0xff]
      %v6386 = vld [vmem:[#allocation2 + $0x30] sm:$0xff]
      %v6387 = vld [vmem:[#allocation2 + $0x38] sm:$0xff]
      %v6388 = vld [vmem:[#allocation2 + $0x40] sm:$0xff]
      %v6389 = vld [vmem:[#allocation2 + $0x58] sm:$0xff]
      %v6390 = vld [vmem:[#allocation2 + $0x60] sm:$0xff]
      %v6391 = vld [vmem:[#allocation2 + $0x68] sm:$0xff]
      %v6392 = vld [vmem:[#allocation2 + $0x80] sm:$0xff]
      %v6393 = vld [vmem:[#allocation2 + $0x88] sm:$0xff]
      %v6394 = vld [vmem:[#allocation2 + $0x90] sm:$0xff]
      %6407 = vrot.lane.b32.xlu0 %v6383, 127
      %v6408 = vpop.permute.xlu0 %6407
      %6409 = vrot.lane.b32.xlu0 %v6384, 127
      %v6410 = vpop.permute.xlu0 %6409
      %6411 = vrot.lane.b32.xlu0 %v6385, 127
      %v6412 = vpop.permute.xlu0 %6411
      %6413 = vrot.lane.b32.xlu0 %v6386, 127
      %v6414 = vpop.permute.xlu0 %6413
      %6415 = vrot.lane.b32.xlu0 %v6387, 127
      %v6416 = vpop.permute.xlu0 %6415
      %6417 = vrot.lane.b32.xlu0 %v6388, 127
      %v6418 = vpop.permute.xlu0 %6417
      %6419 = vrot.lane.b32.xlu0 %v6389, 127
      %v6420 = vpop.permute.xlu0 %6419
      %6421 = vrot.lane.b32.xlu0 %v6390, 127
      %v6422 = vpop.permute.xlu0 %6421
      %6423 = vrot.lane.b32.xlu0 %v6391, 127
      %v6424 = vpop.permute.xlu0 %6423
      %6425 = vrot.lane.b32.xlu0 %v6392, 127
      %v6426 = vpop.permute.xlu0 %6425
      %6427 = vrot.lane.b32.xlu0 %v6393, 127
      %v6428 = vpop.permute.xlu0 %6427
      %6429 = vrot.lane.b32.xlu0 %v6394, 127
      %v6430 = vpop.permute.xlu0 %6429
      %v6431 = vsel %vm505, %v6408, %v6410
      %v6432 = vsel %vm505, %v6410, %v6412
      %v6433 = vsel %vm505, %v6414, %v6416
      %v6434 = vsel %vm505, %v6416, %v6418
      %v6435 = vsel %vm505, %v6420, %v6422
      %v6436 = vsel %vm505, %v6422, %v6424
      %v6437 = vsel %vm505, %v6426, %v6428
      %v6438 = vsel %vm505, %v6428, %v6430
      %v6451 = vmax.f32 %v6171, %v6431
      %v6452 = vmax.f32 %v6172, %v6432
      %v6453 = vmax.f32 %v6173, %v6412
      %v6454 = vmax.f32 %v6174, %v6433
      %v6455 = vmax.f32 %v6175, %v6434
      %v6456 = vmax.f32 %v6176, %v6418
      %v6457 = vmax.f32 %v6177, %v6435
      %v6458 = vmax.f32 %v6178, %v6436
      %v6459 = vmax.f32 %v6179, %v6424
      %v6460 = vmax.f32 %v6180, %v6437
      %v6461 = vmax.f32 %v6181, %v6438
      %v6462 = vmax.f32 %v6182, %v6430
      %6463 = vst [vmem:[#allocation2 + $0x8] sm:$0xff] %v6451
      %6464 = vst [vmem:[#allocation2 + $0x10] sm:$0xff] %v6452
      %6465 = vst.msk [vmem:[#allocation2 + $0x18] sm:$0xff] %vm201, %v6453
      %6466 = vst [vmem:[#allocation2 + $0x30] sm:$0xff] %v6454
      %6467 = vst [vmem:[#allocation2 + $0x38] sm:$0xff] %v6455
      %6468 = vst.msk [vmem:[#allocation2 + $0x40] sm:$0xff] %vm201, %v6456
      %6469 = vst [vmem:[#allocation2 + $0x58] sm:$0xff] %v6457
      %6470 = vst [vmem:[#allocation2 + $0x60] sm:$0xff] %v6458
      %6471 = vst.msk [vmem:[#allocation2 + $0x68] sm:$0xff] %vm201, %v6459
      %6472 = vst [vmem:[#allocation2 + $0x80] sm:$0xff] %v6460
      %6473 = vst [vmem:[#allocation2 + $0x88] sm:$0xff] %v6461
      %6474 = vst.msk [vmem:[#allocation2 + $0x90] sm:$0xff] %vm201, %v6462
      %v6475 = vld [vmem:[#allocation2 + $0x8] sm:$0xff]
      %v6476 = vld [vmem:[#allocation2 + $0x10] sm:$0xff]
      %v6477 = vld [vmem:[#allocation2 + $0x18] sm:$0xff]
      %v6478 = vld [vmem:[#allocation2 + $0x30] sm:$0xff]
      %v6479 = vld [vmem:[#allocation2 + $0x38] sm:$0xff]
      %v6480 = vld [vmem:[#allocation2 + $0x40] sm:$0xff]
      %v6481 = vld [vmem:[#allocation2 + $0x58] sm:$0xff]
      %v6482 = vld [vmem:[#allocation2 + $0x60] sm:$0xff]
      %v6483 = vld [vmem:[#allocation2 + $0x68] sm:$0xff]
      %v6484 = vld [vmem:[#allocation2 + $0x80] sm:$0xff]
      %v6485 = vld [vmem:[#allocation2 + $0x88] sm:$0xff]
      %v6486 = vld [vmem:[#allocation2 + $0x90] sm:$0xff]
      %6499 = vrot.lane.b32.xlu0 %v6475, 126
      %v6500 = vpop.permute.xlu0 %6499
      %6501 = vrot.lane.b32.xlu0 %v6476, 126
      %v6502 = vpop.permute.xlu0 %6501
      %6503 = vrot.lane.b32.xlu0 %v6477, 126
      %v6504 = vpop.permute.xlu0 %6503
      %6505 = vrot.lane.b32.xlu0 %v6478, 126
      %v6506 = vpop.permute.xlu0 %6505
      %6507 = vrot.lane.b32.xlu0 %v6479, 126
      %v6508 = vpop.permute.xlu0 %6507
      %6509 = vrot.lane.b32.xlu0 %v6480, 126
      %v6510 = vpop.permute.xlu0 %6509
      %6511 = vrot.lane.b32.xlu0 %v6481, 126
      %v6512 = vpop.permute.xlu0 %6511
      %6513 = vrot.lane.b32.xlu0 %v6482, 126
      %v6514 = vpop.permute.xlu0 %6513
      %6515 = vrot.lane.b32.xlu0 %v6483, 126
      %v6516 = vpop.permute.xlu0 %6515
      %6517 = vrot.lane.b32.xlu0 %v6484, 126
      %v6518 = vpop.permute.xlu0 %6517
      %6519 = vrot.lane.b32.xlu0 %v6485, 126
      %v6520 = vpop.permute.xlu0 %6519
      %6521 = vrot.lane.b32.xlu0 %v6486, 126
      %v6522 = vpop.permute.xlu0 %6521
      %v6523 = vsel %vm1229, %v6500, %v6502
      %v6524 = vsel %vm1229, %v6502, %v6504
      %v6525 = vsel %vm1229, %v6506, %v6508
      %v6526 = vsel %vm1229, %v6508, %v6510
      %v6527 = vsel %vm1229, %v6512, %v6514
      %v6528 = vsel %vm1229, %v6514, %v6516
      %v6529 = vsel %vm1229, %v6518, %v6520
      %v6530 = vsel %vm1229, %v6520, %v6522
      %v6543 = vmax.f32 %v6451, %v6523
      %v6544 = vmax.f32 %v6452, %v6524
      %v6545 = vmax.f32 %v6453, %v6504
      %v6546 = vmax.f32 %v6454, %v6525
      %v6547 = vmax.f32 %v6455, %v6526
      %v6548 = vmax.f32 %v6456, %v6510
      %v6549 = vmax.f32 %v6457, %v6527
      %v6550 = vmax.f32 %v6458, %v6528
      %v6551 = vmax.f32 %v6459, %v6516
      %v6552 = vmax.f32 %v6460, %v6529
      %v6553 = vmax.f32 %v6461, %v6530
      %v6554 = vmax.f32 %v6462, %v6522
      %6555 = vst [vmem:[#allocation2 + $0x8] sm:$0xff] %v6543
      %6556 = vst [vmem:[#allocation2 + $0x10] sm:$0xff] %v6544
      %6557 = vst.msk [vmem:[#allocation2 + $0x18] sm:$0xff] %vm201, %v6545
      %6558 = vst [vmem:[#allocation2 + $0x30] sm:$0xff] %v6546
      %6559 = vst [vmem:[#allocation2 + $0x38] sm:$0xff] %v6547
      %6560 = vst.msk [vmem:[#allocation2 + $0x40] sm:$0xff] %vm201, %v6548
      %6561 = vst [vmem:[#allocation2 + $0x58] sm:$0xff] %v6549
      %6562 = vst [vmem:[#allocation2 + $0x60] sm:$0xff] %v6550
      %6563 = vst.msk [vmem:[#allocation2 + $0x68] sm:$0xff] %vm201, %v6551
      %6564 = vst [vmem:[#allocation2 + $0x80] sm:$0xff] %v6552
      %6565 = vst [vmem:[#allocation2 + $0x88] sm:$0xff] %v6553
      %6566 = vst.msk [vmem:[#allocation2 + $0x90] sm:$0xff] %vm201, %v6554
      %v6567 = vld [vmem:[#allocation2 + $0x8] sm:$0xff]
      %v6568 = vld [vmem:[#allocation2 + $0x10] sm:$0xff]
      %v6569 = vld [vmem:[#allocation2 + $0x18] sm:$0xff]
      %v6570 = vld [vmem:[#allocation2 + $0x30] sm:$0xff]
      %v6571 = vld [vmem:[#allocation2 + $0x38] sm:$0xff]
      %v6572 = vld [vmem:[#allocation2 + $0x40] sm:$0xff]
      %v6573 = vld [vmem:[#allocation2 + $0x58] sm:$0xff]
      %v6574 = vld [vmem:[#allocation2 + $0x60] sm:$0xff]
      %v6575 = vld [vmem:[#allocation2 + $0x68] sm:$0xff]
      %v6576 = vld [vmem:[#allocation2 + $0x80] sm:$0xff]
      %v6577 = vld [vmem:[#allocation2 + $0x88] sm:$0xff]
      %v6578 = vld [vmem:[#allocation2 + $0x90] sm:$0xff]
      %6591 = vrot.lane.b32.xlu0 %v6567, 124
      %v6592 = vpop.permute.xlu0 %6591
      %6593 = vrot.lane.b32.xlu0 %v6568, 124
      %v6594 = vpop.permute.xlu0 %6593
      %6595 = vrot.lane.b32.xlu0 %v6569, 124
      %v6596 = vpop.permute.xlu0 %6595
      %6597 = vrot.lane.b32.xlu0 %v6570, 124
      %v6598 = vpop.permute.xlu0 %6597
      %6599 = vrot.lane.b32.xlu0 %v6571, 124
      %v6600 = vpop.permute.xlu0 %6599
      %6601 = vrot.lane.b32.xlu0 %v6572, 124
      %v6602 = vpop.permute.xlu0 %6601
      %6603 = vrot.lane.b32.xlu0 %v6573, 124
      %v6604 = vpop.permute.xlu0 %6603
      %6605 = vrot.lane.b32.xlu0 %v6574, 124
      %v6606 = vpop.permute.xlu0 %6605
      %6607 = vrot.lane.b32.xlu0 %v6575, 124
      %v6608 = vpop.permute.xlu0 %6607
      %6609 = vrot.lane.b32.xlu0 %v6576, 124
      %v6610 = vpop.permute.xlu0 %6609
      %6611 = vrot.lane.b32.xlu0 %v6577, 124
      %v6612 = vpop.permute.xlu0 %6611
      %6613 = vrot.lane.b32.xlu0 %v6578, 124
      %v6614 = vpop.permute.xlu0 %6613
      %v6615 = vsel %vm1253, %v6592, %v6594
      %v6616 = vsel %vm1253, %v6594, %v6596
      %v6617 = vsel %vm1253, %v6598, %v6600
      %v6618 = vsel %vm1253, %v6600, %v6602
      %v6619 = vsel %vm1253, %v6604, %v6606
      %v6620 = vsel %vm1253, %v6606, %v6608
      %v6621 = vsel %vm1253, %v6610, %v6612
      %v6622 = vsel %vm1253, %v6612, %v6614
      %v6635 = vmax.f32 %v6543, %v6615
      %v6636 = vmax.f32 %v6544, %v6616
      %v6637 = vmax.f32 %v6545, %v6596
      %v6638 = vmax.f32 %v6546, %v6617
      %v6639 = vmax.f32 %v6547, %v6618
      %v6640 = vmax.f32 %v6548, %v6602
      %v6641 = vmax.f32 %v6549, %v6619
      %v6642 = vmax.f32 %v6550, %v6620
      %v6643 = vmax.f32 %v6551, %v6608
      %v6644 = vmax.f32 %v6552, %v6621
      %v6645 = vmax.f32 %v6553, %v6622
      %v6646 = vmax.f32 %v6554, %v6614
      %6647 = vst [vmem:[#allocation2 + $0x8] sm:$0xff] %v6635
      %6648 = vst [vmem:[#allocation2 + $0x10] sm:$0xff] %v6636
      %6649 = vst.msk [vmem:[#allocation2 + $0x18] sm:$0xff] %vm201, %v6637
      %6650 = vst [vmem:[#allocation2 + $0x30] sm:$0xff] %v6638
      %6651 = vst [vmem:[#allocation2 + $0x38] sm:$0xff] %v6639
      %6652 = vst.msk [vmem:[#allocation2 + $0x40] sm:$0xff] %vm201, %v6640
      %6653 = vst [vmem:[#allocation2 + $0x58] sm:$0xff] %v6641
      %6654 = vst [vmem:[#allocation2 + $0x60] sm:$0xff] %v6642
      %6655 = vst.msk [vmem:[#allocation2 + $0x68] sm:$0xff] %vm201, %v6643
      %6656 = vst [vmem:[#allocation2 + $0x80] sm:$0xff] %v6644
      %6657 = vst [vmem:[#allocation2 + $0x88] sm:$0xff] %v6645
      %6658 = vst.msk [vmem:[#allocation2 + $0x90] sm:$0xff] %vm201, %v6646
      %v6659 = vld [vmem:[#allocation2 + $0x8] sm:$0xff]
      %v6660 = vld [vmem:[#allocation2 + $0x10] sm:$0xff]
      %v6661 = vld [vmem:[#allocation2 + $0x18] sm:$0xff]
      %v6662 = vld [vmem:[#allocation2 + $0x30] sm:$0xff]
      %v6663 = vld [vmem:[#allocation2 + $0x38] sm:$0xff]
      %v6664 = vld [vmem:[#allocation2 + $0x40] sm:$0xff]
      %v6665 = vld [vmem:[#allocation2 + $0x58] sm:$0xff]
      %v6666 = vld [vmem:[#allocation2 + $0x60] sm:$0xff]
      %v6667 = vld [vmem:[#allocation2 + $0x68] sm:$0xff]
      %v6668 = vld [vmem:[#allocation2 + $0x80] sm:$0xff]
      %v6669 = vld [vmem:[#allocation2 + $0x88] sm:$0xff]
      %v6670 = vld [vmem:[#allocation2 + $0x90] sm:$0xff]
      %6683 = vrot.lane.b32.xlu0 %v6659, 120
      %v6684 = vpop.permute.xlu0 %6683
      %6685 = vrot.lane.b32.xlu0 %v6660, 120
      %v6686 = vpop.permute.xlu0 %6685
      %6687 = vrot.lane.b32.xlu0 %v6661, 120
      %v6688 = vpop.permute.xlu0 %6687
      %6689 = vrot.lane.b32.xlu0 %v6662, 120
      %v6690 = vpop.permute.xlu0 %6689
      %6691 = vrot.lane.b32.xlu0 %v6663, 120
      %v6692 = vpop.permute.xlu0 %6691
      %6693 = vrot.lane.b32.xlu0 %v6664, 120
      %v6694 = vpop.permute.xlu0 %6693
      %6695 = vrot.lane.b32.xlu0 %v6665, 120
      %v6696 = vpop.permute.xlu0 %6695
      %6697 = vrot.lane.b32.xlu0 %v6666, 120
      %v6698 = vpop.permute.xlu0 %6697
      %6699 = vrot.lane.b32.xlu0 %v6667, 120
      %v6700 = vpop.permute.xlu0 %6699
      %6701 = vrot.lane.b32.xlu0 %v6668, 120
      %v6702 = vpop.permute.xlu0 %6701
      %6703 = vrot.lane.b32.xlu0 %v6669, 120
      %v6704 = vpop.permute.xlu0 %6703
      %6705 = vrot.lane.b32.xlu0 %v6670, 120
      %v6706 = vpop.permute.xlu0 %6705
      %v6707 = vsel %vm1277, %v6684, %v6686
      %v6708 = vsel %vm1277, %v6686, %v6688
      %v6709 = vsel %vm1277, %v6690, %v6692
      %v6710 = vsel %vm1277, %v6692, %v6694
      %v6711 = vsel %vm1277, %v6696, %v6698
      %v6712 = vsel %vm1277, %v6698, %v6700
      %v6713 = vsel %vm1277, %v6702, %v6704
      %v6714 = vsel %vm1277, %v6704, %v6706
      %v6727 = vmax.f32 %v6635, %v6707
      %v6728 = vmax.f32 %v6636, %v6708
      %v6729 = vmax.f32 %v6637, %v6688
      %v6730 = vmax.f32 %v6638, %v6709
      %v6731 = vmax.f32 %v6639, %v6710
      %v6732 = vmax.f32 %v6640, %v6694
      %v6733 = vmax.f32 %v6641, %v6711
      %v6734 = vmax.f32 %v6642, %v6712
      %v6735 = vmax.f32 %v6643, %v6700
      %v6736 = vmax.f32 %v6644, %v6713
      %v6737 = vmax.f32 %v6645, %v6714
      %v6738 = vmax.f32 %v6646, %v6706
      %v6740 = vsel %vm201, %v6729, 0
      %v6743 = vsel %vm201, %v6732, 0
      %v6746 = vsel %vm201, %v6735, 0
      %v6749 = vsel %vm201, %v6738, 0
      %6751 = vmatprep.subr.mxu0 0.0
      %6752 = vmatpush1.msra.mxu0 %v261
      %6753 = vmatprep.subr.mxu0 0.0
      %6754 = vmatpush1.msra.mxu0 %v262
      %6755 = vmatprep.subr.mxu0 0.0
      %6756 = vmatpush1.msra.mxu0 %v263
      %6757 = vmatprep.subr.mxu0 0.0
      %6758 = vmatpush1.msra.mxu0 %v264
      %6759 = vmatprep.subr.mxu0 0.0
      %6760 = vmatpush1.msra.mxu0 %v265
      %6761 = vmatprep.subr.mxu0 0.0
      %6762 = vmatpush1.msra.mxu0 %v266
      %6763 = vmatprep.subr.mxu0 0.0
      %6764 = vmatpush1.msra.mxu0 %v267
      %6765 = vmatprep.subr.mxu0 0.0
      %6766 = vmatpush1.msra.mxu0 %v268
      %6767 = vmatprep.subr.mxu0 0.0
      %6768 = vmatpush1.msra.mxu0 %v269
      %6769 = vmatprep.subr.mxu0 0.0
      %6770 = vmatpush1.msra.mxu0 %v270
      %6771 = vmatprep.subr.mxu0 0.0
      %6772 = vmatpush1.msra.mxu0 %v271
      %6773 = vmatprep.subr.mxu0 0.0
      %6774 = vmatpush1.msra.mxu0 %v272
      %6775 = vmatprep.subr.mxu0 0.0
      %6776 = vmatpush1.msra.mxu0 %v273
      %6777 = vmatprep.subr.mxu0 0.0
      %6778 = vmatpush1.msra.mxu0 %v274
      %6779 = vmatprep.subr.mxu0 0.0
      %6780 = vmatpush1.msra.mxu0 %v275
      %6781 = vmatprep.subr.mxu0 0.0
      %6782 = vmatpush1.msra.mxu0 %v276
      %6783 = vmatprep.subr.mxu0 0.0
      %6784 = vmatpush1.msra.mxu0 %v277
      %6785 = vmatprep.subr.mxu0 0.0
      %6786 = vmatpush1.msra.mxu0 %v278
      %6787 = vmatprep.subr.mxu0 0.0
      %6788 = vmatpush1.msra.mxu0 %v279
      %6789 = vmatprep.subr.mxu0 0.0
      %6790 = vmatpush1.msra.mxu0 %v280
      %6791 = vmatprep.subr.mxu0 0.0
      %6792 = vmatpush1.msra.mxu0 %v281
      %6793 = vmatprep.subr.mxu0 0.0
      %6794 = vmatpush1.msra.mxu0 %v282
      %6795 = vmatprep.subr.mxu0 0.0
      %6796 = vmatpush1.msra.mxu0 %v283
      %6797 = vmatprep.subr.mxu0 0.0
      %6798 = vmatpush1.msra.mxu0 %v284
      %6799 = vmatprep.subr.mxu0 0.0
      %6800 = vmatpush1.msra.mxu0 %v285
      %6801 = vmatprep.subr.mxu0 0.0
      %6802 = vmatpush1.msra.mxu0 %v286
      %6803 = vmatprep.subr.mxu0 0.0
      %6804 = vmatpush1.msra.mxu0 %v287
      %6805 = vmatprep.subr.mxu0 0.0
      %6806 = vmatpush1.msra.mxu0 %v288
      %6807 = vmatprep.subr.mxu0 0.0
      %6808 = vmatpush1.msra.mxu0 %v289
      %6809 = vmatprep.subr.mxu0 0.0
      %6810 = vmatpush1.msra.mxu0 %v290
      %6811 = vmatprep.subr.mxu0 0.0
      %6812 = vmatpush1.msra.mxu0 %v291
      %6813 = vmatprep.subr.mxu0 0.0
      %6814 = vmatpush1.msra.mxu0 %v292
      %6815 = vmatprep.mubr.f32.mxu0 %v6728
      %6816 = vmatmul.mubr.f32.gmra.mrb[0].mxu0 %v6727
      %v6817 = vpop.f32.mrb[0].mxu0
      %v6818 = vadd.f32 0.0, %v6817
      %v6819 = vpop.f32.mrb[0].mxu0
      %6820 = vmatprep.mubr.f32.mxu0 %v6731
      %6821 = vmatmul.mubr.f32.gmra.mrb[0].mxu0 %v6730
      %v6822 = vpop.f32.mrb[0].mxu0
      %v6823 = vadd.f32 0.0, %v6822
      %v6824 = vpop.f32.mrb[0].mxu0
      %6825 = vmatprep.mubr.f32.mxu0 %v6734
      %6826 = vmatmul.mubr.f32.gmra.mrb[0].mxu0 %v6733
      %v6827 = vpop.f32.mrb[0].mxu0
      %v6828 = vadd.f32 0.0, %v6827
      %v6829 = vpop.f32.mrb[0].mxu0
      %6830 = vmatprep.mubr.f32.mxu0 %v6737
      %6831 = vmatmul.mubr.f32.gmra.mrb[0].mxu0 %v6736
      %v6832 = vpop.f32.mrb[0].mxu0
      %v6833 = vadd.f32 0.0, %v6832
      %v6834 = vpop.f32.mrb[0].mxu0
      %6835 = vdwg.mxu0
      %6836 = vmatprep.subr.mxu0 0.0
      %6837 = vmatpush1.msra.mxu0 %v293
      %6838 = vmatprep.subr.mxu0 0.0
      %6839 = vmatpush1.msra.mxu0 %v294
      %6840 = vmatprep.subr.mxu0 0.0
      %6841 = vmatpush1.msra.mxu0 %v295
      %6842 = vmatprep.subr.mxu0 0.0
      %6843 = vmatpush1.msra.mxu0 %v296
      %6844 = vmatprep.subr.mxu0 0.0
      %6845 = vmatpush1.msra.mxu0 %v297
      %6846 = vmatprep.subr.mxu0 0.0
      %6847 = vmatpush1.msra.mxu0 %v298
      %6848 = vmatprep.subr.mxu0 0.0
      %6849 = vmatpush1.msra.mxu0 0.0
      %6850 = vmatprep.subr.mxu0 0.0
      %6851 = vmatpush1.msra.mxu0 0.0
      %6852 = vmatprep.subr.mxu0 0.0
      %6853 = vmatpush1.msra.mxu0 0.0
      %6854 = vmatprep.subr.mxu0 0.0
      %6855 = vmatpush1.msra.mxu0 0.0
      %6856 = vmatprep.subr.mxu0 0.0
      %6857 = vmatpush1.msra.mxu0 0.0
      %6858 = vmatprep.subr.mxu0 0.0
      %6859 = vmatpush1.msra.mxu0 0.0
      %6860 = vmatprep.subr.mxu0 0.0
      %6861 = vmatpush1.msra.mxu0 0.0
      %6862 = vmatprep.subr.mxu0 0.0
      %6863 = vmatpush1.msra.mxu0 0.0
      %6864 = vmatprep.subr.mxu0 0.0
      %6865 = vmatpush1.msra.mxu0 0.0
      %6866 = vmatprep.subr.mxu0 0.0
      %6867 = vmatpush1.msra.mxu0 0.0
      %6868 = vmatprep.subr.mxu0 0.0
      %6869 = vmatpush1.msra.mxu0 0.0
      %6870 = vmatprep.subr.mxu0 0.0
      %6871 = vmatpush1.msra.mxu0 0.0
      %6872 = vmatprep.subr.mxu0 0.0
      %6873 = vmatpush1.msra.mxu0 0.0
      %6874 = vmatprep.subr.mxu0 0.0
      %6875 = vmatpush1.msra.mxu0 0.0
      %6876 = vmatprep.subr.mxu0 0.0
      %6877 = vmatpush1.msra.mxu0 0.0
      %6878 = vmatprep.subr.mxu0 0.0
      %6879 = vmatpush1.msra.mxu0 0.0
      %6880 = vmatprep.subr.mxu0 0.0
      %6881 = vmatpush1.msra.mxu0 0.0
      %6882 = vmatprep.subr.mxu0 0.0
      %6883 = vmatpush1.msra.mxu0 0.0
      %6884 = vmatprep.subr.mxu0 0.0
      %6885 = vmatpush1.msra.mxu0 0.0
      %6886 = vmatprep.subr.mxu0 0.0
      %6887 = vmatpush1.msra.mxu0 0.0
      %6888 = vmatprep.subr.mxu0 0.0
      %6889 = vmatpush1.msra.mxu0 0.0
      %6890 = vmatprep.subr.mxu0 0.0
      %6891 = vmatpush1.msra.mxu0 0.0
      %6892 = vmatprep.subr.mxu0 0.0
      %6893 = vmatpush1.msra.mxu0 0.0
      %6894 = vmatprep.subr.mxu0 0.0
      %6895 = vmatpush1.msra.mxu0 0.0
      %6896 = vmatprep.subr.mxu0 0.0
      %6897 = vmatpush1.msra.mxu0 0.0
      %6898 = vmatprep.subr.mxu0 0.0
      %6899 = vmatpush1.msra.mxu0 0.0
      %6900 = vmatprep.mubr.f32.mxu0 0.0
      %6901 = vmatmul.mubr.f32.gmra.mrb[0].mxu0 %v6740
      %v6902 = vpop.f32.mrb[0].mxu0
      %v6903 = vadd.f32 %v6818, %v6902
      %v6904 = vpop.f32.mrb[0].mxu0
      %6905 = vmatprep.mubr.f32.mxu0 0.0
      %6906 = vmatmul.mubr.f32.gmra.mrb[0].mxu0 %v6743
      %v6907 = vpop.f32.mrb[0].mxu0
      %v6908 = vadd.f32 %v6823, %v6907
      %v6909 = vpop.f32.mrb[0].mxu0
      %6910 = vmatprep.mubr.f32.mxu0 0.0
      %6911 = vmatmul.mubr.f32.gmra.mrb[0].mxu0 %v6746
      %v6912 = vpop.f32.mrb[0].mxu0
      %v6913 = vadd.f32 %v6828, %v6912
      %v6914 = vpop.f32.mrb[0].mxu0
      %6915 = vmatprep.mubr.f32.mxu0 0.0
      %6916 = vmatmul.mubr.f32.gmra.mrb[0].mxu0 %v6749
      %v6917 = vpop.f32.mrb[0].mxu0
      %v6918 = vadd.f32 %v6833, %v6917
      %v6919 = vpop.f32.mrb[0].mxu0
      %6920 = vdwg.mxu0
      %v6922 = vsel %vm5746, %v6183, 0
      %v6925 = vsel %vm5746, %v6184, 0
      %6927 = vmatprep.subr.mxu0 0.0
      %6928 = vmatpush1.msra.mxu0 %v6353
      %6929 = vmatprep.subr.mxu0 0.0
      %6930 = vmatpush1.msra.mxu0 %v6358
      %6931 = vmatprep.subr.mxu0 0.0
      %6932 = vmatpush1.msra.mxu0 %v6363
      %6933 = vmatprep.subr.mxu0 0.0
      %6934 = vmatpush1.msra.mxu0 %v6368
      %6935 = vmatprep.subr.mxu0 0.0
      %6936 = vmatpush1.msra.mxu0 0.0
      %6937 = vmatprep.subr.mxu0 0.0
      %6938 = vmatpush1.msra.mxu0 0.0
      %6939 = vmatprep.subr.mxu0 0.0
      %6940 = vmatpush1.msra.mxu0 0.0
      %6941 = vmatprep.subr.mxu0 0.0
      %6942 = vmatpush1.msra.mxu0 0.0
      %6943 = vmatprep.subr.mxu0 0.0
      %6944 = vmatpush1.msra.mxu0 0.0
      %6945 = vmatprep.subr.mxu0 0.0
      %6946 = vmatpush1.msra.mxu0 0.0
      %6947 = vmatprep.subr.mxu0 0.0
      %6948 = vmatpush1.msra.mxu0 0.0
      %6949 = vmatprep.subr.mxu0 0.0
      %6950 = vmatpush1.msra.mxu0 0.0
      %6951 = vmatprep.subr.mxu0 0.0
      %6952 = vmatpush1.msra.mxu0 0.0
      %6953 = vmatprep.subr.mxu0 0.0
      %6954 = vmatpush1.msra.mxu0 0.0
      %6955 = vmatprep.subr.mxu0 0.0
      %6956 = vmatpush1.msra.mxu0 0.0
      %6957 = vmatprep.subr.mxu0 0.0
      %6958 = vmatpush1.msra.mxu0 0.0
      %6959 = vmatprep.subr.mxu0 0.0
      %6960 = vmatpush1.msra.mxu0 0.0
      %6961 = vmatprep.subr.mxu0 0.0
      %6962 = vmatpush1.msra.mxu0 0.0
      %6963 = vmatprep.subr.mxu0 0.0
      %6964 = vmatpush1.msra.mxu0 0.0
      %6965 = vmatprep.subr.mxu0 0.0
      %6966 = vmatpush1.msra.mxu0 0.0
      %6967 = vmatprep.subr.mxu0 0.0
      %6968 = vmatpush1.msra.mxu0 0.0
      %6969 = vmatprep.subr.mxu0 0.0
      %6970 = vmatpush1.msra.mxu0 0.0
      %6971 = vmatprep.subr.mxu0 0.0
      %6972 = vmatpush1.msra.mxu0 0.0
      %6973 = vmatprep.subr.mxu0 0.0
      %6974 = vmatpush1.msra.mxu0 0.0
      %6975 = vmatprep.subr.mxu0 0.0
      %6976 = vmatpush1.msra.mxu0 0.0
      %6977 = vmatprep.subr.mxu0 0.0
      %6978 = vmatpush1.msra.mxu0 0.0
      %6979 = vmatprep.subr.mxu0 0.0
      %6980 = vmatpush1.msra.mxu0 0.0
      %6981 = vmatprep.subr.mxu0 0.0
      %6982 = vmatpush1.msra.mxu0 0.0
      %6983 = vmatprep.subr.mxu0 0.0
      %6984 = vmatpush1.msra.mxu0 0.0
      %6985 = vmatprep.subr.mxu0 0.0
      %6986 = vmatpush1.msra.mxu0 0.0
      %6987 = vmatprep.subr.mxu0 0.0
      %6988 = vmatpush1.msra.mxu0 0.0
      %6989 = vmatprep.subr.mxu0 0.0
      %6990 = vmatpush1.msra.mxu0 0.0
      %6991 = vmatprep.mubr.f32.mxu0 0.0
      %6992 = vmatmul.mubr.f32.gmra.mrb[0].mxu0 %v6922
      %v6993 = vpop.f32.mrb[0].mxu0
      %v6994 = vadd.f32 0.0, %v6993
      %v6995 = vpop.f32.mrb[0].mxu0
      %6996 = vmatprep.mubr.f32.mxu0 0.0
      %6997 = vmatmul.mubr.f32.gmra.mrb[0].mxu0 %v6925
      %v6998 = vpop.f32.mrb[0].mxu0
      %v6999 = vadd.f32 0.0, %v6998
      %v7000 = vpop.f32.mrb[0].mxu0
      %7001 = vdwg.mxu0
      %v7002 = vmax.f32 %v6994, 0.0
      %v7003 = vmax.f32 %v6999, 0.0
      %7004 = vmatprep.subr.mxu0 0.0
      %7005 = vmatpush1.msra.mxu0 %v6903
      %7006 = vmatprep.subr.mxu0 0.0
      %7007 = vmatpush1.msra.mxu0 %v6908
      %7008 = vmatprep.subr.mxu0 0.0
      %7009 = vmatpush1.msra.mxu0 %v6913
      %7010 = vmatprep.subr.mxu0 0.0
      %7011 = vmatpush1.msra.mxu0 %v6918
      %7012 = vmatprep.subr.mxu0 0.0
      %7013 = vmatpush1.msra.mxu0 0.0
      %7014 = vmatprep.subr.mxu0 0.0
      %7015 = vmatpush1.msra.mxu0 0.0
      %7016 = vmatprep.subr.mxu0 0.0
      %7017 = vmatpush1.msra.mxu0 0.0
      %7018 = vmatprep.subr.mxu0 0.0
      %7019 = vmatpush1.msra.mxu0 0.0
      %7020 = vmatprep.subr.mxu0 0.0
      %7021 = vmatpush1.msra.mxu0 0.0
      %7022 = vmatprep.subr.mxu0 0.0
      %7023 = vmatpush1.msra.mxu0 0.0
      %7024 = vmatprep.subr.mxu0 0.0
      %7025 = vmatpush1.msra.mxu0 0.0
      %7026 = vmatprep.subr.mxu0 0.0
      %7027 = vmatpush1.msra.mxu0 0.0
      %7028 = vmatprep.subr.mxu0 0.0
      %7029 = vmatpush1.msra.mxu0 0.0
      %7030 = vmatprep.subr.mxu0 0.0
      %7031 = vmatpush1.msra.mxu0 0.0
      %7032 = vmatprep.subr.mxu0 0.0
      %7033 = vmatpush1.msra.mxu0 0.0
      %7034 = vmatprep.subr.mxu0 0.0
      %7035 = vmatpush1.msra.mxu0 0.0
      %7036 = vmatprep.subr.mxu0 0.0
      %7037 = vmatpush1.msra.mxu0 0.0
      %7038 = vmatprep.subr.mxu0 0.0
      %7039 = vmatpush1.msra.mxu0 0.0
      %7040 = vmatprep.subr.mxu0 0.0
      %7041 = vmatpush1.msra.mxu0 0.0
      %7042 = vmatprep.subr.mxu0 0.0
      %7043 = vmatpush1.msra.mxu0 0.0
      %7044 = vmatprep.subr.mxu0 0.0
      %7045 = vmatpush1.msra.mxu0 0.0
      %7046 = vmatprep.subr.mxu0 0.0
      %7047 = vmatpush1.msra.mxu0 0.0
      %7048 = vmatprep.subr.mxu0 0.0
      %7049 = vmatpush1.msra.mxu0 0.0
      %7050 = vmatprep.subr.mxu0 0.0
      %7051 = vmatpush1.msra.mxu0 0.0
      %7052 = vmatprep.subr.mxu0 0.0
      %7053 = vmatpush1.msra.mxu0 0.0
      %7054 = vmatprep.subr.mxu0 0.0
      %7055 = vmatpush1.msra.mxu0 0.0
      %7056 = vmatprep.subr.mxu0 0.0
      %7057 = vmatpush1.msra.mxu0 0.0
      %7058 = vmatprep.subr.mxu0 0.0
      %7059 = vmatpush1.msra.mxu0 0.0
      %7060 = vmatprep.subr.mxu0 0.0
      %7061 = vmatpush1.msra.mxu0 0.0
      %7062 = vmatprep.subr.mxu0 0.0
      %7063 = vmatpush1.msra.mxu0 0.0
      %7064 = vmatprep.subr.mxu0 0.0
      %7065 = vmatpush1.msra.mxu0 0.0
      %7066 = vmatprep.subr.mxu0 0.0
      %7067 = vmatpush1.msra.mxu0 0.0
      %7068 = vmatprep.mubr.f32.mxu0 0.0
      %7069 = vmatmul.mubr.f32.gmra.mrb[0].mxu0 %v6922
      %v7070 = vpop.f32.mrb[0].mxu0
      %v7071 = vadd.f32 0.0, %v7070
      %v7072 = vpop.f32.mrb[0].mxu0
      %7073 = vmatprep.mubr.f32.mxu0 0.0
      %7074 = vmatmul.mubr.f32.gmra.mrb[0].mxu0 %v6925
      %v7075 = vpop.f32.mrb[0].mxu0
      %v7076 = vadd.f32 0.0, %v7075
      %v7077 = vpop.f32.mrb[0].mxu0
      %7078 = vdwg.mxu0
      %v7079 = vmax.f32 %v7071, 0.0
      %v7080 = vmax.f32 %v7076, 0.0
      %v7082 = vsel %vm380, %v6185, 0
      %v7085 = vsel %vm380, %v6186, 0
      %v7088 = vsel %vm380, %v6187, 0
      %v7091 = vsel %vm380, %v6188, 0
      %7093 = vmatprep.subr.mxu0 0.0
      %7094 = vmatpush1.msra.mxu0 %v7079
      %7095 = vmatprep.subr.mxu0 0.0
      %7096 = vmatpush1.msra.mxu0 %v7080
      %7097 = vmatprep.subr.mxu0 0.0
      %7098 = vmatpush1.msra.mxu0 0.0
      %7099 = vmatprep.subr.mxu0 0.0
      %7100 = vmatpush1.msra.mxu0 0.0
      %7101 = vmatprep.subr.mxu0 0.0
      %7102 = vmatpush1.msra.mxu0 0.0
      %7103 = vmatprep.subr.mxu0 0.0
      %7104 = vmatpush1.msra.mxu0 0.0
      %7105 = vmatprep.subr.mxu0 0.0
      %7106 = vmatpush1.msra.mxu0 0.0
      %7107 = vmatprep.subr.mxu0 0.0
      %7108 = vmatpush1.msra.mxu0 0.0
      %7109 = vmatprep.subr.mxu0 0.0
      %7110 = vmatpush1.msra.mxu0 0.0
      %7111 = vmatprep.subr.mxu0 0.0
      %7112 = vmatpush1.msra.mxu0 0.0
      %7113 = vmatprep.subr.mxu0 0.0
      %7114 = vmatpush1.msra.mxu0 0.0
      %7115 = vmatprep.subr.mxu0 0.0
      %7116 = vmatpush1.msra.mxu0 0.0
      %7117 = vmatprep.subr.mxu0 0.0
      %7118 = vmatpush1.msra.mxu0 0.0
      %7119 = vmatprep.subr.mxu0 0.0
      %7120 = vmatpush1.msra.mxu0 0.0
      %7121 = vmatprep.subr.mxu0 0.0
      %7122 = vmatpush1.msra.mxu0 0.0
      %7123 = vmatprep.subr.mxu0 0.0
      %7124 = vmatpush1.msra.mxu0 0.0
      %7125 = vmatprep.subr.mxu0 0.0
      %7126 = vmatpush1.msra.mxu0 0.0
      %7127 = vmatprep.subr.mxu0 0.0
      %7128 = vmatpush1.msra.mxu0 0.0
      %7129 = vmatprep.subr.mxu0 0.0
      %7130 = vmatpush1.msra.mxu0 0.0
      %7131 = vmatprep.subr.mxu0 0.0
      %7132 = vmatpush1.msra.mxu0 0.0
      %7133 = vmatprep.subr.mxu0 0.0
      %7134 = vmatpush1.msra.mxu0 0.0
      %7135 = vmatprep.subr.mxu0 0.0
      %7136 = vmatpush1.msra.mxu0 0.0
      %7137 = vmatprep.subr.mxu0 0.0
      %7138 = vmatpush1.msra.mxu0 0.0
      %7139 = vmatprep.subr.mxu0 0.0
      %7140 = vmatpush1.msra.mxu0 0.0
      %7141 = vmatprep.subr.mxu0 0.0
      %7142 = vmatpush1.msra.mxu0 0.0
      %7143 = vmatprep.subr.mxu0 0.0
      %7144 = vmatpush1.msra.mxu0 0.0
      %7145 = vmatprep.subr.mxu0 0.0
      %7146 = vmatpush1.msra.mxu0 0.0
      %7147 = vmatprep.subr.mxu0 0.0
      %7148 = vmatpush1.msra.mxu0 0.0
      %7149 = vmatprep.subr.mxu0 0.0
      %7150 = vmatpush1.msra.mxu0 0.0
      %7151 = vmatprep.subr.mxu0 0.0
      %7152 = vmatpush1.msra.mxu0 0.0
      %7153 = vmatprep.subr.mxu0 0.0
      %7154 = vmatpush1.msra.mxu0 0.0
      %7155 = vmatprep.subr.mxu0 0.0
      %7156 = vmatpush1.msra.mxu0 0.0
      %7157 = vmatprep.mubr.f32.mxu0 0.0
      %7158 = vmatmul.mubr.f32.gmra.mrb[0].mxu0 %v7082
      %v7159 = vpop.f32.mrb[0].mxu0
      %v7160 = vadd.f32 0.0, %v7159
      %v7161 = vpop.f32.mrb[0].mxu0
      %7162 = vmatprep.mubr.f32.mxu0 0.0
      %7163 = vmatmul.mubr.f32.gmra.mrb[0].mxu0 %v7085
      %v7164 = vpop.f32.mrb[0].mxu0
      %v7165 = vadd.f32 0.0, %v7164
      %v7166 = vpop.f32.mrb[0].mxu0
      %7167 = vmatprep.mubr.f32.mxu0 0.0
      %7168 = vmatmul.mubr.f32.gmra.mrb[0].mxu0 %v7088
      %v7169 = vpop.f32.mrb[0].mxu0
      %v7170 = vadd.f32 0.0, %v7169
      %v7171 = vpop.f32.mrb[0].mxu0
      %7172 = vmatprep.mubr.f32.mxu0 0.0
      %7173 = vmatmul.mubr.f32.gmra.mrb[0].mxu0 %v7091
      %v7174 = vpop.f32.mrb[0].mxu0
      %v7175 = vadd.f32 0.0, %v7174
      %v7176 = vpop.f32.mrb[0].mxu0
      %7177 = vdwg.mxu0
      %7178 = vmatprep.subr.mxu0 0.0
      %7179 = vmatpush1.msra.mxu0 %v7002
      %7180 = vmatprep.subr.mxu0 0.0
      %7181 = vmatpush1.msra.mxu0 %v7003
      %7182 = vmatprep.subr.mxu0 0.0
      %7183 = vmatpush1.msra.mxu0 0.0
      %7184 = vmatprep.subr.mxu0 0.0
      %7185 = vmatpush1.msra.mxu0 0.0
      %7186 = vmatprep.subr.mxu0 0.0
      %7187 = vmatpush1.msra.mxu0 0.0
      %7188 = vmatprep.subr.mxu0 0.0
      %7189 = vmatpush1.msra.mxu0 0.0
      %7190 = vmatprep.subr.mxu0 0.0
      %7191 = vmatpush1.msra.mxu0 0.0
      %7192 = vmatprep.subr.mxu0 0.0
      %7193 = vmatpush1.msra.mxu0 0.0
      %7194 = vmatprep.subr.mxu0 0.0
      %7195 = vmatpush1.msra.mxu0 0.0
      %7196 = vmatprep.subr.mxu0 0.0
      %7197 = vmatpush1.msra.mxu0 0.0
      %7198 = vmatprep.subr.mxu0 0.0
      %7199 = vmatpush1.msra.mxu0 0.0
      %7200 = vmatprep.subr.mxu0 0.0
      %7201 = vmatpush1.msra.mxu0 0.0
      %7202 = vmatprep.subr.mxu0 0.0
      %7203 = vmatpush1.msra.mxu0 0.0
      %7204 = vmatprep.subr.mxu0 0.0
      %7205 = vmatpush1.msra.mxu0 0.0
      %7206 = vmatprep.subr.mxu0 0.0
      %7207 = vmatpush1.msra.mxu0 0.0
      %7208 = vmatprep.subr.mxu0 0.0
      %7209 = vmatpush1.msra.mxu0 0.0
      %7210 = vmatprep.subr.mxu0 0.0
      %7211 = vmatpush1.msra.mxu0 0.0
      %7212 = vmatprep.subr.mxu0 0.0
      %7213 = vmatpush1.msra.mxu0 0.0
      %7214 = vmatprep.subr.mxu0 0.0
      %7215 = vmatpush1.msra.mxu0 0.0
      %7216 = vmatprep.subr.mxu0 0.0
      %7217 = vmatpush1.msra.mxu0 0.0
      %7218 = vmatprep.subr.mxu0 0.0
      %7219 = vmatpush1.msra.mxu0 0.0
      %7220 = vmatprep.subr.mxu0 0.0
      %7221 = vmatpush1.msra.mxu0 0.0
      %7222 = vmatprep.subr.mxu0 0.0
      %7223 = vmatpush1.msra.mxu0 0.0
      %7224 = vmatprep.subr.mxu0 0.0
      %7225 = vmatpush1.msra.mxu0 0.0
      %7226 = vmatprep.subr.mxu0 0.0
      %7227 = vmatpush1.msra.mxu0 0.0
      %7228 = vmatprep.subr.mxu0 0.0
      %7229 = vmatpush1.msra.mxu0 0.0
      %7230 = vmatprep.subr.mxu0 0.0
      %7231 = vmatpush1.msra.mxu0 0.0
      %7232 = vmatprep.subr.mxu0 0.0
      %7233 = vmatpush1.msra.mxu0 0.0
      %7234 = vmatprep.subr.mxu0 0.0
      %7235 = vmatpush1.msra.mxu0 0.0
      %7236 = vmatprep.subr.mxu0 0.0
      %7237 = vmatpush1.msra.mxu0 0.0
      %7238 = vmatprep.subr.mxu0 0.0
      %7239 = vmatpush1.msra.mxu0 0.0
      %7240 = vmatprep.subr.mxu0 0.0
      %7241 = vmatpush1.msra.mxu0 0.0
      %7242 = vmatprep.mubr.f32.mxu0 0.0
      %7243 = vmatmul.mubr.f32.gmra.mrb[0].mxu0 %v7082
      %v7244 = vpop.f32.mrb[0].mxu0
      %v7245 = vadd.f32 %v7160, %v7244
      %v7246 = vpop.f32.mrb[0].mxu0
      %7247 = vmatprep.mubr.f32.mxu0 0.0
      %7248 = vmatmul.mubr.f32.gmra.mrb[0].mxu0 %v7085
      %v7249 = vpop.f32.mrb[0].mxu0
      %v7250 = vadd.f32 %v7165, %v7249
      %v7251 = vpop.f32.mrb[0].mxu0
      %7252 = vmatprep.mubr.f32.mxu0 0.0
      %7253 = vmatmul.mubr.f32.gmra.mrb[0].mxu0 %v7088
      %v7254 = vpop.f32.mrb[0].mxu0
      %v7255 = vadd.f32 %v7170, %v7254
      %v7256 = vpop.f32.mrb[0].mxu0
      %7257 = vmatprep.mubr.f32.mxu0 0.0
      %7258 = vmatmul.mubr.f32.gmra.mrb[0].mxu0 %v7091
      %v7259 = vpop.f32.mrb[0].mxu0
      %v7260 = vadd.f32 %v7175, %v7259
      %v7261 = vpop.f32.mrb[0].mxu0
      %7262 = vdwg.mxu0
      %v7263 = vsub.f32 0.0, %v7245
      %v7264 = vsub.f32 0.0, %v7250
      %v7265 = vsub.f32 0.0, %v7255
      %v7266 = vsub.f32 0.0, %v7260
      %v7267 = vmul.f32 %v7263, 1.442695
      %v7268 = vpow.pop %v7267
      %v7269 = vmul.f32 %v7264, 1.442695
      %v7270 = vpow.pop %v7269
      %v7271 = vmul.f32 %v7265, 1.442695
      %v7272 = vpow.pop %v7271
      %v7273 = vmul.f32 %v7266, 1.442695
      %v7274 = vpow.pop %v7273
      %v7275 = vadd.f32 %v7268, 1.0
      %v7276 = vadd.f32 %v7270, 1.0
      %v7277 = vadd.f32 %v7272, 1.0
      %v7278 = vadd.f32 %v7274, 1.0
      %v7279 = vrcp.pop %v7275
      %v7280 = vmul.f32 1.0, %v7279
      %v7281 = vrcp.pop %v7276
      %v7282 = vmul.f32 1.0, %v7281
      %v7283 = vrcp.pop %v7277
      %v7284 = vmul.f32 1.0, %v7283
      %v7285 = vrcp.pop %v7278
      %v7286 = vmul.f32 1.0, %v7285
      %v7287 = vsel %vm1731, %v7280, 0.0
      %v7288 = vsel %vm1731, %v7282, 0.0
      %v7289 = vadd.f32 %v7287, %v7288
      %v7290 = vsel %vm1731, %v7284, 0.0
      %v7291 = vadd.f32 %v7289, %v7290
      %v7292 = vsel %vm1731, %v7286, 0.0
      %v7293 = vadd.f32 %v7291, %v7292
      %v7294 = vrot.slane %v7293, 4
      %v7295 = vadd.f32 %v7293, %v7294
      %v7296 = vrot.slane %v7295, 2
      %v7297 = vadd.f32 %v7295, %v7296
      %v7298 = vrot.slane %v7297, 1
      %v7299 = vadd.f32 %v7297, %v7298
      %v7300 = vrcp.pop 32.0
      %v7301 = vmul.f32 %v7299, %v7300
      %v7303 = vsel %vm1731, %v7301, 0
      %7305 = vmatprep.subr.mxu0 %v210
      %7306 = vmatpush1.msra.mxu0 %v209
      %7307 = vmatprep.subr.mxu0 %v213
      %7308 = vmatpush1.msra.mxu0 %v212
      %7309 = vmatprep.subr.mxu0 %v1749
      %7310 = vmatpush1.msra.mxu0 %v1746
      %7311 = vmatprep.subr.mxu0 0.0
      %7312 = vmatpush1.msra.mxu0 0.0
      %7313 = vmatprep.subr.mxu0 0.0
      %7314 = vmatpush1.msra.mxu0 0.0
      %7315 = vmatprep.subr.mxu0 0.0
      %7316 = vmatpush1.msra.mxu0 0.0
      %7317 = vmatprep.subr.mxu0 0.0
      %7318 = vmatpush1.msra.mxu0 0.0
      %7319 = vmatprep.subr.mxu0 0.0
      %7320 = vmatpush1.msra.mxu0 0.0
      %7321 = vmatprep.subr.mxu0 0.0
      %7322 = vmatpush1.msra.mxu0 0.0
      %7323 = vmatprep.subr.mxu0 0.0
      %7324 = vmatpush1.msra.mxu0 0.0
      %7325 = vmatprep.subr.mxu0 0.0
      %7326 = vmatpush1.msra.mxu0 0.0
      %7327 = vmatprep.subr.mxu0 0.0
      %7328 = vmatpush1.msra.mxu0 0.0
      %7329 = vmatprep.subr.mxu0 0.0
      %7330 = vmatpush1.msra.mxu0 0.0
      %7331 = vmatprep.subr.mxu0 0.0
      %7332 = vmatpush1.msra.mxu0 0.0
      %7333 = vmatprep.subr.mxu0 0.0
      %7334 = vmatpush1.msra.mxu0 0.0
      %7335 = vmatprep.subr.mxu0 0.0
      %7336 = vmatpush1.msra.mxu0 0.0
      %7337 = vmatprep.subr.mxu0 0.0
      %7338 = vmatpush1.msra.mxu0 0.0
      %7339 = vmatprep.subr.mxu0 0.0
      %7340 = vmatpush1.msra.mxu0 0.0
      %7341 = vmatprep.subr.mxu0 0.0
      %7342 = vmatpush1.msra.mxu0 0.0
      %7343 = vmatprep.subr.mxu0 0.0
      %7344 = vmatpush1.msra.mxu0 0.0
      %7345 = vmatprep.subr.mxu0 0.0
      %7346 = vmatpush1.msra.mxu0 0.0
      %7347 = vmatprep.subr.mxu0 0.0
      %7348 = vmatpush1.msra.mxu0 0.0
      %7349 = vmatprep.subr.mxu0 0.0
      %7350 = vmatpush1.msra.mxu0 0.0
      %7351 = vmatprep.subr.mxu0 0.0
      %7352 = vmatpush1.msra.mxu0 0.0
      %7353 = vmatprep.subr.mxu0 0.0
      %7354 = vmatpush1.msra.mxu0 0.0
      %7355 = vmatprep.subr.mxu0 0.0
      %7356 = vmatpush1.msra.mxu0 0.0
      %7357 = vmatprep.subr.mxu0 0.0
      %7358 = vmatpush1.msra.mxu0 0.0
      %7359 = vmatprep.subr.mxu0 0.0
      %7360 = vmatpush1.msra.mxu0 0.0
      %7361 = vmatprep.subr.mxu0 0.0
      %7362 = vmatpush1.msra.mxu0 0.0
      %7363 = vmatprep.subr.mxu0 0.0
      %7364 = vmatpush1.msra.mxu0 0.0
      %7365 = vmatprep.subr.mxu0 0.0
      %7366 = vmatpush1.msra.mxu0 0.0
      %7367 = vmatprep.subr.mxu0 0.0
      %7368 = vmatpush1.msra.mxu0 0.0
      %7369 = vmatprep.mubr.f32.mxu0 0.0
      %7370 = vmatmul.mubr.f32.gmra.mrb[0].mxu0 %v7303
      %v7371 = vpop.f32.mrb[0].mxu0
      %v7372 = vadd.f32 0.0, %v7371
      %v7373 = vpop.f32.mrb[0].mxu0
      %v7374 = vadd.f32 0.0, %v7373
      %7375 = vmatprep.mubr.f32.mxu0 0.0
      %7376 = vmatmul.mubr.f32.gmra.mrb[0].mxu0 %v7303
      %v7377 = vpop.f32.mrb[0].mxu0
      %v7378 = vadd.f32 0.0, %v7377
      %v7379 = vpop.f32.mrb[0].mxu0
      %v7380 = vadd.f32 0.0, %v7379
      %7381 = vmatprep.mubr.f32.mxu0 0.0
      %7382 = vmatmul.mubr.f32.gmra.mrb[0].mxu0 %v7303
      %v7383 = vpop.f32.mrb[0].mxu0
      %v7384 = vadd.f32 0.0, %v7383
      %v7385 = vpop.f32.mrb[0].mxu0
      %v7386 = vadd.f32 0.0, %v7385
      %7387 = vmatprep.mubr.f32.mxu0 0.0
      %7388 = vmatmul.mubr.f32.gmra.mrb[0].mxu0 %v7303
      %v7389 = vpop.f32.mrb[0].mxu0
      %v7390 = vadd.f32 0.0, %v7389
      %v7391 = vpop.f32.mrb[0].mxu0
      %v7392 = vadd.f32 0.0, %v7391
      %7393 = vdwg.mxu0
      %7394 = vmatprep.subr.mxu0 0.0
      %7395 = vmatpush1.msra.mxu0 %v211
      %7396 = vmatprep.subr.mxu0 0.0
      %7397 = vmatpush1.msra.mxu0 %v214
      %7398 = vmatprep.subr.mxu0 0.0
      %7399 = vmatpush1.msra.mxu0 %v1752
      %7400 = vmatprep.subr.mxu0 0.0
      %7401 = vmatpush1.msra.mxu0 0.0
      %7402 = vmatprep.subr.mxu0 0.0
      %7403 = vmatpush1.msra.mxu0 0.0
      %7404 = vmatprep.subr.mxu0 0.0
      %7405 = vmatpush1.msra.mxu0 0.0
      %7406 = vmatprep.subr.mxu0 0.0
      %7407 = vmatpush1.msra.mxu0 0.0
      %7408 = vmatprep.subr.mxu0 0.0
      %7409 = vmatpush1.msra.mxu0 0.0
      %7410 = vmatprep.subr.mxu0 0.0
      %7411 = vmatpush1.msra.mxu0 0.0
      %7412 = vmatprep.subr.mxu0 0.0
      %7413 = vmatpush1.msra.mxu0 0.0
      %7414 = vmatprep.subr.mxu0 0.0
      %7415 = vmatpush1.msra.mxu0 0.0
      %7416 = vmatprep.subr.mxu0 0.0
      %7417 = vmatpush1.msra.mxu0 0.0
      %7418 = vmatprep.subr.mxu0 0.0
      %7419 = vmatpush1.msra.mxu0 0.0
      %7420 = vmatprep.subr.mxu0 0.0
      %7421 = vmatpush1.msra.mxu0 0.0
      %7422 = vmatprep.subr.mxu0 0.0
      %7423 = vmatpush1.msra.mxu0 0.0
      %7424 = vmatprep.subr.mxu0 0.0
      %7425 = vmatpush1.msra.mxu0 0.0
      %7426 = vmatprep.subr.mxu0 0.0
      %7427 = vmatpush1.msra.mxu0 0.0
      %7428 = vmatprep.subr.mxu0 0.0
      %7429 = vmatpush1.msra.mxu0 0.0
      %7430 = vmatprep.subr.mxu0 0.0
      %7431 = vmatpush1.msra.mxu0 0.0
      %7432 = vmatprep.subr.mxu0 0.0
      %7433 = vmatpush1.msra.mxu0 0.0
      %7434 = vmatprep.subr.mxu0 0.0
      %7435 = vmatpush1.msra.mxu0 0.0
      %7436 = vmatprep.subr.mxu0 0.0
      %7437 = vmatpush1.msra.mxu0 0.0
      %7438 = vmatprep.subr.mxu0 0.0
      %7439 = vmatpush1.msra.mxu0 0.0
      %7440 = vmatprep.subr.mxu0 0.0
      %7441 = vmatpush1.msra.mxu0 0.0
      %7442 = vmatprep.subr.mxu0 0.0
      %7443 = vmatpush1.msra.mxu0 0.0
      %7444 = vmatprep.subr.mxu0 0.0
      %7445 = vmatpush1.msra.mxu0 0.0
      %7446 = vmatprep.subr.mxu0 0.0
      %7447 = vmatpush1.msra.mxu0 0.0
      %7448 = vmatprep.subr.mxu0 0.0
      %7449 = vmatpush1.msra.mxu0 0.0
      %7450 = vmatprep.subr.mxu0 0.0
      %7451 = vmatpush1.msra.mxu0 0.0
      %7452 = vmatprep.subr.mxu0 0.0
      %7453 = vmatpush1.msra.mxu0 0.0
      %7454 = vmatprep.subr.mxu0 0.0
      %7455 = vmatpush1.msra.mxu0 0.0
      %7456 = vmatprep.subr.mxu0 0.0
      %7457 = vmatpush1.msra.mxu0 0.0
      %7458 = vmatprep.mubr.f32.mxu0 0.0
      %7459 = vmatmul.mubr.f32.gmra.mrb[0].mxu0 %v7303
      %v7460 = vpop.f32.mrb[0].mxu0
      %v7461 = vadd.f32 0.0, %v7460
      %v7462 = vpop.f32.mrb[0].mxu0
      %7463 = vmatprep.mubr.f32.mxu0 0.0
      %7464 = vmatmul.mubr.f32.gmra.mrb[0].mxu0 %v7303
      %v7465 = vpop.f32.mrb[0].mxu0
      %v7466 = vadd.f32 0.0, %v7465
      %v7467 = vpop.f32.mrb[0].mxu0
      %7468 = vmatprep.mubr.f32.mxu0 0.0
      %7469 = vmatmul.mubr.f32.gmra.mrb[0].mxu0 %v7303
      %v7470 = vpop.f32.mrb[0].mxu0
      %v7471 = vadd.f32 0.0, %v7470
      %v7472 = vpop.f32.mrb[0].mxu0
      %7473 = vmatprep.mubr.f32.mxu0 0.0
      %7474 = vmatmul.mubr.f32.gmra.mrb[0].mxu0 %v7303
      %v7475 = vpop.f32.mrb[0].mxu0
      %v7476 = vadd.f32 0.0, %v7475
      %v7477 = vpop.f32.mrb[0].mxu0
      %7478 = vdwg.mxu0
      %v7479 = vmul.f32 %v6171, %v7372
      %v7480 = vmul.f32 %v6172, %v7374
      %v7481 = vmul.f32 %v6173, %v7461
      %v7482 = vmul.f32 %v6174, %v7378
      %v7483 = vmul.f32 %v6175, %v7380
      %v7484 = vmul.f32 %v6176, %v7466
      %v7485 = vmul.f32 %v6177, %v7384
      %v7486 = vmul.f32 %v6178, %v7386
      %v7487 = vmul.f32 %v6179, %v7471
      %v7488 = vmul.f32 %v6180, %v7390
      %v7489 = vmul.f32 %v6181, %v7392
      %v7490 = vmul.f32 %v6182, %v7476
      %v7491 = vmul.f32 %v7479, 0.2
      %v7492 = vmul.f32 %v7480, 0.2
      %v7493 = vmul.f32 %v7481, 0.2
      %v7494 = vmul.f32 %v7482, 0.2
      %v7495 = vmul.f32 %v7483, 0.2
      %v7496 = vmul.f32 %v7484, 0.2
      %v7497 = vmul.f32 %v7485, 0.2
      %v7498 = vmul.f32 %v7486, 0.2
      %v7499 = vmul.f32 %v7487, 0.2
      %v7500 = vmul.f32 %v7488, 0.2
      %v7501 = vmul.f32 %v7489, 0.2
      %v7502 = vmul.f32 %v7490, 0.2
      %v7503 = vmax.f32 %v7479, %v7491
      %v7504 = vmax.f32 %v7480, %v7492
      %v7505 = vmax.f32 %v7481, %v7493
      %v7506 = vmax.f32 %v7482, %v7494
      %v7507 = vmax.f32 %v7483, %v7495
      %v7508 = vmax.f32 %v7484, %v7496
      %v7509 = vmax.f32 %v7485, %v7497
      %v7510 = vmax.f32 %v7486, %v7498
      %v7511 = vmax.f32 %v7487, %v7499
      %v7512 = vmax.f32 %v7488, %v7500
      %v7513 = vmax.f32 %v7489, %v7501
      %v7514 = vmax.f32 %v7490, %v7502
      %7515 = vst [vmem:[%s194] sm:$0xff] %v7503
      %7516 = vst [vmem:[%s194 + $0x8] sm:$0xff] %v7504
      %7517 = vst.msk [vmem:[%s194 + $0x10] sm:$0xff] %vm201, %v7505
      %7518 = vst [vmem:[%s194 + $0x18] sm:$0xff] %v7506
      %7519 = vst [vmem:[%s194 + $0x20] sm:$0xff] %v7507
      %7520 = vst.msk [vmem:[%s194 + $0x28] sm:$0xff] %vm201, %v7508
      %7521 = vst [vmem:[%s194 + $0x30] sm:$0xff] %v7509
      %7522 = vst [vmem:[%s194 + $0x38] sm:$0xff] %v7510
      %7523 = vst.msk [vmem:[%s194 + $0x40] sm:$0xff] %vm201, %v7511
      %7524 = vst [vmem:[%s194 + $0x48] sm:$0xff] %v7512
      %7525 = vst [vmem:[%s194 + $0x50] sm:$0xff] %v7513
      %7526 = vst.msk [vmem:[%s194 + $0x58] sm:$0xff] %vm201, %v7514
      %p7527 = scmp.lt.s32.totalorder %s15, 1
      %s7528 = scalar_select %p7527, %s15, 1
      %s7529 = smul.addr %s7528, 12
      %s7530 = smul.addr %s7529, 8
      %s7531 = scalar_lea.vmem %s4, %s7530
      // Predicated region
      $region37: #{mcfe_block_depwise.1} parent=35 // pred_check
        %p7532 = pneg %p122
      $region38: #{mcfe_block_depwise.1} parent=35 // pred_check_branch
        %7534 = sbr.rel (%p7532) target = $region40
      $region39: #{mcfe_block_depwise.1} parent=35 // pred_region
        _
      $region40: #{mcfe_block_depwise.1} parent=35 // pred_fallthru
        _
    $region36: #{mcfe_block_depwise.1} parent=5 // pred_fallthru
      _
    %p7535 = scmp.le.s32.totalorder 2, %s10
    // Predicated region
    $region41: #{mcfe_block_depwise.1} parent=5 // pred_check
      %p7536 = pneg %p7535
    $region42: #{mcfe_block_depwise.1} parent=5 // pred_check_branch
      %7538 = sbr.rel (%p7536) target = $region44
    $region43: #{mcfe_block_depwise.1} parent=5 // pred_region
      %s7539 = ssub.s32 %s10, 2
      // Predicated region
      $region45: #{mcfe_block_depwise.1} parent=43 // pred_check
        %p7540 = pneg %p128
      $region46: #{mcfe_block_depwise.1} parent=43 // pred_check_branch
        %7542 = sbr.rel (%p7540) target = $region48
      $region47: #{mcfe_block_depwise.1} parent=43 // pred_region
        %p7543 = scmp.lt.s32.totalorder %s16, 1
        %s7544 = scalar_select %p7543, %s16, 1
        %s7545 = smul.addr %s7544, 12
        %s7546 = smul.addr %s7545, 8
        %s7547 = scalar_lea.vmem %s4, %s7546
      $region48: #{mcfe_block_depwise.1} parent=43 // pred_fallthru
        _
    $region44: #{mcfe_block_depwise.1} parent=5 // pred_fallthru
      _
  $region6: #{mcfe_block_depwise.1} parent=0 // loop_footer
    %s14 = sadd.s32 1, %s10
  $region7: #{mcfe_block_depwise.1} parent=0 // loop_footer_branch
    %9 = sbr.rel target = $region3
  $region8: #{mcfe_block_depwise.1} parent=0 // loop_exit
    _

</llo_original>
